<compile_context>
chip_gen: v6e
topology: v6e:2x2x1
jax: 0.10.0
libtpu: 0.0.40
codegen_flags: <defaults>
</compile_context>

<pallas_src>
import functools

import jax
import jax.numpy as jnp
from jax import lax
from jax.experimental import pallas as pl
from jax.experimental.pallas import tpu as pltpu

MM_DTYPE = jnp.bfloat16      # MXU operand dtype (accumulation stays f32).
_BLK_ALIGN = 16              # keeps f32 (8,128) and bf16 (16,128) tiles aligned


def _vmem_limit_bytes():
    cap = 64 * 1024 * 1024   # conservative default: v7x has 64 MiB VMEM / core
    try:
        info = pltpu.get_tpu_info()
        cap = int(getattr(info, "vmem_capacity_bytes", cap))
    except Exception:        # query unavailable -> keep conservative default
        pass
    return min(cap, 100 * 1024 * 1024)


VMEM_LIMIT = _vmem_limit_bytes()
_BLOCK_BUDGET = int(VMEM_LIMIT * 0.6)   # headroom for weights/compiler scratch


# ---------------------------------------------------------------------------
# Static helpers
# ---------------------------------------------------------------------------
def _block_and_pad(n, bytes_per_unit, *, cap=256):
    """VMEM-aware block size for a tiled axis of length `n`.

    Returns (block, padded_n): `block` is a multiple of 16 (f32 and bf16
    blocks stay tile-aligned), bounded by `cap` and by the per-call VMEM
    budget; `padded_n` is the smallest multiple of `block` covering `n`.
    Prefers >= 2 blocks so the pipeline double-buffers and megacore (v7x)
    can shard the axis.
    """
    g = _BLK_ALIGN
    fit = max(g, (_BLOCK_BUDGET // max(bytes_per_unit, 1)) // g * g)
    blk = max(g, min(cap // g * g, fit))
    n_g = n + (-n) % g
    if n_g >= 2 * g:                       # expose at least 2 blocks
        blk = min(blk, (n_g // 2) // g * g)
    blk = min(blk, n_g)
    padded = -(-n // blk) * blk
    return blk, padded


def _pad_axis(x, axis, size):
    pad = size - x.shape[axis]
    if pad <= 0:
        return x
    widths = [(0, 0)] * x.ndim
    widths[axis] = (0, pad)
    return jnp.pad(x, widths)


def _unroll(seq_len):
    return True if seq_len <= 16 else 8


# ---------------------------------------------------------------------------
# Shared LSTM building blocks (used inside the kernels)
# ---------------------------------------------------------------------------
def _project_inputs(x, wih_ref, b_ref, gates_ref):
    """Hoisted x @ W_ih + b for a whole (S, NB, Din) block: one MXU matmul."""
    S, NB, Din = x.shape
    G = gates_ref.shape[-1]
    x2d = x.reshape(S * NB, Din).astype(wih_ref.dtype)
    gx = jnp.dot(x2d, wih_ref[...], preferred_element_type=jnp.float32)
    gates_ref[...] = gx.reshape(S, NB, G) + b_ref[...]


def _lstm_loop(gates_ref, whh_ref, hseq_ref, *, dir_axis, unroll):
    """Recurrent loop; h/c live in the fori_loop carry (vregs), the per-step
    hidden state is stored to hseq_ref[t].  dir_axis selects the backward
    direction of a bidirectional LSTM (grid axis value 1 -> reversed seq)."""
    S, NB, G = gates_ref.shape
    D = G // 4
    whh = whh_ref[...]                          # hoisted: constant per block

    if dir_axis is None:
        def t_at(s):
            return s
    else:
        rev = pl.program_id(dir_axis) == 1

        def t_at(s):
            return jnp.where(rev, S - 1 - s, s)

    def step(s, carry):
        h, c = carry
        t = t_at(s)
        gates = gates_ref[t] + jnp.dot(h.astype(whh.dtype), whh,
                                       preferred_element_type=jnp.float32)
        i = jax.nn.sigmoid(gates[:, 0:D])
        f = jax.nn.sigmoid(gates[:, D:2 * D])
        g = jnp.tanh(gates[:, 2 * D:3 * D])
        o = jax.nn.sigmoid(gates[:, 3 * D:4 * D])
        c = f * c + i * g
        h = o * jnp.tanh(c)
        hseq_ref[t] = h.astype(hseq_ref.dtype)
        return (h, c)

    z = jnp.zeros((NB, D), jnp.float32)
    lax.fori_loop(0, S, step, (z, z), unroll=unroll)


# ---------------------------------------------------------------------------
# Kernels
# ---------------------------------------------------------------------------
def _lstm_kernel(x_ref, wih_ref, whh_ref, b_ref, out_ref, gates_scr,
                 *, dir_axis, unroll):
    """Plain LSTM over the leading block axis; out_ref dtype = bf16."""
    _project_inputs(x_ref[...], wih_ref, b_ref, gates_scr)
    _lstm_loop(gates_scr, whh_ref, out_ref, dir_axis=dir_axis, unroll=unroll)


def _lstm_wc_kernel(x_ref, wih_ref, whh_ref, b_ref, wo_ref, bo_ref,
                    out_ref, gates_scr, hseq_scr, *, unroll):
    """c_RNN + fused `out = x + h_seq @ W_c + b_c` epilogue (h_c_temp stays
    in VMEM)."""
    S, NB, D = x_ref.shape
    _project_inputs(x_ref[...], wih_ref, b_ref, gates_scr)
    _lstm_loop(gates_scr, whh_ref, hseq_scr, dir_axis=None, unroll=unroll)
    h2d = hseq_scr[...].reshape(S * NB, D).astype(wo_ref.dtype)
    proj = jnp.dot(h2d, wo_ref[...],
                   preferred_element_type=jnp.float32).reshape(S, NB, D)
    out_ref[...] = x_ref[...] + proj + bo_ref[...]


def _fused_t_f_kernel(hx_ref, hyz_ref, ht_ref, hf_ref, hc_ref,
                      wt_ref, bt_ref, wih_ref, whh_ref, b_ref, wf_ref, bf_ref,
                      out_t_ref, out_f_ref, gates_scr, hseq_scr, *, unroll):
    """W_t + residual, 3-way add, f_delay_RNN (seq = M) and W_f + residual in
    one kernel; h_f_sum / h_f_temp never touch HBM."""
    M, TB, D = ht_ref.shape

    def mm(a_bf16, w2d):
        a2 = a_bf16.reshape(M * TB, D)
        return jnp.dot(a2, w2d,
                       preferred_element_type=jnp.float32).reshape(M, TB, D)

    # output_h_t = input_h_t + concat([h_t_x, h_fwd, h_bwd]) @ W_t + b_t,
    # done as three row-sliced matmuls against static ref slices of W_t.
    proj_t = (mm(hx_ref[...], wt_ref[0:D, :])
              + mm(hyz_ref[0], wt_ref[D:2 * D, :])
              + mm(hyz_ref[1], wt_ref[2 * D:3 * D, :]))
    out_t = ht_ref[...] + proj_t + bt_ref[...]
    out_t_ref[...] = out_t

    # f_delay_RNN input: output_h_t + input_h_f + output_h_c (un-broadcast).
    x_f = out_t + hf_ref[...] + hc_ref[...][None, :, :]
    _project_inputs(x_f, wih_ref, b_ref, gates_scr)
    _lstm_loop(gates_scr, whh_ref, hseq_scr, dir_axis=None, unroll=unroll)

    # output_h_f = input_h_f + h_f_seq @ W_f + b_f   (fused epilogue)
    h2d = hseq_scr[...].reshape(M * TB, D).astype(wf_ref.dtype)
    proj_f = jnp.dot(h2d, wf_ref[...],
                     preferred_element_type=jnp.float32).reshape(M, TB, D)
    out_f_ref[...] = hf_ref[...] + proj_f + bf_ref[...]


# ---------------------------------------------------------------------------
# Wrappers
# ---------------------------------------------------------------------------
def lstm_time_major(x_tmajor, wih, whh, b, nb):
    """x: (S, N, Din) seq-major, N % nb == 0.  Returns (S, N, D) bf16."""
    S, N, Din = x_tmajor.shape
    D = whh.shape[0]
    G = wih.shape[1]
    kernel = functools.partial(_lstm_kernel, dir_axis=None, unroll=_unroll(S))
    return pl.pallas_call(
        kernel,
        out_shape=jax.ShapeDtypeStruct((S, N, D), MM_DTYPE),
        grid=(N // nb,),
        in_specs=[
            pl.BlockSpec((S, nb, Din), lambda i: (0, i, 0)),
            pl.BlockSpec((Din, G), lambda i: (0, 0)),
            pl.BlockSpec((D, G), lambda i: (0, 0)),
            pl.BlockSpec((1, G), lambda i: (0, 0)),
        ],
        out_specs=pl.BlockSpec((S, nb, D), lambda i: (0, i, 0)),
        scratch_shapes=[pltpu.VMEM((S, nb, G), jnp.float32)],
        compiler_params=pltpu.CompilerParams(
            dimension_semantics=("parallel",),
            vmem_limit_bytes=VMEM_LIMIT),
    )(x_tmajor, wih, whh, b)


def bilstm_over_m(x4d, wih2, whh2, b2, tb):
    """Bidirectional LSTM, sequence = M, batch = (B, T-blocks); both
    directions share one pallas_call via a trailing direction grid axis.
    Returns (2, B, M, T, D) bf16: [0] forward, [1] backward hidden states."""
    B, M, T, Din = x4d.shape
    D = whh2.shape[1]
    G = wih2.shape[2]
    kernel = functools.partial(_lstm_kernel, dir_axis=2, unroll=_unroll(M))
    return pl.pallas_call(
        kernel,
        out_shape=jax.ShapeDtypeStruct((2, B, M, T, D), MM_DTYPE),
        grid=(B, T // tb, 2),
        in_specs=[
            # x block ignores the direction axis -> fetched once per (b, t).
            pl.BlockSpec((None, M, tb, Din), lambda b, t, d: (b, 0, t, 0)),
            pl.BlockSpec((None, Din, G), lambda b, t, d: (d, 0, 0)),
            pl.BlockSpec((None, D, G), lambda b, t, d: (d, 0, 0)),
            pl.BlockSpec((None, 1, G), lambda b, t, d: (d, 0, 0)),
        ],
        out_specs=pl.BlockSpec((None, None, M, tb, D),
                               lambda b, t, d: (d, b, 0, t, 0)),
        scratch_shapes=[pltpu.VMEM((M, tb, G), jnp.float32)],
        compiler_params=pltpu.CompilerParams(
            dimension_semantics=("parallel", "parallel", "arbitrary"),
            vmem_limit_bytes=VMEM_LIMIT),
    )(x4d, wih2, whh2, b2)


def lstm_c_wc(x_btd, wih, whh, b, wo, bo):
    """c_RNN + fused W_c linear + residual: (B, T, D) f32 -> (B, T, D) f32."""
    B, T, D = x_btd.shape
    G = wih.shape[1]
    x_t = jnp.swapaxes(x_btd, 0, 1)                       # (T, B, D)
    Bp = B + (-B) % 8
    x_t = _pad_axis(x_t, 1, Bp)
    kernel = functools.partial(_lstm_wc_kernel, unroll=_unroll(T))
    out = pl.pallas_call(
        kernel,
        out_shape=jax.ShapeDtypeStruct((T, Bp, D), jnp.float32),
        grid=(1,),
        in_specs=[
            pl.BlockSpec((T, Bp, D), lambda i: (0, 0, 0)),
            pl.BlockSpec((D, G), lambda i: (0, 0)),
            pl.BlockSpec((D, G), lambda i: (0, 0)),
            pl.BlockSpec((1, G), lambda i: (0, 0)),
            pl.BlockSpec((D, D), lambda i: (0, 0)),
            pl.BlockSpec((1, D), lambda i: (0, 0)),
        ],
        out_specs=pl.BlockSpec((T, Bp, D), lambda i: (0, 0, 0)),
        scratch_shapes=[pltpu.VMEM((T, Bp, G), jnp.float32),
                        pltpu.VMEM((T, Bp, D), jnp.float32)],
        compiler_params=pltpu.CompilerParams(
            dimension_semantics=("arbitrary",),
            vmem_limit_bytes=VMEM_LIMIT),
    )(x_t, wih, whh, b, wo, bo)
    return jnp.swapaxes(out[:, :B], 0, 1)                 # (B, T, D)


def fused_t_f(h_t_x, h_yz, input_h_t, input_h_f, output_h_c,
              w_t, b_t, wih, whh, b, w_f, b_f, tb):
    """Fused W_t + residual + 3-way add + f_delay_RNN + W_f + residual."""
    B, M, T, D = input_h_t.shape
    G = wih.shape[1]
    spec_mtd = pl.BlockSpec((None, M, tb, D), lambda bi, ti: (bi, 0, ti, 0))

    def spec_w(shape):
        return pl.BlockSpec(shape, lambda bi, ti, _n=len(shape): (0,) * _n)

    out_sd = jax.ShapeDtypeStruct((B, M, T, D), jnp.float32)
    kernel = functools.partial(_fused_t_f_kernel, unroll=_unroll(M))
    return pl.pallas_call(
        kernel,
        out_shape=(out_sd, out_sd),
        grid=(B, T // tb),
        in_specs=[
            spec_mtd,                                              # h_t_x bf16
            pl.BlockSpec((2, None, M, tb, D),
                         lambda bi, ti: (0, bi, 0, ti, 0)),        # h_yz bf16
            spec_mtd,                                              # input_h_t
            spec_mtd,                                              # input_h_f
            pl.BlockSpec((None, tb, D), lambda bi, ti: (bi, ti, 0)),  # out_h_c
            spec_w((3 * D, D)), spec_w((1, D)),                    # W_t, b_t
            spec_w((D, G)), spec_w((D, G)), spec_w((1, G)),        # f-LSTM
            spec_w((D, D)), spec_w((1, D)),                        # W_f, b_f
        ],
        out_specs=(spec_mtd, spec_mtd),
        scratch_shapes=[pltpu.VMEM((M, tb, G), jnp.float32),
                        pltpu.VMEM((M, tb, D), jnp.float32)],
        compiler_params=pltpu.CompilerParams(
            dimension_semantics=("parallel", "parallel"),
            vmem_limit_bytes=VMEM_LIMIT),
    )(h_t_x, h_yz, input_h_t, input_h_f, output_h_c,
      w_t, b_t, wih, whh, b, w_f, b_f)


# ---------------------------------------------------------------------------
# DelayedRNN forward (Pallas path)
# ---------------------------------------------------------------------------
def delayed_rnn_forward(params, input_h_t, input_h_f, input_h_c=0.0):
    B, M, T0, D = input_h_t.shape
    if jnp.ndim(input_h_c) == 0:
        input_h_c = jnp.full((B, T0, D), input_h_c, jnp.float32)

    # VMEM-aware T blocking (the fused kernel has the largest per-TB footprint:
    # bf16 hx + 2x bf16 hyz + f32 ht/hf + 2 f32 outputs, double-buffered, plus
    # the f32 gate and h-sequence scratches).
    TB, Tp = _block_and_pad(T0, M * D * 64 + 8 * D, cap=256)
    # Padded timesteps are causally inert for the T-axis LSTMs and pure extra
    # batch rows for the M-axis LSTMs; sliced off at the end.
    input_h_t = _pad_axis(input_h_t, 2, Tp)
    input_h_f = _pad_axis(input_h_f, 2, Tp)
    input_h_c = _pad_axis(input_h_c, 1, Tp)

    def lstm_w(p):
        wih, whh, bias = p
        return wih.astype(MM_DTYPE), whh.astype(MM_DTYPE), bias

    # ---- t_delay_RNN_x: LSTM along T, batch B*M (bf16 output) -------------
    # TODO(synk): the wrapper transposes could be removed with a T-middle-axis
    # LSTM variant (strided per-step slices); kept the proven seq-major path.
    N = B * M
    NB, Np = _block_and_pad(N, Tp * D * 28, cap=512)
    x_tx = jnp.swapaxes(input_h_t.reshape(N, Tp, D), 0, 1)      # (Tp, N, D)
    x_tx = _pad_axis(x_tx, 1, Np)
    h_t_x = lstm_time_major(x_tx, *lstm_w(params["t_x"]), NB)   # (Tp, Np, D)
    h_t_x = jnp.swapaxes(h_t_x[:, :N], 0, 1).reshape(B, M, Tp, D)

    # ---- t_delay_RNN_yz: bidirectional LSTM along M (bf16 output) ---------
    wfd = lstm_w(params["t_yz_f"])
    wbd = lstm_w(params["t_yz_b"])
    h_yz = bilstm_over_m(input_h_t,
                         jnp.stack([wfd[0], wbd[0]]),
                         jnp.stack([wfd[1], wbd[1]]),
                         jnp.stack([wfd[2], wbd[2]]), TB)       # (2,B,M,Tp,D)

    # ---- c_RNN + W_c linear + residual (fused epilogue) -------------------
    # TODO(synk): t_x and c_RNN could share one pallas_call via a
    # weight-selecting grid axis to keep both v7x cores busy at tiny batch.
    w_c, b_c = params["W_c"]
    output_h_c = lstm_c_wc(input_h_c, *lstm_w(params["c"]),
                           w_c.astype(MM_DTYPE), b_c)           # (B, Tp, D)

    # ---- fused: W_t + residual + 3-way add + f_delay_RNN + W_f + residual --
    w_t, b_t = params["W_t"]
    w_f, b_f = params["W_f"]
    output_h_t, output_h_f = fused_t_f(
        h_t_x, h_yz, input_h_t, input_h_f, output_h_c,
        w_t.astype(MM_DTYPE), b_t, *lstm_w(params["f"]),
        w_f.astype(MM_DTYPE), b_f, TB)

    if Tp != T0:
        output_h_t = output_h_t[:, :, :T0]
        output_h_f = output_h_f[:, :, :T0]
        output_h_c = output_h_c[:, :T0]
    return output_h_t, output_h_f, output_h_c


# ---------------------------------------------------------------------------
# Pure-JAX reference (same bf16 matmul precision, for verification)
# ---------------------------------------------------------------------------
def _mm(a, b):
    return jnp.dot(a.astype(MM_DTYPE), b.astype(MM_DTYPE),
                   preferred_element_type=jnp.float32)


def lstm_ref(x_bsd, wih, whh, b, reverse=False):
    N = x_bsd.shape[0]
    D = whh.shape[0]
    xs = jnp.swapaxes(x_bsd, 0, 1)
    if reverse:
        xs = xs[::-1]

    def step(carry, x_t):
        h, c = carry
        gates = _mm(x_t, wih) + _mm(h, whh) + b
        i = jax.nn.sigmoid(gates[:, 0:D])
        f = jax.nn.sigmoid(gates[:, D:2 * D])
        g = jnp.tanh(gates[:, 2 * D:3 * D])
        o = jax.nn.sigmoid(gates[:, 3 * D:4 * D])
        c = f * c + i * g
        h = o * jnp.tanh(c)
        return (h, c), h

    init = (jnp.zeros((N, D), jnp.float32), jnp.zeros((N, D), jnp.float32))
    _, hs = lax.scan(step, init, xs)
    if reverse:
        hs = hs[::-1]
    return jnp.swapaxes(hs, 0, 1)


def delayed_rnn_reference(params, input_h_t, input_h_f, input_h_c):
    B, M, T, D = input_h_t.shape
    h_t_x = lstm_ref(input_h_t.reshape(B * M, T, D),
                     *params["t_x"]).reshape(B, M, T, D)

    xm = input_h_t.transpose(0, 2, 1, 3).reshape(B * T, M, D)
    h_fwd = lstm_ref(xm, *params["t_yz_f"])
    h_bwd = lstm_ref(xm, *params["t_yz_b"], reverse=True)
    h_t_yz = (jnp.concatenate([h_fwd, h_bwd], -1)
              .reshape(B, T, M, 2 * D).transpose(0, 2, 1, 3))

    w_t, b_t = params["W_t"]
    h_t_concat = jnp.concatenate([h_t_x, h_t_yz], -1)
    output_h_t = (input_h_t
                  + _mm(h_t_concat.reshape(-1, 3 * D),
                        w_t).reshape(B, M, T, D)
                  + b_t.reshape(1, 1, 1, D))

    h_c_temp = lstm_ref(input_h_c, *params["c"])
    w_c, b_c = params["W_c"]
    output_h_c = (input_h_c
                  + _mm(h_c_temp.reshape(-1, D), w_c).reshape(B, T, D)
                  + b_c.reshape(1, 1, D))

    h_f_sum = input_h_f + output_h_t + output_h_c[:, None]
    xf = h_f_sum.transpose(0, 2, 1, 3).reshape(B * T, M, D)
    h_f_temp = (lstm_ref(xf, *params["f"])
                .reshape(B, T, M, D).transpose(0, 2, 1, 3))
    w_f, b_f = params["W_f"]
    output_h_f = (input_h_f
                  + _mm(h_f_temp.reshape(-1, D), w_f).reshape(B, M, T, D)
                  + b_f.reshape(1, 1, 1, D))
    return output_h_t, output_h_f, output_h_c


# ---------------------------------------------------------------------------
# Deterministic parameter init (shapes from nn.Module.__init__)
# ---------------------------------------------------------------------------
def init_params(key, D):
    k = 1.0 / float(D) ** 0.5
    keys = iter(jax.random.split(key, 32))

    def u(shape, scale):
        return jax.random.uniform(next(keys), shape, jnp.float32, -scale, scale)

    def lstm_p(scale):
        # (weight_ih^T, weight_hh^T, b_ih + b_hh) in gate order (i, f, g, o)
        return (u((D, 4 * D), scale), u((D, 4 * D), scale),
                u((1, 4 * D), scale))

    k3 = 1.0 / float(3 * D) ** 0.5
    return {
        "t_x": lstm_p(k),        # t_delay_RNN_x
        "t_yz_f": lstm_p(k),     # t_delay_RNN_yz, forward direction
        "t_yz_b": lstm_p(k),     # t_delay_RNN_yz, backward direction
        "c": lstm_p(k),          # c_RNN
        "f": lstm_p(k),          # f_delay_RNN
        "W_t": (u((3 * D, D), k3), u((1, D), k3)),
        "W_c": (u((D, D), k), u((1, D), k)),
        "W_f": (u((D, D), k), u((1, D), k)),
    }


if __name__ == "__main__":
    B, M, T, D = 2, 4, 8, 32
    key = jax.random.PRNGKey(0)
    kp, k1, k2, k3 = jax.random.split(key, 4)
    params = init_params(kp, D)

    input_h_t = jax.random.normal(k1, (B, M, T, D), jnp.float32)
    input_h_f = jax.random.normal(k2, (B, M, T, D), jnp.float32)
    input_h_c = jax.random.normal(k3, (B, T, D), jnp.float32)

    out = jax.jit(delayed_rnn_forward)(params, input_h_t, input_h_f,
                                       input_h_c)
    out = jax.block_until_ready(out)

    ref = jax.jit(delayed_rnn_reference)(params, input_h_t, input_h_f,
                                         input_h_c)
    ref = jax.block_until_ready(ref)

    for o, r in zip(out, ref):
        assert o.shape == r.shape and o.dtype == r.dtype
        err = float(jnp.max(jnp.abs(o - r)))
        assert err < 2e-3, err

    print("KERNEL_OK")
</pallas_src>

<mosaic_0001>
module attributes {stable_mosaic.version = 11 : i64} {
  func.func @_lstm_kernel(%arg0: i32, %arg1: i32, %arg2: i32, %arg3: memref<1x4x16x32xf32, #tpu.memory_space<vmem>>, %arg4: memref<1x32x128xbf16, #tpu.memory_space<vmem>>, %arg5: memref<1x32x128xbf16, #tpu.memory_space<vmem>>, %arg6: memref<1x1x128xf32, #tpu.memory_space<vmem>>, %arg7: memref<1x1x4x16x32xbf16, #tpu.memory_space<vmem>>, %arg8: memref<4x16x128xf32, #tpu.memory_space<vmem>>) attributes {dimension_semantics = [#tpu.dimension_semantics<parallel>, #tpu.dimension_semantics<parallel>, #tpu.dimension_semantics<arbitrary>], iteration_bounds = array<i64: 2, 1, 2>, scalar_prefetch = 0 : i64, scratch_operands = 1 : i64, tpu.core_type = #tpu.core_type<tc>, window_params = [{transform_indices = @transform_0, window_bounds = array<i64: 1, 4, 16, 32>}, {transform_indices = @transform_1, window_bounds = array<i64: 1, 32, 128>}, {transform_indices = @transform_2, window_bounds = array<i64: 1, 32, 128>}, {transform_indices = @transform_3, window_bounds = array<i64: 1, 1, 128>}, {transform_indices = @transform_4, window_bounds = array<i64: 1, 1, 4, 16, 32>}]} {
    %c0 = arith.constant 0 : index
    %c0_0 = arith.constant 0 : index
    %c0_1 = arith.constant 0 : index
    %c0_2 = arith.constant 0 : index
    %0 = vector.load %arg3[%c0, %c0_0, %c0_1, %c0_2] : memref<1x4x16x32xf32, #tpu.memory_space<vmem>>, vector<1x4x16x32xf32>
    %1 = vector.shape_cast %0 : vector<1x4x16x32xf32> to vector<4x16x32xf32>
    %2 = vector.shape_cast %1 : vector<4x16x32xf32> to vector<64x32xf32>
    %3 = arith.truncf %2 : vector<64x32xf32> to vector<64x32xbf16>
    %c0_3 = arith.constant 0 : index
    %c0_4 = arith.constant 0 : index
    %c0_5 = arith.constant 0 : index
    %4 = vector.load %arg4[%c0_3, %c0_4, %c0_5] : memref<1x32x128xbf16, #tpu.memory_space<vmem>>, vector<1x32x128xbf16>
    %5 = vector.shape_cast %4 : vector<1x32x128xbf16> to vector<32x128xbf16>
    %cst = arith.constant dense<0.000000e+00> : vector<64x128xf32>
    %6 = tpu.matmul %3, %5, %cst {dimension_numbers = #tpu.dot_dimension_numbers<[1], [0], [0], [1], [0, 0, 1, 1], [], []>} : vector<64x32xbf16>, vector<32x128xbf16>, vector<64x128xf32> -> vector<64x128xf32>
    %7 = vector.shape_cast %6 : vector<64x128xf32> to vector<4x16x128xf32>
    %c0_6 = arith.constant 0 : index
    %c0_7 = arith.constant 0 : index
    %c0_8 = arith.constant 0 : index
    %8 = vector.load %arg6[%c0_6, %c0_7, %c0_8] : memref<1x1x128xf32, #tpu.memory_space<vmem>>, vector<1x1x128xf32>
    %9 = vector.shape_cast %8 : vector<1x1x128xf32> to vector<1x128xf32>
    %10 = vector.shape_cast %9 : vector<1x128xf32> to vector<1x1x128xf32>
    %11 = vector.broadcast %10 : vector<1x1x128xf32> to vector<4x16x128xf32>
    %12 = arith.addf %7, %11 : vector<4x16x128xf32>
    %c0_9 = arith.constant 0 : index
    %c0_10 = arith.constant 0 : index
    %c0_11 = arith.constant 0 : index
    %13 = vector.load %arg8[%c0_9, %c0_10, %c0_11] : memref<4x16x128xf32, #tpu.memory_space<vmem>>, vector<4x16x128xf32>
    tpu.vector_store %arg8[%c0_9, %c0_10, %c0_11], %12 {strides = array<i32>} : memref<4x16x128xf32, #tpu.memory_space<vmem>>, vector<4x16x128xf32>,
    %c0_12 = arith.constant 0 : index
    %c0_13 = arith.constant 0 : index
    %c0_14 = arith.constant 0 : index
    %14 = vector.load %arg5[%c0_12, %c0_13, %c0_14] : memref<1x32x128xbf16, #tpu.memory_space<vmem>>, vector<1x32x128xbf16>
    %15 = vector.shape_cast %14 : vector<1x32x128xbf16> to vector<32x128xbf16>
    %c1_i32 = arith.constant 1 : i32
    %16 = arith.cmpi eq, %arg2, %c1_i32 : i32
    %cst_15 = arith.constant 0.000000e+00 : f32
    %17 = vector.broadcast %cst_15 : f32 to vector<16x32xf32>
    %c0_i32 = arith.constant 0 : i32
    %c3_i32 = arith.constant 3 : i32
    %18 = arith.subi %c3_i32, %c0_i32 : i32
    %19 = arith.select %16, %18, %c0_i32 : i32
    %20 = arith.index_cast %19 : i32 to index
    %c0_16 = arith.constant 0 : index
    %c0_17 = arith.constant 0 : index
    %21 = vector.load %arg8[%20, %c0_16, %c0_17] : memref<4x16x128xf32, #tpu.memory_space<vmem>>, vector<1x16x128xf32>
    %22 = vector.shape_cast %21 : vector<1x16x128xf32> to vector<16x128xf32>
    %23 = arith.truncf %17 : vector<16x32xf32> to vector<16x32xbf16>
    %cst_18 = arith.constant dense<0.000000e+00> : vector<16x128xf32>
    %24 = tpu.matmul %23, %15, %cst_18 {dimension_numbers = #tpu.dot_dimension_numbers<[1], [0], [0], [1], [0, 0, 1, 1], [], []>} : vector<16x32xbf16>, vector<32x128xbf16>, vector<16x128xf32> -> vector<16x128xf32>
    %25 = arith.addf %22, %24 : vector<16x128xf32>
    %26 = vector.extract_strided_slice %25 {offsets = [0, 0], sizes = [16, 32], strides = [1, 1]} : vector<16x128xf32> to vector<16x32xf32>
    %27 = arith.negf %26 : vector<16x32xf32>
    %28 = math.exp %27 : vector<16x32xf32>
    %cst_19 = arith.constant 1.000000e+00 : f32
    %29 = vector.broadcast %cst_19 : f32 to vector<16x32xf32>
    %30 = arith.addf %29, %28 : vector<16x32xf32>
    %31 = arith.divf %29, %30 : vector<16x32xf32>
    %32 = vector.extract_strided_slice %25 {offsets = [0, 32], sizes = [16, 32], strides = [1, 1]} : vector<16x128xf32> to vector<16x32xf32>
    %33 = arith.negf %32 : vector<16x32xf32>
    %34 = math.exp %33 : vector<16x32xf32>
    %cst_20 = arith.constant 1.000000e+00 : f32
    %35 = vector.broadcast %cst_20 : f32 to vector<16x32xf32>
    %36 = arith.addf %35, %34 : vector<16x32xf32>
    %37 = arith.divf %35, %36 : vector<16x32xf32>
    %38 = vector.extract_strided_slice %25 {offsets = [0, 64], sizes = [16, 32], strides = [1, 1]} : vector<16x128xf32> to vector<16x32xf32>
    %39 = math.tanh %38 : vector<16x32xf32>
    %40 = vector.extract_strided_slice %25 {offsets = [0, 96], sizes = [16, 32], strides = [1, 1]} : vector<16x128xf32> to vector<16x32xf32>
    %41 = arith.negf %40 : vector<16x32xf32>
    %42 = math.exp %41 : vector<16x32xf32>
    %cst_21 = arith.constant 1.000000e+00 : f32
    %43 = vector.broadcast %cst_21 : f32 to vector<16x32xf32>
    %44 = arith.addf %43, %42 : vector<16x32xf32>
    %45 = arith.divf %43, %44 : vector<16x32xf32>
    %46 = arith.mulf %37, %17 : vector<16x32xf32>
    %47 = arith.mulf %31, %39 : vector<16x32xf32>
    %48 = arith.addf %46, %47 : vector<16x32xf32>
    %49 = math.tanh %48 : vector<16x32xf32>
    %50 = arith.mulf %45, %49 : vector<16x32xf32>
    %51 = arith.truncf %50 : vector<16x32xf32> to vector<16x32xbf16>
    %c0_22 = arith.constant 0 : index
    %c0_23 = arith.constant 0 : index
    %52 = arith.index_cast %19 : i32 to index
    %c0_24 = arith.constant 0 : index
    %c0_25 = arith.constant 0 : index
    %53 = vector.load %arg7[%c0_22, %c0_23, %52, %c0_24, %c0_25] : memref<1x1x4x16x32xbf16, #tpu.memory_space<vmem>>, vector<1x1x1x16x32xbf16>
    %54 = vector.shape_cast %53 : vector<1x1x1x16x32xbf16> to vector<16x32xbf16>
    %55 = vector.shape_cast %51 : vector<16x32xbf16> to vector<1x1x1x16x32xbf16>
    tpu.vector_store %arg7[%c0_22, %c0_23, %52, %c0_24, %c0_25], %55 {strides = array<i32>} : memref<1x1x4x16x32xbf16, #tpu.memory_space<vmem>>, vector<1x1x1x16x32xbf16>,
    %c1_i32_26 = arith.constant 1 : i32
    %c3_i32_27 = arith.constant 3 : i32
    %56 = arith.subi %c3_i32_27, %c1_i32_26 : i32
    %57 = arith.select %16, %56, %c1_i32_26 : i32
    %58 = arith.index_cast %57 : i32 to index
    %c0_28 = arith.constant 0 : index
    %c0_29 = arith.constant 0 : index
    %59 = vector.load %arg8[%58, %c0_28, %c0_29] : memref<4x16x128xf32, #tpu.memory_space<vmem>>, vector<1x16x128xf32>
    %60 = vector.shape_cast %59 : vector<1x16x128xf32> to vector<16x128xf32>
    %61 = arith.truncf %50 : vector<16x32xf32> to vector<16x32xbf16>
    %cst_30 = arith.constant dense<0.000000e+00> : vector<16x128xf32>
    %62 = tpu.matmul %61, %15, %cst_30 {dimension_numbers = #tpu.dot_dimension_numbers<[1], [0], [0], [1], [0, 0, 1, 1], [], []>} : vector<16x32xbf16>, vector<32x128xbf16>, vector<16x128xf32> -> vector<16x128xf32>
    %63 = arith.addf %60, %62 : vector<16x128xf32>
    %64 = vector.extract_strided_slice %63 {offsets = [0, 0], sizes = [16, 32], strides = [1, 1]} : vector<16x128xf32> to vector<16x32xf32>
    %65 = arith.negf %64 : vector<16x32xf32>
    %66 = math.exp %65 : vector<16x32xf32>
    %cst_31 = arith.constant 1.000000e+00 : f32
    %67 = vector.broadcast %cst_31 : f32 to vector<16x32xf32>
    %68 = arith.addf %67, %66 : vector<16x32xf32>
    %69 = arith.divf %67, %68 : vector<16x32xf32>
    %70 = vector.extract_strided_slice %63 {offsets = [0, 32], sizes = [16, 32], strides = [1, 1]} : vector<16x128xf32> to vector<16x32xf32>
    %71 = arith.negf %70 : vector<16x32xf32>
    %72 = math.exp %71 : vector<16x32xf32>
    %cst_32 = arith.constant 1.000000e+00 : f32
    %73 = vector.broadcast %cst_32 : f32 to vector<16x32xf32>
    %74 = arith.addf %73, %72 : vector<16x32xf32>
    %75 = arith.divf %73, %74 : vector<16x32xf32>
    %76 = vector.extract_strided_slice %63 {offsets = [0, 64], sizes = [16, 32], strides = [1, 1]} : vector<16x128xf32> to vector<16x32xf32>
    %77 = math.tanh %76 : vector<16x32xf32>
    %78 = vector.extract_strided_slice %63 {offsets = [0, 96], sizes = [16, 32], strides = [1, 1]} : vector<16x128xf32> to vector<16x32xf32>
    %79 = arith.negf %78 : vector<16x32xf32>
    %80 = math.exp %79 : vector<16x32xf32>
    %cst_33 = arith.constant 1.000000e+00 : f32
    %81 = vector.broadcast %cst_33 : f32 to vector<16x32xf32>
    %82 = arith.addf %81, %80 : vector<16x32xf32>
    %83 = arith.divf %81, %82 : vector<16x32xf32>
    %84 = arith.mulf %75, %48 : vector<16x32xf32>
    %85 = arith.mulf %69, %77 : vector<16x32xf32>
    %86 = arith.addf %84, %85 : vector<16x32xf32>
    %87 = math.tanh %86 : vector<16x32xf32>
    %88 = arith.mulf %83, %87 : vector<16x32xf32>
    %89 = arith.truncf %88 : vector<16x32xf32> to vector<16x32xbf16>
    %c0_34 = arith.constant 0 : index
    %c0_35 = arith.constant 0 : index
    %90 = arith.index_cast %57 : i32 to index
    %c0_36 = arith.constant 0 : index
    %c0_37 = arith.constant 0 : index
    %91 = vector.load %arg7[%c0_34, %c0_35, %90, %c0_36, %c0_37] : memref<1x1x4x16x32xbf16, #tpu.memory_space<vmem>>, vector<1x1x1x16x32xbf16>
    %92 = vector.shape_cast %91 : vector<1x1x1x16x32xbf16> to vector<16x32xbf16>
    %93 = vector.shape_cast %89 : vector<16x32xbf16> to vector<1x1x1x16x32xbf16>
    tpu.vector_store %arg7[%c0_34, %c0_35, %90, %c0_36, %c0_37], %93 {strides = array<i32>} : memref<1x1x4x16x32xbf16, #tpu.memory_space<vmem>>, vector<1x1x1x16x32xbf16>,
    %c2_i32 = arith.constant 2 : i32
    %c3_i32_38 = arith.constant 3 : i32
    %94 = arith.subi %c3_i32_38, %c2_i32 : i32
    %95 = arith.select %16, %94, %c2_i32 : i32
    %96 = arith.index_cast %95 : i32 to index
    %c0_39 = arith.constant 0 : index
    %c0_40 = arith.constant 0 : index
    %97 = vector.load %arg8[%96, %c0_39, %c0_40] : memref<4x16x128xf32, #tpu.memory_space<vmem>>, vector<1x16x128xf32>
    %98 = vector.shape_cast %97 : vector<1x16x128xf32> to vector<16x128xf32>
    %99 = arith.truncf %88 : vector<16x32xf32> to vector<16x32xbf16>
    %cst_41 = arith.constant dense<0.000000e+00> : vector<16x128xf32>
    %100 = tpu.matmul %99, %15, %cst_41 {dimension_numbers = #tpu.dot_dimension_numbers<[1], [0], [0], [1], [0, 0, 1, 1], [], []>} : vector<16x32xbf16>, vector<32x128xbf16>, vector<16x128xf32> -> vector<16x128xf32>
    %101 = arith.addf %98, %100 : vector<16x128xf32>
    %102 = vector.extract_strided_slice %101 {offsets = [0, 0], sizes = [16, 32], strides = [1, 1]} : vector<16x128xf32> to vector<16x32xf32>
    %103 = arith.negf %102 : vector<16x32xf32>
    %104 = math.exp %103 : vector<16x32xf32>
    %cst_42 = arith.constant 1.000000e+00 : f32
    %105 = vector.broadcast %cst_42 : f32 to vector<16x32xf32>
    %106 = arith.addf %105, %104 : vector<16x32xf32>
    %107 = arith.divf %105, %106 : vector<16x32xf32>
    %108 = vector.extract_strided_slice %101 {offsets = [0, 32], sizes = [16, 32], strides = [1, 1]} : vector<16x128xf32> to vector<16x32xf32>
    %109 = arith.negf %108 : vector<16x32xf32>
    %110 = math.exp %109 : vector<16x32xf32>
    %cst_43 = arith.constant 1.000000e+00 : f32
    %111 = vector.broadcast %cst_43 : f32 to vector<16x32xf32>
    %112 = arith.addf %111, %110 : vector<16x32xf32>
    %113 = arith.divf %111, %112 : vector<16x32xf32>
    %114 = vector.extract_strided_slice %101 {offsets = [0, 64], sizes = [16, 32], strides = [1, 1]} : vector<16x128xf32> to vector<16x32xf32>
    %115 = math.tanh %114 : vector<16x32xf32>
    %116 = vector.extract_strided_slice %101 {offsets = [0, 96], sizes = [16, 32], strides = [1, 1]} : vector<16x128xf32> to vector<16x32xf32>
    %117 = arith.negf %116 : vector<16x32xf32>
    %118 = math.exp %117 : vector<16x32xf32>
    %cst_44 = arith.constant 1.000000e+00 : f32
    %119 = vector.broadcast %cst_44 : f32 to vector<16x32xf32>
    %120 = arith.addf %119, %118 : vector<16x32xf32>
    %121 = arith.divf %119, %120 : vector<16x32xf32>
    %122 = arith.mulf %113, %86 : vector<16x32xf32>
    %123 = arith.mulf %107, %115 : vector<16x32xf32>
    %124 = arith.addf %122, %123 : vector<16x32xf32>
    %125 = math.tanh %124 : vector<16x32xf32>
    %126 = arith.mulf %121, %125 : vector<16x32xf32>
    %127 = arith.truncf %126 : vector<16x32xf32> to vector<16x32xbf16>
    %c0_45 = arith.constant 0 : index
    %c0_46 = arith.constant 0 : index
    %128 = arith.index_cast %95 : i32 to index
    %c0_47 = arith.constant 0 : index
    %c0_48 = arith.constant 0 : index
    %129 = vector.load %arg7[%c0_45, %c0_46, %128, %c0_47, %c0_48] : memref<1x1x4x16x32xbf16, #tpu.memory_space<vmem>>, vector<1x1x1x16x32xbf16>
    %130 = vector.shape_cast %129 : vector<1x1x1x16x32xbf16> to vector<16x32xbf16>
    %131 = vector.shape_cast %127 : vector<16x32xbf16> to vector<1x1x1x16x32xbf16>
    tpu.vector_store %arg7[%c0_45, %c0_46, %128, %c0_47, %c0_48], %131 {strides = array<i32>} : memref<1x1x4x16x32xbf16, #tpu.memory_space<vmem>>, vector<1x1x1x16x32xbf16>,
    %c3_i32_49 = arith.constant 3 : i32
    %c3_i32_50 = arith.constant 3 : i32
    %132 = arith.subi %c3_i32_50, %c3_i32_49 : i32
    %133 = arith.select %16, %132, %c3_i32_49 : i32
    %134 = arith.index_cast %133 : i32 to index
    %c0_51 = arith.constant 0 : index
    %c0_52 = arith.constant 0 : index
    %135 = vector.load %arg8[%134, %c0_51, %c0_52] : memref<4x16x128xf32, #tpu.memory_space<vmem>>, vector<1x16x128xf32>
    %136 = vector.shape_cast %135 : vector<1x16x128xf32> to vector<16x128xf32>
    %137 = arith.truncf %126 : vector<16x32xf32> to vector<16x32xbf16>
    %cst_53 = arith.constant dense<0.000000e+00> : vector<16x128xf32>
    %138 = tpu.matmul %137, %15, %cst_53 {dimension_numbers = #tpu.dot_dimension_numbers<[1], [0], [0], [1], [0, 0, 1, 1], [], []>} : vector<16x32xbf16>, vector<32x128xbf16>, vector<16x128xf32> -> vector<16x128xf32>
    %139 = arith.addf %136, %138 : vector<16x128xf32>
    %140 = vector.extract_strided_slice %139 {offsets = [0, 0], sizes = [16, 32], strides = [1, 1]} : vector<16x128xf32> to vector<16x32xf32>
    %141 = arith.negf %140 : vector<16x32xf32>
    %142 = math.exp %141 : vector<16x32xf32>
    %cst_54 = arith.constant 1.000000e+00 : f32
    %143 = vector.broadcast %cst_54 : f32 to vector<16x32xf32>
    %144 = arith.addf %143, %142 : vector<16x32xf32>
    %145 = arith.divf %143, %144 : vector<16x32xf32>
    %146 = vector.extract_strided_slice %139 {offsets = [0, 32], sizes = [16, 32], strides = [1, 1]} : vector<16x128xf32> to vector<16x32xf32>
    %147 = arith.negf %146 : vector<16x32xf32>
    %148 = math.exp %147 : vector<16x32xf32>
    %cst_55 = arith.constant 1.000000e+00 : f32
    %149 = vector.broadcast %cst_55 : f32 to vector<16x32xf32>
    %150 = arith.addf %149, %148 : vector<16x32xf32>
    %151 = arith.divf %149, %150 : vector<16x32xf32>
    %152 = vector.extract_strided_slice %139 {offsets = [0, 64], sizes = [16, 32], strides = [1, 1]} : vector<16x128xf32> to vector<16x32xf32>
    %153 = math.tanh %152 : vector<16x32xf32>
    %154 = vector.extract_strided_slice %139 {offsets = [0, 96], sizes = [16, 32], strides = [1, 1]} : vector<16x128xf32> to vector<16x32xf32>
    %155 = arith.negf %154 : vector<16x32xf32>
    %156 = math.exp %155 : vector<16x32xf32>
    %cst_56 = arith.constant 1.000000e+00 : f32
    %157 = vector.broadcast %cst_56 : f32 to vector<16x32xf32>
    %158 = arith.addf %157, %156 : vector<16x32xf32>
    %159 = arith.divf %157, %158 : vector<16x32xf32>
    %160 = arith.mulf %151, %124 : vector<16x32xf32>
    %161 = arith.mulf %145, %153 : vector<16x32xf32>
    %162 = arith.addf %160, %161 : vector<16x32xf32>
    %163 = math.tanh %162 : vector<16x32xf32>
    %164 = arith.mulf %159, %163 : vector<16x32xf32>
    %165 = arith.truncf %164 : vector<16x32xf32> to vector<16x32xbf16>
    %c0_57 = arith.constant 0 : index
    %c0_58 = arith.constant 0 : index
    %166 = arith.index_cast %133 : i32 to index
    %c0_59 = arith.constant 0 : index
    %c0_60 = arith.constant 0 : index
    %167 = vector.load %arg7[%c0_57, %c0_58, %166, %c0_59, %c0_60] : memref<1x1x4x16x32xbf16, #tpu.memory_space<vmem>>, vector<1x1x1x16x32xbf16>
    %168 = vector.shape_cast %167 : vector<1x1x1x16x32xbf16> to vector<16x32xbf16>
    %169 = vector.shape_cast %165 : vector<16x32xbf16> to vector<1x1x1x16x32xbf16>
    tpu.vector_store %arg7[%c0_57, %c0_58, %166, %c0_59, %c0_60], %169 {strides = array<i32>} : memref<1x1x4x16x32xbf16, #tpu.memory_space<vmem>>, vector<1x1x1x16x32xbf16>,
    %c4_i32 = arith.constant 4 : i32
    return
  }
  func.func @transform_0(%arg0: i32, %arg1: i32, %arg2: i32) -> (i32, i32, i32, i32) {
    %c0_i32 = arith.constant 0 : i32
    %c0_i32_0 = arith.constant 0 : i32
    %c0_i32_1 = arith.constant 0 : i32
    return %arg0, %c0_i32, %arg1, %c0_i32_0 : i32, i32, i32, i32
  }
  func.func @transform_1(%arg0: i32, %arg1: i32, %arg2: i32) -> (i32, i32, i32) {
    %c0_i32 = arith.constant 0 : i32
    %c0_i32_0 = arith.constant 0 : i32
    %c0_i32_1 = arith.constant 0 : i32
    return %arg2, %c0_i32, %c0_i32_0 : i32, i32, i32
  }
  func.func @transform_2(%arg0: i32, %arg1: i32, %arg2: i32) -> (i32, i32, i32) {
    %c0_i32 = arith.constant 0 : i32
    %c0_i32_0 = arith.constant 0 : i32
    %c0_i32_1 = arith.constant 0 : i32
    return %arg2, %c0_i32, %c0_i32_0 : i32, i32, i32
  }
  func.func @transform_3(%arg0: i32, %arg1: i32, %arg2: i32) -> (i32, i32, i32) {
    %c0_i32 = arith.constant 0 : i32
    %c0_i32_0 = arith.constant 0 : i32
    %c0_i32_1 = arith.constant 0 : i32
    return %arg2, %c0_i32, %c0_i32_0 : i32, i32, i32
  }
  func.func @transform_4(%arg0: i32, %arg1: i32, %arg2: i32) -> (i32, i32, i32, i32, i32) {
    %c0_i32 = arith.constant 0 : i32
    %c0_i32_0 = arith.constant 0 : i32
    %c0_i32_1 = arith.constant 0 : i32
    return %arg2, %arg0, %c0_i32, %arg1, %c0_i32_0 : i32, i32, i32, i32, i32
  }
}

module attributes {stable_mosaic.version = 11 : i64} {
  func.func @_lstm_kernel(%arg0: i32, %arg1: memref<16x16x32xf32, #tpu.memory_space<vmem>>, %arg2: memref<32x128xbf16, #tpu.memory_space<vmem>>, %arg3: memref<32x128xbf16, #tpu.memory_space<vmem>>, %arg4: memref<1x128xf32, #tpu.memory_space<vmem>>, %arg5: memref<16x16x32xbf16, #tpu.memory_space<vmem>>, %arg6: memref<16x16x128xf32, #tpu.memory_space<vmem>>) attributes {dimension_semantics = [#tpu.dimension_semantics<parallel>], iteration_bounds = array<i64: 1>, scalar_prefetch = 0 : i64, scratch_operands = 1 : i64, tpu.core_type = #tpu.core_type<tc>, window_params = [{transform_indices = @transform_0, window_bounds = array<i64: 16, 16, 32>}, {pipeline_mode = #tpu.pipeline_mode<synchronous>, transform_indices = @transform_1, window_bounds = array<i64: 32, 128>}, {pipeline_mode = #tpu.pipeline_mode<synchronous>, transform_indices = @transform_2, window_bounds = array<i64: 32, 128>}, {pipeline_mode = #tpu.pipeline_mode<synchronous>, transform_indices = @transform_3, window_bounds = array<i64: 1, 128>}, {transform_indices = @transform_4, window_bounds = array<i64: 16, 16, 32>}]} {
    %c0 = arith.constant 0 : index
    %c0_0 = arith.constant 0 : index
    %c0_1 = arith.constant 0 : index
    %0 = vector.load %arg1[%c0, %c0_0, %c0_1] : memref<16x16x32xf32, #tpu.memory_space<vmem>>, vector<16x16x32xf32>
    %1 = vector.shape_cast %0 : vector<16x16x32xf32> to vector<256x32xf32>
    %2 = arith.truncf %1 : vector<256x32xf32> to vector<256x32xbf16>
    %c0_2 = arith.constant 0 : index
    %c0_3 = arith.constant 0 : index
    %3 = vector.load %arg2[%c0_2, %c0_3] : memref<32x128xbf16, #tpu.memory_space<vmem>>, vector<32x128xbf16>
    %cst = arith.constant dense<0.000000e+00> : vector<256x128xf32>
    %4 = tpu.matmul %2, %3, %cst {dimension_numbers = #tpu.dot_dimension_numbers<[1], [0], [0], [1], [0, 0, 1, 1], [], []>} : vector<256x32xbf16>, vector<32x128xbf16>, vector<256x128xf32> -> vector<256x128xf32>
    %5 = vector.shape_cast %4 : vector<256x128xf32> to vector<16x16x128xf32>
    %c0_4 = arith.constant 0 : index
    %c0_5 = arith.constant 0 : index
    %6 = vector.load %arg4[%c0_4, %c0_5] : memref<1x128xf32, #tpu.memory_space<vmem>>, vector<1x128xf32>
    %7 = vector.shape_cast %6 : vector<1x128xf32> to vector<1x1x128xf32>
    %8 = vector.broadcast %7 : vector<1x1x128xf32> to vector<16x16x128xf32>
    %9 = arith.addf %5, %8 : vector<16x16x128xf32>
    %c0_6 = arith.constant 0 : index
    %c0_7 = arith.constant 0 : index
    %c0_8 = arith.constant 0 : index
    %10 = vector.load %arg6[%c0_6, %c0_7, %c0_8] : memref<16x16x128xf32, #tpu.memory_space<vmem>>, vector<16x16x128xf32>
    tpu.vector_store %arg6[%c0_6, %c0_7, %c0_8], %9 {strides = array<i32>} : memref<16x16x128xf32, #tpu.memory_space<vmem>>, vector<16x16x128xf32>,
    %c0_9 = arith.constant 0 : index
    %c0_10 = arith.constant 0 : index
    %11 = vector.load %arg3[%c0_9, %c0_10] : memref<32x128xbf16, #tpu.memory_space<vmem>>, vector<32x128xbf16>
    %cst_11 = arith.constant 0.000000e+00 : f32
    %12 = vector.broadcast %cst_11 : f32 to vector<16x32xf32>
    %c0_i32 = arith.constant 0 : i32
    %13 = arith.index_cast %c0_i32 : i32 to index
    %c0_12 = arith.constant 0 : index
    %c0_13 = arith.constant 0 : index
    %14 = vector.load %arg6[%13, %c0_12, %c0_13] : memref<16x16x128xf32, #tpu.memory_space<vmem>>, vector<1x16x128xf32>
    %15 = vector.shape_cast %14 : vector<1x16x128xf32> to vector<16x128xf32>
    %16 = arith.truncf %12 : vector<16x32xf32> to vector<16x32xbf16>
    %cst_14 = arith.constant dense<0.000000e+00> : vector<16x128xf32>
    %17 = tpu.matmul %16, %11, %cst_14 {dimension_numbers = #tpu.dot_dimension_numbers<[1], [0], [0], [1], [0, 0, 1, 1], [], []>} : vector<16x32xbf16>, vector<32x128xbf16>, vector<16x128xf32> -> vector<16x128xf32>
    %18 = arith.addf %15, %17 : vector<16x128xf32>
    %19 = vector.extract_strided_slice %18 {offsets = [0, 0], sizes = [16, 32], strides = [1, 1]} : vector<16x128xf32> to vector<16x32xf32>
    %20 = arith.negf %19 : vector<16x32xf32>
    %21 = math.exp %20 : vector<16x32xf32>
    %cst_15 = arith.constant 1.000000e+00 : f32
    %22 = vector.broadcast %cst_15 : f32 to vector<16x32xf32>
    %23 = arith.addf %22, %21 : vector<16x32xf32>
    %24 = arith.divf %22, %23 : vector<16x32xf32>
    %25 = vector.extract_strided_slice %18 {offsets = [0, 32], sizes = [16, 32], strides = [1, 1]} : vector<16x128xf32> to vector<16x32xf32>
    %26 = arith.negf %25 : vector<16x32xf32>
    %27 = math.exp %26 : vector<16x32xf32>
    %cst_16 = arith.constant 1.000000e+00 : f32
    %28 = vector.broadcast %cst_16 : f32 to vector<16x32xf32>
    %29 = arith.addf %28, %27 : vector<16x32xf32>
    %30 = arith.divf %28, %29 : vector<16x32xf32>
    %31 = vector.extract_strided_slice %18 {offsets = [0, 64], sizes = [16, 32], strides = [1, 1]} : vector<16x128xf32> to vector<16x32xf32>
    %32 = math.tanh %31 : vector<16x32xf32>
    %33 = vector.extract_strided_slice %18 {offsets = [0, 96], sizes = [16, 32], strides = [1, 1]} : vector<16x128xf32> to vector<16x32xf32>
    %34 = arith.negf %33 : vector<16x32xf32>
    %35 = math.exp %34 : vector<16x32xf32>
    %cst_17 = arith.constant 1.000000e+00 : f32
    %36 = vector.broadcast %cst_17 : f32 to vector<16x32xf32>
    %37 = arith.addf %36, %35 : vector<16x32xf32>
    %38 = arith.divf %36, %37 : vector<16x32xf32>
    %39 = arith.mulf %30, %12 : vector<16x32xf32>
    %40 = arith.mulf %24, %32 : vector<16x32xf32>
    %41 = arith.addf %39, %40 : vector<16x32xf32>
    %42 = math.tanh %41 : vector<16x32xf32>
    %43 = arith.mulf %38, %42 : vector<16x32xf32>
    %44 = arith.truncf %43 : vector<16x32xf32> to vector<16x32xbf16>
    %45 = arith.index_cast %c0_i32 : i32 to index
    %c0_18 = arith.constant 0 : index
    %c0_19 = arith.constant 0 : index
    %46 = vector.load %arg5[%45, %c0_18, %c0_19] : memref<16x16x32xbf16, #tpu.memory_space<vmem>>, vector<1x16x32xbf16>
    %47 = vector.shape_cast %46 : vector<1x16x32xbf16> to vector<16x32xbf16>
    %48 = vector.shape_cast %44 : vector<16x32xbf16> to vector<1x16x32xbf16>
    tpu.vector_store %arg5[%45, %c0_18, %c0_19], %48 {strides = array<i32>} : memref<16x16x32xbf16, #tpu.memory_space<vmem>>, vector<1x16x32xbf16>,
    %c1_i32 = arith.constant 1 : i32
    %49 = arith.index_cast %c1_i32 : i32 to index
    %c0_20 = arith.constant 0 : index
    %c0_21 = arith.constant 0 : index
    %50 = vector.load %arg6[%49, %c0_20, %c0_21] : memref<16x16x128xf32, #tpu.memory_space<vmem>>, vector<1x16x128xf32>
    %51 = vector.shape_cast %50 : vector<1x16x128xf32> to vector<16x128xf32>
    %52 = arith.truncf %43 : vector<16x32xf32> to vector<16x32xbf16>
    %cst_22 = arith.constant dense<0.000000e+00> : vector<16x128xf32>
    %53 = tpu.matmul %52, %11, %cst_22 {dimension_numbers = #tpu.dot_dimension_numbers<[1], [0], [0], [1], [0, 0, 1, 1], [], []>} : vector<16x32xbf16>, vector<32x128xbf16>, vector<16x128xf32> -> vector<16x128xf32>
    %54 = arith.addf %51, %53 : vector<16x128xf32>
    %55 = vector.extract_strided_slice %54 {offsets = [0, 0], sizes = [16, 32], strides = [1, 1]} : vector<16x128xf32> to vector<16x32xf32>
    %56 = arith.negf %55 : vector<16x32xf32>
    %57 = math.exp %56 : vector<16x32xf32>
    %cst_23 = arith.constant 1.000000e+00 : f32
    %58 = vector.broadcast %cst_23 : f32 to vector<16x32xf32>
    %59 = arith.addf %58, %57 : vector<16x32xf32>
    %60 = arith.divf %58, %59 : vector<16x32xf32>
    %61 = vector.extract_strided_slice %54 {offsets = [0, 32], sizes = [16, 32], strides = [1, 1]} : vector<16x128xf32> to vector<16x32xf32>
    %62 = arith.negf %61 : vector<16x32xf32>
    %63 = math.exp %62 : vector<16x32xf32>
    %cst_24 = arith.constant 1.000000e+00 : f32
    %64 = vector.broadcast %cst_24 : f32 to vector<16x32xf32>
    %65 = arith.addf %64, %63 : vector<16x32xf32>
    %66 = arith.divf %64, %65 : vector<16x32xf32>
    %67 = vector.extract_strided_slice %54 {offsets = [0, 64], sizes = [16, 32], strides = [1, 1]} : vector<16x128xf32> to vector<16x32xf32>
    %68 = math.tanh %67 : vector<16x32xf32>
    %69 = vector.extract_strided_slice %54 {offsets = [0, 96], sizes = [16, 32], strides = [1, 1]} : vector<16x128xf32> to vector<16x32xf32>
    %70 = arith.negf %69 : vector<16x32xf32>
    %71 = math.exp %70 : vector<16x32xf32>
    %cst_25 = arith.constant 1.000000e+00 : f32
    %72 = vector.broadcast %cst_25 : f32 to vector<16x32xf32>
    %73 = arith.addf %72, %71 : vector<16x32xf32>
    %74 = arith.divf %72, %73 : vector<16x32xf32>
    %75 = arith.mulf %66, %41 : vector<16x32xf32>
    %76 = arith.mulf %60, %68 : vector<16x32xf32>
    %77 = arith.addf %75, %76 : vector<16x32xf32>
    %78 = math.tanh %77 : vector<16x32xf32>
    %79 = arith.mulf %74, %78 : vector<16x32xf32>
    %80 = arith.truncf %79 : vector<16x32xf32> to vector<16x32xbf16>
    %81 = arith.index_cast %c1_i32 : i32 to index
    %c0_26 = arith.constant 0 : index
    %c0_27 = arith.constant 0 : index
    %82 = vector.load %arg5[%81, %c0_26, %c0_27] : memref<16x16x32xbf16, #tpu.memory_space<vmem>>, vector<1x16x32xbf16>
    %83 = vector.shape_cast %82 : vector<1x16x32xbf16> to vector<16x32xbf16>
    %84 = vector.shape_cast %80 : vector<16x32xbf16> to vector<1x16x32xbf16>
    tpu.vector_store %arg5[%81, %c0_26, %c0_27], %84 {strides = array<i32>} : memref<16x16x32xbf16, #tpu.memory_space<vmem>>, vector<1x16x32xbf16>,
    %c2_i32 = arith.constant 2 : i32
    %85 = arith.index_cast %c2_i32 : i32 to index
    %c0_28 = arith.constant 0 : index
    %c0_29 = arith.constant 0 : index
    %86 = vector.load %arg6[%85, %c0_28, %c0_29] : memref<16x16x128xf32, #tpu.memory_space<vmem>>, vector<1x16x128xf32>
    %87 = vector.shape_cast %86 : vector<1x16x128xf32> to vector<16x128xf32>
    %88 = arith.truncf %79 : vector<16x32xf32> to vector<16x32xbf16>
    %cst_30 = arith.constant dense<0.000000e+00> : vector<16x128xf32>
    %89 = tpu.matmul %88, %11, %cst_30 {dimension_numbers = #tpu.dot_dimension_numbers<[1], [0], [0], [1], [0, 0, 1, 1], [], []>} : vector<16x32xbf16>, vector<32x128xbf16>, vector<16x128xf32> -> vector<16x128xf32>
    %90 = arith.addf %87, %89 : vector<16x128xf32>
    %91 = vector.extract_strided_slice %90 {offsets = [0, 0], sizes = [16, 32], strides = [1, 1]} : vector<16x128xf32> to vector<16x32xf32>
    %92 = arith.negf %91 : vector<16x32xf32>
    %93 = math.exp %92 : vector<16x32xf32>
    %cst_31 = arith.constant 1.000000e+00 : f32
    %94 = vector.broadcast %cst_31 : f32 to vector<16x32xf32>
    %95 = arith.addf %94, %93 : vector<16x32xf32>
    %96 = arith.divf %94, %95 : vector<16x32xf32>
    %97 = vector.extract_strided_slice %90 {offsets = [0, 32], sizes = [16, 32], strides = [1, 1]} : vector<16x128xf32> to vector<16x32xf32>
    %98 = arith.negf %97 : vector<16x32xf32>
    %99 = math.exp %98 : vector<16x32xf32>
    %cst_32 = arith.constant 1.000000e+00 : f32
    %100 = vector.broadcast %cst_32 : f32 to vector<16x32xf32>
    %101 = arith.addf %100, %99 : vector<16x32xf32>
    %102 = arith.divf %100, %101 : vector<16x32xf32>
    %103 = vector.extract_strided_slice %90 {offsets = [0, 64], sizes = [16, 32], strides = [1, 1]} : vector<16x128xf32> to vector<16x32xf32>
    %104 = math.tanh %103 : vector<16x32xf32>
    %105 = vector.extract_strided_slice %90 {offsets = [0, 96], sizes = [16, 32], strides = [1, 1]} : vector<16x128xf32> to vector<16x32xf32>
    %106 = arith.negf %105 : vector<16x32xf32>
    %107 = math.exp %106 : vector<16x32xf32>
    %cst_33 = arith.constant 1.000000e+00 : f32
    %108 = vector.broadcast %cst_33 : f32 to vector<16x32xf32>
    %109 = arith.addf %108, %107 : vector<16x32xf32>
    %110 = arith.divf %108, %109 : vector<16x32xf32>
    %111 = arith.mulf %102, %77 : vector<16x32xf32>
    %112 = arith.mulf %96, %104 : vector<16x32xf32>
    %113 = arith.addf %111, %112 : vector<16x32xf32>
    %114 = math.tanh %113 : vector<16x32xf32>
    %115 = arith.mulf %110, %114 : vector<16x32xf32>
    %116 = arith.truncf %115 : vector<16x32xf32> to vector<16x32xbf16>
    %117 = arith.index_cast %c2_i32 : i32 to index
    %c0_34 = arith.constant 0 : index
    %c0_35 = arith.constant 0 : index
    %118 = vector.load %arg5[%117, %c0_34, %c0_35] : memref<16x16x32xbf16, #tpu.memory_space<vmem>>, vector<1x16x32xbf16>
    %119 = vector.shape_cast %118 : vector<1x16x32xbf16> to vector<16x32xbf16>
    %120 = vector.shape_cast %116 : vector<16x32xbf16> to vector<1x16x32xbf16>
    tpu.vector_store %arg5[%117, %c0_34, %c0_35], %120 {strides = array<i32>} : memref<16x16x32xbf16, #tpu.memory_space<vmem>>, vector<1x16x32xbf16>,
    %c3_i32 = arith.constant 3 : i32
    %121 = arith.index_cast %c3_i32 : i32 to index
    %c0_36 = arith.constant 0 : index
    %c0_37 = arith.constant 0 : index
    %122 = vector.load %arg6[%121, %c0_36, %c0_37] : memref<16x16x128xf32, #tpu.memory_space<vmem>>, vector<1x16x128xf32>
    %123 = vector.shape_cast %122 : vector<1x16x128xf32> to vector<16x128xf32>
    %124 = arith.truncf %115 : vector<16x32xf32> to vector<16x32xbf16>
    %cst_38 = arith.constant dense<0.000000e+00> : vector<16x128xf32>
    %125 = tpu.matmul %124, %11, %cst_38 {dimension_numbers = #tpu.dot_dimension_numbers<[1], [0], [0], [1], [0, 0, 1, 1], [], []>} : vector<16x32xbf16>, vector<32x128xbf16>, vector<16x128xf32> -> vector<16x128xf32>
    %126 = arith.addf %123, %125 : vector<16x128xf32>
    %127 = vector.extract_strided_slice %126 {offsets = [0, 0], sizes = [16, 32], strides = [1, 1]} : vector<16x128xf32> to vector<16x32xf32>
    %128 = arith.negf %127 : vector<16x32xf32>
    %129 = math.exp %128 : vector<16x32xf32>
    %cst_39 = arith.constant 1.000000e+00 : f32
    %130 = vector.broadcast %cst_39 : f32 to vector<16x32xf32>
    %131 = arith.addf %130, %129 : vector<16x32xf32>
    %132 = arith.divf %130, %131 : vector<16x32xf32>
    %133 = vector.extract_strided_slice %126 {offsets = [0, 32], sizes = [16, 32], strides = [1, 1]} : vector<16x128xf32> to vector<16x32xf32>
    %134 = arith.negf %133 : vector<16x32xf32>
    %135 = math.exp %134 : vector<16x32xf32>
    %cst_40 = arith.constant 1.000000e+00 : f32
    %136 = vector.broadcast %cst_40 : f32 to vector<16x32xf32>
    %137 = arith.addf %136, %135 : vector<16x32xf32>
    %138 = arith.divf %136, %137 : vector<16x32xf32>
    %139 = vector.extract_strided_slice %126 {offsets = [0, 64], sizes = [16, 32], strides = [1, 1]} : vector<16x128xf32> to vector<16x32xf32>
    %140 = math.tanh %139 : vector<16x32xf32>
    %141 = vector.extract_strided_slice %126 {offsets = [0, 96], sizes = [16, 32], strides = [1, 1]} : vector<16x128xf32> to vector<16x32xf32>
    %142 = arith.negf %141 : vector<16x32xf32>
    %143 = math.exp %142 : vector<16x32xf32>
    %cst_41 = arith.constant 1.000000e+00 : f32
    %144 = vector.broadcast %cst_41 : f32 to vector<16x32xf32>
    %145 = arith.addf %144, %143 : vector<16x32xf32>
    %146 = arith.divf %144, %145 : vector<16x32xf32>
    %147 = arith.mulf %138, %113 : vector<16x32xf32>
    %148 = arith.mulf %132, %140 : vector<16x32xf32>
    %149 = arith.addf %147, %148 : vector<16x32xf32>
    %150 = math.tanh %149 : vector<16x32xf32>
    %151 = arith.mulf %146, %150 : vector<16x32xf32>
    %152 = arith.truncf %151 : vector<16x32xf32> to vector<16x32xbf16>
    %153 = arith.index_cast %c3_i32 : i32 to index
    %c0_42 = arith.constant 0 : index
    %c0_43 = arith.constant 0 : index
    %154 = vector.load %arg5[%153, %c0_42, %c0_43] : memref<16x16x32xbf16, #tpu.memory_space<vmem>>, vector<1x16x32xbf16>
    %155 = vector.shape_cast %154 : vector<1x16x32xbf16> to vector<16x32xbf16>
    %156 = vector.shape_cast %152 : vector<16x32xbf16> to vector<1x16x32xbf16>
    tpu.vector_store %arg5[%153, %c0_42, %c0_43], %156 {strides = array<i32>} : memref<16x16x32xbf16, #tpu.memory_space<vmem>>, vector<1x16x32xbf16>,
    %c4_i32 = arith.constant 4 : i32
    %157 = arith.index_cast %c4_i32 : i32 to index
    %c0_44 = arith.constant 0 : index
    %c0_45 = arith.constant 0 : index
    %158 = vector.load %arg6[%157, %c0_44, %c0_45] : memref<16x16x128xf32, #tpu.memory_space<vmem>>, vector<1x16x128xf32>
    %159 = vector.shape_cast %158 : vector<1x16x128xf32> to vector<16x128xf32>
    %160 = arith.truncf %151 : vector<16x32xf32> to vector<16x32xbf16>
    %cst_46 = arith.constant dense<0.000000e+00> : vector<16x128xf32>
    %161 = tpu.matmul %160, %11, %cst_46 {dimension_numbers = #tpu.dot_dimension_numbers<[1], [0], [0], [1], [0, 0, 1, 1], [], []>} : vector<16x32xbf16>, vector<32x128xbf16>, vector<16x128xf32> -> vector<16x128xf32>
    %162 = arith.addf %159, %161 : vector<16x128xf32>
    %163 = vector.extract_strided_slice %162 {offsets = [0, 0], sizes = [16, 32], strides = [1, 1]} : vector<16x128xf32> to vector<16x32xf32>
    %164 = arith.negf %163 : vector<16x32xf32>
    %165 = math.exp %164 : vector<16x32xf32>
    %cst_47 = arith.constant 1.000000e+00 : f32
    %166 = vector.broadcast %cst_47 : f32 to vector<16x32xf32>
    %167 = arith.addf %166, %165 : vector<16x32xf32>
    %168 = arith.divf %166, %167 : vector<16x32xf32>
    %169 = vector.extract_strided_slice %162 {offsets = [0, 32], sizes = [16, 32], strides = [1, 1]} : vector<16x128xf32> to vector<16x32xf32>
    %170 = arith.negf %169 : vector<16x32xf32>
    %171 = math.exp %170 : vector<16x32xf32>
    %cst_48 = arith.constant 1.000000e+00 : f32
    %172 = vector.broadcast %cst_48 : f32 to vector<16x32xf32>
    %173 = arith.addf %172, %171 : vector<16x32xf32>
    %174 = arith.divf %172, %173 : vector<16x32xf32>
    %175 = vector.extract_strided_slice %162 {offsets = [0, 64], sizes = [16, 32], strides = [1, 1]} : vector<16x128xf32> to vector<16x32xf32>
    %176 = math.tanh %175 : vector<16x32xf32>
    %177 = vector.extract_strided_slice %162 {offsets = [0, 96], sizes = [16, 32], strides = [1, 1]} : vector<16x128xf32> to vector<16x32xf32>
    %178 = arith.negf %177 : vector<16x32xf32>
    %179 = math.exp %178 : vector<16x32xf32>
    %cst_49 = arith.constant 1.000000e+00 : f32
    %180 = vector.broadcast %cst_49 : f32 to vector<16x32xf32>
    %181 = arith.addf %180, %179 : vector<16x32xf32>
    %182 = arith.divf %180, %181 : vector<16x32xf32>
    %183 = arith.mulf %174, %149 : vector<16x32xf32>
    %184 = arith.mulf %168, %176 : vector<16x32xf32>
    %185 = arith.addf %183, %184 : vector<16x32xf32>
    %186 = math.tanh %185 : vector<16x32xf32>
    %187 = arith.mulf %182, %186 : vector<16x32xf32>
    %188 = arith.truncf %187 : vector<16x32xf32> to vector<16x32xbf16>
    %189 = arith.index_cast %c4_i32 : i32 to index
    %c0_50 = arith.constant 0 : index
    %c0_51 = arith.constant 0 : index
    %190 = vector.load %arg5[%189, %c0_50, %c0_51] : memref<16x16x32xbf16, #tpu.memory_space<vmem>>, vector<1x16x32xbf16>
    %191 = vector.shape_cast %190 : vector<1x16x32xbf16> to vector<16x32xbf16>
    %192 = vector.shape_cast %188 : vector<16x32xbf16> to vector<1x16x32xbf16>
    tpu.vector_store %arg5[%189, %c0_50, %c0_51], %192 {strides = array<i32>} : memref<16x16x32xbf16, #tpu.memory_space<vmem>>, vector<1x16x32xbf16>,
    %c5_i32 = arith.constant 5 : i32
    %193 = arith.index_cast %c5_i32 : i32 to index
    %c0_52 = arith.constant 0 : index
    %c0_53 = arith.constant 0 : index
    %194 = vector.load %arg6[%193, %c0_52, %c0_53] : memref<16x16x128xf32, #tpu.memory_space<vmem>>, vector<1x16x128xf32>
    %195 = vector.shape_cast %194 : vector<1x16x128xf32> to vector<16x128xf32>
    %196 = arith.truncf %187 : vector<16x32xf32> to vector<16x32xbf16>
    %cst_54 = arith.constant dense<0.000000e+00> : vector<16x128xf32>
    %197 = tpu.matmul %196, %11, %cst_54 {dimension_numbers = #tpu.dot_dimension_numbers<[1], [0], [0], [1], [0, 0, 1, 1], [], []>} : vector<16x32xbf16>, vector<32x128xbf16>, vector<16x128xf32> -> vector<16x128xf32>
    %198 = arith.addf %195, %197 : vector<16x128xf32>
    %199 = vector.extract_strided_slice %198 {offsets = [0, 0], sizes = [16, 32], strides = [1, 1]} : vector<16x128xf32> to vector<16x32xf32>
    %200 = arith.negf %199 : vector<16x32xf32>
    %201 = math.exp %200 : vector<16x32xf32>
    %cst_55 = arith.constant 1.000000e+00 : f32
    %202 = vector.broadcast %cst_55 : f32 to vector<16x32xf32>
    %203 = arith.addf %202, %201 : vector<16x32xf32>
    %204 = arith.divf %202, %203 : vector<16x32xf32>
    %205 = vector.extract_strided_slice %198 {offsets = [0, 32], sizes = [16, 32], strides = [1, 1]} : vector<16x128xf32> to vector<16x32xf32>
    %206 = arith.negf %205 : vector<16x32xf32>
    %207 = math.exp %206 : vector<16x32xf32>
    %cst_56 = arith.constant 1.000000e+00 : f32
    %208 = vector.broadcast %cst_56 : f32 to vector<16x32xf32>
    %209 = arith.addf %208, %207 : vector<16x32xf32>
    %210 = arith.divf %208, %209 : vector<16x32xf32>
    %211 = vector.extract_strided_slice %198 {offsets = [0, 64], sizes = [16, 32], strides = [1, 1]} : vector<16x128xf32> to vector<16x32xf32>
    %212 = math.tanh %211 : vector<16x32xf32>
    %213 = vector.extract_strided_slice %198 {offsets = [0, 96], sizes = [16, 32], strides = [1, 1]} : vector<16x128xf32> to vector<16x32xf32>
    %214 = arith.negf %213 : vector<16x32xf32>
    %215 = math.exp %214 : vector<16x32xf32>
    %cst_57 = arith.constant 1.000000e+00 : f32
    %216 = vector.broadcast %cst_57 : f32 to vector<16x32xf32>
    %217 = arith.addf %216, %215 : vector<16x32xf32>
    %218 = arith.divf %216, %217 : vector<16x32xf32>
    %219 = arith.mulf %210, %185 : vector<16x32xf32>
    %220 = arith.mulf %204, %212 : vector<16x32xf32>
    %221 = arith.addf %219, %220 : vector<16x32xf32>
    %222 = math.tanh %221 : vector<16x32xf32>
    %223 = arith.mulf %218, %222 : vector<16x32xf32>
    %224 = arith.truncf %223 : vector<16x32xf32> to vector<16x32xbf16>
    %225 = arith.index_cast %c5_i32 : i32 to index
    %c0_58 = arith.constant 0 : index
    %c0_59 = arith.constant 0 : index
    %226 = vector.load %arg5[%225, %c0_58, %c0_59] : memref<16x16x32xbf16, #tpu.memory_space<vmem>>, vector<1x16x32xbf16>
    %227 = vector.shape_cast %226 : vector<1x16x32xbf16> to vector<16x32xbf16>
    %228 = vector.shape_cast %224 : vector<16x32xbf16> to vector<1x16x32xbf16>
    tpu.vector_store %arg5[%225, %c0_58, %c0_59], %228 {strides = array<i32>} : memref<16x16x32xbf16, #tpu.memory_space<vmem>>, vector<1x16x32xbf16>,
    %c6_i32 = arith.constant 6 : i32
    %229 = arith.index_cast %c6_i32 : i32 to index
    %c0_60 = arith.constant 0 : index
    %c0_61 = arith.constant 0 : index
    %230 = vector.load %arg6[%229, %c0_60, %c0_61] : memref<16x16x128xf32, #tpu.memory_space<vmem>>, vector<1x16x128xf32>
    %231 = vector.shape_cast %230 : vector<1x16x128xf32> to vector<16x128xf32>
    %232 = arith.truncf %223 : vector<16x32xf32> to vector<16x32xbf16>
    %cst_62 = arith.constant dense<0.000000e+00> : vector<16x128xf32>
    %233 = tpu.matmul %232, %11, %cst_62 {dimension_numbers = #tpu.dot_dimension_numbers<[1], [0], [0], [1], [0, 0, 1, 1], [], []>} : vector<16x32xbf16>, vector<32x128xbf16>, vector<16x128xf32> -> vector<16x128xf32>
    %234 = arith.addf %231, %233 : vector<16x128xf32>
    %235 = vector.extract_strided_slice %234 {offsets = [0, 0], sizes = [16, 32], strides = [1, 1]} : vector<16x128xf32> to vector<16x32xf32>
    %236 = arith.negf %235 : vector<16x32xf32>
    %237 = math.exp %236 : vector<16x32xf32>
    %cst_63 = arith.constant 1.000000e+00 : f32
    %238 = vector.broadcast %cst_63 : f32 to vector<16x32xf32>
    %239 = arith.addf %238, %237 : vector<16x32xf32>
    %240 = arith.divf %238, %239 : vector<16x32xf32>
    %241 = vector.extract_strided_slice %234 {offsets = [0, 32], sizes = [16, 32], strides = [1, 1]} : vector<16x128xf32> to vector<16x32xf32>
    %242 = arith.negf %241 : vector<16x32xf32>
    %243 = math.exp %242 : vector<16x32xf32>
    %cst_64 = arith.constant 1.000000e+00 : f32
    %244 = vector.broadcast %cst_64 : f32 to vector<16x32xf32>
    %245 = arith.addf %244, %243 : vector<16x32xf32>
    %246 = arith.divf %244, %245 : vector<16x32xf32>
    %247 = vector.extract_strided_slice %234 {offsets = [0, 64], sizes = [16, 32], strides = [1, 1]} : vector<16x128xf32> to vector<16x32xf32>
    %248 = math.tanh %247 : vector<16x32xf32>
    %249 = vector.extract_strided_slice %234 {offsets = [0, 96], sizes = [16, 32], strides = [1, 1]} : vector<16x128xf32> to vector<16x32xf32>
    %250 = arith.negf %249 : vector<16x32xf32>
    %251 = math.exp %250 : vector<16x32xf32>
    %cst_65 = arith.constant 1.000000e+00 : f32
    %252 = vector.broadcast %cst_65 : f32 to vector<16x32xf32>
    %253 = arith.addf %252, %251 : vector<16x32xf32>
    %254 = arith.divf %252, %253 : vector<16x32xf32>
    %255 = arith.mulf %246, %221 : vector<16x32xf32>
    %256 = arith.mulf %240, %248 : vector<16x32xf32>
    %257 = arith.addf %255, %256 : vector<16x32xf32>
    %258 = math.tanh %257 : vector<16x32xf32>
    %259 = arith.mulf %254, %258 : vector<16x32xf32>
    %260 = arith.truncf %259 : vector<16x32xf32> to vector<16x32xbf16>
    %261 = arith.index_cast %c6_i32 : i32 to index
    %c0_66 = arith.constant 0 : index
    %c0_67 = arith.constant 0 : index
    %262 = vector.load %arg5[%261, %c0_66, %c0_67] : memref<16x16x32xbf16, #tpu.memory_space<vmem>>, vector<1x16x32xbf16>
    %263 = vector.shape_cast %262 : vector<1x16x32xbf16> to vector<16x32xbf16>
    %264 = vector.shape_cast %260 : vector<16x32xbf16> to vector<1x16x32xbf16>
    tpu.vector_store %arg5[%261, %c0_66, %c0_67], %264 {strides = array<i32>} : memref<16x16x32xbf16, #tpu.memory_space<vmem>>, vector<1x16x32xbf16>,
    %c7_i32 = arith.constant 7 : i32
    %265 = arith.index_cast %c7_i32 : i32 to index
    %c0_68 = arith.constant 0 : index
    %c0_69 = arith.constant 0 : index
    %266 = vector.load %arg6[%265, %c0_68, %c0_69] : memref<16x16x128xf32, #tpu.memory_space<vmem>>, vector<1x16x128xf32>
    %267 = vector.shape_cast %266 : vector<1x16x128xf32> to vector<16x128xf32>
    %268 = arith.truncf %259 : vector<16x32xf32> to vector<16x32xbf16>
    %cst_70 = arith.constant dense<0.000000e+00> : vector<16x128xf32>
    %269 = tpu.matmul %268, %11, %cst_70 {dimension_numbers = #tpu.dot_dimension_numbers<[1], [0], [0], [1], [0, 0, 1, 1], [], []>} : vector<16x32xbf16>, vector<32x128xbf16>, vector<16x128xf32> -> vector<16x128xf32>
    %270 = arith.addf %267, %269 : vector<16x128xf32>
    %271 = vector.extract_strided_slice %270 {offsets = [0, 0], sizes = [16, 32], strides = [1, 1]} : vector<16x128xf32> to vector<16x32xf32>
    %272 = arith.negf %271 : vector<16x32xf32>
    %273 = math.exp %272 : vector<16x32xf32>
    %cst_71 = arith.constant 1.000000e+00 : f32
    %274 = vector.broadcast %cst_71 : f32 to vector<16x32xf32>
    %275 = arith.addf %274, %273 : vector<16x32xf32>
    %276 = arith.divf %274, %275 : vector<16x32xf32>
    %277 = vector.extract_strided_slice %270 {offsets = [0, 32], sizes = [16, 32], strides = [1, 1]} : vector<16x128xf32> to vector<16x32xf32>
    %278 = arith.negf %277 : vector<16x32xf32>
    %279 = math.exp %278 : vector<16x32xf32>
    %cst_72 = arith.constant 1.000000e+00 : f32
    %280 = vector.broadcast %cst_72 : f32 to vector<16x32xf32>
    %281 = arith.addf %280, %279 : vector<16x32xf32>
    %282 = arith.divf %280, %281 : vector<16x32xf32>
    %283 = vector.extract_strided_slice %270 {offsets = [0, 64], sizes = [16, 32], strides = [1, 1]} : vector<16x128xf32> to vector<16x32xf32>
    %284 = math.tanh %283 : vector<16x32xf32>
    %285 = vector.extract_strided_slice %270 {offsets = [0, 96], sizes = [16, 32], strides = [1, 1]} : vector<16x128xf32> to vector<16x32xf32>
    %286 = arith.negf %285 : vector<16x32xf32>
    %287 = math.exp %286 : vector<16x32xf32>
    %cst_73 = arith.constant 1.000000e+00 : f32
    %288 = vector.broadcast %cst_73 : f32 to vector<16x32xf32>
    %289 = arith.addf %288, %287 : vector<16x32xf32>
    %290 = arith.divf %288, %289 : vector<16x32xf32>
    %291 = arith.mulf %282, %257 : vector<16x32xf32>
    %292 = arith.mulf %276, %284 : vector<16x32xf32>
    %293 = arith.addf %291, %292 : vector<16x32xf32>
    %294 = math.tanh %293 : vector<16x32xf32>
    %295 = arith.mulf %290, %294 : vector<16x32xf32>
    %296 = arith.truncf %295 : vector<16x32xf32> to vector<16x32xbf16>
    %297 = arith.index_cast %c7_i32 : i32 to index
    %c0_74 = arith.constant 0 : index
    %c0_75 = arith.constant 0 : index
    %298 = vector.load %arg5[%297, %c0_74, %c0_75] : memref<16x16x32xbf16, #tpu.memory_space<vmem>>, vector<1x16x32xbf16>
    %299 = vector.shape_cast %298 : vector<1x16x32xbf16> to vector<16x32xbf16>
    %300 = vector.shape_cast %296 : vector<16x32xbf16> to vector<1x16x32xbf16>
    tpu.vector_store %arg5[%297, %c0_74, %c0_75], %300 {strides = array<i32>} : memref<16x16x32xbf16, #tpu.memory_space<vmem>>, vector<1x16x32xbf16>,
    %c8_i32 = arith.constant 8 : i32
    %301 = arith.index_cast %c8_i32 : i32 to index
    %c0_76 = arith.constant 0 : index
    %c0_77 = arith.constant 0 : index
    %302 = vector.load %arg6[%301, %c0_76, %c0_77] : memref<16x16x128xf32, #tpu.memory_space<vmem>>, vector<1x16x128xf32>
    %303 = vector.shape_cast %302 : vector<1x16x128xf32> to vector<16x128xf32>
    %304 = arith.truncf %295 : vector<16x32xf32> to vector<16x32xbf16>
    %cst_78 = arith.constant dense<0.000000e+00> : vector<16x128xf32>
    %305 = tpu.matmul %304, %11, %cst_78 {dimension_numbers = #tpu.dot_dimension_numbers<[1], [0], [0], [1], [0, 0, 1, 1], [], []>} : vector<16x32xbf16>, vector<32x128xbf16>, vector<16x128xf32> -> vector<16x128xf32>
    %306 = arith.addf %303, %305 : vector<16x128xf32>
    %307 = vector.extract_strided_slice %306 {offsets = [0, 0], sizes = [16, 32], strides = [1, 1]} : vector<16x128xf32> to vector<16x32xf32>
    %308 = arith.negf %307 : vector<16x32xf32>
    %309 = math.exp %308 : vector<16x32xf32>
    %cst_79 = arith.constant 1.000000e+00 : f32
    %310 = vector.broadcast %cst_79 : f32 to vector<16x32xf32>
    %311 = arith.addf %310, %309 : vector<16x32xf32>
    %312 = arith.divf %310, %311 : vector<16x32xf32>
    %313 = vector.extract_strided_slice %306 {offsets = [0, 32], sizes = [16, 32], strides = [1, 1]} : vector<16x128xf32> to vector<16x32xf32>
    %314 = arith.negf %313 : vector<16x32xf32>
    %315 = math.exp %314 : vector<16x32xf32>
    %cst_80 = arith.constant 1.000000e+00 : f32
    %316 = vector.broadcast %cst_80 : f32 to vector<16x32xf32>
    %317 = arith.addf %316, %315 : vector<16x32xf32>
    %318 = arith.divf %316, %317 : vector<16x32xf32>
    %319 = vector.extract_strided_slice %306 {offsets = [0, 64], sizes = [16, 32], strides = [1, 1]} : vector<16x128xf32> to vector<16x32xf32>
    %320 = math.tanh %319 : vector<16x32xf32>
    %321 = vector.extract_strided_slice %306 {offsets = [0, 96], sizes = [16, 32], strides = [1, 1]} : vector<16x128xf32> to vector<16x32xf32>
    %322 = arith.negf %321 : vector<16x32xf32>
    %323 = math.exp %322 : vector<16x32xf32>
    %cst_81 = arith.constant 1.000000e+00 : f32
    %324 = vector.broadcast %cst_81 : f32 to vector<16x32xf32>
    %325 = arith.addf %324, %323 : vector<16x32xf32>
    %326 = arith.divf %324, %325 : vector<16x32xf32>
    %327 = arith.mulf %318, %293 : vector<16x32xf32>
    %328 = arith.mulf %312, %320 : vector<16x32xf32>
    %329 = arith.addf %327, %328 : vector<16x32xf32>
    %330 = math.tanh %329 : vector<16x32xf32>
    %331 = arith.mulf %326, %330 : vector<16x32xf32>
    %332 = arith.truncf %331 : vector<16x32xf32> to vector<16x32xbf16>
    %333 = arith.index_cast %c8_i32 : i32 to index
    %c0_82 = arith.constant 0 : index
    %c0_83 = arith.constant 0 : index
    %334 = vector.load %arg5[%333, %c0_82, %c0_83] : memref<16x16x32xbf16, #tpu.memory_space<vmem>>, vector<1x16x32xbf16>
    %335 = vector.shape_cast %334 : vector<1x16x32xbf16> to vector<16x32xbf16>
    %336 = vector.shape_cast %332 : vector<16x32xbf16> to vector<1x16x32xbf16>
    tpu.vector_store %arg5[%333, %c0_82, %c0_83], %336 {strides = array<i32>} : memref<16x16x32xbf16, #tpu.memory_space<vmem>>, vector<1x16x32xbf16>,
    %c9_i32 = arith.constant 9 : i32
    %337 = arith.index_cast %c9_i32 : i32 to index
    %c0_84 = arith.constant 0 : index
    %c0_85 = arith.constant 0 : index
    %338 = vector.load %arg6[%337, %c0_84, %c0_85] : memref<16x16x128xf32, #tpu.memory_space<vmem>>, vector<1x16x128xf32>
    %339 = vector.shape_cast %338 : vector<1x16x128xf32> to vector<16x128xf32>
    %340 = arith.truncf %331 : vector<16x32xf32> to vector<16x32xbf16>
    %cst_86 = arith.constant dense<0.000000e+00> : vector<16x128xf32>
    %341 = tpu.matmul %340, %11, %cst_86 {dimension_numbers = #tpu.dot_dimension_numbers<[1], [0], [0], [1], [0, 0, 1, 1], [], []>} : vector<16x32xbf16>, vector<32x128xbf16>, vector<16x128xf32> -> vector<16x128xf32>
    %342 = arith.addf %339, %341 : vector<16x128xf32>
    %343 = vector.extract_strided_slice %342 {offsets = [0, 0], sizes = [16, 32], strides = [1, 1]} : vector<16x128xf32> to vector<16x32xf32>
    %344 = arith.negf %343 : vector<16x32xf32>
    %345 = math.exp %344 : vector<16x32xf32>
    %cst_87 = arith.constant 1.000000e+00 : f32
    %346 = vector.broadcast %cst_87 : f32 to vector<16x32xf32>
    %347 = arith.addf %346, %345 : vector<16x32xf32>
    %348 = arith.divf %346, %347 : vector<16x32xf32>
    %349 = vector.extract_strided_slice %342 {offsets = [0, 32], sizes = [16, 32], strides = [1, 1]} : vector<16x128xf32> to vector<16x32xf32>
    %350 = arith.negf %349 : vector<16x32xf32>
    %351 = math.exp %350 : vector<16x32xf32>
    %cst_88 = arith.constant 1.000000e+00 : f32
    %352 = vector.broadcast %cst_88 : f32 to vector<16x32xf32>
    %353 = arith.addf %352, %351 : vector<16x32xf32>
    %354 = arith.divf %352, %353 : vector<16x32xf32>
    %355 = vector.extract_strided_slice %342 {offsets = [0, 64], sizes = [16, 32], strides = [1, 1]} : vector<16x128xf32> to vector<16x32xf32>
    %356 = math.tanh %355 : vector<16x32xf32>
    %357 = vector.extract_strided_slice %342 {offsets = [0, 96], sizes = [16, 32], strides = [1, 1]} : vector<16x128xf32> to vector<16x32xf32>
    %358 = arith.negf %357 : vector<16x32xf32>
    %359 = math.exp %358 : vector<16x32xf32>
    %cst_89 = arith.constant 1.000000e+00 : f32
    %360 = vector.broadcast %cst_89 : f32 to vector<16x32xf32>
    %361 = arith.addf %360, %359 : vector<16x32xf32>
    %362 = arith.divf %360, %361 : vector<16x32xf32>
    %363 = arith.mulf %354, %329 : vector<16x32xf32>
    %364 = arith.mulf %348, %356 : vector<16x32xf32>
    %365 = arith.addf %363, %364 : vector<16x32xf32>
    %366 = math.tanh %365 : vector<16x32xf32>
    %367 = arith.mulf %362, %366 : vector<16x32xf32>
    %368 = arith.truncf %367 : vector<16x32xf32> to vector<16x32xbf16>
    %369 = arith.index_cast %c9_i32 : i32 to index
    %c0_90 = arith.constant 0 : index
    %c0_91 = arith.constant 0 : index
    %370 = vector.load %arg5[%369, %c0_90, %c0_91] : memref<16x16x32xbf16, #tpu.memory_space<vmem>>, vector<1x16x32xbf16>
    %371 = vector.shape_cast %370 : vector<1x16x32xbf16> to vector<16x32xbf16>
    %372 = vector.shape_cast %368 : vector<16x32xbf16> to vector<1x16x32xbf16>
    tpu.vector_store %arg5[%369, %c0_90, %c0_91], %372 {strides = array<i32>} : memref<16x16x32xbf16, #tpu.memory_space<vmem>>, vector<1x16x32xbf16>,
    %c10_i32 = arith.constant 10 : i32
    %373 = arith.index_cast %c10_i32 : i32 to index
    %c0_92 = arith.constant 0 : index
    %c0_93 = arith.constant 0 : index
    %374 = vector.load %arg6[%373, %c0_92, %c0_93] : memref<16x16x128xf32, #tpu.memory_space<vmem>>, vector<1x16x128xf32>
    %375 = vector.shape_cast %374 : vector<1x16x128xf32> to vector<16x128xf32>
    %376 = arith.truncf %367 : vector<16x32xf32> to vector<16x32xbf16>
    %cst_94 = arith.constant dense<0.000000e+00> : vector<16x128xf32>
    %377 = tpu.matmul %376, %11, %cst_94 {dimension_numbers = #tpu.dot_dimension_numbers<[1], [0], [0], [1], [0, 0, 1, 1], [], []>} : vector<16x32xbf16>, vector<32x128xbf16>, vector<16x128xf32> -> vector<16x128xf32>
    %378 = arith.addf %375, %377 : vector<16x128xf32>
    %379 = vector.extract_strided_slice %378 {offsets = [0, 0], sizes = [16, 32], strides = [1, 1]} : vector<16x128xf32> to vector<16x32xf32>
    %380 = arith.negf %379 : vector<16x32xf32>
    %381 = math.exp %380 : vector<16x32xf32>
    %cst_95 = arith.constant 1.000000e+00 : f32
    %382 = vector.broadcast %cst_95 : f32 to vector<16x32xf32>
    %383 = arith.addf %382, %381 : vector<16x32xf32>
    %384 = arith.divf %382, %383 : vector<16x32xf32>
    %385 = vector.extract_strided_slice %378 {offsets = [0, 32], sizes = [16, 32], strides = [1, 1]} : vector<16x128xf32> to vector<16x32xf32>
    %386 = arith.negf %385 : vector<16x32xf32>
    %387 = math.exp %386 : vector<16x32xf32>
    %cst_96 = arith.constant 1.000000e+00 : f32
    %388 = vector.broadcast %cst_96 : f32 to vector<16x32xf32>
    %389 = arith.addf %388, %387 : vector<16x32xf32>
    %390 = arith.divf %388, %389 : vector<16x32xf32>
    %391 = vector.extract_strided_slice %378 {offsets = [0, 64], sizes = [16, 32], strides = [1, 1]} : vector<16x128xf32> to vector<16x32xf32>
    %392 = math.tanh %391 : vector<16x32xf32>
    %393 = vector.extract_strided_slice %378 {offsets = [0, 96], sizes = [16, 32], strides = [1, 1]} : vector<16x128xf32> to vector<16x32xf32>
    %394 = arith.negf %393 : vector<16x32xf32>
    %395 = math.exp %394 : vector<16x32xf32>
    %cst_97 = arith.constant 1.000000e+00 : f32
    %396 = vector.broadcast %cst_97 : f32 to vector<16x32xf32>
    %397 = arith.addf %396, %395 : vector<16x32xf32>
    %398 = arith.divf %396, %397 : vector<16x32xf32>
    %399 = arith.mulf %390, %365 : vector<16x32xf32>
    %400 = arith.mulf %384, %392 : vector<16x32xf32>
    %401 = arith.addf %399, %400 : vector<16x32xf32>
    %402 = math.tanh %401 : vector<16x32xf32>
    %403 = arith.mulf %398, %402 : vector<16x32xf32>
    %404 = arith.truncf %403 : vector<16x32xf32> to vector<16x32xbf16>
    %405 = arith.index_cast %c10_i32 : i32 to index
    %c0_98 = arith.constant 0 : index
    %c0_99 = arith.constant 0 : index
    %406 = vector.load %arg5[%405, %c0_98, %c0_99] : memref<16x16x32xbf16, #tpu.memory_space<vmem>>, vector<1x16x32xbf16>
    %407 = vector.shape_cast %406 : vector<1x16x32xbf16> to vector<16x32xbf16>
    %408 = vector.shape_cast %404 : vector<16x32xbf16> to vector<1x16x32xbf16>
    tpu.vector_store %arg5[%405, %c0_98, %c0_99], %408 {strides = array<i32>} : memref<16x16x32xbf16, #tpu.memory_space<vmem>>, vector<1x16x32xbf16>,
    %c11_i32 = arith.constant 11 : i32
    %409 = arith.index_cast %c11_i32 : i32 to index
    %c0_100 = arith.constant 0 : index
    %c0_101 = arith.constant 0 : index
    %410 = vector.load %arg6[%409, %c0_100, %c0_101] : memref<16x16x128xf32, #tpu.memory_space<vmem>>, vector<1x16x128xf32>
    %411 = vector.shape_cast %410 : vector<1x16x128xf32> to vector<16x128xf32>
    %412 = arith.truncf %403 : vector<16x32xf32> to vector<16x32xbf16>
    %cst_102 = arith.constant dense<0.000000e+00> : vector<16x128xf32>
    %413 = tpu.matmul %412, %11, %cst_102 {dimension_numbers = #tpu.dot_dimension_numbers<[1], [0], [0], [1], [0, 0, 1, 1], [], []>} : vector<16x32xbf16>, vector<32x128xbf16>, vector<16x128xf32> -> vector<16x128xf32>
    %414 = arith.addf %411, %413 : vector<16x128xf32>
    %415 = vector.extract_strided_slice %414 {offsets = [0, 0], sizes = [16, 32], strides = [1, 1]} : vector<16x128xf32> to vector<16x32xf32>
    %416 = arith.negf %415 : vector<16x32xf32>
    %417 = math.exp %416 : vector<16x32xf32>
    %cst_103 = arith.constant 1.000000e+00 : f32
    %418 = vector.broadcast %cst_103 : f32 to vector<16x32xf32>
    %419 = arith.addf %418, %417 : vector<16x32xf32>
    %420 = arith.divf %418, %419 : vector<16x32xf32>
    %421 = vector.extract_strided_slice %414 {offsets = [0, 32], sizes = [16, 32], strides = [1, 1]} : vector<16x128xf32> to vector<16x32xf32>
    %422 = arith.negf %421 : vector<16x32xf32>
    %423 = math.exp %422 : vector<16x32xf32>
    %cst_104 = arith.constant 1.000000e+00 : f32
    %424 = vector.broadcast %cst_104 : f32 to vector<16x32xf32>
    %425 = arith.addf %424, %423 : vector<16x32xf32>
    %426 = arith.divf %424, %425 : vector<16x32xf32>
    %427 = vector.extract_strided_slice %414 {offsets = [0, 64], sizes = [16, 32], strides = [1, 1]} : vector<16x128xf32> to vector<16x32xf32>
    %428 = math.tanh %427 : vector<16x32xf32>
    %429 = vector.extract_strided_slice %414 {offsets = [0, 96], sizes = [16, 32], strides = [1, 1]} : vector<16x128xf32> to vector<16x32xf32>
    %430 = arith.negf %429 : vector<16x32xf32>
    %431 = math.exp %430 : vector<16x32xf32>
    %cst_105 = arith.constant 1.000000e+00 : f32
    %432 = vector.broadcast %cst_105 : f32 to vector<16x32xf32>
    %433 = arith.addf %432, %431 : vector<16x32xf32>
    %434 = arith.divf %432, %433 : vector<16x32xf32>
    %435 = arith.mulf %426, %401 : vector<16x32xf32>
    %436 = arith.mulf %420, %428 : vector<16x32xf32>
    %437 = arith.addf %435, %436 : vector<16x32xf32>
    %438 = math.tanh %437 : vector<16x32xf32>
    %439 = arith.mulf %434, %438 : vector<16x32xf32>
    %440 = arith.truncf %439 : vector<16x32xf32> to vector<16x32xbf16>
    %441 = arith.index_cast %c11_i32 : i32 to index
    %c0_106 = arith.constant 0 : index
    %c0_107 = arith.constant 0 : index
    %442 = vector.load %arg5[%441, %c0_106, %c0_107] : memref<16x16x32xbf16, #tpu.memory_space<vmem>>, vector<1x16x32xbf16>
    %443 = vector.shape_cast %442 : vector<1x16x32xbf16> to vector<16x32xbf16>
    %444 = vector.shape_cast %440 : vector<16x32xbf16> to vector<1x16x32xbf16>
    tpu.vector_store %arg5[%441, %c0_106, %c0_107], %444 {strides = array<i32>} : memref<16x16x32xbf16, #tpu.memory_space<vmem>>, vector<1x16x32xbf16>,
    %c12_i32 = arith.constant 12 : i32
    %445 = arith.index_cast %c12_i32 : i32 to index
    %c0_108 = arith.constant 0 : index
    %c0_109 = arith.constant 0 : index
    %446 = vector.load %arg6[%445, %c0_108, %c0_109] : memref<16x16x128xf32, #tpu.memory_space<vmem>>, vector<1x16x128xf32>
    %447 = vector.shape_cast %446 : vector<1x16x128xf32> to vector<16x128xf32>
    %448 = arith.truncf %439 : vector<16x32xf32> to vector<16x32xbf16>
    %cst_110 = arith.constant dense<0.000000e+00> : vector<16x128xf32>
    %449 = tpu.matmul %448, %11, %cst_110 {dimension_numbers = #tpu.dot_dimension_numbers<[1], [0], [0], [1], [0, 0, 1, 1], [], []>} : vector<16x32xbf16>, vector<32x128xbf16>, vector<16x128xf32> -> vector<16x128xf32>
    %450 = arith.addf %447, %449 : vector<16x128xf32>
    %451 = vector.extract_strided_slice %450 {offsets = [0, 0], sizes = [16, 32], strides = [1, 1]} : vector<16x128xf32> to vector<16x32xf32>
    %452 = arith.negf %451 : vector<16x32xf32>
    %453 = math.exp %452 : vector<16x32xf32>
    %cst_111 = arith.constant 1.000000e+00 : f32
    %454 = vector.broadcast %cst_111 : f32 to vector<16x32xf32>
    %455 = arith.addf %454, %453 : vector<16x32xf32>
    %456 = arith.divf %454, %455 : vector<16x32xf32>
    %457 = vector.extract_strided_slice %450 {offsets = [0, 32], sizes = [16, 32], strides = [1, 1]} : vector<16x128xf32> to vector<16x32xf32>
    %458 = arith.negf %457 : vector<16x32xf32>
    %459 = math.exp %458 : vector<16x32xf32>
    %cst_112 = arith.constant 1.000000e+00 : f32
    %460 = vector.broadcast %cst_112 : f32 to vector<16x32xf32>
    %461 = arith.addf %460, %459 : vector<16x32xf32>
    %462 = arith.divf %460, %461 : vector<16x32xf32>
    %463 = vector.extract_strided_slice %450 {offsets = [0, 64], sizes = [16, 32], strides = [1, 1]} : vector<16x128xf32> to vector<16x32xf32>
    %464 = math.tanh %463 : vector<16x32xf32>
    %465 = vector.extract_strided_slice %450 {offsets = [0, 96], sizes = [16, 32], strides = [1, 1]} : vector<16x128xf32> to vector<16x32xf32>
    %466 = arith.negf %465 : vector<16x32xf32>
    %467 = math.exp %466 : vector<16x32xf32>
    %cst_113 = arith.constant 1.000000e+00 : f32
    %468 = vector.broadcast %cst_113 : f32 to vector<16x32xf32>
    %469 = arith.addf %468, %467 : vector<16x32xf32>
    %470 = arith.divf %468, %469 : vector<16x32xf32>
    %471 = arith.mulf %462, %437 : vector<16x32xf32>
    %472 = arith.mulf %456, %464 : vector<16x32xf32>
    %473 = arith.addf %471, %472 : vector<16x32xf32>
    %474 = math.tanh %473 : vector<16x32xf32>
    %475 = arith.mulf %470, %474 : vector<16x32xf32>
    %476 = arith.truncf %475 : vector<16x32xf32> to vector<16x32xbf16>
    %477 = arith.index_cast %c12_i32 : i32 to index
    %c0_114 = arith.constant 0 : index
    %c0_115 = arith.constant 0 : index
    %478 = vector.load %arg5[%477, %c0_114, %c0_115] : memref<16x16x32xbf16, #tpu.memory_space<vmem>>, vector<1x16x32xbf16>
    %479 = vector.shape_cast %478 : vector<1x16x32xbf16> to vector<16x32xbf16>
    %480 = vector.shape_cast %476 : vector<16x32xbf16> to vector<1x16x32xbf16>
    tpu.vector_store %arg5[%477, %c0_114, %c0_115], %480 {strides = array<i32>} : memref<16x16x32xbf16, #tpu.memory_space<vmem>>, vector<1x16x32xbf16>,
    %c13_i32 = arith.constant 13 : i32
    %481 = arith.index_cast %c13_i32 : i32 to index
    %c0_116 = arith.constant 0 : index
    %c0_117 = arith.constant 0 : index
    %482 = vector.load %arg6[%481, %c0_116, %c0_117] : memref<16x16x128xf32, #tpu.memory_space<vmem>>, vector<1x16x128xf32>
    %483 = vector.shape_cast %482 : vector<1x16x128xf32> to vector<16x128xf32>
    %484 = arith.truncf %475 : vector<16x32xf32> to vector<16x32xbf16>
    %cst_118 = arith.constant dense<0.000000e+00> : vector<16x128xf32>
    %485 = tpu.matmul %484, %11, %cst_118 {dimension_numbers = #tpu.dot_dimension_numbers<[1], [0], [0], [1], [0, 0, 1, 1], [], []>} : vector<16x32xbf16>, vector<32x128xbf16>, vector<16x128xf32> -> vector<16x128xf32>
    %486 = arith.addf %483, %485 : vector<16x128xf32>
    %487 = vector.extract_strided_slice %486 {offsets = [0, 0], sizes = [16, 32], strides = [1, 1]} : vector<16x128xf32> to vector<16x32xf32>
    %488 = arith.negf %487 : vector<16x32xf32>
    %489 = math.exp %488 : vector<16x32xf32>
    %cst_119 = arith.constant 1.000000e+00 : f32
    %490 = vector.broadcast %cst_119 : f32 to vector<16x32xf32>
    %491 = arith.addf %490, %489 : vector<16x32xf32>
    %492 = arith.divf %490, %491 : vector<16x32xf32>
    %493 = vector.extract_strided_slice %486 {offsets = [0, 32], sizes = [16, 32], strides = [1, 1]} : vector<16x128xf32> to vector<16x32xf32>
    %494 = arith.negf %493 : vector<16x32xf32>
    %495 = math.exp %494 : vector<16x32xf32>
    %cst_120 = arith.constant 1.000000e+00 : f32
    %496 = vector.broadcast %cst_120 : f32 to vector<16x32xf32>
    %497 = arith.addf %496, %495 : vector<16x32xf32>
    %498 = arith.divf %496, %497 : vector<16x32xf32>
    %499 = vector.extract_strided_slice %486 {offsets = [0, 64], sizes = [16, 32], strides = [1, 1]} : vector<16x128xf32> to vector<16x32xf32>
    %500 = math.tanh %499 : vector<16x32xf32>
    %501 = vector.extract_strided_slice %486 {offsets = [0, 96], sizes = [16, 32], strides = [1, 1]} : vector<16x128xf32> to vector<16x32xf32>
    %502 = arith.negf %501 : vector<16x32xf32>
    %503 = math.exp %502 : vector<16x32xf32>
    %cst_121 = arith.constant 1.000000e+00 : f32
    %504 = vector.broadcast %cst_121 : f32 to vector<16x32xf32>
    %505 = arith.addf %504, %503 : vector<16x32xf32>
    %506 = arith.divf %504, %505 : vector<16x32xf32>
    %507 = arith.mulf %498, %473 : vector<16x32xf32>
    %508 = arith.mulf %492, %500 : vector<16x32xf32>
    %509 = arith.addf %507, %508 : vector<16x32xf32>
    %510 = math.tanh %509 : vector<16x32xf32>
    %511 = arith.mulf %506, %510 : vector<16x32xf32>
    %512 = arith.truncf %511 : vector<16x32xf32> to vector<16x32xbf16>
    %513 = arith.index_cast %c13_i32 : i32 to index
    %c0_122 = arith.constant 0 : index
    %c0_123 = arith.constant 0 : index
    %514 = vector.load %arg5[%513, %c0_122, %c0_123] : memref<16x16x32xbf16, #tpu.memory_space<vmem>>, vector<1x16x32xbf16>
    %515 = vector.shape_cast %514 : vector<1x16x32xbf16> to vector<16x32xbf16>
    %516 = vector.shape_cast %512 : vector<16x32xbf16> to vector<1x16x32xbf16>
    tpu.vector_store %arg5[%513, %c0_122, %c0_123], %516 {strides = array<i32>} : memref<16x16x32xbf16, #tpu.memory_space<vmem>>, vector<1x16x32xbf16>,
    %c14_i32 = arith.constant 14 : i32
    %517 = arith.index_cast %c14_i32 : i32 to index
    %c0_124 = arith.constant 0 : index
    %c0_125 = arith.constant 0 : index
    %518 = vector.load %arg6[%517, %c0_124, %c0_125] : memref<16x16x128xf32, #tpu.memory_space<vmem>>, vector<1x16x128xf32>
    %519 = vector.shape_cast %518 : vector<1x16x128xf32> to vector<16x128xf32>
    %520 = arith.truncf %511 : vector<16x32xf32> to vector<16x32xbf16>
    %cst_126 = arith.constant dense<0.000000e+00> : vector<16x128xf32>
    %521 = tpu.matmul %520, %11, %cst_126 {dimension_numbers = #tpu.dot_dimension_numbers<[1], [0], [0], [1], [0, 0, 1, 1], [], []>} : vector<16x32xbf16>, vector<32x128xbf16>, vector<16x128xf32> -> vector<16x128xf32>
    %522 = arith.addf %519, %521 : vector<16x128xf32>
    %523 = vector.extract_strided_slice %522 {offsets = [0, 0], sizes = [16, 32], strides = [1, 1]} : vector<16x128xf32> to vector<16x32xf32>
    %524 = arith.negf %523 : vector<16x32xf32>
    %525 = math.exp %524 : vector<16x32xf32>
    %cst_127 = arith.constant 1.000000e+00 : f32
    %526 = vector.broadcast %cst_127 : f32 to vector<16x32xf32>
    %527 = arith.addf %526, %525 : vector<16x32xf32>
    %528 = arith.divf %526, %527 : vector<16x32xf32>
    %529 = vector.extract_strided_slice %522 {offsets = [0, 32], sizes = [16, 32], strides = [1, 1]} : vector<16x128xf32> to vector<16x32xf32>
    %530 = arith.negf %529 : vector<16x32xf32>
    %531 = math.exp %530 : vector<16x32xf32>
    %cst_128 = arith.constant 1.000000e+00 : f32
    %532 = vector.broadcast %cst_128 : f32 to vector<16x32xf32>
    %533 = arith.addf %532, %531 : vector<16x32xf32>
    %534 = arith.divf %532, %533 : vector<16x32xf32>
    %535 = vector.extract_strided_slice %522 {offsets = [0, 64], sizes = [16, 32], strides = [1, 1]} : vector<16x128xf32> to vector<16x32xf32>
    %536 = math.tanh %535 : vector<16x32xf32>
    %537 = vector.extract_strided_slice %522 {offsets = [0, 96], sizes = [16, 32], strides = [1, 1]} : vector<16x128xf32> to vector<16x32xf32>
    %538 = arith.negf %537 : vector<16x32xf32>
    %539 = math.exp %538 : vector<16x32xf32>
    %cst_129 = arith.constant 1.000000e+00 : f32
    %540 = vector.broadcast %cst_129 : f32 to vector<16x32xf32>
    %541 = arith.addf %540, %539 : vector<16x32xf32>
    %542 = arith.divf %540, %541 : vector<16x32xf32>
    %543 = arith.mulf %534, %509 : vector<16x32xf32>
    %544 = arith.mulf %528, %536 : vector<16x32xf32>
    %545 = arith.addf %543, %544 : vector<16x32xf32>
    %546 = math.tanh %545 : vector<16x32xf32>
    %547 = arith.mulf %542, %546 : vector<16x32xf32>
    %548 = arith.truncf %547 : vector<16x32xf32> to vector<16x32xbf16>
    %549 = arith.index_cast %c14_i32 : i32 to index
    %c0_130 = arith.constant 0 : index
    %c0_131 = arith.constant 0 : index
    %550 = vector.load %arg5[%549, %c0_130, %c0_131] : memref<16x16x32xbf16, #tpu.memory_space<vmem>>, vector<1x16x32xbf16>
    %551 = vector.shape_cast %550 : vector<1x16x32xbf16> to vector<16x32xbf16>
    %552 = vector.shape_cast %548 : vector<16x32xbf16> to vector<1x16x32xbf16>
    tpu.vector_store %arg5[%549, %c0_130, %c0_131], %552 {strides = array<i32>} : memref<16x16x32xbf16, #tpu.memory_space<vmem>>, vector<1x16x32xbf16>,
    %c15_i32 = arith.constant 15 : i32
    %553 = arith.index_cast %c15_i32 : i32 to index
    %c0_132 = arith.constant 0 : index
    %c0_133 = arith.constant 0 : index
    %554 = vector.load %arg6[%553, %c0_132, %c0_133] : memref<16x16x128xf32, #tpu.memory_space<vmem>>, vector<1x16x128xf32>
    %555 = vector.shape_cast %554 : vector<1x16x128xf32> to vector<16x128xf32>
    %556 = arith.truncf %547 : vector<16x32xf32> to vector<16x32xbf16>
    %cst_134 = arith.constant dense<0.000000e+00> : vector<16x128xf32>
    %557 = tpu.matmul %556, %11, %cst_134 {dimension_numbers = #tpu.dot_dimension_numbers<[1], [0], [0], [1], [0, 0, 1, 1], [], []>} : vector<16x32xbf16>, vector<32x128xbf16>, vector<16x128xf32> -> vector<16x128xf32>
    %558 = arith.addf %555, %557 : vector<16x128xf32>
    %559 = vector.extract_strided_slice %558 {offsets = [0, 0], sizes = [16, 32], strides = [1, 1]} : vector<16x128xf32> to vector<16x32xf32>
    %560 = arith.negf %559 : vector<16x32xf32>
    %561 = math.exp %560 : vector<16x32xf32>
    %cst_135 = arith.constant 1.000000e+00 : f32
    %562 = vector.broadcast %cst_135 : f32 to vector<16x32xf32>
    %563 = arith.addf %562, %561 : vector<16x32xf32>
    %564 = arith.divf %562, %563 : vector<16x32xf32>
    %565 = vector.extract_strided_slice %558 {offsets = [0, 32], sizes = [16, 32], strides = [1, 1]} : vector<16x128xf32> to vector<16x32xf32>
    %566 = arith.negf %565 : vector<16x32xf32>
    %567 = math.exp %566 : vector<16x32xf32>
    %cst_136 = arith.constant 1.000000e+00 : f32
    %568 = vector.broadcast %cst_136 : f32 to vector<16x32xf32>
    %569 = arith.addf %568, %567 : vector<16x32xf32>
    %570 = arith.divf %568, %569 : vector<16x32xf32>
    %571 = vector.extract_strided_slice %558 {offsets = [0, 64], sizes = [16, 32], strides = [1, 1]} : vector<16x128xf32> to vector<16x32xf32>
    %572 = math.tanh %571 : vector<16x32xf32>
    %573 = vector.extract_strided_slice %558 {offsets = [0, 96], sizes = [16, 32], strides = [1, 1]} : vector<16x128xf32> to vector<16x32xf32>
    %574 = arith.negf %573 : vector<16x32xf32>
    %575 = math.exp %574 : vector<16x32xf32>
    %cst_137 = arith.constant 1.000000e+00 : f32
    %576 = vector.broadcast %cst_137 : f32 to vector<16x32xf32>
    %577 = arith.addf %576, %575 : vector<16x32xf32>
    %578 = arith.divf %576, %577 : vector<16x32xf32>
    %579 = arith.mulf %570, %545 : vector<16x32xf32>
    %580 = arith.mulf %564, %572 : vector<16x32xf32>
    %581 = arith.addf %579, %580 : vector<16x32xf32>
    %582 = math.tanh %581 : vector<16x32xf32>
    %583 = arith.mulf %578, %582 : vector<16x32xf32>
    %584 = arith.truncf %583 : vector<16x32xf32> to vector<16x32xbf16>
    %585 = arith.index_cast %c15_i32 : i32 to index
    %c0_138 = arith.constant 0 : index
    %c0_139 = arith.constant 0 : index
    %586 = vector.load %arg5[%585, %c0_138, %c0_139] : memref<16x16x32xbf16, #tpu.memory_space<vmem>>, vector<1x16x32xbf16>
    %587 = vector.shape_cast %586 : vector<1x16x32xbf16> to vector<16x32xbf16>
    %588 = vector.shape_cast %584 : vector<16x32xbf16> to vector<1x16x32xbf16>
    tpu.vector_store %arg5[%585, %c0_138, %c0_139], %588 {strides = array<i32>} : memref<16x16x32xbf16, #tpu.memory_space<vmem>>, vector<1x16x32xbf16>,
    %c16_i32 = arith.constant 16 : i32
    return
  }
  func.func @transform_0(%arg0: i32) -> (i32, i32, i32) {
    %c0_i32 = arith.constant 0 : i32
    %c0_i32_0 = arith.constant 0 : i32
    %c0_i32_1 = arith.constant 0 : i32
    return %c0_i32, %arg0, %c0_i32_0 : i32, i32, i32
  }
  func.func @transform_1(%arg0: i32) -> (i32, i32) {
    %c0_i32 = arith.constant 0 : i32
    %c0_i32_0 = arith.constant 0 : i32
    %c0_i32_1 = arith.constant 0 : i32
    return %c0_i32, %c0_i32_0 : i32, i32
  }
  func.func @transform_2(%arg0: i32) -> (i32, i32) {
    %c0_i32 = arith.constant 0 : i32
    %c0_i32_0 = arith.constant 0 : i32
    %c0_i32_1 = arith.constant 0 : i32
    return %c0_i32, %c0_i32_0 : i32, i32
  }
  func.func @transform_3(%arg0: i32) -> (i32, i32) {
    %c0_i32 = arith.constant 0 : i32
    %c0_i32_0 = arith.constant 0 : i32
    %c0_i32_1 = arith.constant 0 : i32
    return %c0_i32, %c0_i32_0 : i32, i32
  }
  func.func @transform_4(%arg0: i32) -> (i32, i32, i32) {
    %c0_i32 = arith.constant 0 : i32
    %c0_i32_0 = arith.constant 0 : i32
    %c0_i32_1 = arith.constant 0 : i32
    return %c0_i32, %arg0, %c0_i32_0 : i32, i32, i32
  }
}

module attributes {stable_mosaic.version = 11 : i64} {
  func.func @_lstm_wc_kernel(%arg0: i32, %arg1: memref<16x8x32xf32, #tpu.memory_space<vmem>>, %arg2: memref<32x128xbf16, #tpu.memory_space<vmem>>, %arg3: memref<32x128xbf16, #tpu.memory_space<vmem>>, %arg4: memref<1x128xf32, #tpu.memory_space<vmem>>, %arg5: memref<32x32xbf16, #tpu.memory_space<vmem>>, %arg6: memref<1x32xf32, #tpu.memory_space<vmem>>, %arg7: memref<16x8x32xf32, #tpu.memory_space<vmem>>, %arg8: memref<16x8x128xf32, #tpu.memory_space<vmem>>, %arg9: memref<16x8x32xf32, #tpu.memory_space<vmem>>) attributes {dimension_semantics = [#tpu.dimension_semantics<arbitrary>], iteration_bounds = array<i64: 1>, scalar_prefetch = 0 : i64, scratch_operands = 2 : i64, tpu.core_type = #tpu.core_type<tc>, window_params = [{pipeline_mode = #tpu.pipeline_mode<synchronous>, transform_indices = @transform_0, window_bounds = array<i64: 16, 8, 32>}, {pipeline_mode = #tpu.pipeline_mode<synchronous>, transform_indices = @transform_1, window_bounds = array<i64: 32, 128>}, {pipeline_mode = #tpu.pipeline_mode<synchronous>, transform_indices = @transform_2, window_bounds = array<i64: 32, 128>}, {pipeline_mode = #tpu.pipeline_mode<synchronous>, transform_indices = @transform_3, window_bounds = array<i64: 1, 128>}, {pipeline_mode = #tpu.pipeline_mode<synchronous>, transform_indices = @transform_4, window_bounds = array<i64: 32, 32>}, {pipeline_mode = #tpu.pipeline_mode<synchronous>, transform_indices = @transform_5, window_bounds = array<i64: 1, 32>}, {pipeline_mode = #tpu.pipeline_mode<synchronous>, transform_indices = @transform_6, window_bounds = array<i64: 16, 8, 32>}]} {
    %c0 = arith.constant 0 : index
    %c0_0 = arith.constant 0 : index
    %c0_1 = arith.constant 0 : index
    %0 = vector.load %arg1[%c0, %c0_0, %c0_1] : memref<16x8x32xf32, #tpu.memory_space<vmem>>, vector<16x8x32xf32>
    %1 = vector.shape_cast %0 : vector<16x8x32xf32> to vector<128x32xf32>
    %2 = arith.truncf %1 : vector<128x32xf32> to vector<128x32xbf16>
    %c0_2 = arith.constant 0 : index
    %c0_3 = arith.constant 0 : index
    %3 = vector.load %arg2[%c0_2, %c0_3] : memref<32x128xbf16, #tpu.memory_space<vmem>>, vector<32x128xbf16>
    %cst = arith.constant dense<0.000000e+00> : vector<128x128xf32>
    %4 = tpu.matmul %2, %3, %cst {dimension_numbers = #tpu.dot_dimension_numbers<[1], [0], [0], [1], [0, 0, 1, 1], [], []>} : vector<128x32xbf16>, vector<32x128xbf16>, vector<128x128xf32> -> vector<128x128xf32>
    %5 = vector.shape_cast %4 : vector<128x128xf32> to vector<16x8x128xf32>
    %c0_4 = arith.constant 0 : index
    %c0_5 = arith.constant 0 : index
    %6 = vector.load %arg4[%c0_4, %c0_5] : memref<1x128xf32, #tpu.memory_space<vmem>>, vector<1x128xf32>
    %7 = vector.shape_cast %6 : vector<1x128xf32> to vector<1x1x128xf32>
    %8 = vector.broadcast %7 : vector<1x1x128xf32> to vector<16x8x128xf32>
    %9 = arith.addf %5, %8 : vector<16x8x128xf32>
    %c0_6 = arith.constant 0 : index
    %c0_7 = arith.constant 0 : index
    %c0_8 = arith.constant 0 : index
    %10 = vector.load %arg8[%c0_6, %c0_7, %c0_8] : memref<16x8x128xf32, #tpu.memory_space<vmem>>, vector<16x8x128xf32>
    tpu.vector_store %arg8[%c0_6, %c0_7, %c0_8], %9 {strides = array<i32>} : memref<16x8x128xf32, #tpu.memory_space<vmem>>, vector<16x8x128xf32>,
    %c0_9 = arith.constant 0 : index
    %c0_10 = arith.constant 0 : index
    %11 = vector.load %arg3[%c0_9, %c0_10] : memref<32x128xbf16, #tpu.memory_space<vmem>>, vector<32x128xbf16>
    %cst_11 = arith.constant 0.000000e+00 : f32
    %12 = vector.broadcast %cst_11 : f32 to vector<8x32xf32>
    %c0_i32 = arith.constant 0 : i32
    %13 = arith.index_cast %c0_i32 : i32 to index
    %c0_12 = arith.constant 0 : index
    %c0_13 = arith.constant 0 : index
    %14 = vector.load %arg8[%13, %c0_12, %c0_13] : memref<16x8x128xf32, #tpu.memory_space<vmem>>, vector<1x8x128xf32>
    %15 = vector.shape_cast %14 : vector<1x8x128xf32> to vector<8x128xf32>
    %16 = arith.truncf %12 : vector<8x32xf32> to vector<8x32xbf16>
    %cst_14 = arith.constant dense<0.000000e+00> : vector<8x128xf32>
    %17 = tpu.matmul %16, %11, %cst_14 {dimension_numbers = #tpu.dot_dimension_numbers<[1], [0], [0], [1], [0, 0, 1, 1], [], []>} : vector<8x32xbf16>, vector<32x128xbf16>, vector<8x128xf32> -> vector<8x128xf32>
    %18 = arith.addf %15, %17 : vector<8x128xf32>
    %19 = vector.extract_strided_slice %18 {offsets = [0, 0], sizes = [8, 32], strides = [1, 1]} : vector<8x128xf32> to vector<8x32xf32>
    %20 = arith.negf %19 : vector<8x32xf32>
    %21 = math.exp %20 : vector<8x32xf32>
    %cst_15 = arith.constant 1.000000e+00 : f32
    %22 = vector.broadcast %cst_15 : f32 to vector<8x32xf32>
    %23 = arith.addf %22, %21 : vector<8x32xf32>
    %24 = arith.divf %22, %23 : vector<8x32xf32>
    %25 = vector.extract_strided_slice %18 {offsets = [0, 32], sizes = [8, 32], strides = [1, 1]} : vector<8x128xf32> to vector<8x32xf32>
    %26 = arith.negf %25 : vector<8x32xf32>
    %27 = math.exp %26 : vector<8x32xf32>
    %cst_16 = arith.constant 1.000000e+00 : f32
    %28 = vector.broadcast %cst_16 : f32 to vector<8x32xf32>
    %29 = arith.addf %28, %27 : vector<8x32xf32>
    %30 = arith.divf %28, %29 : vector<8x32xf32>
    %31 = vector.extract_strided_slice %18 {offsets = [0, 64], sizes = [8, 32], strides = [1, 1]} : vector<8x128xf32> to vector<8x32xf32>
    %32 = math.tanh %31 : vector<8x32xf32>
    %33 = vector.extract_strided_slice %18 {offsets = [0, 96], sizes = [8, 32], strides = [1, 1]} : vector<8x128xf32> to vector<8x32xf32>
    %34 = arith.negf %33 : vector<8x32xf32>
    %35 = math.exp %34 : vector<8x32xf32>
    %cst_17 = arith.constant 1.000000e+00 : f32
    %36 = vector.broadcast %cst_17 : f32 to vector<8x32xf32>
    %37 = arith.addf %36, %35 : vector<8x32xf32>
    %38 = arith.divf %36, %37 : vector<8x32xf32>
    %39 = arith.mulf %30, %12 : vector<8x32xf32>
    %40 = arith.mulf %24, %32 : vector<8x32xf32>
    %41 = arith.addf %39, %40 : vector<8x32xf32>
    %42 = math.tanh %41 : vector<8x32xf32>
    %43 = arith.mulf %38, %42 : vector<8x32xf32>
    %44 = arith.index_cast %c0_i32 : i32 to index
    %c0_18 = arith.constant 0 : index
    %c0_19 = arith.constant 0 : index
    %45 = vector.load %arg9[%44, %c0_18, %c0_19] : memref<16x8x32xf32, #tpu.memory_space<vmem>>, vector<1x8x32xf32>
    %46 = vector.shape_cast %45 : vector<1x8x32xf32> to vector<8x32xf32>
    %47 = vector.shape_cast %43 : vector<8x32xf32> to vector<1x8x32xf32>
    tpu.vector_store %arg9[%44, %c0_18, %c0_19], %47 {strides = array<i32>} : memref<16x8x32xf32, #tpu.memory_space<vmem>>, vector<1x8x32xf32>,
    %c1_i32 = arith.constant 1 : i32
    %48 = arith.index_cast %c1_i32 : i32 to index
    %c0_20 = arith.constant 0 : index
    %c0_21 = arith.constant 0 : index
    %49 = vector.load %arg8[%48, %c0_20, %c0_21] : memref<16x8x128xf32, #tpu.memory_space<vmem>>, vector<1x8x128xf32>
    %50 = vector.shape_cast %49 : vector<1x8x128xf32> to vector<8x128xf32>
    %51 = arith.truncf %43 : vector<8x32xf32> to vector<8x32xbf16>
    %cst_22 = arith.constant dense<0.000000e+00> : vector<8x128xf32>
    %52 = tpu.matmul %51, %11, %cst_22 {dimension_numbers = #tpu.dot_dimension_numbers<[1], [0], [0], [1], [0, 0, 1, 1], [], []>} : vector<8x32xbf16>, vector<32x128xbf16>, vector<8x128xf32> -> vector<8x128xf32>
    %53 = arith.addf %50, %52 : vector<8x128xf32>
    %54 = vector.extract_strided_slice %53 {offsets = [0, 0], sizes = [8, 32], strides = [1, 1]} : vector<8x128xf32> to vector<8x32xf32>
    %55 = arith.negf %54 : vector<8x32xf32>
    %56 = math.exp %55 : vector<8x32xf32>
    %cst_23 = arith.constant 1.000000e+00 : f32
    %57 = vector.broadcast %cst_23 : f32 to vector<8x32xf32>
    %58 = arith.addf %57, %56 : vector<8x32xf32>
    %59 = arith.divf %57, %58 : vector<8x32xf32>
    %60 = vector.extract_strided_slice %53 {offsets = [0, 32], sizes = [8, 32], strides = [1, 1]} : vector<8x128xf32> to vector<8x32xf32>
    %61 = arith.negf %60 : vector<8x32xf32>
    %62 = math.exp %61 : vector<8x32xf32>
    %cst_24 = arith.constant 1.000000e+00 : f32
    %63 = vector.broadcast %cst_24 : f32 to vector<8x32xf32>
    %64 = arith.addf %63, %62 : vector<8x32xf32>
    %65 = arith.divf %63, %64 : vector<8x32xf32>
    %66 = vector.extract_strided_slice %53 {offsets = [0, 64], sizes = [8, 32], strides = [1, 1]} : vector<8x128xf32> to vector<8x32xf32>
    %67 = math.tanh %66 : vector<8x32xf32>
    %68 = vector.extract_strided_slice %53 {offsets = [0, 96], sizes = [8, 32], strides = [1, 1]} : vector<8x128xf32> to vector<8x32xf32>
    %69 = arith.negf %68 : vector<8x32xf32>
    %70 = math.exp %69 : vector<8x32xf32>
    %cst_25 = arith.constant 1.000000e+00 : f32
    %71 = vector.broadcast %cst_25 : f32 to vector<8x32xf32>
    %72 = arith.addf %71, %70 : vector<8x32xf32>
    %73 = arith.divf %71, %72 : vector<8x32xf32>
    %74 = arith.mulf %65, %41 : vector<8x32xf32>
    %75 = arith.mulf %59, %67 : vector<8x32xf32>
    %76 = arith.addf %74, %75 : vector<8x32xf32>
    %77 = math.tanh %76 : vector<8x32xf32>
    %78 = arith.mulf %73, %77 : vector<8x32xf32>
    %79 = arith.index_cast %c1_i32 : i32 to index
    %c0_26 = arith.constant 0 : index
    %c0_27 = arith.constant 0 : index
    %80 = vector.load %arg9[%79, %c0_26, %c0_27] : memref<16x8x32xf32, #tpu.memory_space<vmem>>, vector<1x8x32xf32>
    %81 = vector.shape_cast %80 : vector<1x8x32xf32> to vector<8x32xf32>
    %82 = vector.shape_cast %78 : vector<8x32xf32> to vector<1x8x32xf32>
    tpu.vector_store %arg9[%79, %c0_26, %c0_27], %82 {strides = array<i32>} : memref<16x8x32xf32, #tpu.memory_space<vmem>>, vector<1x8x32xf32>,
    %c2_i32 = arith.constant 2 : i32
    %83 = arith.index_cast %c2_i32 : i32 to index
    %c0_28 = arith.constant 0 : index
    %c0_29 = arith.constant 0 : index
    %84 = vector.load %arg8[%83, %c0_28, %c0_29] : memref<16x8x128xf32, #tpu.memory_space<vmem>>, vector<1x8x128xf32>
    %85 = vector.shape_cast %84 : vector<1x8x128xf32> to vector<8x128xf32>
    %86 = arith.truncf %78 : vector<8x32xf32> to vector<8x32xbf16>
    %cst_30 = arith.constant dense<0.000000e+00> : vector<8x128xf32>
    %87 = tpu.matmul %86, %11, %cst_30 {dimension_numbers = #tpu.dot_dimension_numbers<[1], [0], [0], [1], [0, 0, 1, 1], [], []>} : vector<8x32xbf16>, vector<32x128xbf16>, vector<8x128xf32> -> vector<8x128xf32>
    %88 = arith.addf %85, %87 : vector<8x128xf32>
    %89 = vector.extract_strided_slice %88 {offsets = [0, 0], sizes = [8, 32], strides = [1, 1]} : vector<8x128xf32> to vector<8x32xf32>
    %90 = arith.negf %89 : vector<8x32xf32>
    %91 = math.exp %90 : vector<8x32xf32>
    %cst_31 = arith.constant 1.000000e+00 : f32
    %92 = vector.broadcast %cst_31 : f32 to vector<8x32xf32>
    %93 = arith.addf %92, %91 : vector<8x32xf32>
    %94 = arith.divf %92, %93 : vector<8x32xf32>
    %95 = vector.extract_strided_slice %88 {offsets = [0, 32], sizes = [8, 32], strides = [1, 1]} : vector<8x128xf32> to vector<8x32xf32>
    %96 = arith.negf %95 : vector<8x32xf32>
    %97 = math.exp %96 : vector<8x32xf32>
    %cst_32 = arith.constant 1.000000e+00 : f32
    %98 = vector.broadcast %cst_32 : f32 to vector<8x32xf32>
    %99 = arith.addf %98, %97 : vector<8x32xf32>
    %100 = arith.divf %98, %99 : vector<8x32xf32>
    %101 = vector.extract_strided_slice %88 {offsets = [0, 64], sizes = [8, 32], strides = [1, 1]} : vector<8x128xf32> to vector<8x32xf32>
    %102 = math.tanh %101 : vector<8x32xf32>
    %103 = vector.extract_strided_slice %88 {offsets = [0, 96], sizes = [8, 32], strides = [1, 1]} : vector<8x128xf32> to vector<8x32xf32>
    %104 = arith.negf %103 : vector<8x32xf32>
    %105 = math.exp %104 : vector<8x32xf32>
    %cst_33 = arith.constant 1.000000e+00 : f32
    %106 = vector.broadcast %cst_33 : f32 to vector<8x32xf32>
    %107 = arith.addf %106, %105 : vector<8x32xf32>
    %108 = arith.divf %106, %107 : vector<8x32xf32>
    %109 = arith.mulf %100, %76 : vector<8x32xf32>
    %110 = arith.mulf %94, %102 : vector<8x32xf32>
    %111 = arith.addf %109, %110 : vector<8x32xf32>
    %112 = math.tanh %111 : vector<8x32xf32>
    %113 = arith.mulf %108, %112 : vector<8x32xf32>
    %114 = arith.index_cast %c2_i32 : i32 to index
    %c0_34 = arith.constant 0 : index
    %c0_35 = arith.constant 0 : index
    %115 = vector.load %arg9[%114, %c0_34, %c0_35] : memref<16x8x32xf32, #tpu.memory_space<vmem>>, vector<1x8x32xf32>
    %116 = vector.shape_cast %115 : vector<1x8x32xf32> to vector<8x32xf32>
    %117 = vector.shape_cast %113 : vector<8x32xf32> to vector<1x8x32xf32>
    tpu.vector_store %arg9[%114, %c0_34, %c0_35], %117 {strides = array<i32>} : memref<16x8x32xf32, #tpu.memory_space<vmem>>, vector<1x8x32xf32>,
    %c3_i32 = arith.constant 3 : i32
    %118 = arith.index_cast %c3_i32 : i32 to index
    %c0_36 = arith.constant 0 : index
    %c0_37 = arith.constant 0 : index
    %119 = vector.load %arg8[%118, %c0_36, %c0_37] : memref<16x8x128xf32, #tpu.memory_space<vmem>>, vector<1x8x128xf32>
    %120 = vector.shape_cast %119 : vector<1x8x128xf32> to vector<8x128xf32>
    %121 = arith.truncf %113 : vector<8x32xf32> to vector<8x32xbf16>
    %cst_38 = arith.constant dense<0.000000e+00> : vector<8x128xf32>
    %122 = tpu.matmul %121, %11, %cst_38 {dimension_numbers = #tpu.dot_dimension_numbers<[1], [0], [0], [1], [0, 0, 1, 1], [], []>} : vector<8x32xbf16>, vector<32x128xbf16>, vector<8x128xf32> -> vector<8x128xf32>
    %123 = arith.addf %120, %122 : vector<8x128xf32>
    %124 = vector.extract_strided_slice %123 {offsets = [0, 0], sizes = [8, 32], strides = [1, 1]} : vector<8x128xf32> to vector<8x32xf32>
    %125 = arith.negf %124 : vector<8x32xf32>
    %126 = math.exp %125 : vector<8x32xf32>
    %cst_39 = arith.constant 1.000000e+00 : f32
    %127 = vector.broadcast %cst_39 : f32 to vector<8x32xf32>
    %128 = arith.addf %127, %126 : vector<8x32xf32>
    %129 = arith.divf %127, %128 : vector<8x32xf32>
    %130 = vector.extract_strided_slice %123 {offsets = [0, 32], sizes = [8, 32], strides = [1, 1]} : vector<8x128xf32> to vector<8x32xf32>
    %131 = arith.negf %130 : vector<8x32xf32>
    %132 = math.exp %131 : vector<8x32xf32>
    %cst_40 = arith.constant 1.000000e+00 : f32
    %133 = vector.broadcast %cst_40 : f32 to vector<8x32xf32>
    %134 = arith.addf %133, %132 : vector<8x32xf32>
    %135 = arith.divf %133, %134 : vector<8x32xf32>
    %136 = vector.extract_strided_slice %123 {offsets = [0, 64], sizes = [8, 32], strides = [1, 1]} : vector<8x128xf32> to vector<8x32xf32>
    %137 = math.tanh %136 : vector<8x32xf32>
    %138 = vector.extract_strided_slice %123 {offsets = [0, 96], sizes = [8, 32], strides = [1, 1]} : vector<8x128xf32> to vector<8x32xf32>
    %139 = arith.negf %138 : vector<8x32xf32>
    %140 = math.exp %139 : vector<8x32xf32>
    %cst_41 = arith.constant 1.000000e+00 : f32
    %141 = vector.broadcast %cst_41 : f32 to vector<8x32xf32>
    %142 = arith.addf %141, %140 : vector<8x32xf32>
    %143 = arith.divf %141, %142 : vector<8x32xf32>
    %144 = arith.mulf %135, %111 : vector<8x32xf32>
    %145 = arith.mulf %129, %137 : vector<8x32xf32>
    %146 = arith.addf %144, %145 : vector<8x32xf32>
    %147 = math.tanh %146 : vector<8x32xf32>
    %148 = arith.mulf %143, %147 : vector<8x32xf32>
    %149 = arith.index_cast %c3_i32 : i32 to index
    %c0_42 = arith.constant 0 : index
    %c0_43 = arith.constant 0 : index
    %150 = vector.load %arg9[%149, %c0_42, %c0_43] : memref<16x8x32xf32, #tpu.memory_space<vmem>>, vector<1x8x32xf32>
    %151 = vector.shape_cast %150 : vector<1x8x32xf32> to vector<8x32xf32>
    %152 = vector.shape_cast %148 : vector<8x32xf32> to vector<1x8x32xf32>
    tpu.vector_store %arg9[%149, %c0_42, %c0_43], %152 {strides = array<i32>} : memref<16x8x32xf32, #tpu.memory_space<vmem>>, vector<1x8x32xf32>,
    %c4_i32 = arith.constant 4 : i32
    %153 = arith.index_cast %c4_i32 : i32 to index
    %c0_44 = arith.constant 0 : index
    %c0_45 = arith.constant 0 : index
    %154 = vector.load %arg8[%153, %c0_44, %c0_45] : memref<16x8x128xf32, #tpu.memory_space<vmem>>, vector<1x8x128xf32>
    %155 = vector.shape_cast %154 : vector<1x8x128xf32> to vector<8x128xf32>
    %156 = arith.truncf %148 : vector<8x32xf32> to vector<8x32xbf16>
    %cst_46 = arith.constant dense<0.000000e+00> : vector<8x128xf32>
    %157 = tpu.matmul %156, %11, %cst_46 {dimension_numbers = #tpu.dot_dimension_numbers<[1], [0], [0], [1], [0, 0, 1, 1], [], []>} : vector<8x32xbf16>, vector<32x128xbf16>, vector<8x128xf32> -> vector<8x128xf32>
    %158 = arith.addf %155, %157 : vector<8x128xf32>
    %159 = vector.extract_strided_slice %158 {offsets = [0, 0], sizes = [8, 32], strides = [1, 1]} : vector<8x128xf32> to vector<8x32xf32>
    %160 = arith.negf %159 : vector<8x32xf32>
    %161 = math.exp %160 : vector<8x32xf32>
    %cst_47 = arith.constant 1.000000e+00 : f32
    %162 = vector.broadcast %cst_47 : f32 to vector<8x32xf32>
    %163 = arith.addf %162, %161 : vector<8x32xf32>
    %164 = arith.divf %162, %163 : vector<8x32xf32>
    %165 = vector.extract_strided_slice %158 {offsets = [0, 32], sizes = [8, 32], strides = [1, 1]} : vector<8x128xf32> to vector<8x32xf32>
    %166 = arith.negf %165 : vector<8x32xf32>
    %167 = math.exp %166 : vector<8x32xf32>
    %cst_48 = arith.constant 1.000000e+00 : f32
    %168 = vector.broadcast %cst_48 : f32 to vector<8x32xf32>
    %169 = arith.addf %168, %167 : vector<8x32xf32>
    %170 = arith.divf %168, %169 : vector<8x32xf32>
    %171 = vector.extract_strided_slice %158 {offsets = [0, 64], sizes = [8, 32], strides = [1, 1]} : vector<8x128xf32> to vector<8x32xf32>
    %172 = math.tanh %171 : vector<8x32xf32>
    %173 = vector.extract_strided_slice %158 {offsets = [0, 96], sizes = [8, 32], strides = [1, 1]} : vector<8x128xf32> to vector<8x32xf32>
    %174 = arith.negf %173 : vector<8x32xf32>
    %175 = math.exp %174 : vector<8x32xf32>
    %cst_49 = arith.constant 1.000000e+00 : f32
    %176 = vector.broadcast %cst_49 : f32 to vector<8x32xf32>
    %177 = arith.addf %176, %175 : vector<8x32xf32>
    %178 = arith.divf %176, %177 : vector<8x32xf32>
    %179 = arith.mulf %170, %146 : vector<8x32xf32>
    %180 = arith.mulf %164, %172 : vector<8x32xf32>
    %181 = arith.addf %179, %180 : vector<8x32xf32>
    %182 = math.tanh %181 : vector<8x32xf32>
    %183 = arith.mulf %178, %182 : vector<8x32xf32>
    %184 = arith.index_cast %c4_i32 : i32 to index
    %c0_50 = arith.constant 0 : index
    %c0_51 = arith.constant 0 : index
    %185 = vector.load %arg9[%184, %c0_50, %c0_51] : memref<16x8x32xf32, #tpu.memory_space<vmem>>, vector<1x8x32xf32>
    %186 = vector.shape_cast %185 : vector<1x8x32xf32> to vector<8x32xf32>
    %187 = vector.shape_cast %183 : vector<8x32xf32> to vector<1x8x32xf32>
    tpu.vector_store %arg9[%184, %c0_50, %c0_51], %187 {strides = array<i32>} : memref<16x8x32xf32, #tpu.memory_space<vmem>>, vector<1x8x32xf32>,
    %c5_i32 = arith.constant 5 : i32
    %188 = arith.index_cast %c5_i32 : i32 to index
    %c0_52 = arith.constant 0 : index
    %c0_53 = arith.constant 0 : index
    %189 = vector.load %arg8[%188, %c0_52, %c0_53] : memref<16x8x128xf32, #tpu.memory_space<vmem>>, vector<1x8x128xf32>
    %190 = vector.shape_cast %189 : vector<1x8x128xf32> to vector<8x128xf32>
    %191 = arith.truncf %183 : vector<8x32xf32> to vector<8x32xbf16>
    %cst_54 = arith.constant dense<0.000000e+00> : vector<8x128xf32>
    %192 = tpu.matmul %191, %11, %cst_54 {dimension_numbers = #tpu.dot_dimension_numbers<[1], [0], [0], [1], [0, 0, 1, 1], [], []>} : vector<8x32xbf16>, vector<32x128xbf16>, vector<8x128xf32> -> vector<8x128xf32>
    %193 = arith.addf %190, %192 : vector<8x128xf32>
    %194 = vector.extract_strided_slice %193 {offsets = [0, 0], sizes = [8, 32], strides = [1, 1]} : vector<8x128xf32> to vector<8x32xf32>
    %195 = arith.negf %194 : vector<8x32xf32>
    %196 = math.exp %195 : vector<8x32xf32>
    %cst_55 = arith.constant 1.000000e+00 : f32
    %197 = vector.broadcast %cst_55 : f32 to vector<8x32xf32>
    %198 = arith.addf %197, %196 : vector<8x32xf32>
    %199 = arith.divf %197, %198 : vector<8x32xf32>
    %200 = vector.extract_strided_slice %193 {offsets = [0, 32], sizes = [8, 32], strides = [1, 1]} : vector<8x128xf32> to vector<8x32xf32>
    %201 = arith.negf %200 : vector<8x32xf32>
    %202 = math.exp %201 : vector<8x32xf32>
    %cst_56 = arith.constant 1.000000e+00 : f32
    %203 = vector.broadcast %cst_56 : f32 to vector<8x32xf32>
    %204 = arith.addf %203, %202 : vector<8x32xf32>
    %205 = arith.divf %203, %204 : vector<8x32xf32>
    %206 = vector.extract_strided_slice %193 {offsets = [0, 64], sizes = [8, 32], strides = [1, 1]} : vector<8x128xf32> to vector<8x32xf32>
    %207 = math.tanh %206 : vector<8x32xf32>
    %208 = vector.extract_strided_slice %193 {offsets = [0, 96], sizes = [8, 32], strides = [1, 1]} : vector<8x128xf32> to vector<8x32xf32>
    %209 = arith.negf %208 : vector<8x32xf32>
    %210 = math.exp %209 : vector<8x32xf32>
    %cst_57 = arith.constant 1.000000e+00 : f32
    %211 = vector.broadcast %cst_57 : f32 to vector<8x32xf32>
    %212 = arith.addf %211, %210 : vector<8x32xf32>
    %213 = arith.divf %211, %212 : vector<8x32xf32>
    %214 = arith.mulf %205, %181 : vector<8x32xf32>
    %215 = arith.mulf %199, %207 : vector<8x32xf32>
    %216 = arith.addf %214, %215 : vector<8x32xf32>
    %217 = math.tanh %216 : vector<8x32xf32>
    %218 = arith.mulf %213, %217 : vector<8x32xf32>
    %219 = arith.index_cast %c5_i32 : i32 to index
    %c0_58 = arith.constant 0 : index
    %c0_59 = arith.constant 0 : index
    %220 = vector.load %arg9[%219, %c0_58, %c0_59] : memref<16x8x32xf32, #tpu.memory_space<vmem>>, vector<1x8x32xf32>
    %221 = vector.shape_cast %220 : vector<1x8x32xf32> to vector<8x32xf32>
    %222 = vector.shape_cast %218 : vector<8x32xf32> to vector<1x8x32xf32>
    tpu.vector_store %arg9[%219, %c0_58, %c0_59], %222 {strides = array<i32>} : memref<16x8x32xf32, #tpu.memory_space<vmem>>, vector<1x8x32xf32>,
    %c6_i32 = arith.constant 6 : i32
    %223 = arith.index_cast %c6_i32 : i32 to index
    %c0_60 = arith.constant 0 : index
    %c0_61 = arith.constant 0 : index
    %224 = vector.load %arg8[%223, %c0_60, %c0_61] : memref<16x8x128xf32, #tpu.memory_space<vmem>>, vector<1x8x128xf32>
    %225 = vector.shape_cast %224 : vector<1x8x128xf32> to vector<8x128xf32>
    %226 = arith.truncf %218 : vector<8x32xf32> to vector<8x32xbf16>
    %cst_62 = arith.constant dense<0.000000e+00> : vector<8x128xf32>
    %227 = tpu.matmul %226, %11, %cst_62 {dimension_numbers = #tpu.dot_dimension_numbers<[1], [0], [0], [1], [0, 0, 1, 1], [], []>} : vector<8x32xbf16>, vector<32x128xbf16>, vector<8x128xf32> -> vector<8x128xf32>
    %228 = arith.addf %225, %227 : vector<8x128xf32>
    %229 = vector.extract_strided_slice %228 {offsets = [0, 0], sizes = [8, 32], strides = [1, 1]} : vector<8x128xf32> to vector<8x32xf32>
    %230 = arith.negf %229 : vector<8x32xf32>
    %231 = math.exp %230 : vector<8x32xf32>
    %cst_63 = arith.constant 1.000000e+00 : f32
    %232 = vector.broadcast %cst_63 : f32 to vector<8x32xf32>
    %233 = arith.addf %232, %231 : vector<8x32xf32>
    %234 = arith.divf %232, %233 : vector<8x32xf32>
    %235 = vector.extract_strided_slice %228 {offsets = [0, 32], sizes = [8, 32], strides = [1, 1]} : vector<8x128xf32> to vector<8x32xf32>
    %236 = arith.negf %235 : vector<8x32xf32>
    %237 = math.exp %236 : vector<8x32xf32>
    %cst_64 = arith.constant 1.000000e+00 : f32
    %238 = vector.broadcast %cst_64 : f32 to vector<8x32xf32>
    %239 = arith.addf %238, %237 : vector<8x32xf32>
    %240 = arith.divf %238, %239 : vector<8x32xf32>
    %241 = vector.extract_strided_slice %228 {offsets = [0, 64], sizes = [8, 32], strides = [1, 1]} : vector<8x128xf32> to vector<8x32xf32>
    %242 = math.tanh %241 : vector<8x32xf32>
    %243 = vector.extract_strided_slice %228 {offsets = [0, 96], sizes = [8, 32], strides = [1, 1]} : vector<8x128xf32> to vector<8x32xf32>
    %244 = arith.negf %243 : vector<8x32xf32>
    %245 = math.exp %244 : vector<8x32xf32>
    %cst_65 = arith.constant 1.000000e+00 : f32
    %246 = vector.broadcast %cst_65 : f32 to vector<8x32xf32>
    %247 = arith.addf %246, %245 : vector<8x32xf32>
    %248 = arith.divf %246, %247 : vector<8x32xf32>
    %249 = arith.mulf %240, %216 : vector<8x32xf32>
    %250 = arith.mulf %234, %242 : vector<8x32xf32>
    %251 = arith.addf %249, %250 : vector<8x32xf32>
    %252 = math.tanh %251 : vector<8x32xf32>
    %253 = arith.mulf %248, %252 : vector<8x32xf32>
    %254 = arith.index_cast %c6_i32 : i32 to index
    %c0_66 = arith.constant 0 : index
    %c0_67 = arith.constant 0 : index
    %255 = vector.load %arg9[%254, %c0_66, %c0_67] : memref<16x8x32xf32, #tpu.memory_space<vmem>>, vector<1x8x32xf32>
    %256 = vector.shape_cast %255 : vector<1x8x32xf32> to vector<8x32xf32>
    %257 = vector.shape_cast %253 : vector<8x32xf32> to vector<1x8x32xf32>
    tpu.vector_store %arg9[%254, %c0_66, %c0_67], %257 {strides = array<i32>} : memref<16x8x32xf32, #tpu.memory_space<vmem>>, vector<1x8x32xf32>,
    %c7_i32 = arith.constant 7 : i32
    %258 = arith.index_cast %c7_i32 : i32 to index
    %c0_68 = arith.constant 0 : index
    %c0_69 = arith.constant 0 : index
    %259 = vector.load %arg8[%258, %c0_68, %c0_69] : memref<16x8x128xf32, #tpu.memory_space<vmem>>, vector<1x8x128xf32>
    %260 = vector.shape_cast %259 : vector<1x8x128xf32> to vector<8x128xf32>
    %261 = arith.truncf %253 : vector<8x32xf32> to vector<8x32xbf16>
    %cst_70 = arith.constant dense<0.000000e+00> : vector<8x128xf32>
    %262 = tpu.matmul %261, %11, %cst_70 {dimension_numbers = #tpu.dot_dimension_numbers<[1], [0], [0], [1], [0, 0, 1, 1], [], []>} : vector<8x32xbf16>, vector<32x128xbf16>, vector<8x128xf32> -> vector<8x128xf32>
    %263 = arith.addf %260, %262 : vector<8x128xf32>
    %264 = vector.extract_strided_slice %263 {offsets = [0, 0], sizes = [8, 32], strides = [1, 1]} : vector<8x128xf32> to vector<8x32xf32>
    %265 = arith.negf %264 : vector<8x32xf32>
    %266 = math.exp %265 : vector<8x32xf32>
    %cst_71 = arith.constant 1.000000e+00 : f32
    %267 = vector.broadcast %cst_71 : f32 to vector<8x32xf32>
    %268 = arith.addf %267, %266 : vector<8x32xf32>
    %269 = arith.divf %267, %268 : vector<8x32xf32>
    %270 = vector.extract_strided_slice %263 {offsets = [0, 32], sizes = [8, 32], strides = [1, 1]} : vector<8x128xf32> to vector<8x32xf32>
    %271 = arith.negf %270 : vector<8x32xf32>
    %272 = math.exp %271 : vector<8x32xf32>
    %cst_72 = arith.constant 1.000000e+00 : f32
    %273 = vector.broadcast %cst_72 : f32 to vector<8x32xf32>
    %274 = arith.addf %273, %272 : vector<8x32xf32>
    %275 = arith.divf %273, %274 : vector<8x32xf32>
    %276 = vector.extract_strided_slice %263 {offsets = [0, 64], sizes = [8, 32], strides = [1, 1]} : vector<8x128xf32> to vector<8x32xf32>
    %277 = math.tanh %276 : vector<8x32xf32>
    %278 = vector.extract_strided_slice %263 {offsets = [0, 96], sizes = [8, 32], strides = [1, 1]} : vector<8x128xf32> to vector<8x32xf32>
    %279 = arith.negf %278 : vector<8x32xf32>
    %280 = math.exp %279 : vector<8x32xf32>
    %cst_73 = arith.constant 1.000000e+00 : f32
    %281 = vector.broadcast %cst_73 : f32 to vector<8x32xf32>
    %282 = arith.addf %281, %280 : vector<8x32xf32>
    %283 = arith.divf %281, %282 : vector<8x32xf32>
    %284 = arith.mulf %275, %251 : vector<8x32xf32>
    %285 = arith.mulf %269, %277 : vector<8x32xf32>
    %286 = arith.addf %284, %285 : vector<8x32xf32>
    %287 = math.tanh %286 : vector<8x32xf32>
    %288 = arith.mulf %283, %287 : vector<8x32xf32>
    %289 = arith.index_cast %c7_i32 : i32 to index
    %c0_74 = arith.constant 0 : index
    %c0_75 = arith.constant 0 : index
    %290 = vector.load %arg9[%289, %c0_74, %c0_75] : memref<16x8x32xf32, #tpu.memory_space<vmem>>, vector<1x8x32xf32>
    %291 = vector.shape_cast %290 : vector<1x8x32xf32> to vector<8x32xf32>
    %292 = vector.shape_cast %288 : vector<8x32xf32> to vector<1x8x32xf32>
    tpu.vector_store %arg9[%289, %c0_74, %c0_75], %292 {strides = array<i32>} : memref<16x8x32xf32, #tpu.memory_space<vmem>>, vector<1x8x32xf32>,
    %c8_i32 = arith.constant 8 : i32
    %293 = arith.index_cast %c8_i32 : i32 to index
    %c0_76 = arith.constant 0 : index
    %c0_77 = arith.constant 0 : index
    %294 = vector.load %arg8[%293, %c0_76, %c0_77] : memref<16x8x128xf32, #tpu.memory_space<vmem>>, vector<1x8x128xf32>
    %295 = vector.shape_cast %294 : vector<1x8x128xf32> to vector<8x128xf32>
    %296 = arith.truncf %288 : vector<8x32xf32> to vector<8x32xbf16>
    %cst_78 = arith.constant dense<0.000000e+00> : vector<8x128xf32>
    %297 = tpu.matmul %296, %11, %cst_78 {dimension_numbers = #tpu.dot_dimension_numbers<[1], [0], [0], [1], [0, 0, 1, 1], [], []>} : vector<8x32xbf16>, vector<32x128xbf16>, vector<8x128xf32> -> vector<8x128xf32>
    %298 = arith.addf %295, %297 : vector<8x128xf32>
    %299 = vector.extract_strided_slice %298 {offsets = [0, 0], sizes = [8, 32], strides = [1, 1]} : vector<8x128xf32> to vector<8x32xf32>
    %300 = arith.negf %299 : vector<8x32xf32>
    %301 = math.exp %300 : vector<8x32xf32>
    %cst_79 = arith.constant 1.000000e+00 : f32
    %302 = vector.broadcast %cst_79 : f32 to vector<8x32xf32>
    %303 = arith.addf %302, %301 : vector<8x32xf32>
    %304 = arith.divf %302, %303 : vector<8x32xf32>
    %305 = vector.extract_strided_slice %298 {offsets = [0, 32], sizes = [8, 32], strides = [1, 1]} : vector<8x128xf32> to vector<8x32xf32>
    %306 = arith.negf %305 : vector<8x32xf32>
    %307 = math.exp %306 : vector<8x32xf32>
    %cst_80 = arith.constant 1.000000e+00 : f32
    %308 = vector.broadcast %cst_80 : f32 to vector<8x32xf32>
    %309 = arith.addf %308, %307 : vector<8x32xf32>
    %310 = arith.divf %308, %309 : vector<8x32xf32>
    %311 = vector.extract_strided_slice %298 {offsets = [0, 64], sizes = [8, 32], strides = [1, 1]} : vector<8x128xf32> to vector<8x32xf32>
    %312 = math.tanh %311 : vector<8x32xf32>
    %313 = vector.extract_strided_slice %298 {offsets = [0, 96], sizes = [8, 32], strides = [1, 1]} : vector<8x128xf32> to vector<8x32xf32>
    %314 = arith.negf %313 : vector<8x32xf32>
    %315 = math.exp %314 : vector<8x32xf32>
    %cst_81 = arith.constant 1.000000e+00 : f32
    %316 = vector.broadcast %cst_81 : f32 to vector<8x32xf32>
    %317 = arith.addf %316, %315 : vector<8x32xf32>
    %318 = arith.divf %316, %317 : vector<8x32xf32>
    %319 = arith.mulf %310, %286 : vector<8x32xf32>
    %320 = arith.mulf %304, %312 : vector<8x32xf32>
    %321 = arith.addf %319, %320 : vector<8x32xf32>
    %322 = math.tanh %321 : vector<8x32xf32>
    %323 = arith.mulf %318, %322 : vector<8x32xf32>
    %324 = arith.index_cast %c8_i32 : i32 to index
    %c0_82 = arith.constant 0 : index
    %c0_83 = arith.constant 0 : index
    %325 = vector.load %arg9[%324, %c0_82, %c0_83] : memref<16x8x32xf32, #tpu.memory_space<vmem>>, vector<1x8x32xf32>
    %326 = vector.shape_cast %325 : vector<1x8x32xf32> to vector<8x32xf32>
    %327 = vector.shape_cast %323 : vector<8x32xf32> to vector<1x8x32xf32>
    tpu.vector_store %arg9[%324, %c0_82, %c0_83], %327 {strides = array<i32>} : memref<16x8x32xf32, #tpu.memory_space<vmem>>, vector<1x8x32xf32>,
    %c9_i32 = arith.constant 9 : i32
    %328 = arith.index_cast %c9_i32 : i32 to index
    %c0_84 = arith.constant 0 : index
    %c0_85 = arith.constant 0 : index
    %329 = vector.load %arg8[%328, %c0_84, %c0_85] : memref<16x8x128xf32, #tpu.memory_space<vmem>>, vector<1x8x128xf32>
    %330 = vector.shape_cast %329 : vector<1x8x128xf32> to vector<8x128xf32>
    %331 = arith.truncf %323 : vector<8x32xf32> to vector<8x32xbf16>
    %cst_86 = arith.constant dense<0.000000e+00> : vector<8x128xf32>
    %332 = tpu.matmul %331, %11, %cst_86 {dimension_numbers = #tpu.dot_dimension_numbers<[1], [0], [0], [1], [0, 0, 1, 1], [], []>} : vector<8x32xbf16>, vector<32x128xbf16>, vector<8x128xf32> -> vector<8x128xf32>
    %333 = arith.addf %330, %332 : vector<8x128xf32>
    %334 = vector.extract_strided_slice %333 {offsets = [0, 0], sizes = [8, 32], strides = [1, 1]} : vector<8x128xf32> to vector<8x32xf32>
    %335 = arith.negf %334 : vector<8x32xf32>
    %336 = math.exp %335 : vector<8x32xf32>
    %cst_87 = arith.constant 1.000000e+00 : f32
    %337 = vector.broadcast %cst_87 : f32 to vector<8x32xf32>
    %338 = arith.addf %337, %336 : vector<8x32xf32>
    %339 = arith.divf %337, %338 : vector<8x32xf32>
    %340 = vector.extract_strided_slice %333 {offsets = [0, 32], sizes = [8, 32], strides = [1, 1]} : vector<8x128xf32> to vector<8x32xf32>
    %341 = arith.negf %340 : vector<8x32xf32>
    %342 = math.exp %341 : vector<8x32xf32>
    %cst_88 = arith.constant 1.000000e+00 : f32
    %343 = vector.broadcast %cst_88 : f32 to vector<8x32xf32>
    %344 = arith.addf %343, %342 : vector<8x32xf32>
    %345 = arith.divf %343, %344 : vector<8x32xf32>
    %346 = vector.extract_strided_slice %333 {offsets = [0, 64], sizes = [8, 32], strides = [1, 1]} : vector<8x128xf32> to vector<8x32xf32>
    %347 = math.tanh %346 : vector<8x32xf32>
    %348 = vector.extract_strided_slice %333 {offsets = [0, 96], sizes = [8, 32], strides = [1, 1]} : vector<8x128xf32> to vector<8x32xf32>
    %349 = arith.negf %348 : vector<8x32xf32>
    %350 = math.exp %349 : vector<8x32xf32>
    %cst_89 = arith.constant 1.000000e+00 : f32
    %351 = vector.broadcast %cst_89 : f32 to vector<8x32xf32>
    %352 = arith.addf %351, %350 : vector<8x32xf32>
    %353 = arith.divf %351, %352 : vector<8x32xf32>
    %354 = arith.mulf %345, %321 : vector<8x32xf32>
    %355 = arith.mulf %339, %347 : vector<8x32xf32>
    %356 = arith.addf %354, %355 : vector<8x32xf32>
    %357 = math.tanh %356 : vector<8x32xf32>
    %358 = arith.mulf %353, %357 : vector<8x32xf32>
    %359 = arith.index_cast %c9_i32 : i32 to index
    %c0_90 = arith.constant 0 : index
    %c0_91 = arith.constant 0 : index
    %360 = vector.load %arg9[%359, %c0_90, %c0_91] : memref<16x8x32xf32, #tpu.memory_space<vmem>>, vector<1x8x32xf32>
    %361 = vector.shape_cast %360 : vector<1x8x32xf32> to vector<8x32xf32>
    %362 = vector.shape_cast %358 : vector<8x32xf32> to vector<1x8x32xf32>
    tpu.vector_store %arg9[%359, %c0_90, %c0_91], %362 {strides = array<i32>} : memref<16x8x32xf32, #tpu.memory_space<vmem>>, vector<1x8x32xf32>,
    %c10_i32 = arith.constant 10 : i32
    %363 = arith.index_cast %c10_i32 : i32 to index
    %c0_92 = arith.constant 0 : index
    %c0_93 = arith.constant 0 : index
    %364 = vector.load %arg8[%363, %c0_92, %c0_93] : memref<16x8x128xf32, #tpu.memory_space<vmem>>, vector<1x8x128xf32>
    %365 = vector.shape_cast %364 : vector<1x8x128xf32> to vector<8x128xf32>
    %366 = arith.truncf %358 : vector<8x32xf32> to vector<8x32xbf16>
    %cst_94 = arith.constant dense<0.000000e+00> : vector<8x128xf32>
    %367 = tpu.matmul %366, %11, %cst_94 {dimension_numbers = #tpu.dot_dimension_numbers<[1], [0], [0], [1], [0, 0, 1, 1], [], []>} : vector<8x32xbf16>, vector<32x128xbf16>, vector<8x128xf32> -> vector<8x128xf32>
    %368 = arith.addf %365, %367 : vector<8x128xf32>
    %369 = vector.extract_strided_slice %368 {offsets = [0, 0], sizes = [8, 32], strides = [1, 1]} : vector<8x128xf32> to vector<8x32xf32>
    %370 = arith.negf %369 : vector<8x32xf32>
    %371 = math.exp %370 : vector<8x32xf32>
    %cst_95 = arith.constant 1.000000e+00 : f32
    %372 = vector.broadcast %cst_95 : f32 to vector<8x32xf32>
    %373 = arith.addf %372, %371 : vector<8x32xf32>
    %374 = arith.divf %372, %373 : vector<8x32xf32>
    %375 = vector.extract_strided_slice %368 {offsets = [0, 32], sizes = [8, 32], strides = [1, 1]} : vector<8x128xf32> to vector<8x32xf32>
    %376 = arith.negf %375 : vector<8x32xf32>
    %377 = math.exp %376 : vector<8x32xf32>
    %cst_96 = arith.constant 1.000000e+00 : f32
    %378 = vector.broadcast %cst_96 : f32 to vector<8x32xf32>
    %379 = arith.addf %378, %377 : vector<8x32xf32>
    %380 = arith.divf %378, %379 : vector<8x32xf32>
    %381 = vector.extract_strided_slice %368 {offsets = [0, 64], sizes = [8, 32], strides = [1, 1]} : vector<8x128xf32> to vector<8x32xf32>
    %382 = math.tanh %381 : vector<8x32xf32>
    %383 = vector.extract_strided_slice %368 {offsets = [0, 96], sizes = [8, 32], strides = [1, 1]} : vector<8x128xf32> to vector<8x32xf32>
    %384 = arith.negf %383 : vector<8x32xf32>
    %385 = math.exp %384 : vector<8x32xf32>
    %cst_97 = arith.constant 1.000000e+00 : f32
    %386 = vector.broadcast %cst_97 : f32 to vector<8x32xf32>
    %387 = arith.addf %386, %385 : vector<8x32xf32>
    %388 = arith.divf %386, %387 : vector<8x32xf32>
    %389 = arith.mulf %380, %356 : vector<8x32xf32>
    %390 = arith.mulf %374, %382 : vector<8x32xf32>
    %391 = arith.addf %389, %390 : vector<8x32xf32>
    %392 = math.tanh %391 : vector<8x32xf32>
    %393 = arith.mulf %388, %392 : vector<8x32xf32>
    %394 = arith.index_cast %c10_i32 : i32 to index
    %c0_98 = arith.constant 0 : index
    %c0_99 = arith.constant 0 : index
    %395 = vector.load %arg9[%394, %c0_98, %c0_99] : memref<16x8x32xf32, #tpu.memory_space<vmem>>, vector<1x8x32xf32>
    %396 = vector.shape_cast %395 : vector<1x8x32xf32> to vector<8x32xf32>
    %397 = vector.shape_cast %393 : vector<8x32xf32> to vector<1x8x32xf32>
    tpu.vector_store %arg9[%394, %c0_98, %c0_99], %397 {strides = array<i32>} : memref<16x8x32xf32, #tpu.memory_space<vmem>>, vector<1x8x32xf32>,
    %c11_i32 = arith.constant 11 : i32
    %398 = arith.index_cast %c11_i32 : i32 to index
    %c0_100 = arith.constant 0 : index
    %c0_101 = arith.constant 0 : index
    %399 = vector.load %arg8[%398, %c0_100, %c0_101] : memref<16x8x128xf32, #tpu.memory_space<vmem>>, vector<1x8x128xf32>
    %400 = vector.shape_cast %399 : vector<1x8x128xf32> to vector<8x128xf32>
    %401 = arith.truncf %393 : vector<8x32xf32> to vector<8x32xbf16>
    %cst_102 = arith.constant dense<0.000000e+00> : vector<8x128xf32>
    %402 = tpu.matmul %401, %11, %cst_102 {dimension_numbers = #tpu.dot_dimension_numbers<[1], [0], [0], [1], [0, 0, 1, 1], [], []>} : vector<8x32xbf16>, vector<32x128xbf16>, vector<8x128xf32> -> vector<8x128xf32>
    %403 = arith.addf %400, %402 : vector<8x128xf32>
    %404 = vector.extract_strided_slice %403 {offsets = [0, 0], sizes = [8, 32], strides = [1, 1]} : vector<8x128xf32> to vector<8x32xf32>
    %405 = arith.negf %404 : vector<8x32xf32>
    %406 = math.exp %405 : vector<8x32xf32>
    %cst_103 = arith.constant 1.000000e+00 : f32
    %407 = vector.broadcast %cst_103 : f32 to vector<8x32xf32>
    %408 = arith.addf %407, %406 : vector<8x32xf32>
    %409 = arith.divf %407, %408 : vector<8x32xf32>
    %410 = vector.extract_strided_slice %403 {offsets = [0, 32], sizes = [8, 32], strides = [1, 1]} : vector<8x128xf32> to vector<8x32xf32>
    %411 = arith.negf %410 : vector<8x32xf32>
    %412 = math.exp %411 : vector<8x32xf32>
    %cst_104 = arith.constant 1.000000e+00 : f32
    %413 = vector.broadcast %cst_104 : f32 to vector<8x32xf32>
    %414 = arith.addf %413, %412 : vector<8x32xf32>
    %415 = arith.divf %413, %414 : vector<8x32xf32>
    %416 = vector.extract_strided_slice %403 {offsets = [0, 64], sizes = [8, 32], strides = [1, 1]} : vector<8x128xf32> to vector<8x32xf32>
    %417 = math.tanh %416 : vector<8x32xf32>
    %418 = vector.extract_strided_slice %403 {offsets = [0, 96], sizes = [8, 32], strides = [1, 1]} : vector<8x128xf32> to vector<8x32xf32>
    %419 = arith.negf %418 : vector<8x32xf32>
    %420 = math.exp %419 : vector<8x32xf32>
    %cst_105 = arith.constant 1.000000e+00 : f32
    %421 = vector.broadcast %cst_105 : f32 to vector<8x32xf32>
    %422 = arith.addf %421, %420 : vector<8x32xf32>
    %423 = arith.divf %421, %422 : vector<8x32xf32>
    %424 = arith.mulf %415, %391 : vector<8x32xf32>
    %425 = arith.mulf %409, %417 : vector<8x32xf32>
    %426 = arith.addf %424, %425 : vector<8x32xf32>
    %427 = math.tanh %426 : vector<8x32xf32>
    %428 = arith.mulf %423, %427 : vector<8x32xf32>
    %429 = arith.index_cast %c11_i32 : i32 to index
    %c0_106 = arith.constant 0 : index
    %c0_107 = arith.constant 0 : index
    %430 = vector.load %arg9[%429, %c0_106, %c0_107] : memref<16x8x32xf32, #tpu.memory_space<vmem>>, vector<1x8x32xf32>
    %431 = vector.shape_cast %430 : vector<1x8x32xf32> to vector<8x32xf32>
    %432 = vector.shape_cast %428 : vector<8x32xf32> to vector<1x8x32xf32>
    tpu.vector_store %arg9[%429, %c0_106, %c0_107], %432 {strides = array<i32>} : memref<16x8x32xf32, #tpu.memory_space<vmem>>, vector<1x8x32xf32>,
    %c12_i32 = arith.constant 12 : i32
    %433 = arith.index_cast %c12_i32 : i32 to index
    %c0_108 = arith.constant 0 : index
    %c0_109 = arith.constant 0 : index
    %434 = vector.load %arg8[%433, %c0_108, %c0_109] : memref<16x8x128xf32, #tpu.memory_space<vmem>>, vector<1x8x128xf32>
    %435 = vector.shape_cast %434 : vector<1x8x128xf32> to vector<8x128xf32>
    %436 = arith.truncf %428 : vector<8x32xf32> to vector<8x32xbf16>
    %cst_110 = arith.constant dense<0.000000e+00> : vector<8x128xf32>
    %437 = tpu.matmul %436, %11, %cst_110 {dimension_numbers = #tpu.dot_dimension_numbers<[1], [0], [0], [1], [0, 0, 1, 1], [], []>} : vector<8x32xbf16>, vector<32x128xbf16>, vector<8x128xf32> -> vector<8x128xf32>
    %438 = arith.addf %435, %437 : vector<8x128xf32>
    %439 = vector.extract_strided_slice %438 {offsets = [0, 0], sizes = [8, 32], strides = [1, 1]} : vector<8x128xf32> to vector<8x32xf32>
    %440 = arith.negf %439 : vector<8x32xf32>
    %441 = math.exp %440 : vector<8x32xf32>
    %cst_111 = arith.constant 1.000000e+00 : f32
    %442 = vector.broadcast %cst_111 : f32 to vector<8x32xf32>
    %443 = arith.addf %442, %441 : vector<8x32xf32>
    %444 = arith.divf %442, %443 : vector<8x32xf32>
    %445 = vector.extract_strided_slice %438 {offsets = [0, 32], sizes = [8, 32], strides = [1, 1]} : vector<8x128xf32> to vector<8x32xf32>
    %446 = arith.negf %445 : vector<8x32xf32>
    %447 = math.exp %446 : vector<8x32xf32>
    %cst_112 = arith.constant 1.000000e+00 : f32
    %448 = vector.broadcast %cst_112 : f32 to vector<8x32xf32>
    %449 = arith.addf %448, %447 : vector<8x32xf32>
    %450 = arith.divf %448, %449 : vector<8x32xf32>
    %451 = vector.extract_strided_slice %438 {offsets = [0, 64], sizes = [8, 32], strides = [1, 1]} : vector<8x128xf32> to vector<8x32xf32>
    %452 = math.tanh %451 : vector<8x32xf32>
    %453 = vector.extract_strided_slice %438 {offsets = [0, 96], sizes = [8, 32], strides = [1, 1]} : vector<8x128xf32> to vector<8x32xf32>
    %454 = arith.negf %453 : vector<8x32xf32>
    %455 = math.exp %454 : vector<8x32xf32>
    %cst_113 = arith.constant 1.000000e+00 : f32
    %456 = vector.broadcast %cst_113 : f32 to vector<8x32xf32>
    %457 = arith.addf %456, %455 : vector<8x32xf32>
    %458 = arith.divf %456, %457 : vector<8x32xf32>
    %459 = arith.mulf %450, %426 : vector<8x32xf32>
    %460 = arith.mulf %444, %452 : vector<8x32xf32>
    %461 = arith.addf %459, %460 : vector<8x32xf32>
    %462 = math.tanh %461 : vector<8x32xf32>
    %463 = arith.mulf %458, %462 : vector<8x32xf32>
    %464 = arith.index_cast %c12_i32 : i32 to index
    %c0_114 = arith.constant 0 : index
    %c0_115 = arith.constant 0 : index
    %465 = vector.load %arg9[%464, %c0_114, %c0_115] : memref<16x8x32xf32, #tpu.memory_space<vmem>>, vector<1x8x32xf32>
    %466 = vector.shape_cast %465 : vector<1x8x32xf32> to vector<8x32xf32>
    %467 = vector.shape_cast %463 : vector<8x32xf32> to vector<1x8x32xf32>
    tpu.vector_store %arg9[%464, %c0_114, %c0_115], %467 {strides = array<i32>} : memref<16x8x32xf32, #tpu.memory_space<vmem>>, vector<1x8x32xf32>,
    %c13_i32 = arith.constant 13 : i32
    %468 = arith.index_cast %c13_i32 : i32 to index
    %c0_116 = arith.constant 0 : index
    %c0_117 = arith.constant 0 : index
    %469 = vector.load %arg8[%468, %c0_116, %c0_117] : memref<16x8x128xf32, #tpu.memory_space<vmem>>, vector<1x8x128xf32>
    %470 = vector.shape_cast %469 : vector<1x8x128xf32> to vector<8x128xf32>
    %471 = arith.truncf %463 : vector<8x32xf32> to vector<8x32xbf16>
    %cst_118 = arith.constant dense<0.000000e+00> : vector<8x128xf32>
    %472 = tpu.matmul %471, %11, %cst_118 {dimension_numbers = #tpu.dot_dimension_numbers<[1], [0], [0], [1], [0, 0, 1, 1], [], []>} : vector<8x32xbf16>, vector<32x128xbf16>, vector<8x128xf32> -> vector<8x128xf32>
    %473 = arith.addf %470, %472 : vector<8x128xf32>
    %474 = vector.extract_strided_slice %473 {offsets = [0, 0], sizes = [8, 32], strides = [1, 1]} : vector<8x128xf32> to vector<8x32xf32>
    %475 = arith.negf %474 : vector<8x32xf32>
    %476 = math.exp %475 : vector<8x32xf32>
    %cst_119 = arith.constant 1.000000e+00 : f32
    %477 = vector.broadcast %cst_119 : f32 to vector<8x32xf32>
    %478 = arith.addf %477, %476 : vector<8x32xf32>
    %479 = arith.divf %477, %478 : vector<8x32xf32>
    %480 = vector.extract_strided_slice %473 {offsets = [0, 32], sizes = [8, 32], strides = [1, 1]} : vector<8x128xf32> to vector<8x32xf32>
    %481 = arith.negf %480 : vector<8x32xf32>
    %482 = math.exp %481 : vector<8x32xf32>
    %cst_120 = arith.constant 1.000000e+00 : f32
    %483 = vector.broadcast %cst_120 : f32 to vector<8x32xf32>
    %484 = arith.addf %483, %482 : vector<8x32xf32>
    %485 = arith.divf %483, %484 : vector<8x32xf32>
    %486 = vector.extract_strided_slice %473 {offsets = [0, 64], sizes = [8, 32], strides = [1, 1]} : vector<8x128xf32> to vector<8x32xf32>
    %487 = math.tanh %486 : vector<8x32xf32>
    %488 = vector.extract_strided_slice %473 {offsets = [0, 96], sizes = [8, 32], strides = [1, 1]} : vector<8x128xf32> to vector<8x32xf32>
    %489 = arith.negf %488 : vector<8x32xf32>
    %490 = math.exp %489 : vector<8x32xf32>
    %cst_121 = arith.constant 1.000000e+00 : f32
    %491 = vector.broadcast %cst_121 : f32 to vector<8x32xf32>
    %492 = arith.addf %491, %490 : vector<8x32xf32>
    %493 = arith.divf %491, %492 : vector<8x32xf32>
    %494 = arith.mulf %485, %461 : vector<8x32xf32>
    %495 = arith.mulf %479, %487 : vector<8x32xf32>
    %496 = arith.addf %494, %495 : vector<8x32xf32>
    %497 = math.tanh %496 : vector<8x32xf32>
    %498 = arith.mulf %493, %497 : vector<8x32xf32>
    %499 = arith.index_cast %c13_i32 : i32 to index
    %c0_122 = arith.constant 0 : index
    %c0_123 = arith.constant 0 : index
    %500 = vector.load %arg9[%499, %c0_122, %c0_123] : memref<16x8x32xf32, #tpu.memory_space<vmem>>, vector<1x8x32xf32>
    %501 = vector.shape_cast %500 : vector<1x8x32xf32> to vector<8x32xf32>
    %502 = vector.shape_cast %498 : vector<8x32xf32> to vector<1x8x32xf32>
    tpu.vector_store %arg9[%499, %c0_122, %c0_123], %502 {strides = array<i32>} : memref<16x8x32xf32, #tpu.memory_space<vmem>>, vector<1x8x32xf32>,
    %c14_i32 = arith.constant 14 : i32
    %503 = arith.index_cast %c14_i32 : i32 to index
    %c0_124 = arith.constant 0 : index
    %c0_125 = arith.constant 0 : index
    %504 = vector.load %arg8[%503, %c0_124, %c0_125] : memref<16x8x128xf32, #tpu.memory_space<vmem>>, vector<1x8x128xf32>
    %505 = vector.shape_cast %504 : vector<1x8x128xf32> to vector<8x128xf32>
    %506 = arith.truncf %498 : vector<8x32xf32> to vector<8x32xbf16>
    %cst_126 = arith.constant dense<0.000000e+00> : vector<8x128xf32>
    %507 = tpu.matmul %506, %11, %cst_126 {dimension_numbers = #tpu.dot_dimension_numbers<[1], [0], [0], [1], [0, 0, 1, 1], [], []>} : vector<8x32xbf16>, vector<32x128xbf16>, vector<8x128xf32> -> vector<8x128xf32>
    %508 = arith.addf %505, %507 : vector<8x128xf32>
    %509 = vector.extract_strided_slice %508 {offsets = [0, 0], sizes = [8, 32], strides = [1, 1]} : vector<8x128xf32> to vector<8x32xf32>
    %510 = arith.negf %509 : vector<8x32xf32>
    %511 = math.exp %510 : vector<8x32xf32>
    %cst_127 = arith.constant 1.000000e+00 : f32
    %512 = vector.broadcast %cst_127 : f32 to vector<8x32xf32>
    %513 = arith.addf %512, %511 : vector<8x32xf32>
    %514 = arith.divf %512, %513 : vector<8x32xf32>
    %515 = vector.extract_strided_slice %508 {offsets = [0, 32], sizes = [8, 32], strides = [1, 1]} : vector<8x128xf32> to vector<8x32xf32>
    %516 = arith.negf %515 : vector<8x32xf32>
    %517 = math.exp %516 : vector<8x32xf32>
    %cst_128 = arith.constant 1.000000e+00 : f32
    %518 = vector.broadcast %cst_128 : f32 to vector<8x32xf32>
    %519 = arith.addf %518, %517 : vector<8x32xf32>
    %520 = arith.divf %518, %519 : vector<8x32xf32>
    %521 = vector.extract_strided_slice %508 {offsets = [0, 64], sizes = [8, 32], strides = [1, 1]} : vector<8x128xf32> to vector<8x32xf32>
    %522 = math.tanh %521 : vector<8x32xf32>
    %523 = vector.extract_strided_slice %508 {offsets = [0, 96], sizes = [8, 32], strides = [1, 1]} : vector<8x128xf32> to vector<8x32xf32>
    %524 = arith.negf %523 : vector<8x32xf32>
    %525 = math.exp %524 : vector<8x32xf32>
    %cst_129 = arith.constant 1.000000e+00 : f32
    %526 = vector.broadcast %cst_129 : f32 to vector<8x32xf32>
    %527 = arith.addf %526, %525 : vector<8x32xf32>
    %528 = arith.divf %526, %527 : vector<8x32xf32>
    %529 = arith.mulf %520, %496 : vector<8x32xf32>
    %530 = arith.mulf %514, %522 : vector<8x32xf32>
    %531 = arith.addf %529, %530 : vector<8x32xf32>
    %532 = math.tanh %531 : vector<8x32xf32>
    %533 = arith.mulf %528, %532 : vector<8x32xf32>
    %534 = arith.index_cast %c14_i32 : i32 to index
    %c0_130 = arith.constant 0 : index
    %c0_131 = arith.constant 0 : index
    %535 = vector.load %arg9[%534, %c0_130, %c0_131] : memref<16x8x32xf32, #tpu.memory_space<vmem>>, vector<1x8x32xf32>
    %536 = vector.shape_cast %535 : vector<1x8x32xf32> to vector<8x32xf32>
    %537 = vector.shape_cast %533 : vector<8x32xf32> to vector<1x8x32xf32>
    tpu.vector_store %arg9[%534, %c0_130, %c0_131], %537 {strides = array<i32>} : memref<16x8x32xf32, #tpu.memory_space<vmem>>, vector<1x8x32xf32>,
    %c15_i32 = arith.constant 15 : i32
    %538 = arith.index_cast %c15_i32 : i32 to index
    %c0_132 = arith.constant 0 : index
    %c0_133 = arith.constant 0 : index
    %539 = vector.load %arg8[%538, %c0_132, %c0_133] : memref<16x8x128xf32, #tpu.memory_space<vmem>>, vector<1x8x128xf32>
    %540 = vector.shape_cast %539 : vector<1x8x128xf32> to vector<8x128xf32>
    %541 = arith.truncf %533 : vector<8x32xf32> to vector<8x32xbf16>
    %cst_134 = arith.constant dense<0.000000e+00> : vector<8x128xf32>
    %542 = tpu.matmul %541, %11, %cst_134 {dimension_numbers = #tpu.dot_dimension_numbers<[1], [0], [0], [1], [0, 0, 1, 1], [], []>} : vector<8x32xbf16>, vector<32x128xbf16>, vector<8x128xf32> -> vector<8x128xf32>
    %543 = arith.addf %540, %542 : vector<8x128xf32>
    %544 = vector.extract_strided_slice %543 {offsets = [0, 0], sizes = [8, 32], strides = [1, 1]} : vector<8x128xf32> to vector<8x32xf32>
    %545 = arith.negf %544 : vector<8x32xf32>
    %546 = math.exp %545 : vector<8x32xf32>
    %cst_135 = arith.constant 1.000000e+00 : f32
    %547 = vector.broadcast %cst_135 : f32 to vector<8x32xf32>
    %548 = arith.addf %547, %546 : vector<8x32xf32>
    %549 = arith.divf %547, %548 : vector<8x32xf32>
    %550 = vector.extract_strided_slice %543 {offsets = [0, 32], sizes = [8, 32], strides = [1, 1]} : vector<8x128xf32> to vector<8x32xf32>
    %551 = arith.negf %550 : vector<8x32xf32>
    %552 = math.exp %551 : vector<8x32xf32>
    %cst_136 = arith.constant 1.000000e+00 : f32
    %553 = vector.broadcast %cst_136 : f32 to vector<8x32xf32>
    %554 = arith.addf %553, %552 : vector<8x32xf32>
    %555 = arith.divf %553, %554 : vector<8x32xf32>
    %556 = vector.extract_strided_slice %543 {offsets = [0, 64], sizes = [8, 32], strides = [1, 1]} : vector<8x128xf32> to vector<8x32xf32>
    %557 = math.tanh %556 : vector<8x32xf32>
    %558 = vector.extract_strided_slice %543 {offsets = [0, 96], sizes = [8, 32], strides = [1, 1]} : vector<8x128xf32> to vector<8x32xf32>
    %559 = arith.negf %558 : vector<8x32xf32>
    %560 = math.exp %559 : vector<8x32xf32>
    %cst_137 = arith.constant 1.000000e+00 : f32
    %561 = vector.broadcast %cst_137 : f32 to vector<8x32xf32>
    %562 = arith.addf %561, %560 : vector<8x32xf32>
    %563 = arith.divf %561, %562 : vector<8x32xf32>
    %564 = arith.mulf %555, %531 : vector<8x32xf32>
    %565 = arith.mulf %549, %557 : vector<8x32xf32>
    %566 = arith.addf %564, %565 : vector<8x32xf32>
    %567 = math.tanh %566 : vector<8x32xf32>
    %568 = arith.mulf %563, %567 : vector<8x32xf32>
    %569 = arith.index_cast %c15_i32 : i32 to index
    %c0_138 = arith.constant 0 : index
    %c0_139 = arith.constant 0 : index
    %570 = vector.load %arg9[%569, %c0_138, %c0_139] : memref<16x8x32xf32, #tpu.memory_space<vmem>>, vector<1x8x32xf32>
    %571 = vector.shape_cast %570 : vector<1x8x32xf32> to vector<8x32xf32>
    %572 = vector.shape_cast %568 : vector<8x32xf32> to vector<1x8x32xf32>
    tpu.vector_store %arg9[%569, %c0_138, %c0_139], %572 {strides = array<i32>} : memref<16x8x32xf32, #tpu.memory_space<vmem>>, vector<1x8x32xf32>,
    %c16_i32 = arith.constant 16 : i32
    %c0_140 = arith.constant 0 : index
    %c0_141 = arith.constant 0 : index
    %c0_142 = arith.constant 0 : index
    %573 = vector.load %arg9[%c0_140, %c0_141, %c0_142] : memref<16x8x32xf32, #tpu.memory_space<vmem>>, vector<16x8x32xf32>
    %574 = vector.shape_cast %573 : vector<16x8x32xf32> to vector<128x32xf32>
    %575 = arith.truncf %574 : vector<128x32xf32> to vector<128x32xbf16>
    %c0_143 = arith.constant 0 : index
    %c0_144 = arith.constant 0 : index
    %576 = vector.load %arg5[%c0_143, %c0_144] : memref<32x32xbf16, #tpu.memory_space<vmem>>, vector<32x32xbf16>
    %cst_145 = arith.constant dense<0.000000e+00> : vector<128x32xf32>
    %577 = tpu.matmul %575, %576, %cst_145 {dimension_numbers = #tpu.dot_dimension_numbers<[1], [0], [0], [1], [0, 0, 1, 1], [], []>} : vector<128x32xbf16>, vector<32x32xbf16>, vector<128x32xf32> -> vector<128x32xf32>
    %578 = vector.shape_cast %577 : vector<128x32xf32> to vector<16x8x32xf32>
    %c0_146 = arith.constant 0 : index
    %c0_147 = arith.constant 0 : index
    %c0_148 = arith.constant 0 : index
    %579 = vector.load %arg1[%c0_146, %c0_147, %c0_148] : memref<16x8x32xf32, #tpu.memory_space<vmem>>, vector<16x8x32xf32>
    %580 = arith.addf %579, %578 : vector<16x8x32xf32>
    %c0_149 = arith.constant 0 : index
    %c0_150 = arith.constant 0 : index
    %581 = vector.load %arg6[%c0_149, %c0_150] : memref<1x32xf32, #tpu.memory_space<vmem>>, vector<1x32xf32>
    %582 = vector.shape_cast %581 : vector<1x32xf32> to vector<1x1x32xf32>
    %583 = vector.broadcast %582 : vector<1x1x32xf32> to vector<16x8x32xf32>
    %584 = arith.addf %580, %583 : vector<16x8x32xf32>
    %c0_151 = arith.constant 0 : index
    %c0_152 = arith.constant 0 : index
    %c0_153 = arith.constant 0 : index
    %585 = vector.load %arg7[%c0_151, %c0_152, %c0_153] : memref<16x8x32xf32, #tpu.memory_space<vmem>>, vector<16x8x32xf32>
    tpu.vector_store %arg7[%c0_151, %c0_152, %c0_153], %584 {strides = array<i32>} : memref<16x8x32xf32, #tpu.memory_space<vmem>>, vector<16x8x32xf32>,
    return
  }
  func.func @transform_0(%arg0: i32) -> (i32, i32, i32) {
    %c0_i32 = arith.constant 0 : i32
    %c0_i32_0 = arith.constant 0 : i32
    %c0_i32_1 = arith.constant 0 : i32
    %c0_i32_2 = arith.constant 0 : i32
    return %c0_i32, %c0_i32_0, %c0_i32_1 : i32, i32, i32
  }
  func.func @transform_1(%arg0: i32) -> (i32, i32) {
    %c0_i32 = arith.constant 0 : i32
    %c0_i32_0 = arith.constant 0 : i32
    %c0_i32_1 = arith.constant 0 : i32
    return %c0_i32, %c0_i32_0 : i32, i32
  }
  func.func @transform_2(%arg0: i32) -> (i32, i32) {
    %c0_i32 = arith.constant 0 : i32
    %c0_i32_0 = arith.constant 0 : i32
    %c0_i32_1 = arith.constant 0 : i32
    return %c0_i32, %c0_i32_0 : i32, i32
  }
  func.func @transform_3(%arg0: i32) -> (i32, i32) {
    %c0_i32 = arith.constant 0 : i32
    %c0_i32_0 = arith.constant 0 : i32
    %c0_i32_1 = arith.constant 0 : i32
    return %c0_i32, %c0_i32_0 : i32, i32
  }
  func.func @transform_4(%arg0: i32) -> (i32, i32) {
    %c0_i32 = arith.constant 0 : i32
    %c0_i32_0 = arith.constant 0 : i32
    %c0_i32_1 = arith.constant 0 : i32
    return %c0_i32, %c0_i32_0 : i32, i32
  }
  func.func @transform_5(%arg0: i32) -> (i32, i32) {
    %c0_i32 = arith.constant 0 : i32
    %c0_i32_0 = arith.constant 0 : i32
    %c0_i32_1 = arith.constant 0 : i32
    return %c0_i32, %c0_i32_0 : i32, i32
  }
  func.func @transform_6(%arg0: i32) -> (i32, i32, i32) {
    %c0_i32 = arith.constant 0 : i32
    %c0_i32_0 = arith.constant 0 : i32
    %c0_i32_1 = arith.constant 0 : i32
    %c0_i32_2 = arith.constant 0 : i32
    return %c0_i32, %c0_i32_0, %c0_i32_1 : i32, i32, i32
  }
}

module attributes {stable_mosaic.version = 11 : i64} {
  func.func @_fused_t_f_kernel(%arg0: i32, %arg1: i32, %arg2: memref<1x4x16x32xbf16, #tpu.memory_space<vmem>>, %arg3: memref<2x1x4x16x32xbf16, #tpu.memory_space<vmem>>, %arg4: memref<1x4x16x32xf32, #tpu.memory_space<vmem>>, %arg5: memref<1x4x16x32xf32, #tpu.memory_space<vmem>>, %arg6: memref<1x16x32xf32, #tpu.memory_space<vmem>>, %arg7: memref<96x32xbf16, #tpu.memory_space<vmem>>, %arg8: memref<1x32xf32, #tpu.memory_space<vmem>>, %arg9: memref<32x128xbf16, #tpu.memory_space<vmem>>, %arg10: memref<32x128xbf16, #tpu.memory_space<vmem>>, %arg11: memref<1x128xf32, #tpu.memory_space<vmem>>, %arg12: memref<32x32xbf16, #tpu.memory_space<vmem>>, %arg13: memref<1x32xf32, #tpu.memory_space<vmem>>, %arg14: memref<1x4x16x32xf32, #tpu.memory_space<vmem>>, %arg15: memref<1x4x16x32xf32, #tpu.memory_space<vmem>>, %arg16: memref<4x16x128xf32, #tpu.memory_space<vmem>>, %arg17: memref<4x16x32xf32, #tpu.memory_space<vmem>>) attributes {dimension_semantics = [#tpu.dimension_semantics<parallel>, #tpu.dimension_semantics<parallel>], iteration_bounds = array<i64: 2, 1>, scalar_prefetch = 0 : i64, scratch_operands = 2 : i64, tpu.core_type = #tpu.core_type<tc>, window_params = [{transform_indices = @transform_0, window_bounds = array<i64: 1, 4, 16, 32>}, {transform_indices = @transform_1, window_bounds = array<i64: 2, 1, 4, 16, 32>}, {transform_indices = @transform_2, window_bounds = array<i64: 1, 4, 16, 32>}, {transform_indices = @transform_3, window_bounds = array<i64: 1, 4, 16, 32>}, {transform_indices = @transform_4, window_bounds = array<i64: 1, 16, 32>}, {pipeline_mode = #tpu.pipeline_mode<synchronous>, transform_indices = @transform_5, window_bounds = array<i64: 96, 32>}, {pipeline_mode = #tpu.pipeline_mode<synchronous>, transform_indices = @transform_6, window_bounds = array<i64: 1, 32>}, {pipeline_mode = #tpu.pipeline_mode<synchronous>, transform_indices = @transform_7, window_bounds = array<i64: 32, 128>}, {pipeline_mode = #tpu.pipeline_mode<synchronous>, transform_indices = @transform_8, window_bounds = array<i64: 32, 128>}, {pipeline_mode = #tpu.pipeline_mode<synchronous>, transform_indices = @transform_9, window_bounds = array<i64: 1, 128>}, {pipeline_mode = #tpu.pipeline_mode<synchronous>, transform_indices = @transform_10, window_bounds = array<i64: 32, 32>}, {pipeline_mode = #tpu.pipeline_mode<synchronous>, transform_indices = @transform_11, window_bounds = array<i64: 1, 32>}, {transform_indices = @transform_12, window_bounds = array<i64: 1, 4, 16, 32>}, {transform_indices = @transform_13, window_bounds = array<i64: 1, 4, 16, 32>}]} {
    %c0 = arith.constant 0 : index
    %c0_0 = arith.constant 0 : index
    %c0_1 = arith.constant 0 : index
    %c0_2 = arith.constant 0 : index
    %0 = vector.load %arg2[%c0, %c0_0, %c0_1, %c0_2] : memref<1x4x16x32xbf16, #tpu.memory_space<vmem>>, vector<1x4x16x32xbf16>
    %1 = vector.shape_cast %0 : vector<1x4x16x32xbf16> to vector<4x16x32xbf16>
    %c0_3 = arith.constant 0 : index
    %c0_4 = arith.constant 0 : index
    %2 = vector.load %arg7[%c0_3, %c0_4] : memref<96x32xbf16, #tpu.memory_space<vmem>>, vector<32x32xbf16>
    %3 = vector.shape_cast %1 : vector<4x16x32xbf16> to vector<64x32xbf16>
    %cst = arith.constant dense<0.000000e+00> : vector<64x32xf32>
    %4 = tpu.matmul %3, %2, %cst {dimension_numbers = #tpu.dot_dimension_numbers<[1], [0], [0], [1], [0, 0, 1, 1], [], []>} : vector<64x32xbf16>, vector<32x32xbf16>, vector<64x32xf32> -> vector<64x32xf32>
    %5 = vector.shape_cast %4 : vector<64x32xf32> to vector<4x16x32xf32>
    %c0_5 = arith.constant 0 : index
    %c0_6 = arith.constant 0 : index
    %c0_7 = arith.constant 0 : index
    %c0_8 = arith.constant 0 : index
    %c0_9 = arith.constant 0 : index
    %6 = vector.load %arg3[%c0_5, %c0_6, %c0_7, %c0_8, %c0_9] : memref<2x1x4x16x32xbf16, #tpu.memory_space<vmem>>, vector<1x1x4x16x32xbf16>
    %7 = vector.shape_cast %6 : vector<1x1x4x16x32xbf16> to vector<4x16x32xbf16>
    %c32 = arith.constant 32 : index
    %c0_10 = arith.constant 0 : index
    %8 = vector.load %arg7[%c32, %c0_10] : memref<96x32xbf16, #tpu.memory_space<vmem>>, vector<32x32xbf16>
    %9 = vector.shape_cast %7 : vector<4x16x32xbf16> to vector<64x32xbf16>
    %cst_11 = arith.constant dense<0.000000e+00> : vector<64x32xf32>
    %10 = tpu.matmul %9, %8, %cst_11 {dimension_numbers = #tpu.dot_dimension_numbers<[1], [0], [0], [1], [0, 0, 1, 1], [], []>} : vector<64x32xbf16>, vector<32x32xbf16>, vector<64x32xf32> -> vector<64x32xf32>
    %11 = vector.shape_cast %10 : vector<64x32xf32> to vector<4x16x32xf32>
    %12 = arith.addf %5, %11 : vector<4x16x32xf32>
    %c1 = arith.constant 1 : index
    %c0_12 = arith.constant 0 : index
    %c0_13 = arith.constant 0 : index
    %c0_14 = arith.constant 0 : index
    %c0_15 = arith.constant 0 : index
    %13 = vector.load %arg3[%c1, %c0_12, %c0_13, %c0_14, %c0_15] : memref<2x1x4x16x32xbf16, #tpu.memory_space<vmem>>, vector<1x1x4x16x32xbf16>
    %14 = vector.shape_cast %13 : vector<1x1x4x16x32xbf16> to vector<4x16x32xbf16>
    %c64 = arith.constant 64 : index
    %c0_16 = arith.constant 0 : index
    %15 = vector.load %arg7[%c64, %c0_16] : memref<96x32xbf16, #tpu.memory_space<vmem>>, vector<32x32xbf16>
    %16 = vector.shape_cast %14 : vector<4x16x32xbf16> to vector<64x32xbf16>
    %cst_17 = arith.constant dense<0.000000e+00> : vector<64x32xf32>
    %17 = tpu.matmul %16, %15, %cst_17 {dimension_numbers = #tpu.dot_dimension_numbers<[1], [0], [0], [1], [0, 0, 1, 1], [], []>} : vector<64x32xbf16>, vector<32x32xbf16>, vector<64x32xf32> -> vector<64x32xf32>
    %18 = vector.shape_cast %17 : vector<64x32xf32> to vector<4x16x32xf32>
    %19 = arith.addf %12, %18 : vector<4x16x32xf32>
    %c0_18 = arith.constant 0 : index
    %c0_19 = arith.constant 0 : index
    %c0_20 = arith.constant 0 : index
    %c0_21 = arith.constant 0 : index
    %20 = vector.load %arg4[%c0_18, %c0_19, %c0_20, %c0_21] : memref<1x4x16x32xf32, #tpu.memory_space<vmem>>, vector<1x4x16x32xf32>
    %21 = vector.shape_cast %20 : vector<1x4x16x32xf32> to vector<4x16x32xf32>
    %22 = arith.addf %21, %19 : vector<4x16x32xf32>
    %c0_22 = arith.constant 0 : index
    %c0_23 = arith.constant 0 : index
    %23 = vector.load %arg8[%c0_22, %c0_23] : memref<1x32xf32, #tpu.memory_space<vmem>>, vector<1x32xf32>
    %24 = vector.shape_cast %23 : vector<1x32xf32> to vector<1x1x32xf32>
    %25 = vector.broadcast %24 : vector<1x1x32xf32> to vector<4x16x32xf32>
    %26 = arith.addf %22, %25 : vector<4x16x32xf32>
    %c0_24 = arith.constant 0 : index
    %c0_25 = arith.constant 0 : index
    %c0_26 = arith.constant 0 : index
    %c0_27 = arith.constant 0 : index
    %27 = vector.load %arg14[%c0_24, %c0_25, %c0_26, %c0_27] : memref<1x4x16x32xf32, #tpu.memory_space<vmem>>, vector<1x4x16x32xf32>
    %28 = vector.shape_cast %27 : vector<1x4x16x32xf32> to vector<4x16x32xf32>
    %29 = vector.shape_cast %26 : vector<4x16x32xf32> to vector<1x4x16x32xf32>
    tpu.vector_store %arg14[%c0_24, %c0_25, %c0_26, %c0_27], %29 {strides = array<i32>} : memref<1x4x16x32xf32, #tpu.memory_space<vmem>>, vector<1x4x16x32xf32>,
    %c0_28 = arith.constant 0 : index
    %c0_29 = arith.constant 0 : index
    %c0_30 = arith.constant 0 : index
    %c0_31 = arith.constant 0 : index
    %30 = vector.load %arg5[%c0_28, %c0_29, %c0_30, %c0_31] : memref<1x4x16x32xf32, #tpu.memory_space<vmem>>, vector<1x4x16x32xf32>
    %31 = vector.shape_cast %30 : vector<1x4x16x32xf32> to vector<4x16x32xf32>
    %32 = arith.addf %26, %31 : vector<4x16x32xf32>
    %c0_32 = arith.constant 0 : index
    %c0_33 = arith.constant 0 : index
    %c0_34 = arith.constant 0 : index
    %33 = vector.load %arg6[%c0_32, %c0_33, %c0_34] : memref<1x16x32xf32, #tpu.memory_space<vmem>>, vector<1x16x32xf32>
    %34 = vector.shape_cast %33 : vector<1x16x32xf32> to vector<16x32xf32>
    %35 = vector.shape_cast %34 : vector<16x32xf32> to vector<1x16x32xf32>
    %36 = vector.broadcast %35 : vector<1x16x32xf32> to vector<4x16x32xf32>
    %37 = arith.addf %32, %36 : vector<4x16x32xf32>
    %38 = vector.shape_cast %37 : vector<4x16x32xf32> to vector<64x32xf32>
    %39 = arith.truncf %38 : vector<64x32xf32> to vector<64x32xbf16>
    %c0_35 = arith.constant 0 : index
    %c0_36 = arith.constant 0 : index
    %40 = vector.load %arg9[%c0_35, %c0_36] : memref<32x128xbf16, #tpu.memory_space<vmem>>, vector<32x128xbf16>
    %cst_37 = arith.constant dense<0.000000e+00> : vector<64x128xf32>
    %41 = tpu.matmul %39, %40, %cst_37 {dimension_numbers = #tpu.dot_dimension_numbers<[1], [0], [0], [1], [0, 0, 1, 1], [], []>} : vector<64x32xbf16>, vector<32x128xbf16>, vector<64x128xf32> -> vector<64x128xf32>
    %42 = vector.shape_cast %41 : vector<64x128xf32> to vector<4x16x128xf32>
    %c0_38 = arith.constant 0 : index
    %c0_39 = arith.constant 0 : index
    %43 = vector.load %arg11[%c0_38, %c0_39] : memref<1x128xf32, #tpu.memory_space<vmem>>, vector<1x128xf32>
    %44 = vector.shape_cast %43 : vector<1x128xf32> to vector<1x1x128xf32>
    %45 = vector.broadcast %44 : vector<1x1x128xf32> to vector<4x16x128xf32>
    %46 = arith.addf %42, %45 : vector<4x16x128xf32>
    %c0_40 = arith.constant 0 : index
    %c0_41 = arith.constant 0 : index
    %c0_42 = arith.constant 0 : index
    %47 = vector.load %arg16[%c0_40, %c0_41, %c0_42] : memref<4x16x128xf32, #tpu.memory_space<vmem>>, vector<4x16x128xf32>
    tpu.vector_store %arg16[%c0_40, %c0_41, %c0_42], %46 {strides = array<i32>} : memref<4x16x128xf32, #tpu.memory_space<vmem>>, vector<4x16x128xf32>,
    %c0_43 = arith.constant 0 : index
    %c0_44 = arith.constant 0 : index
    %48 = vector.load %arg10[%c0_43, %c0_44] : memref<32x128xbf16, #tpu.memory_space<vmem>>, vector<32x128xbf16>
    %cst_45 = arith.constant 0.000000e+00 : f32
    %49 = vector.broadcast %cst_45 : f32 to vector<16x32xf32>
    %c0_i32 = arith.constant 0 : i32
    %50 = arith.index_cast %c0_i32 : i32 to index
    %c0_46 = arith.constant 0 : index
    %c0_47 = arith.constant 0 : index
    %51 = vector.load %arg16[%50, %c0_46, %c0_47] : memref<4x16x128xf32, #tpu.memory_space<vmem>>, vector<1x16x128xf32>
    %52 = vector.shape_cast %51 : vector<1x16x128xf32> to vector<16x128xf32>
    %53 = arith.truncf %49 : vector<16x32xf32> to vector<16x32xbf16>
    %cst_48 = arith.constant dense<0.000000e+00> : vector<16x128xf32>
    %54 = tpu.matmul %53, %48, %cst_48 {dimension_numbers = #tpu.dot_dimension_numbers<[1], [0], [0], [1], [0, 0, 1, 1], [], []>} : vector<16x32xbf16>, vector<32x128xbf16>, vector<16x128xf32> -> vector<16x128xf32>
    %55 = arith.addf %52, %54 : vector<16x128xf32>
    %56 = vector.extract_strided_slice %55 {offsets = [0, 0], sizes = [16, 32], strides = [1, 1]} : vector<16x128xf32> to vector<16x32xf32>
    %57 = arith.negf %56 : vector<16x32xf32>
    %58 = math.exp %57 : vector<16x32xf32>
    %cst_49 = arith.constant 1.000000e+00 : f32
    %59 = vector.broadcast %cst_49 : f32 to vector<16x32xf32>
    %60 = arith.addf %59, %58 : vector<16x32xf32>
    %61 = arith.divf %59, %60 : vector<16x32xf32>
    %62 = vector.extract_strided_slice %55 {offsets = [0, 32], sizes = [16, 32], strides = [1, 1]} : vector<16x128xf32> to vector<16x32xf32>
    %63 = arith.negf %62 : vector<16x32xf32>
    %64 = math.exp %63 : vector<16x32xf32>
    %cst_50 = arith.constant 1.000000e+00 : f32
    %65 = vector.broadcast %cst_50 : f32 to vector<16x32xf32>
    %66 = arith.addf %65, %64 : vector<16x32xf32>
    %67 = arith.divf %65, %66 : vector<16x32xf32>
    %68 = vector.extract_strided_slice %55 {offsets = [0, 64], sizes = [16, 32], strides = [1, 1]} : vector<16x128xf32> to vector<16x32xf32>
    %69 = math.tanh %68 : vector<16x32xf32>
    %70 = vector.extract_strided_slice %55 {offsets = [0, 96], sizes = [16, 32], strides = [1, 1]} : vector<16x128xf32> to vector<16x32xf32>
    %71 = arith.negf %70 : vector<16x32xf32>
    %72 = math.exp %71 : vector<16x32xf32>
    %cst_51 = arith.constant 1.000000e+00 : f32
    %73 = vector.broadcast %cst_51 : f32 to vector<16x32xf32>
    %74 = arith.addf %73, %72 : vector<16x32xf32>
    %75 = arith.divf %73, %74 : vector<16x32xf32>
    %76 = arith.mulf %67, %49 : vector<16x32xf32>
    %77 = arith.mulf %61, %69 : vector<16x32xf32>
    %78 = arith.addf %76, %77 : vector<16x32xf32>
    %79 = math.tanh %78 : vector<16x32xf32>
    %80 = arith.mulf %75, %79 : vector<16x32xf32>
    %81 = arith.index_cast %c0_i32 : i32 to index
    %c0_52 = arith.constant 0 : index
    %c0_53 = arith.constant 0 : index
    %82 = vector.load %arg17[%81, %c0_52, %c0_53] : memref<4x16x32xf32, #tpu.memory_space<vmem>>, vector<1x16x32xf32>
    %83 = vector.shape_cast %82 : vector<1x16x32xf32> to vector<16x32xf32>
    %84 = vector.shape_cast %80 : vector<16x32xf32> to vector<1x16x32xf32>
    tpu.vector_store %arg17[%81, %c0_52, %c0_53], %84 {strides = array<i32>} : memref<4x16x32xf32, #tpu.memory_space<vmem>>, vector<1x16x32xf32>,
    %c1_i32 = arith.constant 1 : i32
    %85 = arith.index_cast %c1_i32 : i32 to index
    %c0_54 = arith.constant 0 : index
    %c0_55 = arith.constant 0 : index
    %86 = vector.load %arg16[%85, %c0_54, %c0_55] : memref<4x16x128xf32, #tpu.memory_space<vmem>>, vector<1x16x128xf32>
    %87 = vector.shape_cast %86 : vector<1x16x128xf32> to vector<16x128xf32>
    %88 = arith.truncf %80 : vector<16x32xf32> to vector<16x32xbf16>
    %cst_56 = arith.constant dense<0.000000e+00> : vector<16x128xf32>
    %89 = tpu.matmul %88, %48, %cst_56 {dimension_numbers = #tpu.dot_dimension_numbers<[1], [0], [0], [1], [0, 0, 1, 1], [], []>} : vector<16x32xbf16>, vector<32x128xbf16>, vector<16x128xf32> -> vector<16x128xf32>
    %90 = arith.addf %87, %89 : vector<16x128xf32>
    %91 = vector.extract_strided_slice %90 {offsets = [0, 0], sizes = [16, 32], strides = [1, 1]} : vector<16x128xf32> to vector<16x32xf32>
    %92 = arith.negf %91 : vector<16x32xf32>
    %93 = math.exp %92 : vector<16x32xf32>
    %cst_57 = arith.constant 1.000000e+00 : f32
    %94 = vector.broadcast %cst_57 : f32 to vector<16x32xf32>
    %95 = arith.addf %94, %93 : vector<16x32xf32>
    %96 = arith.divf %94, %95 : vector<16x32xf32>
    %97 = vector.extract_strided_slice %90 {offsets = [0, 32], sizes = [16, 32], strides = [1, 1]} : vector<16x128xf32> to vector<16x32xf32>
    %98 = arith.negf %97 : vector<16x32xf32>
    %99 = math.exp %98 : vector<16x32xf32>
    %cst_58 = arith.constant 1.000000e+00 : f32
    %100 = vector.broadcast %cst_58 : f32 to vector<16x32xf32>
    %101 = arith.addf %100, %99 : vector<16x32xf32>
    %102 = arith.divf %100, %101 : vector<16x32xf32>
    %103 = vector.extract_strided_slice %90 {offsets = [0, 64], sizes = [16, 32], strides = [1, 1]} : vector<16x128xf32> to vector<16x32xf32>
    %104 = math.tanh %103 : vector<16x32xf32>
    %105 = vector.extract_strided_slice %90 {offsets = [0, 96], sizes = [16, 32], strides = [1, 1]} : vector<16x128xf32> to vector<16x32xf32>
    %106 = arith.negf %105 : vector<16x32xf32>
    %107 = math.exp %106 : vector<16x32xf32>
    %cst_59 = arith.constant 1.000000e+00 : f32
    %108 = vector.broadcast %cst_59 : f32 to vector<16x32xf32>
    %109 = arith.addf %108, %107 : vector<16x32xf32>
    %110 = arith.divf %108, %109 : vector<16x32xf32>
    %111 = arith.mulf %102, %78 : vector<16x32xf32>
    %112 = arith.mulf %96, %104 : vector<16x32xf32>
    %113 = arith.addf %111, %112 : vector<16x32xf32>
    %114 = math.tanh %113 : vector<16x32xf32>
    %115 = arith.mulf %110, %114 : vector<16x32xf32>
    %116 = arith.index_cast %c1_i32 : i32 to index
    %c0_60 = arith.constant 0 : index
    %c0_61 = arith.constant 0 : index
    %117 = vector.load %arg17[%116, %c0_60, %c0_61] : memref<4x16x32xf32, #tpu.memory_space<vmem>>, vector<1x16x32xf32>
    %118 = vector.shape_cast %117 : vector<1x16x32xf32> to vector<16x32xf32>
    %119 = vector.shape_cast %115 : vector<16x32xf32> to vector<1x16x32xf32>
    tpu.vector_store %arg17[%116, %c0_60, %c0_61], %119 {strides = array<i32>} : memref<4x16x32xf32, #tpu.memory_space<vmem>>, vector<1x16x32xf32>,
    %c2_i32 = arith.constant 2 : i32
    %120 = arith.index_cast %c2_i32 : i32 to index
    %c0_62 = arith.constant 0 : index
    %c0_63 = arith.constant 0 : index
    %121 = vector.load %arg16[%120, %c0_62, %c0_63] : memref<4x16x128xf32, #tpu.memory_space<vmem>>, vector<1x16x128xf32>
    %122 = vector.shape_cast %121 : vector<1x16x128xf32> to vector<16x128xf32>
    %123 = arith.truncf %115 : vector<16x32xf32> to vector<16x32xbf16>
    %cst_64 = arith.constant dense<0.000000e+00> : vector<16x128xf32>
    %124 = tpu.matmul %123, %48, %cst_64 {dimension_numbers = #tpu.dot_dimension_numbers<[1], [0], [0], [1], [0, 0, 1, 1], [], []>} : vector<16x32xbf16>, vector<32x128xbf16>, vector<16x128xf32> -> vector<16x128xf32>
    %125 = arith.addf %122, %124 : vector<16x128xf32>
    %126 = vector.extract_strided_slice %125 {offsets = [0, 0], sizes = [16, 32], strides = [1, 1]} : vector<16x128xf32> to vector<16x32xf32>
    %127 = arith.negf %126 : vector<16x32xf32>
    %128 = math.exp %127 : vector<16x32xf32>
    %cst_65 = arith.constant 1.000000e+00 : f32
    %129 = vector.broadcast %cst_65 : f32 to vector<16x32xf32>
    %130 = arith.addf %129, %128 : vector<16x32xf32>
    %131 = arith.divf %129, %130 : vector<16x32xf32>
    %132 = vector.extract_strided_slice %125 {offsets = [0, 32], sizes = [16, 32], strides = [1, 1]} : vector<16x128xf32> to vector<16x32xf32>
    %133 = arith.negf %132 : vector<16x32xf32>
    %134 = math.exp %133 : vector<16x32xf32>
    %cst_66 = arith.constant 1.000000e+00 : f32
    %135 = vector.broadcast %cst_66 : f32 to vector<16x32xf32>
    %136 = arith.addf %135, %134 : vector<16x32xf32>
    %137 = arith.divf %135, %136 : vector<16x32xf32>
    %138 = vector.extract_strided_slice %125 {offsets = [0, 64], sizes = [16, 32], strides = [1, 1]} : vector<16x128xf32> to vector<16x32xf32>
    %139 = math.tanh %138 : vector<16x32xf32>
    %140 = vector.extract_strided_slice %125 {offsets = [0, 96], sizes = [16, 32], strides = [1, 1]} : vector<16x128xf32> to vector<16x32xf32>
    %141 = arith.negf %140 : vector<16x32xf32>
    %142 = math.exp %141 : vector<16x32xf32>
    %cst_67 = arith.constant 1.000000e+00 : f32
    %143 = vector.broadcast %cst_67 : f32 to vector<16x32xf32>
    %144 = arith.addf %143, %142 : vector<16x32xf32>
    %145 = arith.divf %143, %144 : vector<16x32xf32>
    %146 = arith.mulf %137, %113 : vector<16x32xf32>
    %147 = arith.mulf %131, %139 : vector<16x32xf32>
    %148 = arith.addf %146, %147 : vector<16x32xf32>
    %149 = math.tanh %148 : vector<16x32xf32>
    %150 = arith.mulf %145, %149 : vector<16x32xf32>
    %151 = arith.index_cast %c2_i32 : i32 to index
    %c0_68 = arith.constant 0 : index
    %c0_69 = arith.constant 0 : index
    %152 = vector.load %arg17[%151, %c0_68, %c0_69] : memref<4x16x32xf32, #tpu.memory_space<vmem>>, vector<1x16x32xf32>
    %153 = vector.shape_cast %152 : vector<1x16x32xf32> to vector<16x32xf32>
    %154 = vector.shape_cast %150 : vector<16x32xf32> to vector<1x16x32xf32>
    tpu.vector_store %arg17[%151, %c0_68, %c0_69], %154 {strides = array<i32>} : memref<4x16x32xf32, #tpu.memory_space<vmem>>, vector<1x16x32xf32>,
    %c3_i32 = arith.constant 3 : i32
    %155 = arith.index_cast %c3_i32 : i32 to index
    %c0_70 = arith.constant 0 : index
    %c0_71 = arith.constant 0 : index
    %156 = vector.load %arg16[%155, %c0_70, %c0_71] : memref<4x16x128xf32, #tpu.memory_space<vmem>>, vector<1x16x128xf32>
    %157 = vector.shape_cast %156 : vector<1x16x128xf32> to vector<16x128xf32>
    %158 = arith.truncf %150 : vector<16x32xf32> to vector<16x32xbf16>
    %cst_72 = arith.constant dense<0.000000e+00> : vector<16x128xf32>
    %159 = tpu.matmul %158, %48, %cst_72 {dimension_numbers = #tpu.dot_dimension_numbers<[1], [0], [0], [1], [0, 0, 1, 1], [], []>} : vector<16x32xbf16>, vector<32x128xbf16>, vector<16x128xf32> -> vector<16x128xf32>
    %160 = arith.addf %157, %159 : vector<16x128xf32>
    %161 = vector.extract_strided_slice %160 {offsets = [0, 0], sizes = [16, 32], strides = [1, 1]} : vector<16x128xf32> to vector<16x32xf32>
    %162 = arith.negf %161 : vector<16x32xf32>
    %163 = math.exp %162 : vector<16x32xf32>
    %cst_73 = arith.constant 1.000000e+00 : f32
    %164 = vector.broadcast %cst_73 : f32 to vector<16x32xf32>
    %165 = arith.addf %164, %163 : vector<16x32xf32>
    %166 = arith.divf %164, %165 : vector<16x32xf32>
    %167 = vector.extract_strided_slice %160 {offsets = [0, 32], sizes = [16, 32], strides = [1, 1]} : vector<16x128xf32> to vector<16x32xf32>
    %168 = arith.negf %167 : vector<16x32xf32>
    %169 = math.exp %168 : vector<16x32xf32>
    %cst_74 = arith.constant 1.000000e+00 : f32
    %170 = vector.broadcast %cst_74 : f32 to vector<16x32xf32>
    %171 = arith.addf %170, %169 : vector<16x32xf32>
    %172 = arith.divf %170, %171 : vector<16x32xf32>
    %173 = vector.extract_strided_slice %160 {offsets = [0, 64], sizes = [16, 32], strides = [1, 1]} : vector<16x128xf32> to vector<16x32xf32>
    %174 = math.tanh %173 : vector<16x32xf32>
    %175 = vector.extract_strided_slice %160 {offsets = [0, 96], sizes = [16, 32], strides = [1, 1]} : vector<16x128xf32> to vector<16x32xf32>
    %176 = arith.negf %175 : vector<16x32xf32>
    %177 = math.exp %176 : vector<16x32xf32>
    %cst_75 = arith.constant 1.000000e+00 : f32
    %178 = vector.broadcast %cst_75 : f32 to vector<16x32xf32>
    %179 = arith.addf %178, %177 : vector<16x32xf32>
    %180 = arith.divf %178, %179 : vector<16x32xf32>
    %181 = arith.mulf %172, %148 : vector<16x32xf32>
    %182 = arith.mulf %166, %174 : vector<16x32xf32>
    %183 = arith.addf %181, %182 : vector<16x32xf32>
    %184 = math.tanh %183 : vector<16x32xf32>
    %185 = arith.mulf %180, %184 : vector<16x32xf32>
    %186 = arith.index_cast %c3_i32 : i32 to index
    %c0_76 = arith.constant 0 : index
    %c0_77 = arith.constant 0 : index
    %187 = vector.load %arg17[%186, %c0_76, %c0_77] : memref<4x16x32xf32, #tpu.memory_space<vmem>>, vector<1x16x32xf32>
    %188 = vector.shape_cast %187 : vector<1x16x32xf32> to vector<16x32xf32>
    %189 = vector.shape_cast %185 : vector<16x32xf32> to vector<1x16x32xf32>
    tpu.vector_store %arg17[%186, %c0_76, %c0_77], %189 {strides = array<i32>} : memref<4x16x32xf32, #tpu.memory_space<vmem>>, vector<1x16x32xf32>,
    %c4_i32 = arith.constant 4 : i32
    %c0_78 = arith.constant 0 : index
    %c0_79 = arith.constant 0 : index
    %c0_80 = arith.constant 0 : index
    %190 = vector.load %arg17[%c0_78, %c0_79, %c0_80] : memref<4x16x32xf32, #tpu.memory_space<vmem>>, vector<4x16x32xf32>
    %191 = vector.shape_cast %190 : vector<4x16x32xf32> to vector<64x32xf32>
    %192 = arith.truncf %191 : vector<64x32xf32> to vector<64x32xbf16>
    %c0_81 = arith.constant 0 : index
    %c0_82 = arith.constant 0 : index
    %193 = vector.load %arg12[%c0_81, %c0_82] : memref<32x32xbf16, #tpu.memory_space<vmem>>, vector<32x32xbf16>
    %cst_83 = arith.constant dense<0.000000e+00> : vector<64x32xf32>
    %194 = tpu.matmul %192, %193, %cst_83 {dimension_numbers = #tpu.dot_dimension_numbers<[1], [0], [0], [1], [0, 0, 1, 1], [], []>} : vector<64x32xbf16>, vector<32x32xbf16>, vector<64x32xf32> -> vector<64x32xf32>
    %195 = vector.shape_cast %194 : vector<64x32xf32> to vector<4x16x32xf32>
    %c0_84 = arith.constant 0 : index
    %c0_85 = arith.constant 0 : index
    %c0_86 = arith.constant 0 : index
    %c0_87 = arith.constant 0 : index
    %196 = vector.load %arg5[%c0_84, %c0_85, %c0_86, %c0_87] : memref<1x4x16x32xf32, #tpu.memory_space<vmem>>, vector<1x4x16x32xf32>
    %197 = vector.shape_cast %196 : vector<1x4x16x32xf32> to vector<4x16x32xf32>
    %198 = arith.addf %197, %195 : vector<4x16x32xf32>
    %c0_88 = arith.constant 0 : index
    %c0_89 = arith.constant 0 : index
    %199 = vector.load %arg13[%c0_88, %c0_89] : memref<1x32xf32, #tpu.memory_space<vmem>>, vector<1x32xf32>
    %200 = vector.shape_cast %199 : vector<1x32xf32> to vector<1x1x32xf32>
    %201 = vector.broadcast %200 : vector<1x1x32xf32> to vector<4x16x32xf32>
    %202 = arith.addf %198, %201 : vector<4x16x32xf32>
    %c0_90 = arith.constant 0 : index
    %c0_91 = arith.constant 0 : index
    %c0_92 = arith.constant 0 : index
    %c0_93 = arith.constant 0 : index
    %203 = vector.load %arg15[%c0_90, %c0_91, %c0_92, %c0_93] : memref<1x4x16x32xf32, #tpu.memory_space<vmem>>, vector<1x4x16x32xf32>
    %204 = vector.shape_cast %203 : vector<1x4x16x32xf32> to vector<4x16x32xf32>
    %205 = vector.shape_cast %202 : vector<4x16x32xf32> to vector<1x4x16x32xf32>
    tpu.vector_store %arg15[%c0_90, %c0_91, %c0_92, %c0_93], %205 {strides = array<i32>} : memref<1x4x16x32xf32, #tpu.memory_space<vmem>>, vector<1x4x16x32xf32>,
    return
  }
  func.func @transform_0(%arg0: i32, %arg1: i32) -> (i32, i32, i32, i32) {
    %c0_i32 = arith.constant 0 : i32
    %c0_i32_0 = arith.constant 0 : i32
    %c0_i32_1 = arith.constant 0 : i32
    return %arg0, %c0_i32, %arg1, %c0_i32_0 : i32, i32, i32, i32
  }
  func.func @transform_1(%arg0: i32, %arg1: i32) -> (i32, i32, i32, i32, i32) {
    %c0_i32 = arith.constant 0 : i32
    %c0_i32_0 = arith.constant 0 : i32
    %c0_i32_1 = arith.constant 0 : i32
    %c0_i32_2 = arith.constant 0 : i32
    return %c0_i32, %arg0, %c0_i32_0, %arg1, %c0_i32_1 : i32, i32, i32, i32, i32
  }
  func.func @transform_2(%arg0: i32, %arg1: i32) -> (i32, i32, i32, i32) {
    %c0_i32 = arith.constant 0 : i32
    %c0_i32_0 = arith.constant 0 : i32
    %c0_i32_1 = arith.constant 0 : i32
    return %arg0, %c0_i32, %arg1, %c0_i32_0 : i32, i32, i32, i32
  }
  func.func @transform_3(%arg0: i32, %arg1: i32) -> (i32, i32, i32, i32) {
    %c0_i32 = arith.constant 0 : i32
    %c0_i32_0 = arith.constant 0 : i32
    %c0_i32_1 = arith.constant 0 : i32
    return %arg0, %c0_i32, %arg1, %c0_i32_0 : i32, i32, i32, i32
  }
  func.func @transform_4(%arg0: i32, %arg1: i32) -> (i32, i32, i32) {
    %c0_i32 = arith.constant 0 : i32
    %c0_i32_0 = arith.constant 0 : i32
    return %arg0, %arg1, %c0_i32 : i32, i32, i32
  }
  func.func @transform_5(%arg0: i32, %arg1: i32) -> (i32, i32) {
    %c0_i32 = arith.constant 0 : i32
    %c0_i32_0 = arith.constant 0 : i32
    %c0_i32_1 = arith.constant 0 : i32
    return %c0_i32, %c0_i32_0 : i32, i32
  }
  func.func @transform_6(%arg0: i32, %arg1: i32) -> (i32, i32) {
    %c0_i32 = arith.constant 0 : i32
    %c0_i32_0 = arith.constant 0 : i32
    %c0_i32_1 = arith.constant 0 : i32
    return %c0_i32, %c0_i32_0 : i32, i32
  }
  func.func @transform_7(%arg0: i32, %arg1: i32) -> (i32, i32) {
    %c0_i32 = arith.constant 0 : i32
    %c0_i32_0 = arith.constant 0 : i32
    %c0_i32_1 = arith.constant 0 : i32
    return %c0_i32, %c0_i32_0 : i32, i32
  }
  func.func @transform_8(%arg0: i32, %arg1: i32) -> (i32, i32) {
    %c0_i32 = arith.constant 0 : i32
    %c0_i32_0 = arith.constant 0 : i32
    %c0_i32_1 = arith.constant 0 : i32
    return %c0_i32, %c0_i32_0 : i32, i32
  }
  func.func @transform_9(%arg0: i32, %arg1: i32) -> (i32, i32) {
    %c0_i32 = arith.constant 0 : i32
    %c0_i32_0 = arith.constant 0 : i32
    %c0_i32_1 = arith.constant 0 : i32
    return %c0_i32, %c0_i32_0 : i32, i32
  }
  func.func @transform_10(%arg0: i32, %arg1: i32) -> (i32, i32) {
    %c0_i32 = arith.constant 0 : i32
    %c0_i32_0 = arith.constant 0 : i32
    %c0_i32_1 = arith.constant 0 : i32
    return %c0_i32, %c0_i32_0 : i32, i32
  }
  func.func @transform_11(%arg0: i32, %arg1: i32) -> (i32, i32) {
    %c0_i32 = arith.constant 0 : i32
    %c0_i32_0 = arith.constant 0 : i32
    %c0_i32_1 = arith.constant 0 : i32
    return %c0_i32, %c0_i32_0 : i32, i32
  }
  func.func @transform_12(%arg0: i32, %arg1: i32) -> (i32, i32, i32, i32) {
    %c0_i32 = arith.constant 0 : i32
    %c0_i32_0 = arith.constant 0 : i32
    %c0_i32_1 = arith.constant 0 : i32
    return %arg0, %c0_i32, %arg1, %c0_i32_0 : i32, i32, i32, i32
  }
  func.func @transform_13(%arg0: i32, %arg1: i32) -> (i32, i32, i32, i32) {
    %c0_i32 = arith.constant 0 : i32
    %c0_i32_0 = arith.constant 0 : i32
    %c0_i32_1 = arith.constant 0 : i32
    return %arg0, %c0_i32, %arg1, %c0_i32_0 : i32, i32, i32, i32
  }
}

</mosaic_0001>

<llo_original>
// kernel: delayed_rnn_forward.5
$region0: #{delayed_rnn_forward.5}
  #allocation0 [shape = 'u32[]', space=smem, size = 0x4, offset = 0x4, fixed_abs, tag = 'smem constant byte address 0x4 - core index']
  #allocation1 [shape = 'u32[144,128]{1,0:T(1,128)}', space=vmem, size = 0x12000, scoped, tag = 'internal scratch']
  #allocation2 [shape = 'f32[4,16,128]{2,1,0:T(8,128)}', space=vmem, size = 0x8000, scoped, tag = 'scratch operand']
  %s0 = inlined_call_operand.vmem [shape: f32[2,4,16,32], index: 0, kind: input, shape index: {}]
  %s1 = inlined_call_operand.vmem [shape: bf16[2,32,128], index: 1, kind: input, shape index: {}]
  %s2 = inlined_call_operand.vmem [shape: bf16[2,32,128], index: 2, kind: input, shape index: {}]
  %s3 = inlined_call_operand.vmem [shape: f32[2,1,128], index: 3, kind: input, shape index: {}]
  %s4 = inlined_call_operand.vmem [shape: bf16[2,2,4,16,32], index: 4, kind: output, shape index: {}]
  %s5 = sld [smem:[#allocation0]]
  $region49: #{delayed_rnn_forward.5} parent=0
    _
  %s7 = ssub.s32 1, %s5
  %s8 = scalar_select 0, %s7, %s5
  loop: start=0, step=1, limit=6
  $region2: #{delayed_rnn_forward.5} parent=0 // loop_pre_header
    _
  $region3: #{delayed_rnn_forward.5} parent=0 // loop_header
    %s10 = sphi 0, %s14
    %p11 = scmp.ge.s32.totalorder %s10, 6
    %s17 = sphi 0, %s36
    %s18 = sphi 0, %s32
    %s19 = sphi 0, %s28
    %s20 = sphi 0, %s17
    %s21 = sphi 0, %s18
    %s22 = sphi 0, %s19
    %s23 = sphi 0, %s20
    %s24 = sphi 0, %s21
    %s25 = sphi 0, %s22
    %s41 = sphi 0, %s43
    %s44 = sphi 0, %s41
    %s45 = sphi 0, %s44
    %s61 = sphi 0, %s45
    %s67 = sphi 0, %s69
    %s70 = sphi 0, %s67
    %s71 = sphi 0, %s70
    %s87 = sphi 0, %s71
    %s93 = sphi 0, %s95
    %s96 = sphi 0, %s93
    %s97 = sphi 0, %s96
    %s113 = sphi 0, %s97
    %s119 = sphi 0, %s121
    %s122 = sphi 0, %s119
    %s123 = sphi 0, %s122
    %s139 = sphi 0, %s123
    %s149 = sphi 0, %s151
    %s152 = sphi 0, %s149
    %s153 = sphi 0, %s152
    %s169 = sphi 0, %s153
  $region4: #{delayed_rnn_forward.5} parent=0 // loop_header_branch
    %13 = sbr.rel (%p11) target = $region8
  $region5: #{delayed_rnn_forward.5} parent=0 // loop_body
    %s15 = ssub.s32 %s10, 1
    %s16 = ssub.s32 %s10, 2
    %s26 = sadd.s32 1, %s19
    %p27 = scmp.ge.s32.totalorder %s26, 2
    %s28 = scalar_select %p27, 0, %s26
    %s29 = sadd.s32 1, %s18
    %s30 = scalar_select %p27, %s29, %s18
    %p31 = scmp.ge.s32.totalorder %s30, 1
    %s32 = scalar_select %p31, 0, %s30
    %s33 = sadd.s32 1, %s17
    %s34 = scalar_select %p31, %s33, %s17
    %p35 = scmp.ge.s32.totalorder %s34, 2
    %s36 = scalar_select %p35, 0, %s34
    %s37 = ssub.s32 %s17, %s36
    %s38 = ssub.s32 %s18, %s32
    %s39 = sor.u32 %s37, %s38
    %p40 = scmp.eq.s32.totalorder %s39, 0
    %s42 = sadd.s32 %s41, 1
    %s43 = scalar_select %p40, %s41, %s42
    %p46 = pneg %p40
    %p47 = scmp.eq.s32.totalorder %s10, 3
    %p48 = por %p46, %p47
    %p49 = scmp.ne.s32.totalorder %s41, %s44
    %p50 = scmp.eq.s32.totalorder %s10, 0
    %p51 = por %p49, %p50
    %p52 = scmp.ne.s32.totalorder %s41, %s44
    %p53 = scmp.eq.s32.totalorder %s15, 3
    %p54 = por %p52, %p53
    %p55 = scmp.ne.s32.totalorder %s44, %s45
    %p56 = scmp.eq.s32.totalorder %s15, 0
    %p57 = por %p55, %p56
    %p58 = scmp.ne.s32.totalorder %s44, %s45
    %p59 = scmp.eq.s32.totalorder %s16, 3
    %p60 = por %p58, %p59
    %p62 = scmp.ne.s32.totalorder %s45, %s61
    %p63 = scmp.eq.s32.totalorder %s16, 0
    %p64 = por %p62, %p63
    %s65 = ssub.s32 %s19, %s28
    %p66 = scmp.eq.s32.totalorder %s65, 0
    %s68 = sadd.s32 %s67, 1
    %s69 = scalar_select %p66, %s67, %s68
    %p72 = pneg %p66
    %p73 = scmp.eq.s32.totalorder %s10, 3
    %p74 = por %p72, %p73
    %p75 = scmp.ne.s32.totalorder %s67, %s70
    %p76 = scmp.eq.s32.totalorder %s10, 0
    %p77 = por %p75, %p76
    %p78 = scmp.ne.s32.totalorder %s67, %s70
    %p79 = scmp.eq.s32.totalorder %s15, 3
    %p80 = por %p78, %p79
    %p81 = scmp.ne.s32.totalorder %s70, %s71
    %p82 = scmp.eq.s32.totalorder %s15, 0
    %p83 = por %p81, %p82
    %p84 = scmp.ne.s32.totalorder %s70, %s71
    %p85 = scmp.eq.s32.totalorder %s16, 3
    %p86 = por %p84, %p85
    %p88 = scmp.ne.s32.totalorder %s71, %s87
    %p89 = scmp.eq.s32.totalorder %s16, 0
    %p90 = por %p88, %p89
    %s91 = ssub.s32 %s19, %s28
    %p92 = scmp.eq.s32.totalorder %s91, 0
    %s94 = sadd.s32 %s93, 1
    %s95 = scalar_select %p92, %s93, %s94
    %p98 = pneg %p92
    %p99 = scmp.eq.s32.totalorder %s10, 3
    %p100 = por %p98, %p99
    %p101 = scmp.ne.s32.totalorder %s93, %s96
    %p102 = scmp.eq.s32.totalorder %s10, 0
    %p103 = por %p101, %p102
    %p104 = scmp.ne.s32.totalorder %s93, %s96
    %p105 = scmp.eq.s32.totalorder %s15, 3
    %p106 = por %p104, %p105
    %p107 = scmp.ne.s32.totalorder %s96, %s97
    %p108 = scmp.eq.s32.totalorder %s15, 0
    %p109 = por %p107, %p108
    %p110 = scmp.ne.s32.totalorder %s96, %s97
    %p111 = scmp.eq.s32.totalorder %s16, 3
    %p112 = por %p110, %p111
    %p114 = scmp.ne.s32.totalorder %s97, %s113
    %p115 = scmp.eq.s32.totalorder %s16, 0
    %p116 = por %p114, %p115
    %s117 = ssub.s32 %s19, %s28
    %p118 = scmp.eq.s32.totalorder %s117, 0
    %s120 = sadd.s32 %s119, 1
    %s121 = scalar_select %p118, %s119, %s120
    %p124 = pneg %p118
    %p125 = scmp.eq.s32.totalorder %s10, 3
    %p126 = por %p124, %p125
    %p127 = scmp.ne.s32.totalorder %s119, %s122
    %p128 = scmp.eq.s32.totalorder %s10, 0
    %p129 = por %p127, %p128
    %p130 = scmp.ne.s32.totalorder %s119, %s122
    %p131 = scmp.eq.s32.totalorder %s15, 3
    %p132 = por %p130, %p131
    %p133 = scmp.ne.s32.totalorder %s122, %s123
    %p134 = scmp.eq.s32.totalorder %s15, 0
    %p135 = por %p133, %p134
    %p136 = scmp.ne.s32.totalorder %s122, %s123
    %p137 = scmp.eq.s32.totalorder %s16, 3
    %p138 = por %p136, %p137
    %p140 = scmp.ne.s32.totalorder %s123, %s139
    %p141 = scmp.eq.s32.totalorder %s16, 0
    %p142 = por %p140, %p141
    %s143 = ssub.s32 %s19, %s28
    %s144 = ssub.s32 %s17, %s36
    %s145 = sor.u32 %s143, %s144
    %s146 = ssub.s32 %s18, %s32
    %s147 = sor.u32 %s145, %s146
    %p148 = scmp.eq.s32.totalorder %s147, 0
    %s150 = sadd.s32 %s149, 1
    %s151 = scalar_select %p148, %s149, %s150
    %p154 = pneg %p148
    %p155 = scmp.eq.s32.totalorder %s10, 3
    %p156 = por %p154, %p155
    %p157 = scmp.ne.s32.totalorder %s149, %s152
    %p158 = scmp.eq.s32.totalorder %s10, 0
    %p159 = por %p157, %p158
    %p160 = scmp.ne.s32.totalorder %s149, %s152
    %p161 = scmp.eq.s32.totalorder %s15, 3
    %p162 = por %p160, %p161
    %p163 = scmp.ne.s32.totalorder %s152, %s153
    %p164 = scmp.eq.s32.totalorder %s15, 0
    %p165 = por %p163, %p164
    %p166 = scmp.ne.s32.totalorder %s152, %s153
    %p167 = scmp.eq.s32.totalorder %s16, 3
    %p168 = por %p166, %p167
    %p170 = scmp.ne.s32.totalorder %s153, %s169
    %p171 = scmp.eq.s32.totalorder %s16, 0
    %p172 = por %p170, %p171
    %p173 = scmp.le.s32.totalorder 1, %s10
    %p174 = scmp.lt.s32.totalorder %s10, 5
    %p175 = pnand %p173, %p174
    %p176 = pneg %p175
    // Predicated region
    $region9: #{delayed_rnn_forward.5} parent=5 // pred_check
      _
    $region10: #{delayed_rnn_forward.5} parent=5 // pred_check_branch
      %178 = sbr.rel (%p175) target = $region12
    $region11: #{delayed_rnn_forward.5} parent=5 // pred_region
      %s179 = ssub.s32 %s10, 1
    $region12: #{delayed_rnn_forward.5} parent=5 // pred_fallthru
      _
    %p180 = scmp.lt.s32.totalorder %s10, 4
    // Predicated region
    $region13: #{delayed_rnn_forward.5} parent=5 // pred_check
      %p181 = pneg %p180
    $region14: #{delayed_rnn_forward.5} parent=5 // pred_check_branch
      %183 = sbr.rel (%p181) target = $region16
    $region15: #{delayed_rnn_forward.5} parent=5 // pred_region
      // Predicated region
      $region17: #{delayed_rnn_forward.5} parent=15 // pred_check
        %p184 = pneg %p51
      $region18: #{delayed_rnn_forward.5} parent=15 // pred_check_branch
        %186 = sbr.rel (%p184) target = $region20
      $region19: #{delayed_rnn_forward.5} parent=15 // pred_region
        %s187 = smul.u32 2, %s18
        %p188 = scmp.lt.s32.totalorder %s17, 1
        %s189 = scalar_select %p188, %s17, 1
        %p190 = scmp.lt.s32.totalorder %s187, 1
        %s191 = scalar_select %p190, %s187, 1
        %s192 = smul.addr %s189, 8
        %s193 = sadd.s32 %s191, %s192
        %s194 = smul.addr %s193, 8
        %s195 = scalar_lea.vmem %s0, %s194
        %s196 = smul.u32 2, %s18
      $region20: #{delayed_rnn_forward.5} parent=15 // pred_fallthru
        _
      // Predicated region
      $region21: #{delayed_rnn_forward.5} parent=15 // pred_check
        %p197 = pneg %p77
      $region22: #{delayed_rnn_forward.5} parent=15 // pred_check_branch
        %199 = sbr.rel (%p197) target = $region24
      $region23: #{delayed_rnn_forward.5} parent=15 // pred_region
        %p200 = scmp.lt.s32.totalorder %s19, 1
        %s201 = scalar_select %p200, %s19, 1
        %s202 = smul.addr %s201, 4
        %s203 = smul.addr %s202, 4
        %s204 = scalar_lea.vmem %s1, %s203
      $region24: #{delayed_rnn_forward.5} parent=15 // pred_fallthru
        _
      // Predicated region
      $region25: #{delayed_rnn_forward.5} parent=15 // pred_check
        %p205 = pneg %p103
      $region26: #{delayed_rnn_forward.5} parent=15 // pred_check_branch
        %207 = sbr.rel (%p205) target = $region28
      $region27: #{delayed_rnn_forward.5} parent=15 // pred_region
        %p208 = scmp.lt.s32.totalorder %s19, 1
        %s209 = scalar_select %p208, %s19, 1
        %s210 = smul.addr %s209, 4
        %s211 = smul.addr %s210, 4
        %s212 = scalar_lea.vmem %s2, %s211
      $region28: #{delayed_rnn_forward.5} parent=15 // pred_fallthru
        _
      // Predicated region
      $region29: #{delayed_rnn_forward.5} parent=15 // pred_check
        %p213 = pneg %p129
      $region30: #{delayed_rnn_forward.5} parent=15 // pred_check_branch
        %215 = sbr.rel (%p213) target = $region32
      $region31: #{delayed_rnn_forward.5} parent=15 // pred_region
        %p216 = scmp.lt.s32.totalorder %s19, 1
        %s217 = scalar_select %p216, %s19, 1
        %s218 = scalar_lea.vmem %s3, %s217
      $region32: #{delayed_rnn_forward.5} parent=15 // pred_fallthru
        _
    $region16: #{delayed_rnn_forward.5} parent=5 // pred_fallthru
      _
    %p219 = scmp.le.s32.totalorder 1, %s10
    %p220 = scmp.lt.s32.totalorder %s10, 5
    %p221 = pnand %p219, %p220
    %p222 = pneg %p221
    // Predicated region
    $region33: #{delayed_rnn_forward.5} parent=5 // pred_check
      _
    $region34: #{delayed_rnn_forward.5} parent=5 // pred_check_branch
      %224 = sbr.rel (%p221) target = $region36
    $region35: #{delayed_rnn_forward.5} parent=5 // pred_region
      %s225 = ssub.s32 %s10, 1
      %s226 = smul.u32 2, %s21
      %p227 = scmp.lt.s32.totalorder %s20, 1
      %s228 = scalar_select %p227, %s20, 1
      %p229 = scmp.lt.s32.totalorder %s226, 1
      %s230 = scalar_select %p229, %s226, 1
      %s231 = smul.addr %s228, 8
      %s232 = sadd.s32 %s230, %s231
      %s233 = smul.addr %s232, 8
      %s234 = scalar_lea.vmem %s0, %s233
      %p235 = pneg %p57
      %p236 = pneg %p54
      %p237 = scmp.lt.s32.totalorder %s22, 1
      %s238 = scalar_select %p237, %s22, 1
      %s239 = smul.addr %s238, 4
      %s240 = smul.addr %s239, 4
      %s241 = scalar_lea.vmem %s1, %s240
      %p242 = pneg %p83
      %p243 = pneg %p80
      %p244 = scmp.lt.s32.totalorder %s22, 1
      %s245 = scalar_select %p244, %s22, 1
      %s246 = smul.addr %s245, 4
      %s247 = smul.addr %s246, 4
      %s248 = scalar_lea.vmem %s2, %s247
      %p249 = pneg %p109
      %p250 = pneg %p106
      %p251 = scmp.lt.s32.totalorder %s22, 1
      %s252 = scalar_select %p251, %s22, 1
      %s253 = scalar_lea.vmem %s3, %s252
      %p254 = pneg %p135
      %p255 = pneg %p132
      %p256 = pneg %p165
      %p257 = pneg %p162
      %s258 = smul.u32 2, %s21
      %p259 = scmp.lt.s32.totalorder %s22, 1
      %s260 = scalar_select %p259, %s22, 1
      %p261 = scmp.lt.s32.totalorder %s20, 1
      %s262 = scalar_select %p261, %s20, 1
      %p263 = scmp.lt.s32.totalorder %s258, 1
      %s264 = scalar_select %p263, %s258, 1
      %s265 = smul.addr %s262, 8
      %s266 = sadd.s32 %s264, %s265
      %s267 = smul.addr %s260, 16
      %s268 = sadd.s32 %s266, %s267
      %s269 = smul.addr %s268, 4
      %s270 = scalar_lea.vmem %s4, %s269
      %s271 = smul.u32 2, %s21
      %p272 = scmp.lt.s32.totalorder %s20, 1
      %s273 = scalar_select %p272, %s20, 1
      %p274 = scmp.lt.s32.totalorder %s271, 1
      %s275 = scalar_select %p274, %s271, 1
      %s276 = smul.addr %s273, 8
      %s277 = sadd.s32 %s275, %s276
      %s278 = smul.addr %s277, 8
      %s279 = scalar_lea.vmem %s0, %s278
      %s280 = smul.u32 2, %s21
      %p281 = scmp.lt.s32.totalorder %s22, 1
      %s282 = scalar_select %p281, %s22, 1
      %s283 = smul.addr %s282, 4
      %s284 = smul.addr %s283, 4
      %s285 = scalar_lea.vmem %s1, %s284
      %p286 = scmp.lt.s32.totalorder %s22, 1
      %s287 = scalar_select %p286, %s22, 1
      %s288 = smul.addr %s287, 4
      %s289 = smul.addr %s288, 4
      %s290 = scalar_lea.vmem %s2, %s289
      %p291 = scmp.lt.s32.totalorder %s22, 1
      %s292 = scalar_select %p291, %s22, 1
      %s293 = scalar_lea.vmem %s3, %s292
      %s294 = smul.u32 2, %s21
      %p295 = scmp.lt.s32.totalorder %s22, 1
      %s296 = scalar_select %p295, %s22, 1
      %p297 = scmp.lt.s32.totalorder %s20, 1
      %s298 = scalar_select %p297, %s20, 1
      %p299 = scmp.lt.s32.totalorder %s294, 1
      %s300 = scalar_select %p299, %s294, 1
      %s301 = smul.addr %s298, 8
      %s302 = sadd.s32 %s300, %s301
      %s303 = smul.addr %s296, 16
      %s304 = sadd.s32 %s302, %s303
      %s305 = smul.addr %s304, 4
      %s306 = scalar_lea.vmem %s4, %s305
      %s307 = smul.u32 2, %s21
      %v309 = vld [vmem:[%s279] sm:$0xff]
      %v310 = vld [vmem:[%s279 + $0x8] sm:$0xff]
      %v311 = vld [vmem:[%s279 + $0x10] sm:$0xff]
      %v312 = vld [vmem:[%s279 + $0x18] sm:$0xff]
      %v313 = vld [vmem:[%s279 + $0x20] sm:$0xff]
      %v314 = vld [vmem:[%s279 + $0x28] sm:$0xff]
      %v315 = vld [vmem:[%s279 + $0x30] sm:$0xff]
      %v316 = vld [vmem:[%s279 + $0x38] sm:$0xff]
      %v317 = vpack.c.bf16 %v310, %v309
      %v318 = vpack.c.bf16 %v312, %v311
      %v319 = vpack.c.bf16 %v314, %v313
      %v320 = vpack.c.bf16 %v316, %v315
      %v321 = vld [vmem:[%s285] sm:$0xf]
      %v322 = vld [vmem:[%s285 + $0x4] sm:$0xf]
      %v323 = vld [vmem:[%s285 + $0x8] sm:$0xf]
      %v324 = vld [vmem:[%s285 + $0xc] sm:$0xf]
      %v329 = vunpack.c.l.b16 %v321
      %v330 = vunpack.c.l.b16 %v322
      %v331 = vunpack.c.l.b16 %v323
      %v332 = vunpack.c.l.b16 %v324
      %v333 = vpack.c.b16 %v330, %v329
      %v334 = vpack.c.b16 %v332, %v331
      %vm337 = vcmask 261120
      %v339 = vsel %vm337, %v317, 0
      %v342 = vsel %vm337, %v318, 0
      %v345 = vsel %vm337, %v319, 0
      %v348 = vsel %vm337, %v320, 0
      %350 = vmatprep.subr.bf16.mxu0 0
      %351 = vmatpush1.bf16.msra.mxu0 0
      %352 = vmatprep.subr.bf16.mxu0 0
      %353 = vmatpush1.bf16.msra.mxu0 0
      %354 = vmatprep.subr.bf16.mxu0 0
      %355 = vmatpush1.bf16.msra.mxu0 0
      %356 = vmatprep.subr.bf16.mxu0 0
      %357 = vmatpush1.bf16.msra.mxu0 0
      %358 = vmatprep.subr.bf16.mxu0 0
      %359 = vmatpush1.bf16.msra.mxu0 0
      %360 = vmatprep.subr.bf16.mxu0 0
      %361 = vmatpush1.bf16.msra.mxu0 0
      %362 = vmatprep.subr.bf16.mxu0 0
      %363 = vmatpush1.bf16.msra.mxu0 %v334
      %364 = vmatprep.subr.bf16.mxu0 0
      %365 = vmatpush1.bf16.msra.mxu0 %v333
      %366 = vmatprep.subr.bf16.mxu0 0
      %367 = vmatpush2.bf16.msra.mxu0 0
      %368 = vmatprep.subr.bf16.mxu0 0
      %369 = vmatpush2.bf16.msra.mxu0 0
      %370 = vmatprep.subr.bf16.mxu0 0
      %371 = vmatpush2.bf16.msra.mxu0 0
      %372 = vmatprep.subr.bf16.mxu0 0
      %373 = vmatpush2.bf16.msra.mxu0 0
      %374 = vmatprep.subr.bf16.mxu0 0
      %375 = vmatpush2.bf16.msra.mxu0 0
      %376 = vmatprep.subr.bf16.mxu0 0
      %377 = vmatpush2.bf16.msra.mxu0 0
      %378 = vmatprep.subr.bf16.mxu0 0
      %379 = vmatpush2.bf16.msra.mxu0 0
      %380 = vmatprep.subr.bf16.mxu0 0
      %381 = vmatpush2.bf16.msra.mxu0 0
      %382 = vmatprep.mubr.bf16.mxu0 0
      %383 = vmatmul.mubr.bf16.gmra.mxu0 %v339
      %v384 = vpop.f32.mrf.mxu0
      %v385 = vadd.f32 0.0, %v384
      %v386 = vpop.f32.mrf.mxu0
      %v387 = vpop.f32.mrf.mxu0
      %v388 = vadd.f32 0.0, %v387
      %v389 = vpop.f32.mrf.mxu0
      %390 = vmatprep.mubr.bf16.mxu0 0
      %391 = vmatmul.mubr.bf16.gmra.mxu0 %v342
      %v392 = vpop.f32.mrf.mxu0
      %v393 = vadd.f32 0.0, %v392
      %v394 = vpop.f32.mrf.mxu0
      %v395 = vpop.f32.mrf.mxu0
      %v396 = vadd.f32 0.0, %v395
      %v397 = vpop.f32.mrf.mxu0
      %398 = vmatprep.mubr.bf16.mxu0 0
      %399 = vmatmul.mubr.bf16.gmra.mxu0 %v345
      %v400 = vpop.f32.mrf.mxu0
      %v401 = vadd.f32 0.0, %v400
      %v402 = vpop.f32.mrf.mxu0
      %v403 = vpop.f32.mrf.mxu0
      %v404 = vadd.f32 0.0, %v403
      %v405 = vpop.f32.mrf.mxu0
      %406 = vmatprep.mubr.bf16.mxu0 0
      %407 = vmatmul.mubr.bf16.gmra.mxu0 %v348
      %v408 = vpop.f32.mrf.mxu0
      %v409 = vadd.f32 0.0, %v408
      %v410 = vpop.f32.mrf.mxu0
      %v411 = vpop.f32.mrf.mxu0
      %v412 = vadd.f32 0.0, %v411
      %v413 = vpop.f32.mrf.mxu0
      %414 = vdwg.mxu0
      %v415 = vld [vmem:[%s293] sm:$0x1]
      %v417 = vlaneseq
      %v418 = vshrl.u32 %v417, 7
      %v419 = vsub.s32 0, %v418
      %v420 = vrot.slane %v415, %v419
      %v422 = vadd.f32 %v385, %v420
      %v423 = vadd.f32 %v388, %v420
      %v424 = vadd.f32 %v393, %v420
      %v425 = vadd.f32 %v396, %v420
      %v426 = vadd.f32 %v401, %v420
      %v427 = vadd.f32 %v404, %v420
      %v428 = vadd.f32 %v409, %v420
      %v429 = vadd.f32 %v412, %v420
      %430 = vst [vmem:[#allocation2] sm:$0xff] %v422
      %431 = vst [vmem:[#allocation2 + $0x8] sm:$0xff] %v423
      %432 = vst [vmem:[#allocation2 + $0x10] sm:$0xff] %v424
      %433 = vst [vmem:[#allocation2 + $0x18] sm:$0xff] %v425
      %434 = vst [vmem:[#allocation2 + $0x20] sm:$0xff] %v426
      %435 = vst [vmem:[#allocation2 + $0x28] sm:$0xff] %v427
      %436 = vst [vmem:[#allocation2 + $0x30] sm:$0xff] %v428
      %437 = vst [vmem:[#allocation2 + $0x38] sm:$0xff] %v429
      %v438 = vld [vmem:[%s290] sm:$0xf]
      %v439 = vld [vmem:[%s290 + $0x4] sm:$0xf]
      %v440 = vld [vmem:[%s290 + $0x8] sm:$0xf]
      %v441 = vld [vmem:[%s290 + $0xc] sm:$0xf]
      %p442 = scmp.eq.s32.totalorder %s22, 1
      %s443 = scalar_select %p442, 3, 0
      %s444 = smul.u32 %s443, 16
      %s445 = scalar_lea.vmem [#allocation2], %s444
      %v446 = vld [vmem:[%s445] sm:$0xff]
      %v447 = vld [vmem:[%s445 + $0x8] sm:$0xff]
      %v452 = vunpack.c.l.b16 %v438
      %v453 = vunpack.c.l.b16 %v439
      %v454 = vunpack.c.l.b16 %v440
      %v455 = vunpack.c.l.b16 %v441
      %v456 = vpack.c.b16 %v453, %v452
      %v457 = vpack.c.b16 %v455, %v454
      %v461 = vsel %vm337, 0, 0
      %463 = vmatprep.subr.bf16.mxu0 0
      %464 = vmatpush1.bf16.msra.mxu0 0
      %465 = vmatprep.subr.bf16.mxu0 0
      %466 = vmatpush1.bf16.msra.mxu0 0
      %467 = vmatprep.subr.bf16.mxu0 0
      %468 = vmatpush1.bf16.msra.mxu0 0
      %469 = vmatprep.subr.bf16.mxu0 0
      %470 = vmatpush1.bf16.msra.mxu0 0
      %471 = vmatprep.subr.bf16.mxu0 0
      %472 = vmatpush1.bf16.msra.mxu0 0
      %473 = vmatprep.subr.bf16.mxu0 0
      %474 = vmatpush1.bf16.msra.mxu0 0
      %475 = vmatprep.subr.bf16.mxu0 0
      %476 = vmatpush1.bf16.msra.mxu0 %v457
      %477 = vmatprep.subr.bf16.mxu0 0
      %478 = vmatpush1.bf16.msra.mxu0 %v456
      %479 = vmatprep.subr.bf16.mxu0 0
      %480 = vmatpush2.bf16.msra.mxu0 0
      %481 = vmatprep.subr.bf16.mxu0 0
      %482 = vmatpush2.bf16.msra.mxu0 0
      %483 = vmatprep.subr.bf16.mxu0 0
      %484 = vmatpush2.bf16.msra.mxu0 0
      %485 = vmatprep.subr.bf16.mxu0 0
      %486 = vmatpush2.bf16.msra.mxu0 0
      %487 = vmatprep.subr.bf16.mxu0 0
      %488 = vmatpush2.bf16.msra.mxu0 0
      %489 = vmatprep.subr.bf16.mxu0 0
      %490 = vmatpush2.bf16.msra.mxu0 0
      %491 = vmatprep.subr.bf16.mxu0 0
      %492 = vmatpush2.bf16.msra.mxu0 0
      %493 = vmatprep.subr.bf16.mxu0 0
      %494 = vmatpush2.bf16.msra.mxu0 0
      %495 = vmatprep.mubr.bf16.mxu0 0
      %496 = vmatmul.mubr.bf16.gmra.mxu0 %v461
      %v497 = vpop.f32.mrf.mxu0
      %v498 = vadd.f32 0.0, %v497
      %v499 = vpop.f32.mrf.mxu0
      %v500 = vpop.f32.mrf.mxu0
      %v501 = vadd.f32 0.0, %v500
      %v502 = vpop.f32.mrf.mxu0
      %503 = vdwg.mxu0
      %v504 = vadd.f32 %v446, %v498
      %v505 = vadd.f32 %v447, %v501
      %v506 = vxor.u32 %v504, 2147483648
      %v507 = vxor.u32 %v505, 2147483648
      %v508 = vmul.f32 %v506, 1.442695
      %v509 = vpow.pop %v508
      %v510 = vmul.f32 %v507, 1.442695
      %v511 = vpow.pop %v510
      %v512 = vadd.f32 %v509, 1.0
      %v513 = vadd.f32 %v511, 1.0
      %v514 = vrcp.pop %v512
      %v515 = vmul.f32 1.0, %v514
      %v516 = vrcp.pop %v513
      %v517 = vmul.f32 1.0, %v516
      %v518 = vtanh.pop %v504
      %v519 = vtanh.pop %v505
      %v520 = vmul.f32 %v515, 0.0
      %v521 = vmul.f32 %v517, 0.0
      %524 = vrot.lane.b32.xlu0 %v518, 64
      %v525 = vpop.permute.xlu0 %524
      %526 = vrot.lane.b32.xlu0 %v519, 64
      %v527 = vpop.permute.xlu0 %526
      %v530 = vmul.f32 %v515, %v525
      %v531 = vmul.f32 %v517, %v527
      %534 = vrot.lane.b32.xlu0 %v530, 32
      %v535 = vpop.permute.xlu0 %534
      %536 = vrot.lane.b32.xlu0 %v531, 32
      %v537 = vpop.permute.xlu0 %536
      %v540 = vadd.f32 %v520, %v535
      %v541 = vadd.f32 %v521, %v537
      %v542 = vtanh.pop %v540
      %v543 = vtanh.pop %v541
      %546 = vrot.lane.b32.xlu0 %v542, 64
      %v547 = vpop.permute.xlu0 %546
      %548 = vrot.lane.b32.xlu0 %v543, 64
      %v549 = vpop.permute.xlu0 %548
      %v552 = vmul.f32 %v515, %v547
      %v553 = vmul.f32 %v517, %v549
      %v554 = vpack.c.bf16 %v553, %v552
      %v556 = vunpack.c.l.b16 %v554
      %v557 = vunpack.c.h.b16 %v554
      %v558 = vpack.c.b16 %v556, %v556
      %v559 = vpack.c.b16 %v557, %v557
      %560 = vrot.lane.b32.xlu0 %v558, 32
      %v561 = vpop.permute.xlu0 %560
      %562 = vrot.lane.b32.xlu0 %v559, 32
      %v563 = vpop.permute.xlu0 %562
      %s566 = smul.u32 %s443, 2
      %s567 = smul.addr %s566, 4
      %s568 = scalar_lea.vmem %s306, %s567
      %vm569 = vcmask 257024
      %570 = vst.msk [vmem:[%s568] sm:$0xf] %vm569, %v561
      %571 = vst.msk [vmem:[%s568 + $0x4] sm:$0xf] %vm569, %v563
      %s572 = scalar_select %p442, 2, 1
      %s573 = smul.u32 %s572, 16
      %s574 = scalar_lea.vmem [#allocation2], %s573
      %v575 = vld [vmem:[%s574] sm:$0xff]
      %v576 = vld [vmem:[%s574 + $0x8] sm:$0xff]
      %577 = vrot.lane.b32.xlu0 %v554, 32
      %v578 = vpop.permute.xlu0 %577
      %v580 = vsel %vm337, %v578, 0
      %582 = vmatprep.subr.bf16.mxu0 0
      %583 = vmatpush1.bf16.msra.mxu0 0
      %584 = vmatprep.subr.bf16.mxu0 0
      %585 = vmatpush1.bf16.msra.mxu0 0
      %586 = vmatprep.subr.bf16.mxu0 0
      %587 = vmatpush1.bf16.msra.mxu0 0
      %588 = vmatprep.subr.bf16.mxu0 0
      %589 = vmatpush1.bf16.msra.mxu0 0
      %590 = vmatprep.subr.bf16.mxu0 0
      %591 = vmatpush1.bf16.msra.mxu0 0
      %592 = vmatprep.subr.bf16.mxu0 0
      %593 = vmatpush1.bf16.msra.mxu0 0
      %594 = vmatprep.subr.bf16.mxu0 0
      %595 = vmatpush1.bf16.msra.mxu0 %v457
      %596 = vmatprep.subr.bf16.mxu0 0
      %597 = vmatpush1.bf16.msra.mxu0 %v456
      %598 = vmatprep.subr.bf16.mxu0 0
      %599 = vmatpush2.bf16.msra.mxu0 0
      %600 = vmatprep.subr.bf16.mxu0 0
      %601 = vmatpush2.bf16.msra.mxu0 0
      %602 = vmatprep.subr.bf16.mxu0 0
      %603 = vmatpush2.bf16.msra.mxu0 0
      %604 = vmatprep.subr.bf16.mxu0 0
      %605 = vmatpush2.bf16.msra.mxu0 0
      %606 = vmatprep.subr.bf16.mxu0 0
      %607 = vmatpush2.bf16.msra.mxu0 0
      %608 = vmatprep.subr.bf16.mxu0 0
      %609 = vmatpush2.bf16.msra.mxu0 0
      %610 = vmatprep.subr.bf16.mxu0 0
      %611 = vmatpush2.bf16.msra.mxu0 0
      %612 = vmatprep.subr.bf16.mxu0 0
      %613 = vmatpush2.bf16.msra.mxu0 0
      %614 = vmatprep.mubr.bf16.mxu0 0
      %615 = vmatmul.mubr.bf16.gmra.mxu0 %v580
      %v616 = vpop.f32.mrf.mxu0
      %v617 = vadd.f32 0.0, %v616
      %v618 = vpop.f32.mrf.mxu0
      %v619 = vpop.f32.mrf.mxu0
      %v620 = vadd.f32 0.0, %v619
      %v621 = vpop.f32.mrf.mxu0
      %622 = vdwg.mxu0
      %v623 = vadd.f32 %v575, %v617
      %v624 = vadd.f32 %v576, %v620
      %v625 = vxor.u32 %v623, 2147483648
      %v626 = vxor.u32 %v624, 2147483648
      %v627 = vmul.f32 %v625, 1.442695
      %v628 = vpow.pop %v627
      %v629 = vmul.f32 %v626, 1.442695
      %v630 = vpow.pop %v629
      %v631 = vadd.f32 %v628, 1.0
      %v632 = vadd.f32 %v630, 1.0
      %v633 = vrcp.pop %v631
      %v634 = vmul.f32 1.0, %v633
      %v635 = vrcp.pop %v632
      %v636 = vmul.f32 1.0, %v635
      %v637 = vtanh.pop %v623
      %v638 = vtanh.pop %v624
      %v639 = vmul.f32 %v634, %v540
      %v640 = vmul.f32 %v636, %v541
      %643 = vrot.lane.b32.xlu0 %v637, 64
      %v644 = vpop.permute.xlu0 %643
      %645 = vrot.lane.b32.xlu0 %v638, 64
      %v646 = vpop.permute.xlu0 %645
      %v649 = vmul.f32 %v634, %v644
      %v650 = vmul.f32 %v636, %v646
      %653 = vrot.lane.b32.xlu0 %v649, 32
      %v654 = vpop.permute.xlu0 %653
      %655 = vrot.lane.b32.xlu0 %v650, 32
      %v656 = vpop.permute.xlu0 %655
      %v659 = vadd.f32 %v639, %v654
      %v660 = vadd.f32 %v640, %v656
      %v661 = vtanh.pop %v659
      %v662 = vtanh.pop %v660
      %665 = vrot.lane.b32.xlu0 %v661, 64
      %v666 = vpop.permute.xlu0 %665
      %667 = vrot.lane.b32.xlu0 %v662, 64
      %v668 = vpop.permute.xlu0 %667
      %v671 = vmul.f32 %v634, %v666
      %v672 = vmul.f32 %v636, %v668
      %v673 = vpack.c.bf16 %v672, %v671
      %v675 = vunpack.c.l.b16 %v673
      %v676 = vunpack.c.h.b16 %v673
      %v677 = vpack.c.b16 %v675, %v675
      %v678 = vpack.c.b16 %v676, %v676
      %679 = vrot.lane.b32.xlu0 %v677, 32
      %v680 = vpop.permute.xlu0 %679
      %681 = vrot.lane.b32.xlu0 %v678, 32
      %v682 = vpop.permute.xlu0 %681
      %s685 = smul.u32 %s572, 2
      %s686 = smul.addr %s685, 4
      %s687 = scalar_lea.vmem %s306, %s686
      %688 = vst.msk [vmem:[%s687] sm:$0xf] %vm569, %v680
      %689 = vst.msk [vmem:[%s687 + $0x4] sm:$0xf] %vm569, %v682
      %s690 = scalar_select %p442, 1, 2
      %s691 = smul.u32 %s690, 16
      %s692 = scalar_lea.vmem [#allocation2], %s691
      %v693 = vld [vmem:[%s692] sm:$0xff]
      %v694 = vld [vmem:[%s692 + $0x8] sm:$0xff]
      %695 = vrot.lane.b32.xlu0 %v673, 32
      %v696 = vpop.permute.xlu0 %695
      %v698 = vsel %vm337, %v696, 0
      %700 = vmatprep.subr.bf16.mxu0 0
      %701 = vmatpush1.bf16.msra.mxu0 0
      %702 = vmatprep.subr.bf16.mxu0 0
      %703 = vmatpush1.bf16.msra.mxu0 0
      %704 = vmatprep.subr.bf16.mxu0 0
      %705 = vmatpush1.bf16.msra.mxu0 0
      %706 = vmatprep.subr.bf16.mxu0 0
      %707 = vmatpush1.bf16.msra.mxu0 0
      %708 = vmatprep.subr.bf16.mxu0 0
      %709 = vmatpush1.bf16.msra.mxu0 0
      %710 = vmatprep.subr.bf16.mxu0 0
      %711 = vmatpush1.bf16.msra.mxu0 0
      %712 = vmatprep.subr.bf16.mxu0 0
      %713 = vmatpush1.bf16.msra.mxu0 %v457
      %714 = vmatprep.subr.bf16.mxu0 0
      %715 = vmatpush1.bf16.msra.mxu0 %v456
      %716 = vmatprep.subr.bf16.mxu0 0
      %717 = vmatpush2.bf16.msra.mxu0 0
      %718 = vmatprep.subr.bf16.mxu0 0
      %719 = vmatpush2.bf16.msra.mxu0 0
      %720 = vmatprep.subr.bf16.mxu0 0
      %721 = vmatpush2.bf16.msra.mxu0 0
      %722 = vmatprep.subr.bf16.mxu0 0
      %723 = vmatpush2.bf16.msra.mxu0 0
      %724 = vmatprep.subr.bf16.mxu0 0
      %725 = vmatpush2.bf16.msra.mxu0 0
      %726 = vmatprep.subr.bf16.mxu0 0
      %727 = vmatpush2.bf16.msra.mxu0 0
      %728 = vmatprep.subr.bf16.mxu0 0
      %729 = vmatpush2.bf16.msra.mxu0 0
      %730 = vmatprep.subr.bf16.mxu0 0
      %731 = vmatpush2.bf16.msra.mxu0 0
      %732 = vmatprep.mubr.bf16.mxu0 0
      %733 = vmatmul.mubr.bf16.gmra.mxu0 %v698
      %v734 = vpop.f32.mrf.mxu0
      %v735 = vadd.f32 0.0, %v734
      %v736 = vpop.f32.mrf.mxu0
      %v737 = vpop.f32.mrf.mxu0
      %v738 = vadd.f32 0.0, %v737
      %v739 = vpop.f32.mrf.mxu0
      %740 = vdwg.mxu0
      %v741 = vadd.f32 %v693, %v735
      %v742 = vadd.f32 %v694, %v738
      %v743 = vxor.u32 %v741, 2147483648
      %v744 = vxor.u32 %v742, 2147483648
      %v745 = vmul.f32 %v743, 1.442695
      %v746 = vpow.pop %v745
      %v747 = vmul.f32 %v744, 1.442695
      %v748 = vpow.pop %v747
      %v749 = vadd.f32 %v746, 1.0
      %v750 = vadd.f32 %v748, 1.0
      %v751 = vrcp.pop %v749
      %v752 = vmul.f32 1.0, %v751
      %v753 = vrcp.pop %v750
      %v754 = vmul.f32 1.0, %v753
      %v755 = vtanh.pop %v741
      %v756 = vtanh.pop %v742
      %v757 = vmul.f32 %v752, %v659
      %v758 = vmul.f32 %v754, %v660
      %761 = vrot.lane.b32.xlu0 %v755, 64
      %v762 = vpop.permute.xlu0 %761
      %763 = vrot.lane.b32.xlu0 %v756, 64
      %v764 = vpop.permute.xlu0 %763
      %v767 = vmul.f32 %v752, %v762
      %v768 = vmul.f32 %v754, %v764
      %771 = vrot.lane.b32.xlu0 %v767, 32
      %v772 = vpop.permute.xlu0 %771
      %773 = vrot.lane.b32.xlu0 %v768, 32
      %v774 = vpop.permute.xlu0 %773
      %v777 = vadd.f32 %v757, %v772
      %v778 = vadd.f32 %v758, %v774
      %v779 = vtanh.pop %v777
      %v780 = vtanh.pop %v778
      %783 = vrot.lane.b32.xlu0 %v779, 64
      %v784 = vpop.permute.xlu0 %783
      %785 = vrot.lane.b32.xlu0 %v780, 64
      %v786 = vpop.permute.xlu0 %785
      %v789 = vmul.f32 %v752, %v784
      %v790 = vmul.f32 %v754, %v786
      %v791 = vpack.c.bf16 %v790, %v789
      %v793 = vunpack.c.l.b16 %v791
      %v794 = vunpack.c.h.b16 %v791
      %v795 = vpack.c.b16 %v793, %v793
      %v796 = vpack.c.b16 %v794, %v794
      %797 = vrot.lane.b32.xlu0 %v795, 32
      %v798 = vpop.permute.xlu0 %797
      %799 = vrot.lane.b32.xlu0 %v796, 32
      %v800 = vpop.permute.xlu0 %799
      %s803 = smul.u32 %s690, 2
      %s804 = smul.addr %s803, 4
      %s805 = scalar_lea.vmem %s306, %s804
      %806 = vst.msk [vmem:[%s805] sm:$0xf] %vm569, %v798
      %807 = vst.msk [vmem:[%s805 + $0x4] sm:$0xf] %vm569, %v800
      %s808 = scalar_select %p442, 0, 3
      %s809 = smul.u32 %s808, 16
      %s810 = scalar_lea.vmem [#allocation2], %s809
      %v811 = vld [vmem:[%s810] sm:$0xff]
      %v812 = vld [vmem:[%s810 + $0x8] sm:$0xff]
      %813 = vrot.lane.b32.xlu0 %v791, 32
      %v814 = vpop.permute.xlu0 %813
      %v816 = vsel %vm337, %v814, 0
      %818 = vmatprep.subr.bf16.mxu0 0
      %819 = vmatpush1.bf16.msra.mxu0 0
      %820 = vmatprep.subr.bf16.mxu0 0
      %821 = vmatpush1.bf16.msra.mxu0 0
      %822 = vmatprep.subr.bf16.mxu0 0
      %823 = vmatpush1.bf16.msra.mxu0 0
      %824 = vmatprep.subr.bf16.mxu0 0
      %825 = vmatpush1.bf16.msra.mxu0 0
      %826 = vmatprep.subr.bf16.mxu0 0
      %827 = vmatpush1.bf16.msra.mxu0 0
      %828 = vmatprep.subr.bf16.mxu0 0
      %829 = vmatpush1.bf16.msra.mxu0 0
      %830 = vmatprep.subr.bf16.mxu0 0
      %831 = vmatpush1.bf16.msra.mxu0 %v457
      %832 = vmatprep.subr.bf16.mxu0 0
      %833 = vmatpush1.bf16.msra.mxu0 %v456
      %834 = vmatprep.subr.bf16.mxu0 0
      %835 = vmatpush2.bf16.msra.mxu0 0
      %836 = vmatprep.subr.bf16.mxu0 0
      %837 = vmatpush2.bf16.msra.mxu0 0
      %838 = vmatprep.subr.bf16.mxu0 0
      %839 = vmatpush2.bf16.msra.mxu0 0
      %840 = vmatprep.subr.bf16.mxu0 0
      %841 = vmatpush2.bf16.msra.mxu0 0
      %842 = vmatprep.subr.bf16.mxu0 0
      %843 = vmatpush2.bf16.msra.mxu0 0
      %844 = vmatprep.subr.bf16.mxu0 0
      %845 = vmatpush2.bf16.msra.mxu0 0
      %846 = vmatprep.subr.bf16.mxu0 0
      %847 = vmatpush2.bf16.msra.mxu0 0
      %848 = vmatprep.subr.bf16.mxu0 0
      %849 = vmatpush2.bf16.msra.mxu0 0
      %850 = vmatprep.mubr.bf16.mxu0 0
      %851 = vmatmul.mubr.bf16.gmra.mxu0 %v816
      %v852 = vpop.f32.mrf.mxu0
      %v853 = vadd.f32 0.0, %v852
      %v854 = vpop.f32.mrf.mxu0
      %v855 = vpop.f32.mrf.mxu0
      %v856 = vadd.f32 0.0, %v855
      %v857 = vpop.f32.mrf.mxu0
      %858 = vdwg.mxu0
      %v859 = vadd.f32 %v811, %v853
      %v860 = vadd.f32 %v812, %v856
      %v861 = vxor.u32 %v859, 2147483648
      %v862 = vxor.u32 %v860, 2147483648
      %v863 = vmul.f32 %v861, 1.442695
      %v864 = vpow.pop %v863
      %v865 = vmul.f32 %v862, 1.442695
      %v866 = vpow.pop %v865
      %v867 = vadd.f32 %v864, 1.0
      %v868 = vadd.f32 %v866, 1.0
      %v869 = vrcp.pop %v867
      %v870 = vmul.f32 1.0, %v869
      %v871 = vrcp.pop %v868
      %v872 = vmul.f32 1.0, %v871
      %v873 = vtanh.pop %v859
      %v874 = vtanh.pop %v860
      %v875 = vmul.f32 %v870, %v777
      %v876 = vmul.f32 %v872, %v778
      %879 = vrot.lane.b32.xlu0 %v873, 64
      %v880 = vpop.permute.xlu0 %879
      %881 = vrot.lane.b32.xlu0 %v874, 64
      %v882 = vpop.permute.xlu0 %881
      %v885 = vmul.f32 %v870, %v880
      %v886 = vmul.f32 %v872, %v882
      %889 = vrot.lane.b32.xlu0 %v885, 32
      %v890 = vpop.permute.xlu0 %889
      %891 = vrot.lane.b32.xlu0 %v886, 32
      %v892 = vpop.permute.xlu0 %891
      %v895 = vadd.f32 %v875, %v890
      %v896 = vadd.f32 %v876, %v892
      %v897 = vtanh.pop %v895
      %v898 = vtanh.pop %v896
      %901 = vrot.lane.b32.xlu0 %v897, 64
      %v902 = vpop.permute.xlu0 %901
      %903 = vrot.lane.b32.xlu0 %v898, 64
      %v904 = vpop.permute.xlu0 %903
      %v907 = vmul.f32 %v870, %v902
      %v908 = vmul.f32 %v872, %v904
      %v909 = vpack.c.bf16 %v908, %v907
      %v911 = vunpack.c.l.b16 %v909
      %v912 = vunpack.c.h.b16 %v909
      %v913 = vpack.c.b16 %v911, %v911
      %v914 = vpack.c.b16 %v912, %v912
      %915 = vrot.lane.b32.xlu0 %v913, 32
      %v916 = vpop.permute.xlu0 %915
      %917 = vrot.lane.b32.xlu0 %v914, 32
      %v918 = vpop.permute.xlu0 %917
      %s921 = smul.u32 %s808, 2
      %s922 = smul.addr %s921, 4
      %s923 = scalar_lea.vmem %s306, %s922
      %924 = vst.msk [vmem:[%s923] sm:$0xf] %vm569, %v916
      %925 = vst.msk [vmem:[%s923 + $0x4] sm:$0xf] %vm569, %v918
      %s926 = smul.u32 2, %s21
      %p927 = scmp.lt.s32.totalorder %s22, 1
      %s928 = scalar_select %p927, %s22, 1
      %p929 = scmp.lt.s32.totalorder %s20, 1
      %s930 = scalar_select %p929, %s20, 1
      %p931 = scmp.lt.s32.totalorder %s926, 1
      %s932 = scalar_select %p931, %s926, 1
      %s933 = smul.addr %s930, 8
      %s934 = sadd.s32 %s932, %s933
      %s935 = smul.addr %s928, 16
      %s936 = sadd.s32 %s934, %s935
      %s937 = smul.addr %s936, 4
      %s938 = scalar_lea.vmem %s4, %s937
      // Predicated region
      $region37: #{delayed_rnn_forward.5} parent=35 // pred_check
        %p939 = pneg %p162
      $region38: #{delayed_rnn_forward.5} parent=35 // pred_check_branch
        %941 = sbr.rel (%p939) target = $region40
      $region39: #{delayed_rnn_forward.5} parent=35 // pred_region
        %s942 = smul.u32 2, %s21
      $region40: #{delayed_rnn_forward.5} parent=35 // pred_fallthru
        _
    $region36: #{delayed_rnn_forward.5} parent=5 // pred_fallthru
      _
    %p943 = scmp.le.s32.totalorder 2, %s10
    // Predicated region
    $region41: #{delayed_rnn_forward.5} parent=5 // pred_check
      %p944 = pneg %p943
    $region42: #{delayed_rnn_forward.5} parent=5 // pred_check_branch
      %946 = sbr.rel (%p944) target = $region44
    $region43: #{delayed_rnn_forward.5} parent=5 // pred_region
      %s947 = ssub.s32 %s10, 2
      // Predicated region
      $region45: #{delayed_rnn_forward.5} parent=43 // pred_check
        %p948 = pneg %p168
      $region46: #{delayed_rnn_forward.5} parent=43 // pred_check_branch
        %950 = sbr.rel (%p948) target = $region48
      $region47: #{delayed_rnn_forward.5} parent=43 // pred_region
        %s951 = smul.u32 2, %s24
        %p952 = scmp.lt.s32.totalorder %s25, 1
        %s953 = scalar_select %p952, %s25, 1
        %p954 = scmp.lt.s32.totalorder %s23, 1
        %s955 = scalar_select %p954, %s23, 1
        %p956 = scmp.lt.s32.totalorder %s951, 1
        %s957 = scalar_select %p956, %s951, 1
        %s958 = smul.addr %s955, 8
        %s959 = sadd.s32 %s957, %s958
        %s960 = smul.addr %s953, 16
        %s961 = sadd.s32 %s959, %s960
        %s962 = smul.addr %s961, 4
        %s963 = scalar_lea.vmem %s4, %s962
      $region48: #{delayed_rnn_forward.5} parent=43 // pred_fallthru
        _
    $region44: #{delayed_rnn_forward.5} parent=5 // pred_fallthru
      _
  $region6: #{delayed_rnn_forward.5} parent=0 // loop_footer
    %s14 = sadd.s32 1, %s10
  $region7: #{delayed_rnn_forward.5} parent=0 // loop_footer_branch
    %9 = sbr.rel target = $region3
  $region8: #{delayed_rnn_forward.5} parent=0 // loop_exit
    _

// kernel: delayed_rnn_forward.7
$region0: #{delayed_rnn_forward.7}
  #allocation0 [shape = 'u32[]', space=smem, size = 0x4, offset = 0x4, fixed_abs, tag = 'smem constant byte address 0x4 - core index']
  #allocation1 [shape = 'u32[144,128]{1,0:T(1,128)}', space=vmem, size = 0x12000, scoped, tag = 'internal scratch']
  #allocation2 [shape = 'f32[4,16,128]{2,1,0:T(8,128)}', space=vmem, size = 0x8000, scoped, tag = 'scratch operand']
  #allocation3 [shape = 'f32[4,16,32]{2,1,0:T(8,128)}', space=vmem, size = 0x8000, scoped, tag = 'scratch operand']
  %s0 = inlined_call_operand.vmem [shape: bf16[2,4,16,32], index: 0, kind: input, shape index: {}]
  %s1 = inlined_call_operand.vmem [shape: bf16[2,2,4,16,32], index: 1, kind: input, shape index: {}]
  %s2 = inlined_call_operand.vmem [shape: f32[2,4,16,32], index: 2, kind: input, shape index: {}]
  %s3 = inlined_call_operand.vmem [shape: f32[2,4,16,32], index: 3, kind: input, shape index: {}]
  %s4 = inlined_call_operand.vmem [shape: f32[2,16,32], index: 4, kind: input, shape index: {}]
  %s5 = inlined_call_operand.vmem [shape: bf16[96,32], index: 5, kind: input, shape index: {}]
  %s6 = inlined_call_operand.vmem [shape: f32[1,32], index: 6, kind: input, shape index: {}]
  %s7 = inlined_call_operand.vmem [shape: bf16[32,128], index: 7, kind: input, shape index: {}]
  %s8 = inlined_call_operand.vmem [shape: bf16[32,128], index: 8, kind: input, shape index: {}]
  %s9 = inlined_call_operand.vmem [shape: f32[1,128], index: 9, kind: input, shape index: {}]
  %s10 = inlined_call_operand.vmem [shape: bf16[32,32], index: 10, kind: input, shape index: {}]
  %s11 = inlined_call_operand.vmem [shape: f32[1,32], index: 11, kind: input, shape index: {}]
  %s12 = inlined_call_operand.vmem [shape: f32[2,4,16,32], index: 12, kind: output, shape index: {0}]
  %s13 = inlined_call_operand.vmem [shape: f32[2,4,16,32], index: 13, kind: output, shape index: {1}]
  %14 = xla_tuple %s12, %s13
  %s15 = sld [smem:[#allocation0]]
  $region130: #{delayed_rnn_forward.7} parent=0
    _
  %s17 = ssub.s32 1, %s15
  %s18 = scalar_select 0, %s17, %s15
  $region1: #{delayed_rnn_forward.7} parent=0
    #allocation4 [shape = 'u8[65536]{0}', space=vmem, size = 0x10000, scoped, tag = 'input window, operand 1']
    loop: start=0, step=1, limit=4
    $region2: #{delayed_rnn_forward.7} parent=1 // loop_pre_header
      _
    $region3: #{delayed_rnn_forward.7} parent=1 // loop_header
      %s20 = sphi 0, %s24
      %p21 = scmp.ge.s32.totalorder %s20, 4
      %s27 = sphi 0, %s39
      %s28 = sphi 0, %s35
      %s29 = sphi 0, %s27
      %s30 = sphi 0, %s28
      %s31 = sphi 0, %s29
      %s32 = sphi 0, %s30
      %s44 = sphi 0, %s46
      %s47 = sphi 0, %s44
      %s48 = sphi 0, %s47
      %s64 = sphi 0, %s48
      %s72 = sphi 0, %s74
      %s75 = sphi 0, %s72
      %s76 = sphi 0, %s75
      %s92 = sphi 0, %s76
      %s100 = sphi 0, %s102
      %s103 = sphi 0, %s100
      %s104 = sphi 0, %s103
      %s120 = sphi 0, %s104
      %s128 = sphi 0, %s130
      %s131 = sphi 0, %s128
      %s132 = sphi 0, %s131
      %s148 = sphi 0, %s132
      %s156 = sphi 0, %s158
      %s159 = sphi 0, %s156
      %s160 = sphi 0, %s159
      %s176 = sphi 0, %s160
      %s180 = sphi 0, %s180
      %s182 = sphi 0, %s180
      %s183 = sphi 0, %s182
      %s197 = sphi 0, %s183
      %s201 = sphi 0, %s201
      %s203 = sphi 0, %s201
      %s204 = sphi 0, %s203
      %s218 = sphi 0, %s204
      %s222 = sphi 0, %s222
      %s224 = sphi 0, %s222
      %s225 = sphi 0, %s224
      %s239 = sphi 0, %s225
      %s243 = sphi 0, %s243
      %s245 = sphi 0, %s243
      %s246 = sphi 0, %s245
      %s260 = sphi 0, %s246
      %s264 = sphi 0, %s264
      %s266 = sphi 0, %s264
      %s267 = sphi 0, %s266
      %s281 = sphi 0, %s267
      %s285 = sphi 0, %s285
      %s287 = sphi 0, %s285
      %s288 = sphi 0, %s287
      %s302 = sphi 0, %s288
      %s306 = sphi 0, %s306
      %s308 = sphi 0, %s306
      %s309 = sphi 0, %s308
      %s323 = sphi 0, %s309
      %s331 = sphi 0, %s333
      %s334 = sphi 0, %s331
      %s335 = sphi 0, %s334
      %s351 = sphi 0, %s335
      %s359 = sphi 0, %s361
      %s362 = sphi 0, %s359
      %s363 = sphi 0, %s362
      %s379 = sphi 0, %s363
    $region4: #{delayed_rnn_forward.7} parent=1 // loop_header_branch
      %23 = sbr.rel (%p21) target = $region8
    $region5: #{delayed_rnn_forward.7} parent=1 // loop_body
      %s25 = ssub.s32 %s20, 1
      %s26 = ssub.s32 %s20, 2
      %s33 = sadd.s32 1, %s28
      %p34 = scmp.ge.s32.totalorder %s33, 1
      %s35 = scalar_select %p34, 0, %s33
      %s36 = sadd.s32 1, %s27
      %s37 = scalar_select %p34, %s36, %s27
      %p38 = scmp.ge.s32.totalorder %s37, 2
      %s39 = scalar_select %p38, 0, %s37
      %s40 = ssub.s32 %s27, %s39
      %s41 = ssub.s32 %s28, %s35
      %s42 = sor.u32 %s40, %s41
      %p43 = scmp.eq.s32.totalorder %s42, 0
      %s45 = sadd.s32 %s44, 1
      %s46 = scalar_select %p43, %s44, %s45
      %p49 = pneg %p43
      %p50 = scmp.eq.s32.totalorder %s20, 1
      %p51 = por %p49, %p50
      %p52 = scmp.ne.s32.totalorder %s44, %s47
      %p53 = scmp.eq.s32.totalorder %s20, 0
      %p54 = por %p52, %p53
      %p55 = scmp.ne.s32.totalorder %s44, %s47
      %p56 = scmp.eq.s32.totalorder %s25, 1
      %p57 = por %p55, %p56
      %p58 = scmp.ne.s32.totalorder %s47, %s48
      %p59 = scmp.eq.s32.totalorder %s25, 0
      %p60 = por %p58, %p59
      %p61 = scmp.ne.s32.totalorder %s47, %s48
      %p62 = scmp.eq.s32.totalorder %s26, 1
      %p63 = por %p61, %p62
      %p65 = scmp.ne.s32.totalorder %s48, %s64
      %p66 = scmp.eq.s32.totalorder %s26, 0
      %p67 = por %p65, %p66
      %s68 = ssub.s32 %s27, %s39
      %s69 = ssub.s32 %s28, %s35
      %s70 = sor.u32 %s68, %s69
      %p71 = scmp.eq.s32.totalorder %s70, 0
      %s73 = sadd.s32 %s72, 1
      %s74 = scalar_select %p71, %s72, %s73
      %p77 = pneg %p71
      %p78 = scmp.eq.s32.totalorder %s20, 1
      %p79 = por %p77, %p78
      %p80 = scmp.ne.s32.totalorder %s72, %s75
      %p81 = scmp.eq.s32.totalorder %s20, 0
      %p82 = por %p80, %p81
      %p83 = scmp.ne.s32.totalorder %s72, %s75
      %p84 = scmp.eq.s32.totalorder %s25, 1
      %p85 = por %p83, %p84
      %p86 = scmp.ne.s32.totalorder %s75, %s76
      %p87 = scmp.eq.s32.totalorder %s25, 0
      %p88 = por %p86, %p87
      %p89 = scmp.ne.s32.totalorder %s75, %s76
      %p90 = scmp.eq.s32.totalorder %s26, 1
      %p91 = por %p89, %p90
      %p93 = scmp.ne.s32.totalorder %s76, %s92
      %p94 = scmp.eq.s32.totalorder %s26, 0
      %p95 = por %p93, %p94
      %s96 = ssub.s32 %s27, %s39
      %s97 = ssub.s32 %s28, %s35
      %s98 = sor.u32 %s96, %s97
      %p99 = scmp.eq.s32.totalorder %s98, 0
      %s101 = sadd.s32 %s100, 1
      %s102 = scalar_select %p99, %s100, %s101
      %p105 = pneg %p99
      %p106 = scmp.eq.s32.totalorder %s20, 1
      %p107 = por %p105, %p106
      %p108 = scmp.ne.s32.totalorder %s100, %s103
      %p109 = scmp.eq.s32.totalorder %s20, 0
      %p110 = por %p108, %p109
      %p111 = scmp.ne.s32.totalorder %s100, %s103
      %p112 = scmp.eq.s32.totalorder %s25, 1
      %p113 = por %p111, %p112
      %p114 = scmp.ne.s32.totalorder %s103, %s104
      %p115 = scmp.eq.s32.totalorder %s25, 0
      %p116 = por %p114, %p115
      %p117 = scmp.ne.s32.totalorder %s103, %s104
      %p118 = scmp.eq.s32.totalorder %s26, 1
      %p119 = por %p117, %p118
      %p121 = scmp.ne.s32.totalorder %s104, %s120
      %p122 = scmp.eq.s32.totalorder %s26, 0
      %p123 = por %p121, %p122
      %s124 = ssub.s32 %s27, %s39
      %s125 = ssub.s32 %s28, %s35
      %s126 = sor.u32 %s124, %s125
      %p127 = scmp.eq.s32.totalorder %s126, 0
      %s129 = sadd.s32 %s128, 1
      %s130 = scalar_select %p127, %s128, %s129
      %p133 = pneg %p127
      %p134 = scmp.eq.s32.totalorder %s20, 1
      %p135 = por %p133, %p134
      %p136 = scmp.ne.s32.totalorder %s128, %s131
      %p137 = scmp.eq.s32.totalorder %s20, 0
      %p138 = por %p136, %p137
      %p139 = scmp.ne.s32.totalorder %s128, %s131
      %p140 = scmp.eq.s32.totalorder %s25, 1
      %p141 = por %p139, %p140
      %p142 = scmp.ne.s32.totalorder %s131, %s132
      %p143 = scmp.eq.s32.totalorder %s25, 0
      %p144 = por %p142, %p143
      %p145 = scmp.ne.s32.totalorder %s131, %s132
      %p146 = scmp.eq.s32.totalorder %s26, 1
      %p147 = por %p145, %p146
      %p149 = scmp.ne.s32.totalorder %s132, %s148
      %p150 = scmp.eq.s32.totalorder %s26, 0
      %p151 = por %p149, %p150
      %s152 = ssub.s32 %s27, %s39
      %s153 = ssub.s32 %s28, %s35
      %s154 = sor.u32 %s152, %s153
      %p155 = scmp.eq.s32.totalorder %s154, 0
      %s157 = sadd.s32 %s156, 1
      %s158 = scalar_select %p155, %s156, %s157
      %p161 = pneg %p155
      %p162 = scmp.eq.s32.totalorder %s20, 1
      %p163 = por %p161, %p162
      %p164 = scmp.ne.s32.totalorder %s156, %s159
      %p165 = scmp.eq.s32.totalorder %s20, 0
      %p166 = por %p164, %p165
      %p167 = scmp.ne.s32.totalorder %s156, %s159
      %p168 = scmp.eq.s32.totalorder %s25, 1
      %p169 = por %p167, %p168
      %p170 = scmp.ne.s32.totalorder %s159, %s160
      %p171 = scmp.eq.s32.totalorder %s25, 0
      %p172 = por %p170, %p171
      %p173 = scmp.ne.s32.totalorder %s159, %s160
      %p174 = scmp.eq.s32.totalorder %s26, 1
      %p175 = por %p173, %p174
      %p177 = scmp.ne.s32.totalorder %s160, %s176
      %p178 = scmp.eq.s32.totalorder %s26, 0
      %p179 = por %p177, %p178
      %s181 = sadd.s32 %s180, 1
      %p184 = scmp.eq.s32.totalorder %s20, 1
      %p185 = scmp.ne.s32.totalorder %s180, %s182
      %p186 = scmp.eq.s32.totalorder %s20, 0
      %p187 = por %p185, %p186
      %p188 = scmp.ne.s32.totalorder %s180, %s182
      %p189 = scmp.eq.s32.totalorder %s25, 1
      %p190 = por %p188, %p189
      %p191 = scmp.ne.s32.totalorder %s182, %s183
      %p192 = scmp.eq.s32.totalorder %s25, 0
      %p193 = por %p191, %p192
      %p194 = scmp.ne.s32.totalorder %s182, %s183
      %p195 = scmp.eq.s32.totalorder %s26, 1
      %p196 = por %p194, %p195
      %p198 = scmp.ne.s32.totalorder %s183, %s197
      %p199 = scmp.eq.s32.totalorder %s26, 0
      %p200 = por %p198, %p199
      %s202 = sadd.s32 %s201, 1
      %p205 = scmp.eq.s32.totalorder %s20, 1
      %p206 = scmp.ne.s32.totalorder %s201, %s203
      %p207 = scmp.eq.s32.totalorder %s20, 0
      %p208 = por %p206, %p207
      %p209 = scmp.ne.s32.totalorder %s201, %s203
      %p210 = scmp.eq.s32.totalorder %s25, 1
      %p211 = por %p209, %p210
      %p212 = scmp.ne.s32.totalorder %s203, %s204
      %p213 = scmp.eq.s32.totalorder %s25, 0
      %p214 = por %p212, %p213
      %p215 = scmp.ne.s32.totalorder %s203, %s204
      %p216 = scmp.eq.s32.totalorder %s26, 1
      %p217 = por %p215, %p216
      %p219 = scmp.ne.s32.totalorder %s204, %s218
      %p220 = scmp.eq.s32.totalorder %s26, 0
      %p221 = por %p219, %p220
      %s223 = sadd.s32 %s222, 1
      %p226 = scmp.eq.s32.totalorder %s20, 1
      %p227 = scmp.ne.s32.totalorder %s222, %s224
      %p228 = scmp.eq.s32.totalorder %s20, 0
      %p229 = por %p227, %p228
      %p230 = scmp.ne.s32.totalorder %s222, %s224
      %p231 = scmp.eq.s32.totalorder %s25, 1
      %p232 = por %p230, %p231
      %p233 = scmp.ne.s32.totalorder %s224, %s225
      %p234 = scmp.eq.s32.totalorder %s25, 0
      %p235 = por %p233, %p234
      %p236 = scmp.ne.s32.totalorder %s224, %s225
      %p237 = scmp.eq.s32.totalorder %s26, 1
      %p238 = por %p236, %p237
      %p240 = scmp.ne.s32.totalorder %s225, %s239
      %p241 = scmp.eq.s32.totalorder %s26, 0
      %p242 = por %p240, %p241
      %s244 = sadd.s32 %s243, 1
      %p247 = scmp.eq.s32.totalorder %s20, 1
      %p248 = scmp.ne.s32.totalorder %s243, %s245
      %p249 = scmp.eq.s32.totalorder %s20, 0
      %p250 = por %p248, %p249
      %p251 = scmp.ne.s32.totalorder %s243, %s245
      %p252 = scmp.eq.s32.totalorder %s25, 1
      %p253 = por %p251, %p252
      %p254 = scmp.ne.s32.totalorder %s245, %s246
      %p255 = scmp.eq.s32.totalorder %s25, 0
      %p256 = por %p254, %p255
      %p257 = scmp.ne.s32.totalorder %s245, %s246
      %p258 = scmp.eq.s32.totalorder %s26, 1
      %p259 = por %p257, %p258
      %p261 = scmp.ne.s32.totalorder %s246, %s260
      %p262 = scmp.eq.s32.totalorder %s26, 0
      %p263 = por %p261, %p262
      %s265 = sadd.s32 %s264, 1
      %p268 = scmp.eq.s32.totalorder %s20, 1
      %p269 = scmp.ne.s32.totalorder %s264, %s266
      %p270 = scmp.eq.s32.totalorder %s20, 0
      %p271 = por %p269, %p270
      %p272 = scmp.ne.s32.totalorder %s264, %s266
      %p273 = scmp.eq.s32.totalorder %s25, 1
      %p274 = por %p272, %p273
      %p275 = scmp.ne.s32.totalorder %s266, %s267
      %p276 = scmp.eq.s32.totalorder %s25, 0
      %p277 = por %p275, %p276
      %p278 = scmp.ne.s32.totalorder %s266, %s267
      %p279 = scmp.eq.s32.totalorder %s26, 1
      %p280 = por %p278, %p279
      %p282 = scmp.ne.s32.totalorder %s267, %s281
      %p283 = scmp.eq.s32.totalorder %s26, 0
      %p284 = por %p282, %p283
      %s286 = sadd.s32 %s285, 1
      %p289 = scmp.eq.s32.totalorder %s20, 1
      %p290 = scmp.ne.s32.totalorder %s285, %s287
      %p291 = scmp.eq.s32.totalorder %s20, 0
      %p292 = por %p290, %p291
      %p293 = scmp.ne.s32.totalorder %s285, %s287
      %p294 = scmp.eq.s32.totalorder %s25, 1
      %p295 = por %p293, %p294
      %p296 = scmp.ne.s32.totalorder %s287, %s288
      %p297 = scmp.eq.s32.totalorder %s25, 0
      %p298 = por %p296, %p297
      %p299 = scmp.ne.s32.totalorder %s287, %s288
      %p300 = scmp.eq.s32.totalorder %s26, 1
      %p301 = por %p299, %p300
      %p303 = scmp.ne.s32.totalorder %s288, %s302
      %p304 = scmp.eq.s32.totalorder %s26, 0
      %p305 = por %p303, %p304
      %s307 = sadd.s32 %s306, 1
      %p310 = scmp.eq.s32.totalorder %s20, 1
      %p311 = scmp.ne.s32.totalorder %s306, %s308
      %p312 = scmp.eq.s32.totalorder %s20, 0
      %p313 = por %p311, %p312
      %p314 = scmp.ne.s32.totalorder %s306, %s308
      %p315 = scmp.eq.s32.totalorder %s25, 1
      %p316 = por %p314, %p315
      %p317 = scmp.ne.s32.totalorder %s308, %s309
      %p318 = scmp.eq.s32.totalorder %s25, 0
      %p319 = por %p317, %p318
      %p320 = scmp.ne.s32.totalorder %s308, %s309
      %p321 = scmp.eq.s32.totalorder %s26, 1
      %p322 = por %p320, %p321
      %p324 = scmp.ne.s32.totalorder %s309, %s323
      %p325 = scmp.eq.s32.totalorder %s26, 0
      %p326 = por %p324, %p325
      %s327 = ssub.s32 %s27, %s39
      %s328 = ssub.s32 %s28, %s35
      %s329 = sor.u32 %s327, %s328
      %p330 = scmp.eq.s32.totalorder %s329, 0
      %s332 = sadd.s32 %s331, 1
      %s333 = scalar_select %p330, %s331, %s332
      %p336 = pneg %p330
      %p337 = scmp.eq.s32.totalorder %s20, 1
      %p338 = por %p336, %p337
      %p339 = scmp.ne.s32.totalorder %s331, %s334
      %p340 = scmp.eq.s32.totalorder %s20, 0
      %p341 = por %p339, %p340
      %p342 = scmp.ne.s32.totalorder %s331, %s334
      %p343 = scmp.eq.s32.totalorder %s25, 1
      %p344 = por %p342, %p343
      %p345 = scmp.ne.s32.totalorder %s334, %s335
      %p346 = scmp.eq.s32.totalorder %s25, 0
      %p347 = por %p345, %p346
      %p348 = scmp.ne.s32.totalorder %s334, %s335
      %p349 = scmp.eq.s32.totalorder %s26, 1
      %p350 = por %p348, %p349
      %p352 = scmp.ne.s32.totalorder %s335, %s351
      %p353 = scmp.eq.s32.totalorder %s26, 0
      %p354 = por %p352, %p353
      %s355 = ssub.s32 %s27, %s39
      %s356 = ssub.s32 %s28, %s35
      %s357 = sor.u32 %s355, %s356
      %p358 = scmp.eq.s32.totalorder %s357, 0
      %s360 = sadd.s32 %s359, 1
      %s361 = scalar_select %p358, %s359, %s360
      %p364 = pneg %p358
      %p365 = scmp.eq.s32.totalorder %s20, 1
      %p366 = por %p364, %p365
      %p367 = scmp.ne.s32.totalorder %s359, %s362
      %p368 = scmp.eq.s32.totalorder %s20, 0
      %p369 = por %p367, %p368
      %p370 = scmp.ne.s32.totalorder %s359, %s362
      %p371 = scmp.eq.s32.totalorder %s25, 1
      %p372 = por %p370, %p371
      %p373 = scmp.ne.s32.totalorder %s362, %s363
      %p374 = scmp.eq.s32.totalorder %s25, 0
      %p375 = por %p373, %p374
      %p376 = scmp.ne.s32.totalorder %s362, %s363
      %p377 = scmp.eq.s32.totalorder %s26, 1
      %p378 = por %p376, %p377
      %p380 = scmp.ne.s32.totalorder %s363, %s379
      %p381 = scmp.eq.s32.totalorder %s26, 0
      %p382 = por %p380, %p381
      %p383 = scmp.le.s32.totalorder 1, %s20
      %p384 = scmp.lt.s32.totalorder %s20, 3
      %p385 = pnand %p383, %p384
      %p386 = pneg %p385
      // Predicated region
      $region9: #{delayed_rnn_forward.7} parent=5 // pred_check
        _
      $region10: #{delayed_rnn_forward.7} parent=5 // pred_check_branch
        %388 = sbr.rel (%p385) target = $region12
      $region11: #{delayed_rnn_forward.7} parent=5 // pred_region
        %s389 = ssub.s32 %s20, 1
        // Predicated region
        $region13: #{delayed_rnn_forward.7} parent=11 // pred_check
          %p390 = pneg %p193
        $region14: #{delayed_rnn_forward.7} parent=11 // pred_check_branch
          %392 = sbr.rel (%p390) target = $region16
        $region15: #{delayed_rnn_forward.7} parent=11 // pred_region
          _
        $region16: #{delayed_rnn_forward.7} parent=11 // pred_fallthru
          _
        // Predicated region
        $region17: #{delayed_rnn_forward.7} parent=11 // pred_check
          %p393 = pneg %p214
        $region18: #{delayed_rnn_forward.7} parent=11 // pred_check_branch
          %395 = sbr.rel (%p393) target = $region20
        $region19: #{delayed_rnn_forward.7} parent=11 // pred_region
          _
        $region20: #{delayed_rnn_forward.7} parent=11 // pred_fallthru
          _
        // Predicated region
        $region21: #{delayed_rnn_forward.7} parent=11 // pred_check
          %p396 = pneg %p235
        $region22: #{delayed_rnn_forward.7} parent=11 // pred_check_branch
          %398 = sbr.rel (%p396) target = $region24
        $region23: #{delayed_rnn_forward.7} parent=11 // pred_region
          _
        $region24: #{delayed_rnn_forward.7} parent=11 // pred_fallthru
          _
        // Predicated region
        $region25: #{delayed_rnn_forward.7} parent=11 // pred_check
          %p399 = pneg %p256
        $region26: #{delayed_rnn_forward.7} parent=11 // pred_check_branch
          %401 = sbr.rel (%p399) target = $region28
        $region27: #{delayed_rnn_forward.7} parent=11 // pred_region
          _
        $region28: #{delayed_rnn_forward.7} parent=11 // pred_fallthru
          _
        // Predicated region
        $region29: #{delayed_rnn_forward.7} parent=11 // pred_check
          %p402 = pneg %p277
        $region30: #{delayed_rnn_forward.7} parent=11 // pred_check_branch
          %404 = sbr.rel (%p402) target = $region32
        $region31: #{delayed_rnn_forward.7} parent=11 // pred_region
          _
        $region32: #{delayed_rnn_forward.7} parent=11 // pred_fallthru
          _
        // Predicated region
        $region33: #{delayed_rnn_forward.7} parent=11 // pred_check
          %p405 = pneg %p298
        $region34: #{delayed_rnn_forward.7} parent=11 // pred_check_branch
          %407 = sbr.rel (%p405) target = $region36
        $region35: #{delayed_rnn_forward.7} parent=11 // pred_region
          _
        $region36: #{delayed_rnn_forward.7} parent=11 // pred_fallthru
          _
        // Predicated region
        $region37: #{delayed_rnn_forward.7} parent=11 // pred_check
          %p408 = pneg %p319
        $region38: #{delayed_rnn_forward.7} parent=11 // pred_check_branch
          %410 = sbr.rel (%p408) target = $region40
        $region39: #{delayed_rnn_forward.7} parent=11 // pred_region
          _
        $region40: #{delayed_rnn_forward.7} parent=11 // pred_fallthru
          _
      $region12: #{delayed_rnn_forward.7} parent=5 // pred_fallthru
        _
      %p411 = scmp.lt.s32.totalorder %s20, 2
      // Predicated region
      $region41: #{delayed_rnn_forward.7} parent=5 // pred_check
        %p412 = pneg %p411
      $region42: #{delayed_rnn_forward.7} parent=5 // pred_check_branch
        %414 = sbr.rel (%p412) target = $region44
      $region43: #{delayed_rnn_forward.7} parent=5 // pred_region
        // Predicated region
        $region45: #{delayed_rnn_forward.7} parent=43 // pred_check
          %p415 = pneg %p54
        $region46: #{delayed_rnn_forward.7} parent=43 // pred_check_branch
          %417 = sbr.rel (%p415) target = $region48
        $region47: #{delayed_rnn_forward.7} parent=43 // pred_region
          %s418 = smul.u32 2, %s28
          %p419 = scmp.lt.s32.totalorder %s27, 1
          %s420 = scalar_select %p419, %s27, 1
          %p421 = scmp.lt.s32.totalorder %s418, 1
          %s422 = scalar_select %p421, %s418, 1
          %s423 = smul.addr %s420, 8
          %s424 = sadd.s32 %s422, %s423
          %s425 = smul.addr %s424, 4
          %s426 = scalar_lea.vmem %s0, %s425
          %s427 = smul.u32 2, %s28
        $region48: #{delayed_rnn_forward.7} parent=43 // pred_fallthru
          _
        // Predicated region
        $region49: #{delayed_rnn_forward.7} parent=43 // pred_check
          %p428 = pneg %p82
        $region50: #{delayed_rnn_forward.7} parent=43 // pred_check_branch
          %430 = sbr.rel (%p428) target = $region52
        $region51: #{delayed_rnn_forward.7} parent=43 // pred_region
          %s431 = sand.u32 %s72, 1
          %s432 = sand.u32 %s72, 1
          %s433 = smul.addr %s432, 64
          %s434 = scalar_lea.vmem [#allocation4], %s433
          %s435 = smul.u32 2, %s28
          %s436 = smul.addr %s27, 8
          %s437 = sadd.s32 %s435, %s436
          %s438 = smul.addr %s437, 4
          %s439 = scalar_lea.vmem %s1, %s438
          // Predicated region
          $region53: #{delayed_rnn_forward.7} parent=51 // pred_check
            _
          $region54: #{delayed_rnn_forward.7} parent=51 // pred_check_branch
            %441 = sbr.rel (0) target = $region56
          $region55: #{delayed_rnn_forward.7} parent=51 // pred_region
            // Predicated region
            $region57: #{delayed_rnn_forward.7} parent=55 // pred_check
              _
            $region58: #{delayed_rnn_forward.7} parent=55 // pred_check_branch
              %443 = sbr.rel target = $region60
            $region59: #{delayed_rnn_forward.7} parent=55 // pred_region
              // Predicated region
              $region72: #{delayed_rnn_forward.7} parent=59 // pred_check
                _
              $region73: #{delayed_rnn_forward.7} parent=59 // pred_check_branch
                %489 = sbr.rel (0) target = $region75
              $region74: #{delayed_rnn_forward.7} parent=59 // pred_region
                loop: start=0, step=1, limit=1
                $region76: #{delayed_rnn_forward.7} parent=74 // loop_pre_header
                  _
                $region77: #{delayed_rnn_forward.7} parent=74 // loop_header
                  %s491 = sphi 0, %s495
                  %p492 = scmp.ge.s32.totalorder %s491, 1
                  %s496 = sphi %s439, %s439
                  %s497 = sphi %s434, %s434
                $region78: #{delayed_rnn_forward.7} parent=74 // loop_header_branch
                  %494 = sbr.rel (%p492) target = $region82
                $region79: #{delayed_rnn_forward.7} parent=74 // loop_body
                  _
                $region80: #{delayed_rnn_forward.7} parent=74 // loop_footer
                  %s495 = sadd.s32 1, %s491
                $region81: #{delayed_rnn_forward.7} parent=74 // loop_footer_branch
                  %490 = sbr.rel target = $region77
                $region82: #{delayed_rnn_forward.7} parent=74 // loop_exit
                  _
                %s499 = ssub.s32 16, 1
                loop: start=0, step=1, limit=1
                $region83: #{delayed_rnn_forward.7} parent=74 // loop_pre_header
                  _
                $region84: #{delayed_rnn_forward.7} parent=74 // loop_header
                  %s501 = sphi 0, %s505
                  %p502 = scmp.ge.s32.totalorder %s501, 1
                  %s506 = sphi %s439, %s439
                  %s507 = sphi %s434, %s434
                $region85: #{delayed_rnn_forward.7} parent=74 // loop_header_branch
                  %504 = sbr.rel (%p502) target = $region89
                $region86: #{delayed_rnn_forward.7} parent=74 // loop_body
                  %v508 = vld [vmem:[%s506] sm:%s499]
                  %509 = vst [vmem:[%s507] sm:%s499] %v508
                  %v510 = vld [vmem:[%s506 + $0x4] sm:%s499]
                  %511 = vst [vmem:[%s507 + $0x4] sm:%s499] %v510
                  %v512 = vld [vmem:[%s506 + $0x8] sm:%s499]
                  %513 = vst [vmem:[%s507 + $0x8] sm:%s499] %v512
                  %v514 = vld [vmem:[%s506 + $0xc] sm:%s499]
                  %515 = vst [vmem:[%s507 + $0xc] sm:%s499] %v514
                  %v516 = vld [vmem:[%s506 + $0x10] sm:%s499]
                  %517 = vst [vmem:[%s507 + $0x10] sm:%s499] %v516
                  %v518 = vld [vmem:[%s506 + $0x14] sm:%s499]
                  %519 = vst [vmem:[%s507 + $0x14] sm:%s499] %v518
                  %v520 = vld [vmem:[%s506 + $0x18] sm:%s499]
                  %521 = vst [vmem:[%s507 + $0x18] sm:%s499] %v520
                  %v522 = vld [vmem:[%s506 + $0x1c] sm:%s499]
                  %523 = vst [vmem:[%s507 + $0x1c] sm:%s499] %v522
                  %v524 = vld [vmem:[%s506 + $0x40] sm:%s499]
                  %525 = vst [vmem:[%s507 + $0x20] sm:%s499] %v524
                  %v526 = vld [vmem:[%s506 + $0x44] sm:%s499]
                  %527 = vst [vmem:[%s507 + $0x24] sm:%s499] %v526
                  %v528 = vld [vmem:[%s506 + $0x48] sm:%s499]
                  %529 = vst [vmem:[%s507 + $0x28] sm:%s499] %v528
                  %v530 = vld [vmem:[%s506 + $0x4c] sm:%s499]
                  %531 = vst [vmem:[%s507 + $0x2c] sm:%s499] %v530
                  %v532 = vld [vmem:[%s506 + $0x50] sm:%s499]
                  %533 = vst [vmem:[%s507 + $0x30] sm:%s499] %v532
                  %v534 = vld [vmem:[%s506 + $0x54] sm:%s499]
                  %535 = vst [vmem:[%s507 + $0x34] sm:%s499] %v534
                  %v536 = vld [vmem:[%s506 + $0x58] sm:%s499]
                  %537 = vst [vmem:[%s507 + $0x38] sm:%s499] %v536
                  %v538 = vld [vmem:[%s506 + $0x5c] sm:%s499]
                  %539 = vst [vmem:[%s507 + $0x3c] sm:%s499] %v538
                $region87: #{delayed_rnn_forward.7} parent=74 // loop_footer
                  %s505 = sadd.s32 1, %s501
                $region88: #{delayed_rnn_forward.7} parent=74 // loop_footer_branch
                  %500 = sbr.rel target = $region84
                $region89: #{delayed_rnn_forward.7} parent=74 // loop_exit
                  _
              $region75: #{delayed_rnn_forward.7} parent=59 // pred_fallthru
                _
            $region60: #{delayed_rnn_forward.7} parent=55 // pred_fallthru
              _
            // Predicated region
            $region61: #{delayed_rnn_forward.7} parent=55 // pred_check
              _
            $region62: #{delayed_rnn_forward.7} parent=55 // pred_check_branch
              %445 = sbr.rel (0) target = $region64
            $region63: #{delayed_rnn_forward.7} parent=55 // pred_region
              %s447 = ssub.s32 16, 1
              loop: start=0, step=1, limit=1
              $region65: #{delayed_rnn_forward.7} parent=63 // loop_pre_header
                _
              $region66: #{delayed_rnn_forward.7} parent=63 // loop_header
                %s449 = sphi 0, %s453
                %p450 = scmp.ge.s32.totalorder %s449, 1
                %s454 = sphi %s439, %s439
                %s455 = sphi %s434, %s434
              $region67: #{delayed_rnn_forward.7} parent=63 // loop_header_branch
                %452 = sbr.rel (%p450) target = $region71
              $region68: #{delayed_rnn_forward.7} parent=63 // loop_body
                %v456 = vld [vmem:[%s454] sm:%s447]
                %457 = vst [vmem:[%s455] sm:%s447] %v456
                %v458 = vld [vmem:[%s454 + $0x4] sm:%s447]
                %459 = vst [vmem:[%s455 + $0x4] sm:%s447] %v458
                %v460 = vld [vmem:[%s454 + $0x8] sm:%s447]
                %461 = vst [vmem:[%s455 + $0x8] sm:%s447] %v460
                %v462 = vld [vmem:[%s454 + $0xc] sm:%s447]
                %463 = vst [vmem:[%s455 + $0xc] sm:%s447] %v462
                %v464 = vld [vmem:[%s454 + $0x10] sm:%s447]
                %465 = vst [vmem:[%s455 + $0x10] sm:%s447] %v464
                %v466 = vld [vmem:[%s454 + $0x14] sm:%s447]
                %467 = vst [vmem:[%s455 + $0x14] sm:%s447] %v466
                %v468 = vld [vmem:[%s454 + $0x18] sm:%s447]
                %469 = vst [vmem:[%s455 + $0x18] sm:%s447] %v468
                %v470 = vld [vmem:[%s454 + $0x1c] sm:%s447]
                %471 = vst [vmem:[%s455 + $0x1c] sm:%s447] %v470
                %v472 = vld [vmem:[%s454 + $0x40] sm:%s447]
                %473 = vst [vmem:[%s455 + $0x20] sm:%s447] %v472
                %v474 = vld [vmem:[%s454 + $0x44] sm:%s447]
                %475 = vst [vmem:[%s455 + $0x24] sm:%s447] %v474
                %v476 = vld [vmem:[%s454 + $0x48] sm:%s447]
                %477 = vst [vmem:[%s455 + $0x28] sm:%s447] %v476
                %v478 = vld [vmem:[%s454 + $0x4c] sm:%s447]
                %479 = vst [vmem:[%s455 + $0x2c] sm:%s447] %v478
                %v480 = vld [vmem:[%s454 + $0x50] sm:%s447]
                %481 = vst [vmem:[%s455 + $0x30] sm:%s447] %v480
                %v482 = vld [vmem:[%s454 + $0x54] sm:%s447]
                %483 = vst [vmem:[%s455 + $0x34] sm:%s447] %v482
                %v484 = vld [vmem:[%s454 + $0x58] sm:%s447]
                %485 = vst [vmem:[%s455 + $0x38] sm:%s447] %v484
                %v486 = vld [vmem:[%s454 + $0x5c] sm:%s447]
                %487 = vst [vmem:[%s455 + $0x3c] sm:%s447] %v486
              $region69: #{delayed_rnn_forward.7} parent=63 // loop_footer
                %s453 = sadd.s32 1, %s449
              $region70: #{delayed_rnn_forward.7} parent=63 // loop_footer_branch
                %448 = sbr.rel target = $region66
              $region71: #{delayed_rnn_forward.7} parent=63 // loop_exit
                _
            $region64: #{delayed_rnn_forward.7} parent=55 // pred_fallthru
              _
          $region56: #{delayed_rnn_forward.7} parent=51 // pred_fallthru
            _
          %540 = vnop
        $region52: #{delayed_rnn_forward.7} parent=43 // pred_fallthru
          _
        // Predicated region
        $region90: #{delayed_rnn_forward.7} parent=43 // pred_check
          %p541 = pneg %p110
        $region91: #{delayed_rnn_forward.7} parent=43 // pred_check_branch
          %543 = sbr.rel (%p541) target = $region93
        $region92: #{delayed_rnn_forward.7} parent=43 // pred_region
          %s544 = smul.u32 2, %s28
          %p545 = scmp.lt.s32.totalorder %s27, 1
          %s546 = scalar_select %p545, %s27, 1
          %p547 = scmp.lt.s32.totalorder %s544, 1
          %s548 = scalar_select %p547, %s544, 1
          %s549 = smul.addr %s546, 8
          %s550 = sadd.s32 %s548, %s549
          %s551 = smul.addr %s550, 8
          %s552 = scalar_lea.vmem %s2, %s551
          %s553 = smul.u32 2, %s28
        $region93: #{delayed_rnn_forward.7} parent=43 // pred_fallthru
          _
        // Predicated region
        $region94: #{delayed_rnn_forward.7} parent=43 // pred_check
          %p554 = pneg %p138
        $region95: #{delayed_rnn_forward.7} parent=43 // pred_check_branch
          %556 = sbr.rel (%p554) target = $region97
        $region96: #{delayed_rnn_forward.7} parent=43 // pred_region
          %s557 = smul.u32 2, %s28
          %p558 = scmp.lt.s32.totalorder %s27, 1
          %s559 = scalar_select %p558, %s27, 1
          %p560 = scmp.lt.s32.totalorder %s557, 1
          %s561 = scalar_select %p560, %s557, 1
          %s562 = smul.addr %s559, 8
          %s563 = sadd.s32 %s561, %s562
          %s564 = smul.addr %s563, 8
          %s565 = scalar_lea.vmem %s3, %s564
          %s566 = smul.u32 2, %s28
        $region97: #{delayed_rnn_forward.7} parent=43 // pred_fallthru
          _
        // Predicated region
        $region98: #{delayed_rnn_forward.7} parent=43 // pred_check
          %p567 = pneg %p166
        $region99: #{delayed_rnn_forward.7} parent=43 // pred_check_branch
          %569 = sbr.rel (%p567) target = $region101
        $region100: #{delayed_rnn_forward.7} parent=43 // pred_region
          %s570 = smul.u32 2, %s28
          %p571 = scmp.lt.s32.totalorder %s27, 1
          %s572 = scalar_select %p571, %s27, 1
          %p573 = scmp.lt.s32.totalorder %s570, 1
          %s574 = scalar_select %p573, %s570, 1
          %s575 = smul.addr %s572, 2
          %s576 = sadd.s32 %s574, %s575
          %s577 = smul.addr %s576, 8
          %s578 = scalar_lea.vmem %s4, %s577
          %s579 = smul.u32 2, %s28
        $region101: #{delayed_rnn_forward.7} parent=43 // pred_fallthru
          _
      $region44: #{delayed_rnn_forward.7} parent=5 // pred_fallthru
        _
      %p580 = scmp.le.s32.totalorder 1, %s20
      %p581 = scmp.lt.s32.totalorder %s20, 3
      %p582 = pnand %p580, %p581
      %p583 = pneg %p582
      // Predicated region
      $region102: #{delayed_rnn_forward.7} parent=5 // pred_check
        _
      $region103: #{delayed_rnn_forward.7} parent=5 // pred_check_branch
        %585 = sbr.rel (%p582) target = $region105
      $region104: #{delayed_rnn_forward.7} parent=5 // pred_region
        %s586 = ssub.s32 %s20, 1
        %s587 = sand.u32 %s75, 1
        %s588 = sand.u32 %s75, 1
        %s589 = smul.addr %s588, 64
        %s590 = scalar_lea.vmem [#allocation4], %s589
        // Predicated region
        $region106: #{delayed_rnn_forward.7} parent=104 // pred_check
          %p591 = pneg %p88
        $region107: #{delayed_rnn_forward.7} parent=104 // pred_check_branch
          %593 = sbr.rel (%p591) target = $region109
        $region108: #{delayed_rnn_forward.7} parent=104 // pred_region
          _
        $region109: #{delayed_rnn_forward.7} parent=104 // pred_fallthru
          _
        %s594 = smul.u32 2, %s30
        %p595 = scmp.lt.s32.totalorder %s29, 1
        %s596 = scalar_select %p595, %s29, 1
        %p597 = scmp.lt.s32.totalorder %s594, 1
        %s598 = scalar_select %p597, %s594, 1
        %s599 = smul.addr %s596, 8
        %s600 = sadd.s32 %s598, %s599
        %s601 = smul.addr %s600, 4
        %s602 = scalar_lea.vmem %s0, %s601
        %p603 = pneg %p60
        %p604 = pneg %p57
        %s605 = sand.u32 %s75, 1
        %s606 = sand.u32 %s75, 1
        %s607 = smul.addr %s606, 64
        %s608 = scalar_lea.vmem [#allocation4], %s607
        %p609 = pneg %p88
        %p610 = pneg %p85
        %s611 = smul.u32 2, %s30
        %p612 = scmp.lt.s32.totalorder %s29, 1
        %s613 = scalar_select %p612, %s29, 1
        %p614 = scmp.lt.s32.totalorder %s611, 1
        %s615 = scalar_select %p614, %s611, 1
        %s616 = smul.addr %s613, 8
        %s617 = sadd.s32 %s615, %s616
        %s618 = smul.addr %s617, 8
        %s619 = scalar_lea.vmem %s2, %s618
        %p620 = pneg %p116
        %p621 = pneg %p113
        %s622 = smul.u32 2, %s30
        %p623 = scmp.lt.s32.totalorder %s29, 1
        %s624 = scalar_select %p623, %s29, 1
        %p625 = scmp.lt.s32.totalorder %s622, 1
        %s626 = scalar_select %p625, %s622, 1
        %s627 = smul.addr %s624, 8
        %s628 = sadd.s32 %s626, %s627
        %s629 = smul.addr %s628, 8
        %s630 = scalar_lea.vmem %s3, %s629
        %p631 = pneg %p144
        %p632 = pneg %p141
        %s633 = smul.u32 2, %s30
        %p634 = scmp.lt.s32.totalorder %s29, 1
        %s635 = scalar_select %p634, %s29, 1
        %p636 = scmp.lt.s32.totalorder %s633, 1
        %s637 = scalar_select %p636, %s633, 1
        %s638 = smul.addr %s635, 2
        %s639 = sadd.s32 %s637, %s638
        %s640 = smul.addr %s639, 8
        %s641 = scalar_lea.vmem %s4, %s640
        %p642 = pneg %p172
        %p643 = pneg %p169
        %p644 = pneg %p193
        %p645 = pneg %p190
        %p646 = pneg %p214
        %p647 = pneg %p211
        %p648 = pneg %p235
        %p649 = pneg %p232
        %p650 = pneg %p256
        %p651 = pneg %p253
        %p652 = pneg %p277
        %p653 = pneg %p274
        %p654 = pneg %p298
        %p655 = pneg %p295
        %p656 = pneg %p319
        %p657 = pneg %p316
        %p658 = pneg %p347
        %p659 = pneg %p344
        %s660 = smul.u32 2, %s30
        %p661 = scmp.lt.s32.totalorder %s29, 1
        %s662 = scalar_select %p661, %s29, 1
        %p663 = scmp.lt.s32.totalorder %s660, 1
        %s664 = scalar_select %p663, %s660, 1
        %s665 = smul.addr %s662, 8
        %s666 = sadd.s32 %s664, %s665
        %s667 = smul.addr %s666, 8
        %s668 = scalar_lea.vmem %s12, %s667
        %p669 = pneg %p375
        %p670 = pneg %p372
        %s671 = smul.u32 2, %s30
        %p672 = scmp.lt.s32.totalorder %s29, 1
        %s673 = scalar_select %p672, %s29, 1
        %p674 = scmp.lt.s32.totalorder %s671, 1
        %s675 = scalar_select %p674, %s671, 1
        %s676 = smul.addr %s673, 8
        %s677 = sadd.s32 %s675, %s676
        %s678 = smul.addr %s677, 8
        %s679 = scalar_lea.vmem %s13, %s678
        %s680 = smul.u32 2, %s30
        %p681 = scmp.lt.s32.totalorder %s29, 1
        %s682 = scalar_select %p681, %s29, 1
        %p683 = scmp.lt.s32.totalorder %s680, 1
        %s684 = scalar_select %p683, %s680, 1
        %s685 = smul.addr %s682, 8
        %s686 = sadd.s32 %s684, %s685
        %s687 = smul.addr %s686, 4
        %s688 = scalar_lea.vmem %s0, %s687
        %s689 = smul.u32 2, %s30
        %s690 = smul.u32 2, %s30
        %s691 = smul.u32 2, %s30
        %p692 = scmp.lt.s32.totalorder %s29, 1
        %s693 = scalar_select %p692, %s29, 1
        %p694 = scmp.lt.s32.totalorder %s691, 1
        %s695 = scalar_select %p694, %s691, 1
        %s696 = smul.addr %s693, 8
        %s697 = sadd.s32 %s695, %s696
        %s698 = smul.addr %s697, 8
        %s699 = scalar_lea.vmem %s2, %s698
        %s700 = smul.u32 2, %s30
        %s701 = smul.u32 2, %s30
        %p702 = scmp.lt.s32.totalorder %s29, 1
        %s703 = scalar_select %p702, %s29, 1
        %p704 = scmp.lt.s32.totalorder %s701, 1
        %s705 = scalar_select %p704, %s701, 1
        %s706 = smul.addr %s703, 8
        %s707 = sadd.s32 %s705, %s706
        %s708 = smul.addr %s707, 8
        %s709 = scalar_lea.vmem %s3, %s708
        %s710 = smul.u32 2, %s30
        %s711 = smul.u32 2, %s30
        %p712 = scmp.lt.s32.totalorder %s29, 1
        %s713 = scalar_select %p712, %s29, 1
        %p714 = scmp.lt.s32.totalorder %s711, 1
        %s715 = scalar_select %p714, %s711, 1
        %s716 = smul.addr %s713, 2
        %s717 = sadd.s32 %s715, %s716
        %s718 = smul.addr %s717, 8
        %s719 = scalar_lea.vmem %s4, %s718
        %s720 = smul.u32 2, %s30
        %s721 = smul.u32 2, %s30
        %p722 = scmp.lt.s32.totalorder %s29, 1
        %s723 = scalar_select %p722, %s29, 1
        %p724 = scmp.lt.s32.totalorder %s721, 1
        %s725 = scalar_select %p724, %s721, 1
        %s726 = smul.addr %s723, 8
        %s727 = sadd.s32 %s725, %s726
        %s728 = smul.addr %s727, 8
        %s729 = scalar_lea.vmem %s12, %s728
        %s730 = smul.u32 2, %s30
        %s731 = smul.u32 2, %s30
        %p732 = scmp.lt.s32.totalorder %s29, 1
        %s733 = scalar_select %p732, %s29, 1
        %p734 = scmp.lt.s32.totalorder %s731, 1
        %s735 = scalar_select %p734, %s731, 1
        %s736 = smul.addr %s733, 8
        %s737 = sadd.s32 %s735, %s736
        %s738 = smul.addr %s737, 8
        %s739 = scalar_lea.vmem %s13, %s738
        %s740 = smul.u32 2, %s30
        %v742 = vld [vmem:[%s688] sm:$0xf]
        %v743 = vld [vmem:[%s688 + $0x4] sm:$0xf]
        %v744 = vld [vmem:[%s688 + $0x8] sm:$0xf]
        %v745 = vld [vmem:[%s688 + $0xc] sm:$0xf]
        %v746 = vld [vmem:[%s688 + $0x10] sm:$0xf]
        %v747 = vld [vmem:[%s688 + $0x14] sm:$0xf]
        %v748 = vld [vmem:[%s688 + $0x18] sm:$0xf]
        %v749 = vld [vmem:[%s688 + $0x1c] sm:$0xf]
        %v750 = vld [vmem:[%s5] sm:$0xf]
        %v751 = vld [vmem:[%s5 + $0x4] sm:$0xf]
        %v752 = vld [vmem:[%s5 + $0x8] sm:$0xf]
        %v753 = vld [vmem:[%s5 + $0xc] sm:$0xf]
        %v762 = vunpack.c.l.b16 %v742
        %v763 = vunpack.c.l.b16 %v743
        %v764 = vunpack.c.l.b16 %v744
        %v765 = vunpack.c.l.b16 %v745
        %v766 = vunpack.c.l.b16 %v746
        %v767 = vunpack.c.l.b16 %v747
        %v768 = vunpack.c.l.b16 %v748
        %v769 = vunpack.c.l.b16 %v749
        %v770 = vpack.c.b16 %v763, %v762
        %v771 = vpack.c.b16 %v765, %v764
        %v772 = vpack.c.b16 %v767, %v766
        %v773 = vpack.c.b16 %v769, %v768
        %v778 = vunpack.c.l.b16 %v750
        %v779 = vunpack.c.l.b16 %v751
        %v780 = vunpack.c.l.b16 %v752
        %v781 = vunpack.c.l.b16 %v753
        %v782 = vpack.c.b16 %v779, %v778
        %v783 = vpack.c.b16 %v781, %v780
        %vm786 = vcmask 261120
        %v788 = vsel %vm786, %v770, 0
        %v791 = vsel %vm786, %v771, 0
        %v794 = vsel %vm786, %v772, 0
        %v797 = vsel %vm786, %v773, 0
        %799 = vmatprep.subr.bf16.mxu0 0
        %800 = vmatpush1.bf16.msra.mxu0 0
        %801 = vmatprep.subr.bf16.mxu0 0
        %802 = vmatpush1.bf16.msra.mxu0 0
        %803 = vmatprep.subr.bf16.mxu0 0
        %804 = vmatpush1.bf16.msra.mxu0 0
        %805 = vmatprep.subr.bf16.mxu0 0
        %806 = vmatpush1.bf16.msra.mxu0 0
        %807 = vmatprep.subr.bf16.mxu0 0
        %808 = vmatpush1.bf16.msra.mxu0 0
        %809 = vmatprep.subr.bf16.mxu0 0
        %810 = vmatpush1.bf16.msra.mxu0 0
        %811 = vmatprep.subr.bf16.mxu0 0
        %812 = vmatpush1.bf16.msra.mxu0 %v783
        %813 = vmatprep.subr.bf16.mxu0 0
        %814 = vmatpush1.bf16.msra.mxu0 %v782
        %815 = vmatprep.subr.bf16.mxu0 0
        %816 = vmatpush2.bf16.msra.mxu0 0
        %817 = vmatprep.subr.bf16.mxu0 0
        %818 = vmatpush2.bf16.msra.mxu0 0
        %819 = vmatprep.subr.bf16.mxu0 0
        %820 = vmatpush2.bf16.msra.mxu0 0
        %821 = vmatprep.subr.bf16.mxu0 0
        %822 = vmatpush2.bf16.msra.mxu0 0
        %823 = vmatprep.subr.bf16.mxu0 0
        %824 = vmatpush2.bf16.msra.mxu0 0
        %825 = vmatprep.subr.bf16.mxu0 0
        %826 = vmatpush2.bf16.msra.mxu0 0
        %827 = vmatprep.subr.bf16.mxu0 0
        %828 = vmatpush2.bf16.msra.mxu0 0
        %829 = vmatprep.subr.bf16.mxu0 0
        %830 = vmatpush2.bf16.msra.mxu0 0
        %831 = vmatprep.mubr.bf16.mxu0 0
        %832 = vmatmul.mubr.bf16.gmra.mxu0 %v788
        %v833 = vpop.f32.mrf.mxu0
        %v834 = vadd.f32 0.0, %v833
        %v835 = vpop.f32.mrf.mxu0
        %v836 = vpop.f32.mrf.mxu0
        %v837 = vadd.f32 0.0, %v836
        %v838 = vpop.f32.mrf.mxu0
        %839 = vmatprep.mubr.bf16.mxu0 0
        %840 = vmatmul.mubr.bf16.gmra.mxu0 %v791
        %v841 = vpop.f32.mrf.mxu0
        %v842 = vadd.f32 0.0, %v841
        %v843 = vpop.f32.mrf.mxu0
        %v844 = vpop.f32.mrf.mxu0
        %v845 = vadd.f32 0.0, %v844
        %v846 = vpop.f32.mrf.mxu0
        %847 = vmatprep.mubr.bf16.mxu0 0
        %848 = vmatmul.mubr.bf16.gmra.mxu0 %v794
        %v849 = vpop.f32.mrf.mxu0
        %v850 = vadd.f32 0.0, %v849
        %v851 = vpop.f32.mrf.mxu0
        %v852 = vpop.f32.mrf.mxu0
        %v853 = vadd.f32 0.0, %v852
        %v854 = vpop.f32.mrf.mxu0
        %855 = vmatprep.mubr.bf16.mxu0 0
        %856 = vmatmul.mubr.bf16.gmra.mxu0 %v797
        %v857 = vpop.f32.mrf.mxu0
        %v858 = vadd.f32 0.0, %v857
        %v859 = vpop.f32.mrf.mxu0
        %v860 = vpop.f32.mrf.mxu0
        %v861 = vadd.f32 0.0, %v860
        %v862 = vpop.f32.mrf.mxu0
        %863 = vdwg.mxu0
        %v864 = vld [vmem:[%s590] sm:$0xf]
        %v865 = vld [vmem:[%s590 + $0x4] sm:$0xf]
        %v866 = vld [vmem:[%s590 + $0x8] sm:$0xf]
        %v867 = vld [vmem:[%s590 + $0xc] sm:$0xf]
        %v868 = vld [vmem:[%s590 + $0x10] sm:$0xf]
        %v869 = vld [vmem:[%s590 + $0x14] sm:$0xf]
        %v870 = vld [vmem:[%s590 + $0x18] sm:$0xf]
        %v871 = vld [vmem:[%s590 + $0x1c] sm:$0xf]
        %v872 = vld [vmem:[%s5 + $0x10] sm:$0xf]
        %v873 = vld [vmem:[%s5 + $0x14] sm:$0xf]
        %v874 = vld [vmem:[%s5 + $0x18] sm:$0xf]
        %v875 = vld [vmem:[%s5 + $0x1c] sm:$0xf]
        %v884 = vunpack.c.l.b16 %v864
        %v885 = vunpack.c.l.b16 %v865
        %v886 = vunpack.c.l.b16 %v866
        %v887 = vunpack.c.l.b16 %v867
        %v888 = vunpack.c.l.b16 %v868
        %v889 = vunpack.c.l.b16 %v869
        %v890 = vunpack.c.l.b16 %v870
        %v891 = vunpack.c.l.b16 %v871
        %v892 = vpack.c.b16 %v885, %v884
        %v893 = vpack.c.b16 %v887, %v886
        %v894 = vpack.c.b16 %v889, %v888
        %v895 = vpack.c.b16 %v891, %v890
        %v900 = vunpack.c.l.b16 %v872
        %v901 = vunpack.c.l.b16 %v873
        %v902 = vunpack.c.l.b16 %v874
        %v903 = vunpack.c.l.b16 %v875
        %v904 = vpack.c.b16 %v901, %v900
        %v905 = vpack.c.b16 %v903, %v902
        %v909 = vsel %vm786, %v892, 0
        %v912 = vsel %vm786, %v893, 0
        %v915 = vsel %vm786, %v894, 0
        %v918 = vsel %vm786, %v895, 0
        %920 = vmatprep.subr.bf16.mxu0 0
        %921 = vmatpush1.bf16.msra.mxu0 0
        %922 = vmatprep.subr.bf16.mxu0 0
        %923 = vmatpush1.bf16.msra.mxu0 0
        %924 = vmatprep.subr.bf16.mxu0 0
        %925 = vmatpush1.bf16.msra.mxu0 0
        %926 = vmatprep.subr.bf16.mxu0 0
        %927 = vmatpush1.bf16.msra.mxu0 0
        %928 = vmatprep.subr.bf16.mxu0 0
        %929 = vmatpush1.bf16.msra.mxu0 0
        %930 = vmatprep.subr.bf16.mxu0 0
        %931 = vmatpush1.bf16.msra.mxu0 0
        %932 = vmatprep.subr.bf16.mxu0 0
        %933 = vmatpush1.bf16.msra.mxu0 %v905
        %934 = vmatprep.subr.bf16.mxu0 0
        %935 = vmatpush1.bf16.msra.mxu0 %v904
        %936 = vmatprep.subr.bf16.mxu0 0
        %937 = vmatpush2.bf16.msra.mxu0 0
        %938 = vmatprep.subr.bf16.mxu0 0
        %939 = vmatpush2.bf16.msra.mxu0 0
        %940 = vmatprep.subr.bf16.mxu0 0
        %941 = vmatpush2.bf16.msra.mxu0 0
        %942 = vmatprep.subr.bf16.mxu0 0
        %943 = vmatpush2.bf16.msra.mxu0 0
        %944 = vmatprep.subr.bf16.mxu0 0
        %945 = vmatpush2.bf16.msra.mxu0 0
        %946 = vmatprep.subr.bf16.mxu0 0
        %947 = vmatpush2.bf16.msra.mxu0 0
        %948 = vmatprep.subr.bf16.mxu0 0
        %949 = vmatpush2.bf16.msra.mxu0 0
        %950 = vmatprep.subr.bf16.mxu0 0
        %951 = vmatpush2.bf16.msra.mxu0 0
        %952 = vmatprep.mubr.bf16.mxu0 0
        %953 = vmatmul.mubr.bf16.gmra.mxu0 %v909
        %v954 = vpop.f32.mrf.mxu0
        %v955 = vadd.f32 0.0, %v954
        %v956 = vpop.f32.mrf.mxu0
        %v957 = vpop.f32.mrf.mxu0
        %v958 = vadd.f32 0.0, %v957
        %v959 = vpop.f32.mrf.mxu0
        %960 = vmatprep.mubr.bf16.mxu0 0
        %961 = vmatmul.mubr.bf16.gmra.mxu0 %v912
        %v962 = vpop.f32.mrf.mxu0
        %v963 = vadd.f32 0.0, %v962
        %v964 = vpop.f32.mrf.mxu0
        %v965 = vpop.f32.mrf.mxu0
        %v966 = vadd.f32 0.0, %v965
        %v967 = vpop.f32.mrf.mxu0
        %968 = vmatprep.mubr.bf16.mxu0 0
        %969 = vmatmul.mubr.bf16.gmra.mxu0 %v915
        %v970 = vpop.f32.mrf.mxu0
        %v971 = vadd.f32 0.0, %v970
        %v972 = vpop.f32.mrf.mxu0
        %v973 = vpop.f32.mrf.mxu0
        %v974 = vadd.f32 0.0, %v973
        %v975 = vpop.f32.mrf.mxu0
        %976 = vmatprep.mubr.bf16.mxu0 0
        %977 = vmatmul.mubr.bf16.gmra.mxu0 %v918
        %v978 = vpop.f32.mrf.mxu0
        %v979 = vadd.f32 0.0, %v978
        %v980 = vpop.f32.mrf.mxu0
        %v981 = vpop.f32.mrf.mxu0
        %v982 = vadd.f32 0.0, %v981
        %v983 = vpop.f32.mrf.mxu0
        %984 = vdwg.mxu0
        %v985 = vadd.f32 %v834, %v955
        %v986 = vadd.f32 %v837, %v958
        %v987 = vadd.f32 %v842, %v963
        %v988 = vadd.f32 %v845, %v966
        %v989 = vadd.f32 %v850, %v971
        %v990 = vadd.f32 %v853, %v974
        %v991 = vadd.f32 %v858, %v979
        %v992 = vadd.f32 %v861, %v982
        %s993 = scalar_lea.vmem %s590, 32 [#allocation4]
        %v994 = vld [vmem:[%s993] sm:$0xf]
        %v995 = vld [vmem:[%s993 + $0x4] sm:$0xf]
        %v996 = vld [vmem:[%s993 + $0x8] sm:$0xf]
        %v997 = vld [vmem:[%s993 + $0xc] sm:$0xf]
        %v998 = vld [vmem:[%s993 + $0x10] sm:$0xf]
        %v999 = vld [vmem:[%s993 + $0x14] sm:$0xf]
        %v1000 = vld [vmem:[%s993 + $0x18] sm:$0xf]
        %v1001 = vld [vmem:[%s993 + $0x1c] sm:$0xf]
        %v1002 = vld [vmem:[%s5 + $0x20] sm:$0xf]
        %v1003 = vld [vmem:[%s5 + $0x24] sm:$0xf]
        %v1004 = vld [vmem:[%s5 + $0x28] sm:$0xf]
        %v1005 = vld [vmem:[%s5 + $0x2c] sm:$0xf]
        %v1014 = vunpack.c.l.b16 %v994
        %v1015 = vunpack.c.l.b16 %v995
        %v1016 = vunpack.c.l.b16 %v996
        %v1017 = vunpack.c.l.b16 %v997
        %v1018 = vunpack.c.l.b16 %v998
        %v1019 = vunpack.c.l.b16 %v999
        %v1020 = vunpack.c.l.b16 %v1000
        %v1021 = vunpack.c.l.b16 %v1001
        %v1022 = vpack.c.b16 %v1015, %v1014
        %v1023 = vpack.c.b16 %v1017, %v1016
        %v1024 = vpack.c.b16 %v1019, %v1018
        %v1025 = vpack.c.b16 %v1021, %v1020
        %v1030 = vunpack.c.l.b16 %v1002
        %v1031 = vunpack.c.l.b16 %v1003
        %v1032 = vunpack.c.l.b16 %v1004
        %v1033 = vunpack.c.l.b16 %v1005
        %v1034 = vpack.c.b16 %v1031, %v1030
        %v1035 = vpack.c.b16 %v1033, %v1032
        %v1039 = vsel %vm786, %v1022, 0
        %v1042 = vsel %vm786, %v1023, 0
        %v1045 = vsel %vm786, %v1024, 0
        %v1048 = vsel %vm786, %v1025, 0
        %1050 = vmatprep.subr.bf16.mxu0 0
        %1051 = vmatpush1.bf16.msra.mxu0 0
        %1052 = vmatprep.subr.bf16.mxu0 0
        %1053 = vmatpush1.bf16.msra.mxu0 0
        %1054 = vmatprep.subr.bf16.mxu0 0
        %1055 = vmatpush1.bf16.msra.mxu0 0
        %1056 = vmatprep.subr.bf16.mxu0 0
        %1057 = vmatpush1.bf16.msra.mxu0 0
        %1058 = vmatprep.subr.bf16.mxu0 0
        %1059 = vmatpush1.bf16.msra.mxu0 0
        %1060 = vmatprep.subr.bf16.mxu0 0
        %1061 = vmatpush1.bf16.msra.mxu0 0
        %1062 = vmatprep.subr.bf16.mxu0 0
        %1063 = vmatpush1.bf16.msra.mxu0 %v1035
        %1064 = vmatprep.subr.bf16.mxu0 0
        %1065 = vmatpush1.bf16.msra.mxu0 %v1034
        %1066 = vmatprep.subr.bf16.mxu0 0
        %1067 = vmatpush2.bf16.msra.mxu0 0
        %1068 = vmatprep.subr.bf16.mxu0 0
        %1069 = vmatpush2.bf16.msra.mxu0 0
        %1070 = vmatprep.subr.bf16.mxu0 0
        %1071 = vmatpush2.bf16.msra.mxu0 0
        %1072 = vmatprep.subr.bf16.mxu0 0
        %1073 = vmatpush2.bf16.msra.mxu0 0
        %1074 = vmatprep.subr.bf16.mxu0 0
        %1075 = vmatpush2.bf16.msra.mxu0 0
        %1076 = vmatprep.subr.bf16.mxu0 0
        %1077 = vmatpush2.bf16.msra.mxu0 0
        %1078 = vmatprep.subr.bf16.mxu0 0
        %1079 = vmatpush2.bf16.msra.mxu0 0
        %1080 = vmatprep.subr.bf16.mxu0 0
        %1081 = vmatpush2.bf16.msra.mxu0 0
        %1082 = vmatprep.mubr.bf16.mxu0 0
        %1083 = vmatmul.mubr.bf16.gmra.mxu0 %v1039
        %v1084 = vpop.f32.mrf.mxu0
        %v1085 = vadd.f32 0.0, %v1084
        %v1086 = vpop.f32.mrf.mxu0
        %v1087 = vpop.f32.mrf.mxu0
        %v1088 = vadd.f32 0.0, %v1087
        %v1089 = vpop.f32.mrf.mxu0
        %1090 = vmatprep.mubr.bf16.mxu0 0
        %1091 = vmatmul.mubr.bf16.gmra.mxu0 %v1042
        %v1092 = vpop.f32.mrf.mxu0
        %v1093 = vadd.f32 0.0, %v1092
        %v1094 = vpop.f32.mrf.mxu0
        %v1095 = vpop.f32.mrf.mxu0
        %v1096 = vadd.f32 0.0, %v1095
        %v1097 = vpop.f32.mrf.mxu0
        %1098 = vmatprep.mubr.bf16.mxu0 0
        %1099 = vmatmul.mubr.bf16.gmra.mxu0 %v1045
        %v1100 = vpop.f32.mrf.mxu0
        %v1101 = vadd.f32 0.0, %v1100
        %v1102 = vpop.f32.mrf.mxu0
        %v1103 = vpop.f32.mrf.mxu0
        %v1104 = vadd.f32 0.0, %v1103
        %v1105 = vpop.f32.mrf.mxu0
        %1106 = vmatprep.mubr.bf16.mxu0 0
        %1107 = vmatmul.mubr.bf16.gmra.mxu0 %v1048
        %v1108 = vpop.f32.mrf.mxu0
        %v1109 = vadd.f32 0.0, %v1108
        %v1110 = vpop.f32.mrf.mxu0
        %v1111 = vpop.f32.mrf.mxu0
        %v1112 = vadd.f32 0.0, %v1111
        %v1113 = vpop.f32.mrf.mxu0
        %1114 = vdwg.mxu0
        %v1115 = vadd.f32 %v985, %v1085
        %v1116 = vadd.f32 %v986, %v1088
        %v1117 = vadd.f32 %v987, %v1093
        %v1118 = vadd.f32 %v988, %v1096
        %v1119 = vadd.f32 %v989, %v1101
        %v1120 = vadd.f32 %v990, %v1104
        %v1121 = vadd.f32 %v991, %v1109
        %v1122 = vadd.f32 %v992, %v1112
        %v1123 = vld [vmem:[%s699] sm:$0xff]
        %v1124 = vld [vmem:[%s699 + $0x8] sm:$0xff]
        %v1125 = vld [vmem:[%s699 + $0x10] sm:$0xff]
        %v1126 = vld [vmem:[%s699 + $0x18] sm:$0xff]
        %v1127 = vld [vmem:[%s699 + $0x20] sm:$0xff]
        %v1128 = vld [vmem:[%s699 + $0x28] sm:$0xff]
        %v1129 = vld [vmem:[%s699 + $0x30] sm:$0xff]
        %v1130 = vld [vmem:[%s699 + $0x38] sm:$0xff]
        %v1131 = vadd.f32 %v1123, %v1115
        %v1132 = vadd.f32 %v1124, %v1116
        %v1133 = vadd.f32 %v1125, %v1117
        %v1134 = vadd.f32 %v1126, %v1118
        %v1135 = vadd.f32 %v1127, %v1119
        %v1136 = vadd.f32 %v1128, %v1120
        %v1137 = vadd.f32 %v1129, %v1121
        %v1138 = vadd.f32 %v1130, %v1122
        %v1139 = vld [vmem:[%s6] sm:$0x1]
        %v1141 = vlaneseq
        %v1142 = vshrl.u32 %v1141, 7
        %v1143 = vsub.s32 0, %v1142
        %v1144 = vrot.slane %v1139, %v1143
        %v1146 = vadd.f32 %v1131, %v1144
        %v1147 = vadd.f32 %v1132, %v1144
        %v1148 = vadd.f32 %v1133, %v1144
        %v1149 = vadd.f32 %v1134, %v1144
        %v1150 = vadd.f32 %v1135, %v1144
        %v1151 = vadd.f32 %v1136, %v1144
        %v1152 = vadd.f32 %v1137, %v1144
        %v1153 = vadd.f32 %v1138, %v1144
        %1154 = vst.msk [vmem:[%s729] sm:$0xff] %vm786, %v1146
        %1155 = vst.msk [vmem:[%s729 + $0x8] sm:$0xff] %vm786, %v1147
        %1156 = vst.msk [vmem:[%s729 + $0x10] sm:$0xff] %vm786, %v1148
        %1157 = vst.msk [vmem:[%s729 + $0x18] sm:$0xff] %vm786, %v1149
        %1158 = vst.msk [vmem:[%s729 + $0x20] sm:$0xff] %vm786, %v1150
        %1159 = vst.msk [vmem:[%s729 + $0x28] sm:$0xff] %vm786, %v1151
        %1160 = vst.msk [vmem:[%s729 + $0x30] sm:$0xff] %vm786, %v1152
        %1161 = vst.msk [vmem:[%s729 + $0x38] sm:$0xff] %vm786, %v1153
        %v1162 = vld [vmem:[%s709] sm:$0xff]
        %v1163 = vld [vmem:[%s709 + $0x8] sm:$0xff]
        %v1164 = vld [vmem:[%s709 + $0x10] sm:$0xff]
        %v1165 = vld [vmem:[%s709 + $0x18] sm:$0xff]
        %v1166 = vld [vmem:[%s709 + $0x20] sm:$0xff]
        %v1167 = vld [vmem:[%s709 + $0x28] sm:$0xff]
        %v1168 = vld [vmem:[%s709 + $0x30] sm:$0xff]
        %v1169 = vld [vmem:[%s709 + $0x38] sm:$0xff]
        %v1170 = vadd.f32 %v1146, %v1162
        %v1171 = vadd.f32 %v1147, %v1163
        %v1172 = vadd.f32 %v1148, %v1164
        %v1173 = vadd.f32 %v1149, %v1165
        %v1174 = vadd.f32 %v1150, %v1166
        %v1175 = vadd.f32 %v1151, %v1167
        %v1176 = vadd.f32 %v1152, %v1168
        %v1177 = vadd.f32 %v1153, %v1169
        %v1178 = vld [vmem:[%s719] sm:$0xff]
        %v1179 = vld [vmem:[%s719 + $0x8] sm:$0xff]
        %v1180 = vadd.f32 %v1170, %v1178
        %v1181 = vadd.f32 %v1171, %v1179
        %v1182 = vadd.f32 %v1172, %v1178
        %v1183 = vadd.f32 %v1173, %v1179
        %v1184 = vadd.f32 %v1174, %v1178
        %v1185 = vadd.f32 %v1175, %v1179
        %v1186 = vadd.f32 %v1176, %v1178
        %v1187 = vadd.f32 %v1177, %v1179
        %v1188 = vpack.c.bf16 %v1181, %v1180
        %v1189 = vpack.c.bf16 %v1183, %v1182
        %v1190 = vpack.c.bf16 %v1185, %v1184
        %v1191 = vpack.c.bf16 %v1187, %v1186
        %v1192 = vld [vmem:[%s7] sm:$0xf]
        %v1193 = vld [vmem:[%s7 + $0x4] sm:$0xf]
        %v1194 = vld [vmem:[%s7 + $0x8] sm:$0xf]
        %v1195 = vld [vmem:[%s7 + $0xc] sm:$0xf]
        %v1200 = vunpack.c.l.b16 %v1192
        %v1201 = vunpack.c.l.b16 %v1193
        %v1202 = vunpack.c.l.b16 %v1194
        %v1203 = vunpack.c.l.b16 %v1195
        %v1204 = vpack.c.b16 %v1201, %v1200
        %v1205 = vpack.c.b16 %v1203, %v1202
        %v1209 = vsel %vm786, %v1188, 0
        %v1212 = vsel %vm786, %v1189, 0
        %v1215 = vsel %vm786, %v1190, 0
        %v1218 = vsel %vm786, %v1191, 0
        %1220 = vmatprep.subr.bf16.mxu0 0
        %1221 = vmatpush1.bf16.msra.mxu0 0
        %1222 = vmatprep.subr.bf16.mxu0 0
        %1223 = vmatpush1.bf16.msra.mxu0 0
        %1224 = vmatprep.subr.bf16.mxu0 0
        %1225 = vmatpush1.bf16.msra.mxu0 0
        %1226 = vmatprep.subr.bf16.mxu0 0
        %1227 = vmatpush1.bf16.msra.mxu0 0
        %1228 = vmatprep.subr.bf16.mxu0 0
        %1229 = vmatpush1.bf16.msra.mxu0 0
        %1230 = vmatprep.subr.bf16.mxu0 0
        %1231 = vmatpush1.bf16.msra.mxu0 0
        %1232 = vmatprep.subr.bf16.mxu0 0
        %1233 = vmatpush1.bf16.msra.mxu0 %v1205
        %1234 = vmatprep.subr.bf16.mxu0 0
        %1235 = vmatpush1.bf16.msra.mxu0 %v1204
        %1236 = vmatprep.subr.bf16.mxu0 0
        %1237 = vmatpush2.bf16.msra.mxu0 0
        %1238 = vmatprep.subr.bf16.mxu0 0
        %1239 = vmatpush2.bf16.msra.mxu0 0
        %1240 = vmatprep.subr.bf16.mxu0 0
        %1241 = vmatpush2.bf16.msra.mxu0 0
        %1242 = vmatprep.subr.bf16.mxu0 0
        %1243 = vmatpush2.bf16.msra.mxu0 0
        %1244 = vmatprep.subr.bf16.mxu0 0
        %1245 = vmatpush2.bf16.msra.mxu0 0
        %1246 = vmatprep.subr.bf16.mxu0 0
        %1247 = vmatpush2.bf16.msra.mxu0 0
        %1248 = vmatprep.subr.bf16.mxu0 0
        %1249 = vmatpush2.bf16.msra.mxu0 0
        %1250 = vmatprep.subr.bf16.mxu0 0
        %1251 = vmatpush2.bf16.msra.mxu0 0
        %1252 = vmatprep.mubr.bf16.mxu0 0
        %1253 = vmatmul.mubr.bf16.gmra.mxu0 %v1209
        %v1254 = vpop.f32.mrf.mxu0
        %v1255 = vadd.f32 0.0, %v1254
        %v1256 = vpop.f32.mrf.mxu0
        %v1257 = vpop.f32.mrf.mxu0
        %v1258 = vadd.f32 0.0, %v1257
        %v1259 = vpop.f32.mrf.mxu0
        %1260 = vmatprep.mubr.bf16.mxu0 0
        %1261 = vmatmul.mubr.bf16.gmra.mxu0 %v1212
        %v1262 = vpop.f32.mrf.mxu0
        %v1263 = vadd.f32 0.0, %v1262
        %v1264 = vpop.f32.mrf.mxu0
        %v1265 = vpop.f32.mrf.mxu0
        %v1266 = vadd.f32 0.0, %v1265
        %v1267 = vpop.f32.mrf.mxu0
        %1268 = vmatprep.mubr.bf16.mxu0 0
        %1269 = vmatmul.mubr.bf16.gmra.mxu0 %v1215
        %v1270 = vpop.f32.mrf.mxu0
        %v1271 = vadd.f32 0.0, %v1270
        %v1272 = vpop.f32.mrf.mxu0
        %v1273 = vpop.f32.mrf.mxu0
        %v1274 = vadd.f32 0.0, %v1273
        %v1275 = vpop.f32.mrf.mxu0
        %1276 = vmatprep.mubr.bf16.mxu0 0
        %1277 = vmatmul.mubr.bf16.gmra.mxu0 %v1218
        %v1278 = vpop.f32.mrf.mxu0
        %v1279 = vadd.f32 0.0, %v1278
        %v1280 = vpop.f32.mrf.mxu0
        %v1281 = vpop.f32.mrf.mxu0
        %v1282 = vadd.f32 0.0, %v1281
        %v1283 = vpop.f32.mrf.mxu0
        %1284 = vdwg.mxu0
        %v1285 = vld [vmem:[%s9] sm:$0x1]
        %v1287 = vlaneseq
        %v1288 = vshrl.u32 %v1287, 7
        %v1289 = vsub.s32 0, %v1288
        %v1290 = vrot.slane %v1285, %v1289
        %v1292 = vadd.f32 %v1255, %v1290
        %v1293 = vadd.f32 %v1258, %v1290
        %v1294 = vadd.f32 %v1263, %v1290
        %v1295 = vadd.f32 %v1266, %v1290
        %v1296 = vadd.f32 %v1271, %v1290
        %v1297 = vadd.f32 %v1274, %v1290
        %v1298 = vadd.f32 %v1279, %v1290
        %v1299 = vadd.f32 %v1282, %v1290
        %1300 = vst [vmem:[#allocation2] sm:$0xff] %v1292
        %1301 = vst [vmem:[#allocation2 + $0x8] sm:$0xff] %v1293
        %1302 = vst [vmem:[#allocation2 + $0x10] sm:$0xff] %v1294
        %1303 = vst [vmem:[#allocation2 + $0x18] sm:$0xff] %v1295
        %1304 = vst [vmem:[#allocation2 + $0x20] sm:$0xff] %v1296
        %1305 = vst [vmem:[#allocation2 + $0x28] sm:$0xff] %v1297
        %1306 = vst [vmem:[#allocation2 + $0x30] sm:$0xff] %v1298
        %1307 = vst [vmem:[#allocation2 + $0x38] sm:$0xff] %v1299
        %v1308 = vld [vmem:[%s8] sm:$0xf]
        %v1309 = vld [vmem:[%s8 + $0x4] sm:$0xf]
        %v1310 = vld [vmem:[%s8 + $0x8] sm:$0xf]
        %v1311 = vld [vmem:[%s8 + $0xc] sm:$0xf]
        %v1312 = vld [vmem:[#allocation2] sm:$0xff]
        %v1313 = vld [vmem:[#allocation2 + $0x8] sm:$0xff]
        %v1318 = vunpack.c.l.b16 %v1308
        %v1319 = vunpack.c.l.b16 %v1309
        %v1320 = vunpack.c.l.b16 %v1310
        %v1321 = vunpack.c.l.b16 %v1311
        %v1322 = vpack.c.b16 %v1319, %v1318
        %v1323 = vpack.c.b16 %v1321, %v1320
        %v1327 = vsel %vm786, 0, 0
        %1329 = vmatprep.subr.bf16.mxu0 0
        %1330 = vmatpush1.bf16.msra.mxu0 0
        %1331 = vmatprep.subr.bf16.mxu0 0
        %1332 = vmatpush1.bf16.msra.mxu0 0
        %1333 = vmatprep.subr.bf16.mxu0 0
        %1334 = vmatpush1.bf16.msra.mxu0 0
        %1335 = vmatprep.subr.bf16.mxu0 0
        %1336 = vmatpush1.bf16.msra.mxu0 0
        %1337 = vmatprep.subr.bf16.mxu0 0
        %1338 = vmatpush1.bf16.msra.mxu0 0
        %1339 = vmatprep.subr.bf16.mxu0 0
        %1340 = vmatpush1.bf16.msra.mxu0 0
        %1341 = vmatprep.subr.bf16.mxu0 0
        %1342 = vmatpush1.bf16.msra.mxu0 %v1323
        %1343 = vmatprep.subr.bf16.mxu0 0
        %1344 = vmatpush1.bf16.msra.mxu0 %v1322
        %1345 = vmatprep.subr.bf16.mxu0 0
        %1346 = vmatpush2.bf16.msra.mxu0 0
        %1347 = vmatprep.subr.bf16.mxu0 0
        %1348 = vmatpush2.bf16.msra.mxu0 0
        %1349 = vmatprep.subr.bf16.mxu0 0
        %1350 = vmatpush2.bf16.msra.mxu0 0
        %1351 = vmatprep.subr.bf16.mxu0 0
        %1352 = vmatpush2.bf16.msra.mxu0 0
        %1353 = vmatprep.subr.bf16.mxu0 0
        %1354 = vmatpush2.bf16.msra.mxu0 0
        %1355 = vmatprep.subr.bf16.mxu0 0
        %1356 = vmatpush2.bf16.msra.mxu0 0
        %1357 = vmatprep.subr.bf16.mxu0 0
        %1358 = vmatpush2.bf16.msra.mxu0 0
        %1359 = vmatprep.subr.bf16.mxu0 0
        %1360 = vmatpush2.bf16.msra.mxu0 0
        %1361 = vmatprep.mubr.bf16.mxu0 0
        %1362 = vmatmul.mubr.bf16.gmra.mxu0 %v1327
        %v1363 = vpop.f32.mrf.mxu0
        %v1364 = vadd.f32 0.0, %v1363
        %v1365 = vpop.f32.mrf.mxu0
        %v1366 = vpop.f32.mrf.mxu0
        %v1367 = vadd.f32 0.0, %v1366
        %v1368 = vpop.f32.mrf.mxu0
        %1369 = vdwg.mxu0
        %v1370 = vadd.f32 %v1312, %v1364
        %v1371 = vadd.f32 %v1313, %v1367
        %v1372 = vxor.u32 %v1370, 2147483648
        %v1373 = vxor.u32 %v1371, 2147483648
        %v1374 = vmul.f32 %v1372, 1.442695
        %v1375 = vpow.pop %v1374
        %v1376 = vmul.f32 %v1373, 1.442695
        %v1377 = vpow.pop %v1376
        %v1378 = vadd.f32 %v1375, 1.0
        %v1379 = vadd.f32 %v1377, 1.0
        %v1380 = vrcp.pop %v1378
        %v1381 = vmul.f32 1.0, %v1380
        %v1382 = vrcp.pop %v1379
        %v1383 = vmul.f32 1.0, %v1382
        %v1384 = vtanh.pop %v1370
        %v1385 = vtanh.pop %v1371
        %v1386 = vmul.f32 %v1381, 0.0
        %v1387 = vmul.f32 %v1383, 0.0
        %1390 = vrot.lane.b32.xlu0 %v1384, 64
        %v1391 = vpop.permute.xlu0 %1390
        %1392 = vrot.lane.b32.xlu0 %v1385, 64
        %v1393 = vpop.permute.xlu0 %1392
        %v1396 = vmul.f32 %v1381, %v1391
        %v1397 = vmul.f32 %v1383, %v1393
        %1400 = vrot.lane.b32.xlu0 %v1396, 32
        %v1401 = vpop.permute.xlu0 %1400
        %1402 = vrot.lane.b32.xlu0 %v1397, 32
        %v1403 = vpop.permute.xlu0 %1402
        %v1406 = vadd.f32 %v1386, %v1401
        %v1407 = vadd.f32 %v1387, %v1403
        %v1408 = vtanh.pop %v1406
        %v1409 = vtanh.pop %v1407
        %1412 = vrot.lane.b32.xlu0 %v1408, 64
        %v1413 = vpop.permute.xlu0 %1412
        %1414 = vrot.lane.b32.xlu0 %v1409, 64
        %v1415 = vpop.permute.xlu0 %1414
        %v1418 = vmul.f32 %v1381, %v1413
        %v1419 = vmul.f32 %v1383, %v1415
        %1422 = vrot.lane.b32.xlu0 %v1418, 32
        %v1423 = vpop.permute.xlu0 %1422
        %1424 = vrot.lane.b32.xlu0 %v1419, 32
        %v1425 = vpop.permute.xlu0 %1424
        %1428 = vst.msk [vmem:[#allocation3] sm:$0xff] %vm786, %v1423
        %1429 = vst.msk [vmem:[#allocation3 + $0x8] sm:$0xff] %vm786, %v1425
        %s1430 = scalar_lea.vmem [#allocation2], 16
        %v1431 = vld [vmem:[%s1430] sm:$0xff]
        %v1432 = vld [vmem:[%s1430 + $0x8] sm:$0xff]
        %v1433 = vpack.c.bf16 %v1419, %v1418
        %1435 = vrot.lane.b32.xlu0 %v1433, 32
        %v1436 = vpop.permute.xlu0 %1435
        %v1438 = vsel %vm786, %v1436, 0
        %1440 = vmatprep.subr.bf16.mxu0 0
        %1441 = vmatpush1.bf16.msra.mxu0 0
        %1442 = vmatprep.subr.bf16.mxu0 0
        %1443 = vmatpush1.bf16.msra.mxu0 0
        %1444 = vmatprep.subr.bf16.mxu0 0
        %1445 = vmatpush1.bf16.msra.mxu0 0
        %1446 = vmatprep.subr.bf16.mxu0 0
        %1447 = vmatpush1.bf16.msra.mxu0 0
        %1448 = vmatprep.subr.bf16.mxu0 0
        %1449 = vmatpush1.bf16.msra.mxu0 0
        %1450 = vmatprep.subr.bf16.mxu0 0
        %1451 = vmatpush1.bf16.msra.mxu0 0
        %1452 = vmatprep.subr.bf16.mxu0 0
        %1453 = vmatpush1.bf16.msra.mxu0 %v1323
        %1454 = vmatprep.subr.bf16.mxu0 0
        %1455 = vmatpush1.bf16.msra.mxu0 %v1322
        %1456 = vmatprep.subr.bf16.mxu0 0
        %1457 = vmatpush2.bf16.msra.mxu0 0
        %1458 = vmatprep.subr.bf16.mxu0 0
        %1459 = vmatpush2.bf16.msra.mxu0 0
        %1460 = vmatprep.subr.bf16.mxu0 0
        %1461 = vmatpush2.bf16.msra.mxu0 0
        %1462 = vmatprep.subr.bf16.mxu0 0
        %1463 = vmatpush2.bf16.msra.mxu0 0
        %1464 = vmatprep.subr.bf16.mxu0 0
        %1465 = vmatpush2.bf16.msra.mxu0 0
        %1466 = vmatprep.subr.bf16.mxu0 0
        %1467 = vmatpush2.bf16.msra.mxu0 0
        %1468 = vmatprep.subr.bf16.mxu0 0
        %1469 = vmatpush2.bf16.msra.mxu0 0
        %1470 = vmatprep.subr.bf16.mxu0 0
        %1471 = vmatpush2.bf16.msra.mxu0 0
        %1472 = vmatprep.mubr.bf16.mxu0 0
        %1473 = vmatmul.mubr.bf16.gmra.mxu0 %v1438
        %v1474 = vpop.f32.mrf.mxu0
        %v1475 = vadd.f32 0.0, %v1474
        %v1476 = vpop.f32.mrf.mxu0
        %v1477 = vpop.f32.mrf.mxu0
        %v1478 = vadd.f32 0.0, %v1477
        %v1479 = vpop.f32.mrf.mxu0
        %1480 = vdwg.mxu0
        %v1481 = vadd.f32 %v1431, %v1475
        %v1482 = vadd.f32 %v1432, %v1478
        %v1483 = vxor.u32 %v1481, 2147483648
        %v1484 = vxor.u32 %v1482, 2147483648
        %v1485 = vmul.f32 %v1483, 1.442695
        %v1486 = vpow.pop %v1485
        %v1487 = vmul.f32 %v1484, 1.442695
        %v1488 = vpow.pop %v1487
        %v1489 = vadd.f32 %v1486, 1.0
        %v1490 = vadd.f32 %v1488, 1.0
        %v1491 = vrcp.pop %v1489
        %v1492 = vmul.f32 1.0, %v1491
        %v1493 = vrcp.pop %v1490
        %v1494 = vmul.f32 1.0, %v1493
        %v1495 = vtanh.pop %v1481
        %v1496 = vtanh.pop %v1482
        %v1497 = vmul.f32 %v1492, %v1406
        %v1498 = vmul.f32 %v1494, %v1407
        %1501 = vrot.lane.b32.xlu0 %v1495, 64
        %v1502 = vpop.permute.xlu0 %1501
        %1503 = vrot.lane.b32.xlu0 %v1496, 64
        %v1504 = vpop.permute.xlu0 %1503
        %v1507 = vmul.f32 %v1492, %v1502
        %v1508 = vmul.f32 %v1494, %v1504
        %1511 = vrot.lane.b32.xlu0 %v1507, 32
        %v1512 = vpop.permute.xlu0 %1511
        %1513 = vrot.lane.b32.xlu0 %v1508, 32
        %v1514 = vpop.permute.xlu0 %1513
        %v1517 = vadd.f32 %v1497, %v1512
        %v1518 = vadd.f32 %v1498, %v1514
        %v1519 = vtanh.pop %v1517
        %v1520 = vtanh.pop %v1518
        %1523 = vrot.lane.b32.xlu0 %v1519, 64
        %v1524 = vpop.permute.xlu0 %1523
        %1525 = vrot.lane.b32.xlu0 %v1520, 64
        %v1526 = vpop.permute.xlu0 %1525
        %v1529 = vmul.f32 %v1492, %v1524
        %v1530 = vmul.f32 %v1494, %v1526
        %1533 = vrot.lane.b32.xlu0 %v1529, 32
        %v1534 = vpop.permute.xlu0 %1533
        %1535 = vrot.lane.b32.xlu0 %v1530, 32
        %v1536 = vpop.permute.xlu0 %1535
        %s1539 = scalar_lea.vmem [#allocation3], 16
        %1540 = vst.msk [vmem:[%s1539] sm:$0xff] %vm786, %v1534
        %1541 = vst.msk [vmem:[%s1539 + $0x8] sm:$0xff] %vm786, %v1536
        %s1542 = scalar_lea.vmem [#allocation2], 32
        %v1543 = vld [vmem:[%s1542] sm:$0xff]
        %v1544 = vld [vmem:[%s1542 + $0x8] sm:$0xff]
        %v1545 = vpack.c.bf16 %v1530, %v1529
        %1547 = vrot.lane.b32.xlu0 %v1545, 32
        %v1548 = vpop.permute.xlu0 %1547
        %v1550 = vsel %vm786, %v1548, 0
        %1552 = vmatprep.subr.bf16.mxu0 0
        %1553 = vmatpush1.bf16.msra.mxu0 0
        %1554 = vmatprep.subr.bf16.mxu0 0
        %1555 = vmatpush1.bf16.msra.mxu0 0
        %1556 = vmatprep.subr.bf16.mxu0 0
        %1557 = vmatpush1.bf16.msra.mxu0 0
        %1558 = vmatprep.subr.bf16.mxu0 0
        %1559 = vmatpush1.bf16.msra.mxu0 0
        %1560 = vmatprep.subr.bf16.mxu0 0
        %1561 = vmatpush1.bf16.msra.mxu0 0
        %1562 = vmatprep.subr.bf16.mxu0 0
        %1563 = vmatpush1.bf16.msra.mxu0 0
        %1564 = vmatprep.subr.bf16.mxu0 0
        %1565 = vmatpush1.bf16.msra.mxu0 %v1323
        %1566 = vmatprep.subr.bf16.mxu0 0
        %1567 = vmatpush1.bf16.msra.mxu0 %v1322
        %1568 = vmatprep.subr.bf16.mxu0 0
        %1569 = vmatpush2.bf16.msra.mxu0 0
        %1570 = vmatprep.subr.bf16.mxu0 0
        %1571 = vmatpush2.bf16.msra.mxu0 0
        %1572 = vmatprep.subr.bf16.mxu0 0
        %1573 = vmatpush2.bf16.msra.mxu0 0
        %1574 = vmatprep.subr.bf16.mxu0 0
        %1575 = vmatpush2.bf16.msra.mxu0 0
        %1576 = vmatprep.subr.bf16.mxu0 0
        %1577 = vmatpush2.bf16.msra.mxu0 0
        %1578 = vmatprep.subr.bf16.mxu0 0
        %1579 = vmatpush2.bf16.msra.mxu0 0
        %1580 = vmatprep.subr.bf16.mxu0 0
        %1581 = vmatpush2.bf16.msra.mxu0 0
        %1582 = vmatprep.subr.bf16.mxu0 0
        %1583 = vmatpush2.bf16.msra.mxu0 0
        %1584 = vmatprep.mubr.bf16.mxu0 0
        %1585 = vmatmul.mubr.bf16.gmra.mxu0 %v1550
        %v1586 = vpop.f32.mrf.mxu0
        %v1587 = vadd.f32 0.0, %v1586
        %v1588 = vpop.f32.mrf.mxu0
        %v1589 = vpop.f32.mrf.mxu0
        %v1590 = vadd.f32 0.0, %v1589
        %v1591 = vpop.f32.mrf.mxu0
        %1592 = vdwg.mxu0
        %v1593 = vadd.f32 %v1543, %v1587
        %v1594 = vadd.f32 %v1544, %v1590
        %v1595 = vxor.u32 %v1593, 2147483648
        %v1596 = vxor.u32 %v1594, 2147483648
        %v1597 = vmul.f32 %v1595, 1.442695
        %v1598 = vpow.pop %v1597
        %v1599 = vmul.f32 %v1596, 1.442695
        %v1600 = vpow.pop %v1599
        %v1601 = vadd.f32 %v1598, 1.0
        %v1602 = vadd.f32 %v1600, 1.0
        %v1603 = vrcp.pop %v1601
        %v1604 = vmul.f32 1.0, %v1603
        %v1605 = vrcp.pop %v1602
        %v1606 = vmul.f32 1.0, %v1605
        %v1607 = vtanh.pop %v1593
        %v1608 = vtanh.pop %v1594
        %v1609 = vmul.f32 %v1604, %v1517
        %v1610 = vmul.f32 %v1606, %v1518
        %1613 = vrot.lane.b32.xlu0 %v1607, 64
        %v1614 = vpop.permute.xlu0 %1613
        %1615 = vrot.lane.b32.xlu0 %v1608, 64
        %v1616 = vpop.permute.xlu0 %1615
        %v1619 = vmul.f32 %v1604, %v1614
        %v1620 = vmul.f32 %v1606, %v1616
        %1623 = vrot.lane.b32.xlu0 %v1619, 32
        %v1624 = vpop.permute.xlu0 %1623
        %1625 = vrot.lane.b32.xlu0 %v1620, 32
        %v1626 = vpop.permute.xlu0 %1625
        %v1629 = vadd.f32 %v1609, %v1624
        %v1630 = vadd.f32 %v1610, %v1626
        %v1631 = vtanh.pop %v1629
        %v1632 = vtanh.pop %v1630
        %1635 = vrot.lane.b32.xlu0 %v1631, 64
        %v1636 = vpop.permute.xlu0 %1635
        %1637 = vrot.lane.b32.xlu0 %v1632, 64
        %v1638 = vpop.permute.xlu0 %1637
        %v1641 = vmul.f32 %v1604, %v1636
        %v1642 = vmul.f32 %v1606, %v1638
        %1645 = vrot.lane.b32.xlu0 %v1641, 32
        %v1646 = vpop.permute.xlu0 %1645
        %1647 = vrot.lane.b32.xlu0 %v1642, 32
        %v1648 = vpop.permute.xlu0 %1647
        %s1651 = scalar_lea.vmem [#allocation3], 32
        %1652 = vst.msk [vmem:[%s1651] sm:$0xff] %vm786, %v1646
        %1653 = vst.msk [vmem:[%s1651 + $0x8] sm:$0xff] %vm786, %v1648
        %s1654 = scalar_lea.vmem [#allocation2], 48
        %v1655 = vld [vmem:[%s1654] sm:$0xff]
        %v1656 = vld [vmem:[%s1654 + $0x8] sm:$0xff]
        %v1657 = vpack.c.bf16 %v1642, %v1641
        %1659 = vrot.lane.b32.xlu0 %v1657, 32
        %v1660 = vpop.permute.xlu0 %1659
        %v1662 = vsel %vm786, %v1660, 0
        %1664 = vmatprep.subr.bf16.mxu0 0
        %1665 = vmatpush1.bf16.msra.mxu0 0
        %1666 = vmatprep.subr.bf16.mxu0 0
        %1667 = vmatpush1.bf16.msra.mxu0 0
        %1668 = vmatprep.subr.bf16.mxu0 0
        %1669 = vmatpush1.bf16.msra.mxu0 0
        %1670 = vmatprep.subr.bf16.mxu0 0
        %1671 = vmatpush1.bf16.msra.mxu0 0
        %1672 = vmatprep.subr.bf16.mxu0 0
        %1673 = vmatpush1.bf16.msra.mxu0 0
        %1674 = vmatprep.subr.bf16.mxu0 0
        %1675 = vmatpush1.bf16.msra.mxu0 0
        %1676 = vmatprep.subr.bf16.mxu0 0
        %1677 = vmatpush1.bf16.msra.mxu0 %v1323
        %1678 = vmatprep.subr.bf16.mxu0 0
        %1679 = vmatpush1.bf16.msra.mxu0 %v1322
        %1680 = vmatprep.subr.bf16.mxu0 0
        %1681 = vmatpush2.bf16.msra.mxu0 0
        %1682 = vmatprep.subr.bf16.mxu0 0
        %1683 = vmatpush2.bf16.msra.mxu0 0
        %1684 = vmatprep.subr.bf16.mxu0 0
        %1685 = vmatpush2.bf16.msra.mxu0 0
        %1686 = vmatprep.subr.bf16.mxu0 0
        %1687 = vmatpush2.bf16.msra.mxu0 0
        %1688 = vmatprep.subr.bf16.mxu0 0
        %1689 = vmatpush2.bf16.msra.mxu0 0
        %1690 = vmatprep.subr.bf16.mxu0 0
        %1691 = vmatpush2.bf16.msra.mxu0 0
        %1692 = vmatprep.subr.bf16.mxu0 0
        %1693 = vmatpush2.bf16.msra.mxu0 0
        %1694 = vmatprep.subr.bf16.mxu0 0
        %1695 = vmatpush2.bf16.msra.mxu0 0
        %1696 = vmatprep.mubr.bf16.mxu0 0
        %1697 = vmatmul.mubr.bf16.gmra.mxu0 %v1662
        %v1698 = vpop.f32.mrf.mxu0
        %v1699 = vadd.f32 0.0, %v1698
        %v1700 = vpop.f32.mrf.mxu0
        %v1701 = vpop.f32.mrf.mxu0
        %v1702 = vadd.f32 0.0, %v1701
        %v1703 = vpop.f32.mrf.mxu0
        %1704 = vdwg.mxu0
        %v1705 = vadd.f32 %v1655, %v1699
        %v1706 = vadd.f32 %v1656, %v1702
        %v1707 = vxor.u32 %v1705, 2147483648
        %v1708 = vxor.u32 %v1706, 2147483648
        %v1709 = vmul.f32 %v1707, 1.442695
        %v1710 = vpow.pop %v1709
        %v1711 = vmul.f32 %v1708, 1.442695
        %v1712 = vpow.pop %v1711
        %v1713 = vadd.f32 %v1710, 1.0
        %v1714 = vadd.f32 %v1712, 1.0
        %v1715 = vrcp.pop %v1713
        %v1716 = vmul.f32 1.0, %v1715
        %v1717 = vrcp.pop %v1714
        %v1718 = vmul.f32 1.0, %v1717
        %v1719 = vtanh.pop %v1705
        %v1720 = vtanh.pop %v1706
        %v1721 = vmul.f32 %v1716, %v1629
        %v1722 = vmul.f32 %v1718, %v1630
        %1725 = vrot.lane.b32.xlu0 %v1719, 64
        %v1726 = vpop.permute.xlu0 %1725
        %1727 = vrot.lane.b32.xlu0 %v1720, 64
        %v1728 = vpop.permute.xlu0 %1727
        %v1731 = vmul.f32 %v1716, %v1726
        %v1732 = vmul.f32 %v1718, %v1728
        %1735 = vrot.lane.b32.xlu0 %v1731, 32
        %v1736 = vpop.permute.xlu0 %1735
        %1737 = vrot.lane.b32.xlu0 %v1732, 32
        %v1738 = vpop.permute.xlu0 %1737
        %v1741 = vadd.f32 %v1721, %v1736
        %v1742 = vadd.f32 %v1722, %v1738
        %v1743 = vtanh.pop %v1741
        %v1744 = vtanh.pop %v1742
        %1747 = vrot.lane.b32.xlu0 %v1743, 64
        %v1748 = vpop.permute.xlu0 %1747
        %1749 = vrot.lane.b32.xlu0 %v1744, 64
        %v1750 = vpop.permute.xlu0 %1749
        %v1753 = vmul.f32 %v1716, %v1748
        %v1754 = vmul.f32 %v1718, %v1750
        %1757 = vrot.lane.b32.xlu0 %v1753, 32
        %v1758 = vpop.permute.xlu0 %1757
        %1759 = vrot.lane.b32.xlu0 %v1754, 32
        %v1760 = vpop.permute.xlu0 %1759
        %s1763 = scalar_lea.vmem [#allocation3], 48
        %1764 = vst.msk [vmem:[%s1763] sm:$0xff] %vm786, %v1758
        %1765 = vst.msk [vmem:[%s1763 + $0x8] sm:$0xff] %vm786, %v1760
        %v1766 = vld [vmem:[#allocation3] sm:$0xff]
        %v1767 = vld [vmem:[#allocation3 + $0x8] sm:$0xff]
        %v1768 = vld [vmem:[#allocation3 + $0x10] sm:$0xff]
        %v1769 = vld [vmem:[#allocation3 + $0x18] sm:$0xff]
        %v1770 = vld [vmem:[#allocation3 + $0x20] sm:$0xff]
        %v1771 = vld [vmem:[#allocation3 + $0x28] sm:$0xff]
        %v1772 = vld [vmem:[#allocation3 + $0x30] sm:$0xff]
        %v1773 = vld [vmem:[#allocation3 + $0x38] sm:$0xff]
        %v1774 = vpack.c.bf16 %v1767, %v1766
        %v1775 = vpack.c.bf16 %v1769, %v1768
        %v1776 = vpack.c.bf16 %v1771, %v1770
        %v1777 = vpack.c.bf16 %v1773, %v1772
        %v1778 = vld [vmem:[%s10] sm:$0xf]
        %v1779 = vld [vmem:[%s10 + $0x4] sm:$0xf]
        %v1780 = vld [vmem:[%s10 + $0x8] sm:$0xf]
        %v1781 = vld [vmem:[%s10 + $0xc] sm:$0xf]
        %v1786 = vunpack.c.l.b16 %v1778
        %v1787 = vunpack.c.l.b16 %v1779
        %v1788 = vunpack.c.l.b16 %v1780
        %v1789 = vunpack.c.l.b16 %v1781
        %v1790 = vpack.c.b16 %v1787, %v1786
        %v1791 = vpack.c.b16 %v1789, %v1788
        %v1795 = vsel %vm786, %v1774, 0
        %v1798 = vsel %vm786, %v1775, 0
        %v1801 = vsel %vm786, %v1776, 0
        %v1804 = vsel %vm786, %v1777, 0
        %1806 = vmatprep.subr.bf16.mxu0 0
        %1807 = vmatpush1.bf16.msra.mxu0 0
        %1808 = vmatprep.subr.bf16.mxu0 0
        %1809 = vmatpush1.bf16.msra.mxu0 0
        %1810 = vmatprep.subr.bf16.mxu0 0
        %1811 = vmatpush1.bf16.msra.mxu0 0
        %1812 = vmatprep.subr.bf16.mxu0 0
        %1813 = vmatpush1.bf16.msra.mxu0 0
        %1814 = vmatprep.subr.bf16.mxu0 0
        %1815 = vmatpush1.bf16.msra.mxu0 0
        %1816 = vmatprep.subr.bf16.mxu0 0
        %1817 = vmatpush1.bf16.msra.mxu0 0
        %1818 = vmatprep.subr.bf16.mxu0 0
        %1819 = vmatpush1.bf16.msra.mxu0 %v1791
        %1820 = vmatprep.subr.bf16.mxu0 0
        %1821 = vmatpush1.bf16.msra.mxu0 %v1790
        %1822 = vmatprep.subr.bf16.mxu0 0
        %1823 = vmatpush2.bf16.msra.mxu0 0
        %1824 = vmatprep.subr.bf16.mxu0 0
        %1825 = vmatpush2.bf16.msra.mxu0 0
        %1826 = vmatprep.subr.bf16.mxu0 0
        %1827 = vmatpush2.bf16.msra.mxu0 0
        %1828 = vmatprep.subr.bf16.mxu0 0
        %1829 = vmatpush2.bf16.msra.mxu0 0
        %1830 = vmatprep.subr.bf16.mxu0 0
        %1831 = vmatpush2.bf16.msra.mxu0 0
        %1832 = vmatprep.subr.bf16.mxu0 0
        %1833 = vmatpush2.bf16.msra.mxu0 0
        %1834 = vmatprep.subr.bf16.mxu0 0
        %1835 = vmatpush2.bf16.msra.mxu0 0
        %1836 = vmatprep.subr.bf16.mxu0 0
        %1837 = vmatpush2.bf16.msra.mxu0 0
        %1838 = vmatprep.mubr.bf16.mxu0 0
        %1839 = vmatmul.mubr.bf16.gmra.mxu0 %v1795
        %v1840 = vpop.f32.mrf.mxu0
        %v1841 = vadd.f32 0.0, %v1840
        %v1842 = vpop.f32.mrf.mxu0
        %v1843 = vpop.f32.mrf.mxu0
        %v1844 = vadd.f32 0.0, %v1843
        %v1845 = vpop.f32.mrf.mxu0
        %1846 = vmatprep.mubr.bf16.mxu0 0
        %1847 = vmatmul.mubr.bf16.gmra.mxu0 %v1798
        %v1848 = vpop.f32.mrf.mxu0
        %v1849 = vadd.f32 0.0, %v1848
        %v1850 = vpop.f32.mrf.mxu0
        %v1851 = vpop.f32.mrf.mxu0
        %v1852 = vadd.f32 0.0, %v1851
        %v1853 = vpop.f32.mrf.mxu0
        %1854 = vmatprep.mubr.bf16.mxu0 0
        %1855 = vmatmul.mubr.bf16.gmra.mxu0 %v1801
        %v1856 = vpop.f32.mrf.mxu0
        %v1857 = vadd.f32 0.0, %v1856
        %v1858 = vpop.f32.mrf.mxu0
        %v1859 = vpop.f32.mrf.mxu0
        %v1860 = vadd.f32 0.0, %v1859
        %v1861 = vpop.f32.mrf.mxu0
        %1862 = vmatprep.mubr.bf16.mxu0 0
        %1863 = vmatmul.mubr.bf16.gmra.mxu0 %v1804
        %v1864 = vpop.f32.mrf.mxu0
        %v1865 = vadd.f32 0.0, %v1864
        %v1866 = vpop.f32.mrf.mxu0
        %v1867 = vpop.f32.mrf.mxu0
        %v1868 = vadd.f32 0.0, %v1867
        %v1869 = vpop.f32.mrf.mxu0
        %1870 = vdwg.mxu0
        %v1871 = vld [vmem:[%s709] sm:$0xff]
        %v1872 = vld [vmem:[%s709 + $0x8] sm:$0xff]
        %v1873 = vld [vmem:[%s709 + $0x10] sm:$0xff]
        %v1874 = vld [vmem:[%s709 + $0x18] sm:$0xff]
        %v1875 = vld [vmem:[%s709 + $0x20] sm:$0xff]
        %v1876 = vld [vmem:[%s709 + $0x28] sm:$0xff]
        %v1877 = vld [vmem:[%s709 + $0x30] sm:$0xff]
        %v1878 = vld [vmem:[%s709 + $0x38] sm:$0xff]
        %v1879 = vadd.f32 %v1871, %v1841
        %v1880 = vadd.f32 %v1872, %v1844
        %v1881 = vadd.f32 %v1873, %v1849
        %v1882 = vadd.f32 %v1874, %v1852
        %v1883 = vadd.f32 %v1875, %v1857
        %v1884 = vadd.f32 %v1876, %v1860
        %v1885 = vadd.f32 %v1877, %v1865
        %v1886 = vadd.f32 %v1878, %v1868
        %v1887 = vld [vmem:[%s11] sm:$0x1]
        %v1889 = vlaneseq
        %v1890 = vshrl.u32 %v1889, 7
        %v1891 = vsub.s32 0, %v1890
        %v1892 = vrot.slane %v1887, %v1891
        %v1894 = vadd.f32 %v1879, %v1892
        %v1895 = vadd.f32 %v1880, %v1892
        %v1896 = vadd.f32 %v1881, %v1892
        %v1897 = vadd.f32 %v1882, %v1892
        %v1898 = vadd.f32 %v1883, %v1892
        %v1899 = vadd.f32 %v1884, %v1892
        %v1900 = vadd.f32 %v1885, %v1892
        %v1901 = vadd.f32 %v1886, %v1892
        %1902 = vst.msk [vmem:[%s739] sm:$0xff] %vm786, %v1894
        %1903 = vst.msk [vmem:[%s739 + $0x8] sm:$0xff] %vm786, %v1895
        %1904 = vst.msk [vmem:[%s739 + $0x10] sm:$0xff] %vm786, %v1896
        %1905 = vst.msk [vmem:[%s739 + $0x18] sm:$0xff] %vm786, %v1897
        %1906 = vst.msk [vmem:[%s739 + $0x20] sm:$0xff] %vm786, %v1898
        %1907 = vst.msk [vmem:[%s739 + $0x28] sm:$0xff] %vm786, %v1899
        %1908 = vst.msk [vmem:[%s739 + $0x30] sm:$0xff] %vm786, %v1900
        %1909 = vst.msk [vmem:[%s739 + $0x38] sm:$0xff] %vm786, %v1901
        %s1910 = smul.u32 2, %s30
        %p1911 = scmp.lt.s32.totalorder %s29, 1
        %s1912 = scalar_select %p1911, %s29, 1
        %p1913 = scmp.lt.s32.totalorder %s1910, 1
        %s1914 = scalar_select %p1913, %s1910, 1
        %s1915 = smul.addr %s1912, 8
        %s1916 = sadd.s32 %s1914, %s1915
        %s1917 = smul.addr %s1916, 8
        %s1918 = scalar_lea.vmem %s12, %s1917
        %s1919 = smul.u32 2, %s30
        %p1920 = scmp.lt.s32.totalorder %s29, 1
        %s1921 = scalar_select %p1920, %s29, 1
        %p1922 = scmp.lt.s32.totalorder %s1919, 1
        %s1923 = scalar_select %p1922, %s1919, 1
        %s1924 = smul.addr %s1921, 8
        %s1925 = sadd.s32 %s1923, %s1924
        %s1926 = smul.addr %s1925, 8
        %s1927 = scalar_lea.vmem %s13, %s1926
        // Predicated region
        $region110: #{delayed_rnn_forward.7} parent=104 // pred_check
          %p1928 = pneg %p344
        $region111: #{delayed_rnn_forward.7} parent=104 // pred_check_branch
          %1930 = sbr.rel (%p1928) target = $region113
        $region112: #{delayed_rnn_forward.7} parent=104 // pred_region
          %s1931 = smul.u32 2, %s30
        $region113: #{delayed_rnn_forward.7} parent=104 // pred_fallthru
          _
        // Predicated region
        $region114: #{delayed_rnn_forward.7} parent=104 // pred_check
          %p1932 = pneg %p372
        $region115: #{delayed_rnn_forward.7} parent=104 // pred_check_branch
          %1934 = sbr.rel (%p1932) target = $region117
        $region116: #{delayed_rnn_forward.7} parent=104 // pred_region
          %s1935 = smul.u32 2, %s30
        $region117: #{delayed_rnn_forward.7} parent=104 // pred_fallthru
          _
      $region105: #{delayed_rnn_forward.7} parent=5 // pred_fallthru
        _
      %p1936 = scmp.le.s32.totalorder 2, %s20
      // Predicated region
      $region118: #{delayed_rnn_forward.7} parent=5 // pred_check
        %p1937 = pneg %p1936
      $region119: #{delayed_rnn_forward.7} parent=5 // pred_check_branch
        %1939 = sbr.rel (%p1937) target = $region121
      $region120: #{delayed_rnn_forward.7} parent=5 // pred_region
        %s1940 = ssub.s32 %s20, 2
        // Predicated region
        $region122: #{delayed_rnn_forward.7} parent=120 // pred_check
          %p1941 = pneg %p350
        $region123: #{delayed_rnn_forward.7} parent=120 // pred_check_branch
          %1943 = sbr.rel (%p1941) target = $region125
        $region124: #{delayed_rnn_forward.7} parent=120 // pred_region
          %s1944 = smul.u32 2, %s32
          %p1945 = scmp.lt.s32.totalorder %s31, 1
          %s1946 = scalar_select %p1945, %s31, 1
          %p1947 = scmp.lt.s32.totalorder %s1944, 1
          %s1948 = scalar_select %p1947, %s1944, 1
          %s1949 = smul.addr %s1946, 8
          %s1950 = sadd.s32 %s1948, %s1949
          %s1951 = smul.addr %s1950, 8
          %s1952 = scalar_lea.vmem %s12, %s1951
        $region125: #{delayed_rnn_forward.7} parent=120 // pred_fallthru
          _
        // Predicated region
        $region126: #{delayed_rnn_forward.7} parent=120 // pred_check
          %p1953 = pneg %p378
        $region127: #{delayed_rnn_forward.7} parent=120 // pred_check_branch
          %1955 = sbr.rel (%p1953) target = $region129
        $region128: #{delayed_rnn_forward.7} parent=120 // pred_region
          %s1956 = smul.u32 2, %s32
          %p1957 = scmp.lt.s32.totalorder %s31, 1
          %s1958 = scalar_select %p1957, %s31, 1
          %p1959 = scmp.lt.s32.totalorder %s1956, 1
          %s1960 = scalar_select %p1959, %s1956, 1
          %s1961 = smul.addr %s1958, 8
          %s1962 = sadd.s32 %s1960, %s1961
          %s1963 = smul.addr %s1962, 8
          %s1964 = scalar_lea.vmem %s13, %s1963
        $region129: #{delayed_rnn_forward.7} parent=120 // pred_fallthru
          _
      $region121: #{delayed_rnn_forward.7} parent=5 // pred_fallthru
        _
    $region6: #{delayed_rnn_forward.7} parent=1 // loop_footer
      %s24 = sadd.s32 1, %s20
    $region7: #{delayed_rnn_forward.7} parent=1 // loop_footer_branch
      %19 = sbr.rel target = $region3
    $region8: #{delayed_rnn_forward.7} parent=1 // loop_exit
      _

// kernel: delayed_rnn_forward.6
$region0: #{delayed_rnn_forward.6}
  #allocation0 [shape = 'u32[]', space=smem, size = 0x4, offset = 0x4, fixed_abs, tag = 'smem constant byte address 0x4 - core index']
  #allocation1 [shape = 'u32[144,128]{1,0:T(1,128)}', space=vmem, size = 0x12000, scoped, tag = 'internal scratch']
  #allocation2 [shape = 'f32[16,8,128]{2,1,0:T(8,128)}', space=vmem, size = 0x10000, scoped, tag = 'scratch operand']
  #allocation3 [shape = 'f32[16,8,32]{2,1,0:T(8,128)}', space=vmem, size = 0x10000, scoped, tag = 'scratch operand']
  %s0 = inlined_call_operand.vmem [shape: f32[16,8,32], index: 0, kind: input, shape index: {}]
  %s1 = inlined_call_operand.vmem [shape: bf16[32,128], index: 1, kind: input, shape index: {}]
  %s2 = inlined_call_operand.vmem [shape: bf16[32,128], index: 2, kind: input, shape index: {}]
  %s3 = inlined_call_operand.vmem [shape: f32[1,128], index: 3, kind: input, shape index: {}]
  %s4 = inlined_call_operand.vmem [shape: bf16[32,32], index: 4, kind: input, shape index: {}]
  %s5 = inlined_call_operand.vmem [shape: f32[1,32], index: 5, kind: input, shape index: {}]
  %s6 = inlined_call_operand.vmem [shape: f32[16,8,32], index: 6, kind: output, shape index: {}]
  %s7 = sld [smem:[#allocation0]]
  $region34: #{delayed_rnn_forward.6} parent=0
    _
  %s9 = ssub.s32 1, %s7
  %s10 = scalar_select 0, %s9, %s7
  // Predicated region
  $region2: #{delayed_rnn_forward.6} parent=0 // pred_check
    _
  $region3: #{delayed_rnn_forward.6} parent=0 // pred_check_branch
    %12 = sbr.rel (0) target = $region5
  $region4: #{delayed_rnn_forward.6} parent=0 // pred_region
    _
  $region5: #{delayed_rnn_forward.6} parent=0 // pred_fallthru
    _
  // Predicated region
  $region6: #{delayed_rnn_forward.6} parent=0 // pred_check
    _
  $region7: #{delayed_rnn_forward.6} parent=0 // pred_check_branch
    %14 = sbr.rel (0) target = $region9
  $region8: #{delayed_rnn_forward.6} parent=0 // pred_region
    _
  $region9: #{delayed_rnn_forward.6} parent=0 // pred_fallthru
    _
  // Predicated region
  $region10: #{delayed_rnn_forward.6} parent=0 // pred_check
    _
  $region11: #{delayed_rnn_forward.6} parent=0 // pred_check_branch
    %16 = sbr.rel (0) target = $region13
  $region12: #{delayed_rnn_forward.6} parent=0 // pred_region
    _
  $region13: #{delayed_rnn_forward.6} parent=0 // pred_fallthru
    _
  // Predicated region
  $region14: #{delayed_rnn_forward.6} parent=0 // pred_check
    _
  $region15: #{delayed_rnn_forward.6} parent=0 // pred_check_branch
    %18 = sbr.rel (0) target = $region17
  $region16: #{delayed_rnn_forward.6} parent=0 // pred_region
    _
  $region17: #{delayed_rnn_forward.6} parent=0 // pred_fallthru
    _
  // Predicated region
  $region18: #{delayed_rnn_forward.6} parent=0 // pred_check
    _
  $region19: #{delayed_rnn_forward.6} parent=0 // pred_check_branch
    %20 = sbr.rel (0) target = $region21
  $region20: #{delayed_rnn_forward.6} parent=0 // pred_region
    _
  $region21: #{delayed_rnn_forward.6} parent=0 // pred_fallthru
    _
  // Predicated region
  $region22: #{delayed_rnn_forward.6} parent=0 // pred_check
    _
  $region23: #{delayed_rnn_forward.6} parent=0 // pred_check_branch
    %22 = sbr.rel (0) target = $region25
  $region24: #{delayed_rnn_forward.6} parent=0 // pred_region
    _
  $region25: #{delayed_rnn_forward.6} parent=0 // pred_fallthru
    _
  %v24 = vld [vmem:[%s0] sm:$0xff]
  %v25 = vld [vmem:[%s0 + $0x8] sm:$0xff]
  %v26 = vld [vmem:[%s0 + $0x10] sm:$0xff]
  %v27 = vld [vmem:[%s0 + $0x18] sm:$0xff]
  %v28 = vld [vmem:[%s0 + $0x20] sm:$0xff]
  %v29 = vld [vmem:[%s0 + $0x28] sm:$0xff]
  %v30 = vld [vmem:[%s0 + $0x30] sm:$0xff]
  %v31 = vld [vmem:[%s0 + $0x38] sm:$0xff]
  %v32 = vld [vmem:[%s0 + $0x40] sm:$0xff]
  %v33 = vld [vmem:[%s0 + $0x48] sm:$0xff]
  %v34 = vld [vmem:[%s0 + $0x50] sm:$0xff]
  %v35 = vld [vmem:[%s0 + $0x58] sm:$0xff]
  %v36 = vld [vmem:[%s0 + $0x60] sm:$0xff]
  %v37 = vld [vmem:[%s0 + $0x68] sm:$0xff]
  %v38 = vld [vmem:[%s0 + $0x70] sm:$0xff]
  %v39 = vld [vmem:[%s0 + $0x78] sm:$0xff]
  %v40 = vpack.c.bf16 %v25, %v24
  %v41 = vpack.c.bf16 %v27, %v26
  %v42 = vpack.c.bf16 %v29, %v28
  %v43 = vpack.c.bf16 %v31, %v30
  %v44 = vpack.c.bf16 %v33, %v32
  %v45 = vpack.c.bf16 %v35, %v34
  %v46 = vpack.c.bf16 %v37, %v36
  %v47 = vpack.c.bf16 %v39, %v38
  %v48 = vld [vmem:[%s1] sm:$0xf]
  %v49 = vld [vmem:[%s1 + $0x4] sm:$0xf]
  %v50 = vld [vmem:[%s1 + $0x8] sm:$0xf]
  %v51 = vld [vmem:[%s1 + $0xc] sm:$0xf]
  %v56 = vunpack.c.l.b16 %v48
  %v57 = vunpack.c.l.b16 %v49
  %v58 = vunpack.c.l.b16 %v50
  %v59 = vunpack.c.l.b16 %v51
  %v60 = vpack.c.b16 %v57, %v56
  %v61 = vpack.c.b16 %v59, %v58
  %vm64 = vcmask 261120
  %v66 = vsel %vm64, %v40, 0
  %v69 = vsel %vm64, %v41, 0
  %v72 = vsel %vm64, %v42, 0
  %v75 = vsel %vm64, %v43, 0
  %v78 = vsel %vm64, %v44, 0
  %v81 = vsel %vm64, %v45, 0
  %v84 = vsel %vm64, %v46, 0
  %v87 = vsel %vm64, %v47, 0
  %89 = vmatprep.subr.bf16.mxu0 0
  %90 = vmatpush1.bf16.msra.mxu0 0
  %91 = vmatprep.subr.bf16.mxu0 0
  %92 = vmatpush1.bf16.msra.mxu0 0
  %93 = vmatprep.subr.bf16.mxu0 0
  %94 = vmatpush1.bf16.msra.mxu0 0
  %95 = vmatprep.subr.bf16.mxu0 0
  %96 = vmatpush1.bf16.msra.mxu0 0
  %97 = vmatprep.subr.bf16.mxu0 0
  %98 = vmatpush1.bf16.msra.mxu0 0
  %99 = vmatprep.subr.bf16.mxu0 0
  %100 = vmatpush1.bf16.msra.mxu0 0
  %101 = vmatprep.subr.bf16.mxu0 0
  %102 = vmatpush1.bf16.msra.mxu0 %v61
  %103 = vmatprep.subr.bf16.mxu0 0
  %104 = vmatpush1.bf16.msra.mxu0 %v60
  %105 = vmatprep.subr.bf16.mxu0 0
  %106 = vmatpush2.bf16.msra.mxu0 0
  %107 = vmatprep.subr.bf16.mxu0 0
  %108 = vmatpush2.bf16.msra.mxu0 0
  %109 = vmatprep.subr.bf16.mxu0 0
  %110 = vmatpush2.bf16.msra.mxu0 0
  %111 = vmatprep.subr.bf16.mxu0 0
  %112 = vmatpush2.bf16.msra.mxu0 0
  %113 = vmatprep.subr.bf16.mxu0 0
  %114 = vmatpush2.bf16.msra.mxu0 0
  %115 = vmatprep.subr.bf16.mxu0 0
  %116 = vmatpush2.bf16.msra.mxu0 0
  %117 = vmatprep.subr.bf16.mxu0 0
  %118 = vmatpush2.bf16.msra.mxu0 0
  %119 = vmatprep.subr.bf16.mxu0 0
  %120 = vmatpush2.bf16.msra.mxu0 0
  %121 = vmatprep.mubr.bf16.mxu0 0
  %122 = vmatmul.mubr.bf16.gmra.mxu0 %v66
  %v123 = vpop.f32.mrf.mxu0
  %v124 = vadd.f32 0.0, %v123
  %v125 = vpop.f32.mrf.mxu0
  %v126 = vpop.f32.mrf.mxu0
  %v127 = vadd.f32 0.0, %v126
  %v128 = vpop.f32.mrf.mxu0
  %129 = vmatprep.mubr.bf16.mxu0 0
  %130 = vmatmul.mubr.bf16.gmra.mxu0 %v69
  %v131 = vpop.f32.mrf.mxu0
  %v132 = vadd.f32 0.0, %v131
  %v133 = vpop.f32.mrf.mxu0
  %v134 = vpop.f32.mrf.mxu0
  %v135 = vadd.f32 0.0, %v134
  %v136 = vpop.f32.mrf.mxu0
  %137 = vmatprep.mubr.bf16.mxu0 0
  %138 = vmatmul.mubr.bf16.gmra.mxu0 %v72
  %v139 = vpop.f32.mrf.mxu0
  %v140 = vadd.f32 0.0, %v139
  %v141 = vpop.f32.mrf.mxu0
  %v142 = vpop.f32.mrf.mxu0
  %v143 = vadd.f32 0.0, %v142
  %v144 = vpop.f32.mrf.mxu0
  %145 = vmatprep.mubr.bf16.mxu0 0
  %146 = vmatmul.mubr.bf16.gmra.mxu0 %v75
  %v147 = vpop.f32.mrf.mxu0
  %v148 = vadd.f32 0.0, %v147
  %v149 = vpop.f32.mrf.mxu0
  %v150 = vpop.f32.mrf.mxu0
  %v151 = vadd.f32 0.0, %v150
  %v152 = vpop.f32.mrf.mxu0
  %153 = vmatprep.mubr.bf16.mxu0 0
  %154 = vmatmul.mubr.bf16.gmra.mxu0 %v78
  %v155 = vpop.f32.mrf.mxu0
  %v156 = vadd.f32 0.0, %v155
  %v157 = vpop.f32.mrf.mxu0
  %v158 = vpop.f32.mrf.mxu0
  %v159 = vadd.f32 0.0, %v158
  %v160 = vpop.f32.mrf.mxu0
  %161 = vmatprep.mubr.bf16.mxu0 0
  %162 = vmatmul.mubr.bf16.gmra.mxu0 %v81
  %v163 = vpop.f32.mrf.mxu0
  %v164 = vadd.f32 0.0, %v163
  %v165 = vpop.f32.mrf.mxu0
  %v166 = vpop.f32.mrf.mxu0
  %v167 = vadd.f32 0.0, %v166
  %v168 = vpop.f32.mrf.mxu0
  %169 = vmatprep.mubr.bf16.mxu0 0
  %170 = vmatmul.mubr.bf16.gmra.mxu0 %v84
  %v171 = vpop.f32.mrf.mxu0
  %v172 = vadd.f32 0.0, %v171
  %v173 = vpop.f32.mrf.mxu0
  %v174 = vpop.f32.mrf.mxu0
  %v175 = vadd.f32 0.0, %v174
  %v176 = vpop.f32.mrf.mxu0
  %177 = vmatprep.mubr.bf16.mxu0 0
  %178 = vmatmul.mubr.bf16.gmra.mxu0 %v87
  %v179 = vpop.f32.mrf.mxu0
  %v180 = vadd.f32 0.0, %v179
  %v181 = vpop.f32.mrf.mxu0
  %v182 = vpop.f32.mrf.mxu0
  %v183 = vadd.f32 0.0, %v182
  %v184 = vpop.f32.mrf.mxu0
  %185 = vdwg.mxu0
  %v186 = vld [vmem:[%s3] sm:$0x1]
  %v188 = vlaneseq
  %v189 = vshrl.u32 %v188, 7
  %v190 = vsub.s32 0, %v189
  %v191 = vrot.slane %v186, %v190
  %v193 = vadd.f32 %v124, %v191
  %v194 = vadd.f32 %v127, %v191
  %v195 = vadd.f32 %v132, %v191
  %v196 = vadd.f32 %v135, %v191
  %v197 = vadd.f32 %v140, %v191
  %v198 = vadd.f32 %v143, %v191
  %v199 = vadd.f32 %v148, %v191
  %v200 = vadd.f32 %v151, %v191
  %v201 = vadd.f32 %v156, %v191
  %v202 = vadd.f32 %v159, %v191
  %v203 = vadd.f32 %v164, %v191
  %v204 = vadd.f32 %v167, %v191
  %v205 = vadd.f32 %v172, %v191
  %v206 = vadd.f32 %v175, %v191
  %v207 = vadd.f32 %v180, %v191
  %v208 = vadd.f32 %v183, %v191
  %209 = vst [vmem:[#allocation2] sm:$0xff] %v193
  %210 = vst [vmem:[#allocation2 + $0x8] sm:$0xff] %v194
  %211 = vst [vmem:[#allocation2 + $0x10] sm:$0xff] %v195
  %212 = vst [vmem:[#allocation2 + $0x18] sm:$0xff] %v196
  %213 = vst [vmem:[#allocation2 + $0x20] sm:$0xff] %v197
  %214 = vst [vmem:[#allocation2 + $0x28] sm:$0xff] %v198
  %215 = vst [vmem:[#allocation2 + $0x30] sm:$0xff] %v199
  %216 = vst [vmem:[#allocation2 + $0x38] sm:$0xff] %v200
  %217 = vst [vmem:[#allocation2 + $0x40] sm:$0xff] %v201
  %218 = vst [vmem:[#allocation2 + $0x48] sm:$0xff] %v202
  %219 = vst [vmem:[#allocation2 + $0x50] sm:$0xff] %v203
  %220 = vst [vmem:[#allocation2 + $0x58] sm:$0xff] %v204
  %221 = vst [vmem:[#allocation2 + $0x60] sm:$0xff] %v205
  %222 = vst [vmem:[#allocation2 + $0x68] sm:$0xff] %v206
  %223 = vst [vmem:[#allocation2 + $0x70] sm:$0xff] %v207
  %224 = vst [vmem:[#allocation2 + $0x78] sm:$0xff] %v208
  %v225 = vld [vmem:[%s2] sm:$0xf]
  %v226 = vld [vmem:[%s2 + $0x4] sm:$0xf]
  %v227 = vld [vmem:[%s2 + $0x8] sm:$0xf]
  %v228 = vld [vmem:[%s2 + $0xc] sm:$0xf]
  %v229 = vld [vmem:[#allocation2] sm:$0xff]
  %v234 = vunpack.c.l.b16 %v225
  %v235 = vunpack.c.l.b16 %v226
  %v236 = vunpack.c.l.b16 %v227
  %v237 = vunpack.c.l.b16 %v228
  %v238 = vpack.c.b16 %v235, %v234
  %v239 = vpack.c.b16 %v237, %v236
  %v243 = vsel %vm64, 0, 0
  %245 = vmatprep.subr.bf16.mxu0 0
  %246 = vmatpush1.bf16.msra.mxu0 0
  %247 = vmatprep.subr.bf16.mxu0 0
  %248 = vmatpush1.bf16.msra.mxu0 0
  %249 = vmatprep.subr.bf16.mxu0 0
  %250 = vmatpush1.bf16.msra.mxu0 0
  %251 = vmatprep.subr.bf16.mxu0 0
  %252 = vmatpush1.bf16.msra.mxu0 0
  %253 = vmatprep.subr.bf16.mxu0 0
  %254 = vmatpush1.bf16.msra.mxu0 0
  %255 = vmatprep.subr.bf16.mxu0 0
  %256 = vmatpush1.bf16.msra.mxu0 0
  %257 = vmatprep.subr.bf16.mxu0 0
  %258 = vmatpush1.bf16.msra.mxu0 %v239
  %259 = vmatprep.subr.bf16.mxu0 0
  %260 = vmatpush1.bf16.msra.mxu0 %v238
  %261 = vmatprep.subr.bf16.mxu0 0
  %262 = vmatpush2.bf16.msra.mxu0 0
  %263 = vmatprep.subr.bf16.mxu0 0
  %264 = vmatpush2.bf16.msra.mxu0 0
  %265 = vmatprep.subr.bf16.mxu0 0
  %266 = vmatpush2.bf16.msra.mxu0 0
  %267 = vmatprep.subr.bf16.mxu0 0
  %268 = vmatpush2.bf16.msra.mxu0 0
  %269 = vmatprep.subr.bf16.mxu0 0
  %270 = vmatpush2.bf16.msra.mxu0 0
  %271 = vmatprep.subr.bf16.mxu0 0
  %272 = vmatpush2.bf16.msra.mxu0 0
  %273 = vmatprep.subr.bf16.mxu0 0
  %274 = vmatpush2.bf16.msra.mxu0 0
  %275 = vmatprep.subr.bf16.mxu0 0
  %276 = vmatpush2.bf16.msra.mxu0 0
  %277 = vmatprep.mubr.bf16.mxu0 0
  %278 = vmatmul.mubr.bf16.gmra.mxu0 %v243
  %v279 = vpop.f32.mrf.mxu0
  %v280 = vadd.f32 0.0, %v279
  %v281 = vpop.f32.mrf.mxu0
  %v282 = vpop.f32.mrf.mxu0
  %v283 = vpop.f32.mrf.mxu0
  %284 = vdwg.mxu0
  %v285 = vadd.f32 %v229, %v280
  %v286 = vxor.u32 %v285, 2147483648
  %v287 = vmul.f32 %v286, 1.442695
  %v288 = vpow.pop %v287
  %v289 = vadd.f32 %v288, 1.0
  %v290 = vrcp.pop %v289
  %v291 = vmul.f32 1.0, %v290
  %v292 = vtanh.pop %v285
  %v293 = vmul.f32 %v291, 0.0
  %295 = vrot.lane.b32.xlu0 %v292, 64
  %v296 = vpop.permute.xlu0 %295
  %v298 = vmul.f32 %v291, %v296
  %300 = vrot.lane.b32.xlu0 %v298, 32
  %v301 = vpop.permute.xlu0 %300
  %v303 = vadd.f32 %v293, %v301
  %v304 = vtanh.pop %v303
  %306 = vrot.lane.b32.xlu0 %v304, 64
  %v307 = vpop.permute.xlu0 %306
  %v309 = vmul.f32 %v291, %v307
  %311 = vrot.lane.b32.xlu0 %v309, 32
  %v312 = vpop.permute.xlu0 %311
  %314 = vst.msk [vmem:[#allocation3] sm:$0xff] %vm64, %v312
  %s315 = scalar_lea.vmem [#allocation2], 8
  %v316 = vld [vmem:[%s315] sm:$0xff]
  %v317 = vpack.c.bf16 %v309, %v309
  %319 = vrot.lane.b32.xlu0 %v317, 32
  %v320 = vpop.permute.xlu0 %319
  %v322 = vsel %vm64, %v320, 0
  %324 = vmatprep.subr.bf16.mxu0 0
  %325 = vmatpush1.bf16.msra.mxu0 0
  %326 = vmatprep.subr.bf16.mxu0 0
  %327 = vmatpush1.bf16.msra.mxu0 0
  %328 = vmatprep.subr.bf16.mxu0 0
  %329 = vmatpush1.bf16.msra.mxu0 0
  %330 = vmatprep.subr.bf16.mxu0 0
  %331 = vmatpush1.bf16.msra.mxu0 0
  %332 = vmatprep.subr.bf16.mxu0 0
  %333 = vmatpush1.bf16.msra.mxu0 0
  %334 = vmatprep.subr.bf16.mxu0 0
  %335 = vmatpush1.bf16.msra.mxu0 0
  %336 = vmatprep.subr.bf16.mxu0 0
  %337 = vmatpush1.bf16.msra.mxu0 %v239
  %338 = vmatprep.subr.bf16.mxu0 0
  %339 = vmatpush1.bf16.msra.mxu0 %v238
  %340 = vmatprep.subr.bf16.mxu0 0
  %341 = vmatpush2.bf16.msra.mxu0 0
  %342 = vmatprep.subr.bf16.mxu0 0
  %343 = vmatpush2.bf16.msra.mxu0 0
  %344 = vmatprep.subr.bf16.mxu0 0
  %345 = vmatpush2.bf16.msra.mxu0 0
  %346 = vmatprep.subr.bf16.mxu0 0
  %347 = vmatpush2.bf16.msra.mxu0 0
  %348 = vmatprep.subr.bf16.mxu0 0
  %349 = vmatpush2.bf16.msra.mxu0 0
  %350 = vmatprep.subr.bf16.mxu0 0
  %351 = vmatpush2.bf16.msra.mxu0 0
  %352 = vmatprep.subr.bf16.mxu0 0
  %353 = vmatpush2.bf16.msra.mxu0 0
  %354 = vmatprep.subr.bf16.mxu0 0
  %355 = vmatpush2.bf16.msra.mxu0 0
  %356 = vmatprep.mubr.bf16.mxu0 0
  %357 = vmatmul.mubr.bf16.gmra.mxu0 %v322
  %v358 = vpop.f32.mrf.mxu0
  %v359 = vadd.f32 0.0, %v358
  %v360 = vpop.f32.mrf.mxu0
  %v361 = vpop.f32.mrf.mxu0
  %v362 = vpop.f32.mrf.mxu0
  %363 = vdwg.mxu0
  %v364 = vadd.f32 %v316, %v359
  %v365 = vxor.u32 %v364, 2147483648
  %v366 = vmul.f32 %v365, 1.442695
  %v367 = vpow.pop %v366
  %v368 = vadd.f32 %v367, 1.0
  %v369 = vrcp.pop %v368
  %v370 = vmul.f32 1.0, %v369
  %v371 = vtanh.pop %v364
  %v372 = vmul.f32 %v370, %v303
  %374 = vrot.lane.b32.xlu0 %v371, 64
  %v375 = vpop.permute.xlu0 %374
  %v377 = vmul.f32 %v370, %v375
  %379 = vrot.lane.b32.xlu0 %v377, 32
  %v380 = vpop.permute.xlu0 %379
  %v382 = vadd.f32 %v372, %v380
  %v383 = vtanh.pop %v382
  %385 = vrot.lane.b32.xlu0 %v383, 64
  %v386 = vpop.permute.xlu0 %385
  %v388 = vmul.f32 %v370, %v386
  %390 = vrot.lane.b32.xlu0 %v388, 32
  %v391 = vpop.permute.xlu0 %390
  %s393 = scalar_lea.vmem [#allocation3], 8
  %394 = vst.msk [vmem:[%s393] sm:$0xff] %vm64, %v391
  %s395 = scalar_lea.vmem [#allocation2], 16
  %v396 = vld [vmem:[%s395] sm:$0xff]
  %v397 = vpack.c.bf16 %v388, %v388
  %399 = vrot.lane.b32.xlu0 %v397, 32
  %v400 = vpop.permute.xlu0 %399
  %v402 = vsel %vm64, %v400, 0
  %404 = vmatprep.subr.bf16.mxu0 0
  %405 = vmatpush1.bf16.msra.mxu0 0
  %406 = vmatprep.subr.bf16.mxu0 0
  %407 = vmatpush1.bf16.msra.mxu0 0
  %408 = vmatprep.subr.bf16.mxu0 0
  %409 = vmatpush1.bf16.msra.mxu0 0
  %410 = vmatprep.subr.bf16.mxu0 0
  %411 = vmatpush1.bf16.msra.mxu0 0
  %412 = vmatprep.subr.bf16.mxu0 0
  %413 = vmatpush1.bf16.msra.mxu0 0
  %414 = vmatprep.subr.bf16.mxu0 0
  %415 = vmatpush1.bf16.msra.mxu0 0
  %416 = vmatprep.subr.bf16.mxu0 0
  %417 = vmatpush1.bf16.msra.mxu0 %v239
  %418 = vmatprep.subr.bf16.mxu0 0
  %419 = vmatpush1.bf16.msra.mxu0 %v238
  %420 = vmatprep.subr.bf16.mxu0 0
  %421 = vmatpush2.bf16.msra.mxu0 0
  %422 = vmatprep.subr.bf16.mxu0 0
  %423 = vmatpush2.bf16.msra.mxu0 0
  %424 = vmatprep.subr.bf16.mxu0 0
  %425 = vmatpush2.bf16.msra.mxu0 0
  %426 = vmatprep.subr.bf16.mxu0 0
  %427 = vmatpush2.bf16.msra.mxu0 0
  %428 = vmatprep.subr.bf16.mxu0 0
  %429 = vmatpush2.bf16.msra.mxu0 0
  %430 = vmatprep.subr.bf16.mxu0 0
  %431 = vmatpush2.bf16.msra.mxu0 0
  %432 = vmatprep.subr.bf16.mxu0 0
  %433 = vmatpush2.bf16.msra.mxu0 0
  %434 = vmatprep.subr.bf16.mxu0 0
  %435 = vmatpush2.bf16.msra.mxu0 0
  %436 = vmatprep.mubr.bf16.mxu0 0
  %437 = vmatmul.mubr.bf16.gmra.mxu0 %v402
  %v438 = vpop.f32.mrf.mxu0
  %v439 = vadd.f32 0.0, %v438
  %v440 = vpop.f32.mrf.mxu0
  %v441 = vpop.f32.mrf.mxu0
  %v442 = vpop.f32.mrf.mxu0
  %443 = vdwg.mxu0
  %v444 = vadd.f32 %v396, %v439
  %v445 = vxor.u32 %v444, 2147483648
  %v446 = vmul.f32 %v445, 1.442695
  %v447 = vpow.pop %v446
  %v448 = vadd.f32 %v447, 1.0
  %v449 = vrcp.pop %v448
  %v450 = vmul.f32 1.0, %v449
  %v451 = vtanh.pop %v444
  %v452 = vmul.f32 %v450, %v382
  %454 = vrot.lane.b32.xlu0 %v451, 64
  %v455 = vpop.permute.xlu0 %454
  %v457 = vmul.f32 %v450, %v455
  %459 = vrot.lane.b32.xlu0 %v457, 32
  %v460 = vpop.permute.xlu0 %459
  %v462 = vadd.f32 %v452, %v460
  %v463 = vtanh.pop %v462
  %465 = vrot.lane.b32.xlu0 %v463, 64
  %v466 = vpop.permute.xlu0 %465
  %v468 = vmul.f32 %v450, %v466
  %470 = vrot.lane.b32.xlu0 %v468, 32
  %v471 = vpop.permute.xlu0 %470
  %s473 = scalar_lea.vmem [#allocation3], 16
  %474 = vst.msk [vmem:[%s473] sm:$0xff] %vm64, %v471
  %s475 = scalar_lea.vmem [#allocation2], 24
  %v476 = vld [vmem:[%s475] sm:$0xff]
  %v477 = vpack.c.bf16 %v468, %v468
  %479 = vrot.lane.b32.xlu0 %v477, 32
  %v480 = vpop.permute.xlu0 %479
  %v482 = vsel %vm64, %v480, 0
  %484 = vmatprep.subr.bf16.mxu0 0
  %485 = vmatpush1.bf16.msra.mxu0 0
  %486 = vmatprep.subr.bf16.mxu0 0
  %487 = vmatpush1.bf16.msra.mxu0 0
  %488 = vmatprep.subr.bf16.mxu0 0
  %489 = vmatpush1.bf16.msra.mxu0 0
  %490 = vmatprep.subr.bf16.mxu0 0
  %491 = vmatpush1.bf16.msra.mxu0 0
  %492 = vmatprep.subr.bf16.mxu0 0
  %493 = vmatpush1.bf16.msra.mxu0 0
  %494 = vmatprep.subr.bf16.mxu0 0
  %495 = vmatpush1.bf16.msra.mxu0 0
  %496 = vmatprep.subr.bf16.mxu0 0
  %497 = vmatpush1.bf16.msra.mxu0 %v239
  %498 = vmatprep.subr.bf16.mxu0 0
  %499 = vmatpush1.bf16.msra.mxu0 %v238
  %500 = vmatprep.subr.bf16.mxu0 0
  %501 = vmatpush2.bf16.msra.mxu0 0
  %502 = vmatprep.subr.bf16.mxu0 0
  %503 = vmatpush2.bf16.msra.mxu0 0
  %504 = vmatprep.subr.bf16.mxu0 0
  %505 = vmatpush2.bf16.msra.mxu0 0
  %506 = vmatprep.subr.bf16.mxu0 0
  %507 = vmatpush2.bf16.msra.mxu0 0
  %508 = vmatprep.subr.bf16.mxu0 0
  %509 = vmatpush2.bf16.msra.mxu0 0
  %510 = vmatprep.subr.bf16.mxu0 0
  %511 = vmatpush2.bf16.msra.mxu0 0
  %512 = vmatprep.subr.bf16.mxu0 0
  %513 = vmatpush2.bf16.msra.mxu0 0
  %514 = vmatprep.subr.bf16.mxu0 0
  %515 = vmatpush2.bf16.msra.mxu0 0
  %516 = vmatprep.mubr.bf16.mxu0 0
  %517 = vmatmul.mubr.bf16.gmra.mxu0 %v482
  %v518 = vpop.f32.mrf.mxu0
  %v519 = vadd.f32 0.0, %v518
  %v520 = vpop.f32.mrf.mxu0
  %v521 = vpop.f32.mrf.mxu0
  %v522 = vpop.f32.mrf.mxu0
  %523 = vdwg.mxu0
  %v524 = vadd.f32 %v476, %v519
  %v525 = vxor.u32 %v524, 2147483648
  %v526 = vmul.f32 %v525, 1.442695
  %v527 = vpow.pop %v526
  %v528 = vadd.f32 %v527, 1.0
  %v529 = vrcp.pop %v528
  %v530 = vmul.f32 1.0, %v529
  %v531 = vtanh.pop %v524
  %v532 = vmul.f32 %v530, %v462
  %534 = vrot.lane.b32.xlu0 %v531, 64
  %v535 = vpop.permute.xlu0 %534
  %v537 = vmul.f32 %v530, %v535
  %539 = vrot.lane.b32.xlu0 %v537, 32
  %v540 = vpop.permute.xlu0 %539
  %v542 = vadd.f32 %v532, %v540
  %v543 = vtanh.pop %v542
  %545 = vrot.lane.b32.xlu0 %v543, 64
  %v546 = vpop.permute.xlu0 %545
  %v548 = vmul.f32 %v530, %v546
  %550 = vrot.lane.b32.xlu0 %v548, 32
  %v551 = vpop.permute.xlu0 %550
  %s553 = scalar_lea.vmem [#allocation3], 24
  %554 = vst.msk [vmem:[%s553] sm:$0xff] %vm64, %v551
  %s555 = scalar_lea.vmem [#allocation2], 32
  %v556 = vld [vmem:[%s555] sm:$0xff]
  %v557 = vpack.c.bf16 %v548, %v548
  %559 = vrot.lane.b32.xlu0 %v557, 32
  %v560 = vpop.permute.xlu0 %559
  %v562 = vsel %vm64, %v560, 0
  %564 = vmatprep.subr.bf16.mxu0 0
  %565 = vmatpush1.bf16.msra.mxu0 0
  %566 = vmatprep.subr.bf16.mxu0 0
  %567 = vmatpush1.bf16.msra.mxu0 0
  %568 = vmatprep.subr.bf16.mxu0 0
  %569 = vmatpush1.bf16.msra.mxu0 0
  %570 = vmatprep.subr.bf16.mxu0 0
  %571 = vmatpush1.bf16.msra.mxu0 0
  %572 = vmatprep.subr.bf16.mxu0 0
  %573 = vmatpush1.bf16.msra.mxu0 0
  %574 = vmatprep.subr.bf16.mxu0 0
  %575 = vmatpush1.bf16.msra.mxu0 0
  %576 = vmatprep.subr.bf16.mxu0 0
  %577 = vmatpush1.bf16.msra.mxu0 %v239
  %578 = vmatprep.subr.bf16.mxu0 0
  %579 = vmatpush1.bf16.msra.mxu0 %v238
  %580 = vmatprep.subr.bf16.mxu0 0
  %581 = vmatpush2.bf16.msra.mxu0 0
  %582 = vmatprep.subr.bf16.mxu0 0
  %583 = vmatpush2.bf16.msra.mxu0 0
  %584 = vmatprep.subr.bf16.mxu0 0
  %585 = vmatpush2.bf16.msra.mxu0 0
  %586 = vmatprep.subr.bf16.mxu0 0
  %587 = vmatpush2.bf16.msra.mxu0 0
  %588 = vmatprep.subr.bf16.mxu0 0
  %589 = vmatpush2.bf16.msra.mxu0 0
  %590 = vmatprep.subr.bf16.mxu0 0
  %591 = vmatpush2.bf16.msra.mxu0 0
  %592 = vmatprep.subr.bf16.mxu0 0
  %593 = vmatpush2.bf16.msra.mxu0 0
  %594 = vmatprep.subr.bf16.mxu0 0
  %595 = vmatpush2.bf16.msra.mxu0 0
  %596 = vmatprep.mubr.bf16.mxu0 0
  %597 = vmatmul.mubr.bf16.gmra.mxu0 %v562
  %v598 = vpop.f32.mrf.mxu0
  %v599 = vadd.f32 0.0, %v598
  %v600 = vpop.f32.mrf.mxu0
  %v601 = vpop.f32.mrf.mxu0
  %v602 = vpop.f32.mrf.mxu0
  %603 = vdwg.mxu0
  %v604 = vadd.f32 %v556, %v599
  %v605 = vxor.u32 %v604, 2147483648
  %v606 = vmul.f32 %v605, 1.442695
  %v607 = vpow.pop %v606
  %v608 = vadd.f32 %v607, 1.0
  %v609 = vrcp.pop %v608
  %v610 = vmul.f32 1.0, %v609
  %v611 = vtanh.pop %v604
  %v612 = vmul.f32 %v610, %v542
  %614 = vrot.lane.b32.xlu0 %v611, 64
  %v615 = vpop.permute.xlu0 %614
  %v617 = vmul.f32 %v610, %v615
  %619 = vrot.lane.b32.xlu0 %v617, 32
  %v620 = vpop.permute.xlu0 %619
  %v622 = vadd.f32 %v612, %v620
  %v623 = vtanh.pop %v622
  %625 = vrot.lane.b32.xlu0 %v623, 64
  %v626 = vpop.permute.xlu0 %625
  %v628 = vmul.f32 %v610, %v626
  %630 = vrot.lane.b32.xlu0 %v628, 32
  %v631 = vpop.permute.xlu0 %630
  %s633 = scalar_lea.vmem [#allocation3], 32
  %634 = vst.msk [vmem:[%s633] sm:$0xff] %vm64, %v631
  %s635 = scalar_lea.vmem [#allocation2], 40
  %v636 = vld [vmem:[%s635] sm:$0xff]
  %v637 = vpack.c.bf16 %v628, %v628
  %639 = vrot.lane.b32.xlu0 %v637, 32
  %v640 = vpop.permute.xlu0 %639
  %v642 = vsel %vm64, %v640, 0
  %644 = vmatprep.subr.bf16.mxu0 0
  %645 = vmatpush1.bf16.msra.mxu0 0
  %646 = vmatprep.subr.bf16.mxu0 0
  %647 = vmatpush1.bf16.msra.mxu0 0
  %648 = vmatprep.subr.bf16.mxu0 0
  %649 = vmatpush1.bf16.msra.mxu0 0
  %650 = vmatprep.subr.bf16.mxu0 0
  %651 = vmatpush1.bf16.msra.mxu0 0
  %652 = vmatprep.subr.bf16.mxu0 0
  %653 = vmatpush1.bf16.msra.mxu0 0
  %654 = vmatprep.subr.bf16.mxu0 0
  %655 = vmatpush1.bf16.msra.mxu0 0
  %656 = vmatprep.subr.bf16.mxu0 0
  %657 = vmatpush1.bf16.msra.mxu0 %v239
  %658 = vmatprep.subr.bf16.mxu0 0
  %659 = vmatpush1.bf16.msra.mxu0 %v238
  %660 = vmatprep.subr.bf16.mxu0 0
  %661 = vmatpush2.bf16.msra.mxu0 0
  %662 = vmatprep.subr.bf16.mxu0 0
  %663 = vmatpush2.bf16.msra.mxu0 0
  %664 = vmatprep.subr.bf16.mxu0 0
  %665 = vmatpush2.bf16.msra.mxu0 0
  %666 = vmatprep.subr.bf16.mxu0 0
  %667 = vmatpush2.bf16.msra.mxu0 0
  %668 = vmatprep.subr.bf16.mxu0 0
  %669 = vmatpush2.bf16.msra.mxu0 0
  %670 = vmatprep.subr.bf16.mxu0 0
  %671 = vmatpush2.bf16.msra.mxu0 0
  %672 = vmatprep.subr.bf16.mxu0 0
  %673 = vmatpush2.bf16.msra.mxu0 0
  %674 = vmatprep.subr.bf16.mxu0 0
  %675 = vmatpush2.bf16.msra.mxu0 0
  %676 = vmatprep.mubr.bf16.mxu0 0
  %677 = vmatmul.mubr.bf16.gmra.mxu0 %v642
  %v678 = vpop.f32.mrf.mxu0
  %v679 = vadd.f32 0.0, %v678
  %v680 = vpop.f32.mrf.mxu0
  %v681 = vpop.f32.mrf.mxu0
  %v682 = vpop.f32.mrf.mxu0
  %683 = vdwg.mxu0
  %v684 = vadd.f32 %v636, %v679
  %v685 = vxor.u32 %v684, 2147483648
  %v686 = vmul.f32 %v685, 1.442695
  %v687 = vpow.pop %v686
  %v688 = vadd.f32 %v687, 1.0
  %v689 = vrcp.pop %v688
  %v690 = vmul.f32 1.0, %v689
  %v691 = vtanh.pop %v684
  %v692 = vmul.f32 %v690, %v622
  %694 = vrot.lane.b32.xlu0 %v691, 64
  %v695 = vpop.permute.xlu0 %694
  %v697 = vmul.f32 %v690, %v695
  %699 = vrot.lane.b32.xlu0 %v697, 32
  %v700 = vpop.permute.xlu0 %699
  %v702 = vadd.f32 %v692, %v700
  %v703 = vtanh.pop %v702
  %705 = vrot.lane.b32.xlu0 %v703, 64
  %v706 = vpop.permute.xlu0 %705
  %v708 = vmul.f32 %v690, %v706
  %710 = vrot.lane.b32.xlu0 %v708, 32
  %v711 = vpop.permute.xlu0 %710
  %s713 = scalar_lea.vmem [#allocation3], 40
  %714 = vst.msk [vmem:[%s713] sm:$0xff] %vm64, %v711
  %s715 = scalar_lea.vmem [#allocation2], 48
  %v716 = vld [vmem:[%s715] sm:$0xff]
  %v717 = vpack.c.bf16 %v708, %v708
  %719 = vrot.lane.b32.xlu0 %v717, 32
  %v720 = vpop.permute.xlu0 %719
  %v722 = vsel %vm64, %v720, 0
  %724 = vmatprep.subr.bf16.mxu0 0
  %725 = vmatpush1.bf16.msra.mxu0 0
  %726 = vmatprep.subr.bf16.mxu0 0
  %727 = vmatpush1.bf16.msra.mxu0 0
  %728 = vmatprep.subr.bf16.mxu0 0
  %729 = vmatpush1.bf16.msra.mxu0 0
  %730 = vmatprep.subr.bf16.mxu0 0
  %731 = vmatpush1.bf16.msra.mxu0 0
  %732 = vmatprep.subr.bf16.mxu0 0
  %733 = vmatpush1.bf16.msra.mxu0 0
  %734 = vmatprep.subr.bf16.mxu0 0
  %735 = vmatpush1.bf16.msra.mxu0 0
  %736 = vmatprep.subr.bf16.mxu0 0
  %737 = vmatpush1.bf16.msra.mxu0 %v239
  %738 = vmatprep.subr.bf16.mxu0 0
  %739 = vmatpush1.bf16.msra.mxu0 %v238
  %740 = vmatprep.subr.bf16.mxu0 0
  %741 = vmatpush2.bf16.msra.mxu0 0
  %742 = vmatprep.subr.bf16.mxu0 0
  %743 = vmatpush2.bf16.msra.mxu0 0
  %744 = vmatprep.subr.bf16.mxu0 0
  %745 = vmatpush2.bf16.msra.mxu0 0
  %746 = vmatprep.subr.bf16.mxu0 0
  %747 = vmatpush2.bf16.msra.mxu0 0
  %748 = vmatprep.subr.bf16.mxu0 0
  %749 = vmatpush2.bf16.msra.mxu0 0
  %750 = vmatprep.subr.bf16.mxu0 0
  %751 = vmatpush2.bf16.msra.mxu0 0
  %752 = vmatprep.subr.bf16.mxu0 0
  %753 = vmatpush2.bf16.msra.mxu0 0
  %754 = vmatprep.subr.bf16.mxu0 0
  %755 = vmatpush2.bf16.msra.mxu0 0
  %756 = vmatprep.mubr.bf16.mxu0 0
  %757 = vmatmul.mubr.bf16.gmra.mxu0 %v722
  %v758 = vpop.f32.mrf.mxu0
  %v759 = vadd.f32 0.0, %v758
  %v760 = vpop.f32.mrf.mxu0
  %v761 = vpop.f32.mrf.mxu0
  %v762 = vpop.f32.mrf.mxu0
  %763 = vdwg.mxu0
  %v764 = vadd.f32 %v716, %v759
  %v765 = vxor.u32 %v764, 2147483648
  %v766 = vmul.f32 %v765, 1.442695
  %v767 = vpow.pop %v766
  %v768 = vadd.f32 %v767, 1.0
  %v769 = vrcp.pop %v768
  %v770 = vmul.f32 1.0, %v769
  %v771 = vtanh.pop %v764
  %v772 = vmul.f32 %v770, %v702
  %774 = vrot.lane.b32.xlu0 %v771, 64
  %v775 = vpop.permute.xlu0 %774
  %v777 = vmul.f32 %v770, %v775
  %779 = vrot.lane.b32.xlu0 %v777, 32
  %v780 = vpop.permute.xlu0 %779
  %v782 = vadd.f32 %v772, %v780
  %v783 = vtanh.pop %v782
  %785 = vrot.lane.b32.xlu0 %v783, 64
  %v786 = vpop.permute.xlu0 %785
  %v788 = vmul.f32 %v770, %v786
  %790 = vrot.lane.b32.xlu0 %v788, 32
  %v791 = vpop.permute.xlu0 %790
  %s793 = scalar_lea.vmem [#allocation3], 48
  %794 = vst.msk [vmem:[%s793] sm:$0xff] %vm64, %v791
  %s795 = scalar_lea.vmem [#allocation2], 56
  %v796 = vld [vmem:[%s795] sm:$0xff]
  %v797 = vpack.c.bf16 %v788, %v788
  %799 = vrot.lane.b32.xlu0 %v797, 32
  %v800 = vpop.permute.xlu0 %799
  %v802 = vsel %vm64, %v800, 0
  %804 = vmatprep.subr.bf16.mxu0 0
  %805 = vmatpush1.bf16.msra.mxu0 0
  %806 = vmatprep.subr.bf16.mxu0 0
  %807 = vmatpush1.bf16.msra.mxu0 0
  %808 = vmatprep.subr.bf16.mxu0 0
  %809 = vmatpush1.bf16.msra.mxu0 0
  %810 = vmatprep.subr.bf16.mxu0 0
  %811 = vmatpush1.bf16.msra.mxu0 0
  %812 = vmatprep.subr.bf16.mxu0 0
  %813 = vmatpush1.bf16.msra.mxu0 0
  %814 = vmatprep.subr.bf16.mxu0 0
  %815 = vmatpush1.bf16.msra.mxu0 0
  %816 = vmatprep.subr.bf16.mxu0 0
  %817 = vmatpush1.bf16.msra.mxu0 %v239
  %818 = vmatprep.subr.bf16.mxu0 0
  %819 = vmatpush1.bf16.msra.mxu0 %v238
  %820 = vmatprep.subr.bf16.mxu0 0
  %821 = vmatpush2.bf16.msra.mxu0 0
  %822 = vmatprep.subr.bf16.mxu0 0
  %823 = vmatpush2.bf16.msra.mxu0 0
  %824 = vmatprep.subr.bf16.mxu0 0
  %825 = vmatpush2.bf16.msra.mxu0 0
  %826 = vmatprep.subr.bf16.mxu0 0
  %827 = vmatpush2.bf16.msra.mxu0 0
  %828 = vmatprep.subr.bf16.mxu0 0
  %829 = vmatpush2.bf16.msra.mxu0 0
  %830 = vmatprep.subr.bf16.mxu0 0
  %831 = vmatpush2.bf16.msra.mxu0 0
  %832 = vmatprep.subr.bf16.mxu0 0
  %833 = vmatpush2.bf16.msra.mxu0 0
  %834 = vmatprep.subr.bf16.mxu0 0
  %835 = vmatpush2.bf16.msra.mxu0 0
  %836 = vmatprep.mubr.bf16.mxu0 0
  %837 = vmatmul.mubr.bf16.gmra.mxu0 %v802
  %v838 = vpop.f32.mrf.mxu0
  %v839 = vadd.f32 0.0, %v838
  %v840 = vpop.f32.mrf.mxu0
  %v841 = vpop.f32.mrf.mxu0
  %v842 = vpop.f32.mrf.mxu0
  %843 = vdwg.mxu0
  %v844 = vadd.f32 %v796, %v839
  %v845 = vxor.u32 %v844, 2147483648
  %v846 = vmul.f32 %v845, 1.442695
  %v847 = vpow.pop %v846
  %v848 = vadd.f32 %v847, 1.0
  %v849 = vrcp.pop %v848
  %v850 = vmul.f32 1.0, %v849
  %v851 = vtanh.pop %v844
  %v852 = vmul.f32 %v850, %v782
  %854 = vrot.lane.b32.xlu0 %v851, 64
  %v855 = vpop.permute.xlu0 %854
  %v857 = vmul.f32 %v850, %v855
  %859 = vrot.lane.b32.xlu0 %v857, 32
  %v860 = vpop.permute.xlu0 %859
  %v862 = vadd.f32 %v852, %v860
  %v863 = vtanh.pop %v862
  %865 = vrot.lane.b32.xlu0 %v863, 64
  %v866 = vpop.permute.xlu0 %865
  %v868 = vmul.f32 %v850, %v866
  %870 = vrot.lane.b32.xlu0 %v868, 32
  %v871 = vpop.permute.xlu0 %870
  %s873 = scalar_lea.vmem [#allocation3], 56
  %874 = vst.msk [vmem:[%s873] sm:$0xff] %vm64, %v871
  %s875 = scalar_lea.vmem [#allocation2], 64
  %v876 = vld [vmem:[%s875] sm:$0xff]
  %v877 = vpack.c.bf16 %v868, %v868
  %879 = vrot.lane.b32.xlu0 %v877, 32
  %v880 = vpop.permute.xlu0 %879
  %v882 = vsel %vm64, %v880, 0
  %884 = vmatprep.subr.bf16.mxu0 0
  %885 = vmatpush1.bf16.msra.mxu0 0
  %886 = vmatprep.subr.bf16.mxu0 0
  %887 = vmatpush1.bf16.msra.mxu0 0
  %888 = vmatprep.subr.bf16.mxu0 0
  %889 = vmatpush1.bf16.msra.mxu0 0
  %890 = vmatprep.subr.bf16.mxu0 0
  %891 = vmatpush1.bf16.msra.mxu0 0
  %892 = vmatprep.subr.bf16.mxu0 0
  %893 = vmatpush1.bf16.msra.mxu0 0
  %894 = vmatprep.subr.bf16.mxu0 0
  %895 = vmatpush1.bf16.msra.mxu0 0
  %896 = vmatprep.subr.bf16.mxu0 0
  %897 = vmatpush1.bf16.msra.mxu0 %v239
  %898 = vmatprep.subr.bf16.mxu0 0
  %899 = vmatpush1.bf16.msra.mxu0 %v238
  %900 = vmatprep.subr.bf16.mxu0 0
  %901 = vmatpush2.bf16.msra.mxu0 0
  %902 = vmatprep.subr.bf16.mxu0 0
  %903 = vmatpush2.bf16.msra.mxu0 0
  %904 = vmatprep.subr.bf16.mxu0 0
  %905 = vmatpush2.bf16.msra.mxu0 0
  %906 = vmatprep.subr.bf16.mxu0 0
  %907 = vmatpush2.bf16.msra.mxu0 0
  %908 = vmatprep.subr.bf16.mxu0 0
  %909 = vmatpush2.bf16.msra.mxu0 0
  %910 = vmatprep.subr.bf16.mxu0 0
  %911 = vmatpush2.bf16.msra.mxu0 0
  %912 = vmatprep.subr.bf16.mxu0 0
  %913 = vmatpush2.bf16.msra.mxu0 0
  %914 = vmatprep.subr.bf16.mxu0 0
  %915 = vmatpush2.bf16.msra.mxu0 0
  %916 = vmatprep.mubr.bf16.mxu0 0
  %917 = vmatmul.mubr.bf16.gmra.mxu0 %v882
  %v918 = vpop.f32.mrf.mxu0
  %v919 = vadd.f32 0.0, %v918
  %v920 = vpop.f32.mrf.mxu0
  %v921 = vpop.f32.mrf.mxu0
  %v922 = vpop.f32.mrf.mxu0
  %923 = vdwg.mxu0
  %v924 = vadd.f32 %v876, %v919
  %v925 = vxor.u32 %v924, 2147483648
  %v926 = vmul.f32 %v925, 1.442695
  %v927 = vpow.pop %v926
  %v928 = vadd.f32 %v927, 1.0
  %v929 = vrcp.pop %v928
  %v930 = vmul.f32 1.0, %v929
  %v931 = vtanh.pop %v924
  %v932 = vmul.f32 %v930, %v862
  %934 = vrot.lane.b32.xlu0 %v931, 64
  %v935 = vpop.permute.xlu0 %934
  %v937 = vmul.f32 %v930, %v935
  %939 = vrot.lane.b32.xlu0 %v937, 32
  %v940 = vpop.permute.xlu0 %939
  %v942 = vadd.f32 %v932, %v940
  %v943 = vtanh.pop %v942
  %945 = vrot.lane.b32.xlu0 %v943, 64
  %v946 = vpop.permute.xlu0 %945
  %v948 = vmul.f32 %v930, %v946
  %950 = vrot.lane.b32.xlu0 %v948, 32
  %v951 = vpop.permute.xlu0 %950
  %s953 = scalar_lea.vmem [#allocation3], 64
  %954 = vst.msk [vmem:[%s953] sm:$0xff] %vm64, %v951
  %s955 = scalar_lea.vmem [#allocation2], 72
  %v956 = vld [vmem:[%s955] sm:$0xff]
  %v957 = vpack.c.bf16 %v948, %v948
  %959 = vrot.lane.b32.xlu0 %v957, 32
  %v960 = vpop.permute.xlu0 %959
  %v962 = vsel %vm64, %v960, 0
  %964 = vmatprep.subr.bf16.mxu0 0
  %965 = vmatpush1.bf16.msra.mxu0 0
  %966 = vmatprep.subr.bf16.mxu0 0
  %967 = vmatpush1.bf16.msra.mxu0 0
  %968 = vmatprep.subr.bf16.mxu0 0
  %969 = vmatpush1.bf16.msra.mxu0 0
  %970 = vmatprep.subr.bf16.mxu0 0
  %971 = vmatpush1.bf16.msra.mxu0 0
  %972 = vmatprep.subr.bf16.mxu0 0
  %973 = vmatpush1.bf16.msra.mxu0 0
  %974 = vmatprep.subr.bf16.mxu0 0
  %975 = vmatpush1.bf16.msra.mxu0 0
  %976 = vmatprep.subr.bf16.mxu0 0
  %977 = vmatpush1.bf16.msra.mxu0 %v239
  %978 = vmatprep.subr.bf16.mxu0 0
  %979 = vmatpush1.bf16.msra.mxu0 %v238
  %980 = vmatprep.subr.bf16.mxu0 0
  %981 = vmatpush2.bf16.msra.mxu0 0
  %982 = vmatprep.subr.bf16.mxu0 0
  %983 = vmatpush2.bf16.msra.mxu0 0
  %984 = vmatprep.subr.bf16.mxu0 0
  %985 = vmatpush2.bf16.msra.mxu0 0
  %986 = vmatprep.subr.bf16.mxu0 0
  %987 = vmatpush2.bf16.msra.mxu0 0
  %988 = vmatprep.subr.bf16.mxu0 0
  %989 = vmatpush2.bf16.msra.mxu0 0
  %990 = vmatprep.subr.bf16.mxu0 0
  %991 = vmatpush2.bf16.msra.mxu0 0
  %992 = vmatprep.subr.bf16.mxu0 0
  %993 = vmatpush2.bf16.msra.mxu0 0
  %994 = vmatprep.subr.bf16.mxu0 0
  %995 = vmatpush2.bf16.msra.mxu0 0
  %996 = vmatprep.mubr.bf16.mxu0 0
  %997 = vmatmul.mubr.bf16.gmra.mxu0 %v962
  %v998 = vpop.f32.mrf.mxu0
  %v999 = vadd.f32 0.0, %v998
  %v1000 = vpop.f32.mrf.mxu0
  %v1001 = vpop.f32.mrf.mxu0
  %v1002 = vpop.f32.mrf.mxu0
  %1003 = vdwg.mxu0
  %v1004 = vadd.f32 %v956, %v999
  %v1005 = vxor.u32 %v1004, 2147483648
  %v1006 = vmul.f32 %v1005, 1.442695
  %v1007 = vpow.pop %v1006
  %v1008 = vadd.f32 %v1007, 1.0
  %v1009 = vrcp.pop %v1008
  %v1010 = vmul.f32 1.0, %v1009
  %v1011 = vtanh.pop %v1004
  %v1012 = vmul.f32 %v1010, %v942
  %1014 = vrot.lane.b32.xlu0 %v1011, 64
  %v1015 = vpop.permute.xlu0 %1014
  %v1017 = vmul.f32 %v1010, %v1015
  %1019 = vrot.lane.b32.xlu0 %v1017, 32
  %v1020 = vpop.permute.xlu0 %1019
  %v1022 = vadd.f32 %v1012, %v1020
  %v1023 = vtanh.pop %v1022
  %1025 = vrot.lane.b32.xlu0 %v1023, 64
  %v1026 = vpop.permute.xlu0 %1025
  %v1028 = vmul.f32 %v1010, %v1026
  %1030 = vrot.lane.b32.xlu0 %v1028, 32
  %v1031 = vpop.permute.xlu0 %1030
  %s1033 = scalar_lea.vmem [#allocation3], 72
  %1034 = vst.msk [vmem:[%s1033] sm:$0xff] %vm64, %v1031
  %s1035 = scalar_lea.vmem [#allocation2], 80
  %v1036 = vld [vmem:[%s1035] sm:$0xff]
  %v1037 = vpack.c.bf16 %v1028, %v1028
  %1039 = vrot.lane.b32.xlu0 %v1037, 32
  %v1040 = vpop.permute.xlu0 %1039
  %v1042 = vsel %vm64, %v1040, 0
  %1044 = vmatprep.subr.bf16.mxu0 0
  %1045 = vmatpush1.bf16.msra.mxu0 0
  %1046 = vmatprep.subr.bf16.mxu0 0
  %1047 = vmatpush1.bf16.msra.mxu0 0
  %1048 = vmatprep.subr.bf16.mxu0 0
  %1049 = vmatpush1.bf16.msra.mxu0 0
  %1050 = vmatprep.subr.bf16.mxu0 0
  %1051 = vmatpush1.bf16.msra.mxu0 0
  %1052 = vmatprep.subr.bf16.mxu0 0
  %1053 = vmatpush1.bf16.msra.mxu0 0
  %1054 = vmatprep.subr.bf16.mxu0 0
  %1055 = vmatpush1.bf16.msra.mxu0 0
  %1056 = vmatprep.subr.bf16.mxu0 0
  %1057 = vmatpush1.bf16.msra.mxu0 %v239
  %1058 = vmatprep.subr.bf16.mxu0 0
  %1059 = vmatpush1.bf16.msra.mxu0 %v238
  %1060 = vmatprep.subr.bf16.mxu0 0
  %1061 = vmatpush2.bf16.msra.mxu0 0
  %1062 = vmatprep.subr.bf16.mxu0 0
  %1063 = vmatpush2.bf16.msra.mxu0 0
  %1064 = vmatprep.subr.bf16.mxu0 0
  %1065 = vmatpush2.bf16.msra.mxu0 0
  %1066 = vmatprep.subr.bf16.mxu0 0
  %1067 = vmatpush2.bf16.msra.mxu0 0
  %1068 = vmatprep.subr.bf16.mxu0 0
  %1069 = vmatpush2.bf16.msra.mxu0 0
  %1070 = vmatprep.subr.bf16.mxu0 0
  %1071 = vmatpush2.bf16.msra.mxu0 0
  %1072 = vmatprep.subr.bf16.mxu0 0
  %1073 = vmatpush2.bf16.msra.mxu0 0
  %1074 = vmatprep.subr.bf16.mxu0 0
  %1075 = vmatpush2.bf16.msra.mxu0 0
  %1076 = vmatprep.mubr.bf16.mxu0 0
  %1077 = vmatmul.mubr.bf16.gmra.mxu0 %v1042
  %v1078 = vpop.f32.mrf.mxu0
  %v1079 = vadd.f32 0.0, %v1078
  %v1080 = vpop.f32.mrf.mxu0
  %v1081 = vpop.f32.mrf.mxu0
  %v1082 = vpop.f32.mrf.mxu0
  %1083 = vdwg.mxu0
  %v1084 = vadd.f32 %v1036, %v1079
  %v1085 = vxor.u32 %v1084, 2147483648
  %v1086 = vmul.f32 %v1085, 1.442695
  %v1087 = vpow.pop %v1086
  %v1088 = vadd.f32 %v1087, 1.0
  %v1089 = vrcp.pop %v1088
  %v1090 = vmul.f32 1.0, %v1089
  %v1091 = vtanh.pop %v1084
  %v1092 = vmul.f32 %v1090, %v1022
  %1094 = vrot.lane.b32.xlu0 %v1091, 64
  %v1095 = vpop.permute.xlu0 %1094
  %v1097 = vmul.f32 %v1090, %v1095
  %1099 = vrot.lane.b32.xlu0 %v1097, 32
  %v1100 = vpop.permute.xlu0 %1099
  %v1102 = vadd.f32 %v1092, %v1100
  %v1103 = vtanh.pop %v1102
  %1105 = vrot.lane.b32.xlu0 %v1103, 64
  %v1106 = vpop.permute.xlu0 %1105
  %v1108 = vmul.f32 %v1090, %v1106
  %1110 = vrot.lane.b32.xlu0 %v1108, 32
  %v1111 = vpop.permute.xlu0 %1110
  %s1113 = scalar_lea.vmem [#allocation3], 80
  %1114 = vst.msk [vmem:[%s1113] sm:$0xff] %vm64, %v1111
  %s1115 = scalar_lea.vmem [#allocation2], 88
  %v1116 = vld [vmem:[%s1115] sm:$0xff]
  %v1117 = vpack.c.bf16 %v1108, %v1108
  %1119 = vrot.lane.b32.xlu0 %v1117, 32
  %v1120 = vpop.permute.xlu0 %1119
  %v1122 = vsel %vm64, %v1120, 0
  %1124 = vmatprep.subr.bf16.mxu0 0
  %1125 = vmatpush1.bf16.msra.mxu0 0
  %1126 = vmatprep.subr.bf16.mxu0 0
  %1127 = vmatpush1.bf16.msra.mxu0 0
  %1128 = vmatprep.subr.bf16.mxu0 0
  %1129 = vmatpush1.bf16.msra.mxu0 0
  %1130 = vmatprep.subr.bf16.mxu0 0
  %1131 = vmatpush1.bf16.msra.mxu0 0
  %1132 = vmatprep.subr.bf16.mxu0 0
  %1133 = vmatpush1.bf16.msra.mxu0 0
  %1134 = vmatprep.subr.bf16.mxu0 0
  %1135 = vmatpush1.bf16.msra.mxu0 0
  %1136 = vmatprep.subr.bf16.mxu0 0
  %1137 = vmatpush1.bf16.msra.mxu0 %v239
  %1138 = vmatprep.subr.bf16.mxu0 0
  %1139 = vmatpush1.bf16.msra.mxu0 %v238
  %1140 = vmatprep.subr.bf16.mxu0 0
  %1141 = vmatpush2.bf16.msra.mxu0 0
  %1142 = vmatprep.subr.bf16.mxu0 0
  %1143 = vmatpush2.bf16.msra.mxu0 0
  %1144 = vmatprep.subr.bf16.mxu0 0
  %1145 = vmatpush2.bf16.msra.mxu0 0
  %1146 = vmatprep.subr.bf16.mxu0 0
  %1147 = vmatpush2.bf16.msra.mxu0 0
  %1148 = vmatprep.subr.bf16.mxu0 0
  %1149 = vmatpush2.bf16.msra.mxu0 0
  %1150 = vmatprep.subr.bf16.mxu0 0
  %1151 = vmatpush2.bf16.msra.mxu0 0
  %1152 = vmatprep.subr.bf16.mxu0 0
  %1153 = vmatpush2.bf16.msra.mxu0 0
  %1154 = vmatprep.subr.bf16.mxu0 0
  %1155 = vmatpush2.bf16.msra.mxu0 0
  %1156 = vmatprep.mubr.bf16.mxu0 0
  %1157 = vmatmul.mubr.bf16.gmra.mxu0 %v1122
  %v1158 = vpop.f32.mrf.mxu0
  %v1159 = vadd.f32 0.0, %v1158
  %v1160 = vpop.f32.mrf.mxu0
  %v1161 = vpop.f32.mrf.mxu0
  %v1162 = vpop.f32.mrf.mxu0
  %1163 = vdwg.mxu0
  %v1164 = vadd.f32 %v1116, %v1159
  %v1165 = vxor.u32 %v1164, 2147483648
  %v1166 = vmul.f32 %v1165, 1.442695
  %v1167 = vpow.pop %v1166
  %v1168 = vadd.f32 %v1167, 1.0
  %v1169 = vrcp.pop %v1168
  %v1170 = vmul.f32 1.0, %v1169
  %v1171 = vtanh.pop %v1164
  %v1172 = vmul.f32 %v1170, %v1102
  %1174 = vrot.lane.b32.xlu0 %v1171, 64
  %v1175 = vpop.permute.xlu0 %1174
  %v1177 = vmul.f32 %v1170, %v1175
  %1179 = vrot.lane.b32.xlu0 %v1177, 32
  %v1180 = vpop.permute.xlu0 %1179
  %v1182 = vadd.f32 %v1172, %v1180
  %v1183 = vtanh.pop %v1182
  %1185 = vrot.lane.b32.xlu0 %v1183, 64
  %v1186 = vpop.permute.xlu0 %1185
  %v1188 = vmul.f32 %v1170, %v1186
  %1190 = vrot.lane.b32.xlu0 %v1188, 32
  %v1191 = vpop.permute.xlu0 %1190
  %s1193 = scalar_lea.vmem [#allocation3], 88
  %1194 = vst.msk [vmem:[%s1193] sm:$0xff] %vm64, %v1191
  %s1195 = scalar_lea.vmem [#allocation2], 96
  %v1196 = vld [vmem:[%s1195] sm:$0xff]
  %v1197 = vpack.c.bf16 %v1188, %v1188
  %1199 = vrot.lane.b32.xlu0 %v1197, 32
  %v1200 = vpop.permute.xlu0 %1199
  %v1202 = vsel %vm64, %v1200, 0
  %1204 = vmatprep.subr.bf16.mxu0 0
  %1205 = vmatpush1.bf16.msra.mxu0 0
  %1206 = vmatprep.subr.bf16.mxu0 0
  %1207 = vmatpush1.bf16.msra.mxu0 0
  %1208 = vmatprep.subr.bf16.mxu0 0
  %1209 = vmatpush1.bf16.msra.mxu0 0
  %1210 = vmatprep.subr.bf16.mxu0 0
  %1211 = vmatpush1.bf16.msra.mxu0 0
  %1212 = vmatprep.subr.bf16.mxu0 0
  %1213 = vmatpush1.bf16.msra.mxu0 0
  %1214 = vmatprep.subr.bf16.mxu0 0
  %1215 = vmatpush1.bf16.msra.mxu0 0
  %1216 = vmatprep.subr.bf16.mxu0 0
  %1217 = vmatpush1.bf16.msra.mxu0 %v239
  %1218 = vmatprep.subr.bf16.mxu0 0
  %1219 = vmatpush1.bf16.msra.mxu0 %v238
  %1220 = vmatprep.subr.bf16.mxu0 0
  %1221 = vmatpush2.bf16.msra.mxu0 0
  %1222 = vmatprep.subr.bf16.mxu0 0
  %1223 = vmatpush2.bf16.msra.mxu0 0
  %1224 = vmatprep.subr.bf16.mxu0 0
  %1225 = vmatpush2.bf16.msra.mxu0 0
  %1226 = vmatprep.subr.bf16.mxu0 0
  %1227 = vmatpush2.bf16.msra.mxu0 0
  %1228 = vmatprep.subr.bf16.mxu0 0
  %1229 = vmatpush2.bf16.msra.mxu0 0
  %1230 = vmatprep.subr.bf16.mxu0 0
  %1231 = vmatpush2.bf16.msra.mxu0 0
  %1232 = vmatprep.subr.bf16.mxu0 0
  %1233 = vmatpush2.bf16.msra.mxu0 0
  %1234 = vmatprep.subr.bf16.mxu0 0
  %1235 = vmatpush2.bf16.msra.mxu0 0
  %1236 = vmatprep.mubr.bf16.mxu0 0
  %1237 = vmatmul.mubr.bf16.gmra.mxu0 %v1202
  %v1238 = vpop.f32.mrf.mxu0
  %v1239 = vadd.f32 0.0, %v1238
  %v1240 = vpop.f32.mrf.mxu0
  %v1241 = vpop.f32.mrf.mxu0
  %v1242 = vpop.f32.mrf.mxu0
  %1243 = vdwg.mxu0
  %v1244 = vadd.f32 %v1196, %v1239
  %v1245 = vxor.u32 %v1244, 2147483648
  %v1246 = vmul.f32 %v1245, 1.442695
  %v1247 = vpow.pop %v1246
  %v1248 = vadd.f32 %v1247, 1.0
  %v1249 = vrcp.pop %v1248
  %v1250 = vmul.f32 1.0, %v1249
  %v1251 = vtanh.pop %v1244
  %v1252 = vmul.f32 %v1250, %v1182
  %1254 = vrot.lane.b32.xlu0 %v1251, 64
  %v1255 = vpop.permute.xlu0 %1254
  %v1257 = vmul.f32 %v1250, %v1255
  %1259 = vrot.lane.b32.xlu0 %v1257, 32
  %v1260 = vpop.permute.xlu0 %1259
  %v1262 = vadd.f32 %v1252, %v1260
  %v1263 = vtanh.pop %v1262
  %1265 = vrot.lane.b32.xlu0 %v1263, 64
  %v1266 = vpop.permute.xlu0 %1265
  %v1268 = vmul.f32 %v1250, %v1266
  %1270 = vrot.lane.b32.xlu0 %v1268, 32
  %v1271 = vpop.permute.xlu0 %1270
  %s1273 = scalar_lea.vmem [#allocation3], 96
  %1274 = vst.msk [vmem:[%s1273] sm:$0xff] %vm64, %v1271
  %s1275 = scalar_lea.vmem [#allocation2], 104
  %v1276 = vld [vmem:[%s1275] sm:$0xff]
  %v1277 = vpack.c.bf16 %v1268, %v1268
  %1279 = vrot.lane.b32.xlu0 %v1277, 32
  %v1280 = vpop.permute.xlu0 %1279
  %v1282 = vsel %vm64, %v1280, 0
  %1284 = vmatprep.subr.bf16.mxu0 0
  %1285 = vmatpush1.bf16.msra.mxu0 0
  %1286 = vmatprep.subr.bf16.mxu0 0
  %1287 = vmatpush1.bf16.msra.mxu0 0
  %1288 = vmatprep.subr.bf16.mxu0 0
  %1289 = vmatpush1.bf16.msra.mxu0 0
  %1290 = vmatprep.subr.bf16.mxu0 0
  %1291 = vmatpush1.bf16.msra.mxu0 0
  %1292 = vmatprep.subr.bf16.mxu0 0
  %1293 = vmatpush1.bf16.msra.mxu0 0
  %1294 = vmatprep.subr.bf16.mxu0 0
  %1295 = vmatpush1.bf16.msra.mxu0 0
  %1296 = vmatprep.subr.bf16.mxu0 0
  %1297 = vmatpush1.bf16.msra.mxu0 %v239
  %1298 = vmatprep.subr.bf16.mxu0 0
  %1299 = vmatpush1.bf16.msra.mxu0 %v238
  %1300 = vmatprep.subr.bf16.mxu0 0
  %1301 = vmatpush2.bf16.msra.mxu0 0
  %1302 = vmatprep.subr.bf16.mxu0 0
  %1303 = vmatpush2.bf16.msra.mxu0 0
  %1304 = vmatprep.subr.bf16.mxu0 0
  %1305 = vmatpush2.bf16.msra.mxu0 0
  %1306 = vmatprep.subr.bf16.mxu0 0
  %1307 = vmatpush2.bf16.msra.mxu0 0
  %1308 = vmatprep.subr.bf16.mxu0 0
  %1309 = vmatpush2.bf16.msra.mxu0 0
  %1310 = vmatprep.subr.bf16.mxu0 0
  %1311 = vmatpush2.bf16.msra.mxu0 0
  %1312 = vmatprep.subr.bf16.mxu0 0
  %1313 = vmatpush2.bf16.msra.mxu0 0
  %1314 = vmatprep.subr.bf16.mxu0 0
  %1315 = vmatpush2.bf16.msra.mxu0 0
  %1316 = vmatprep.mubr.bf16.mxu0 0
  %1317 = vmatmul.mubr.bf16.gmra.mxu0 %v1282
  %v1318 = vpop.f32.mrf.mxu0
  %v1319 = vadd.f32 0.0, %v1318
  %v1320 = vpop.f32.mrf.mxu0
  %v1321 = vpop.f32.mrf.mxu0
  %v1322 = vpop.f32.mrf.mxu0
  %1323 = vdwg.mxu0
  %v1324 = vadd.f32 %v1276, %v1319
  %v1325 = vxor.u32 %v1324, 2147483648
  %v1326 = vmul.f32 %v1325, 1.442695
  %v1327 = vpow.pop %v1326
  %v1328 = vadd.f32 %v1327, 1.0
  %v1329 = vrcp.pop %v1328
  %v1330 = vmul.f32 1.0, %v1329
  %v1331 = vtanh.pop %v1324
  %v1332 = vmul.f32 %v1330, %v1262
  %1334 = vrot.lane.b32.xlu0 %v1331, 64
  %v1335 = vpop.permute.xlu0 %1334
  %v1337 = vmul.f32 %v1330, %v1335
  %1339 = vrot.lane.b32.xlu0 %v1337, 32
  %v1340 = vpop.permute.xlu0 %1339
  %v1342 = vadd.f32 %v1332, %v1340
  %v1343 = vtanh.pop %v1342
  %1345 = vrot.lane.b32.xlu0 %v1343, 64
  %v1346 = vpop.permute.xlu0 %1345
  %v1348 = vmul.f32 %v1330, %v1346
  %1350 = vrot.lane.b32.xlu0 %v1348, 32
  %v1351 = vpop.permute.xlu0 %1350
  %s1353 = scalar_lea.vmem [#allocation3], 104
  %1354 = vst.msk [vmem:[%s1353] sm:$0xff] %vm64, %v1351
  %s1355 = scalar_lea.vmem [#allocation2], 112
  %v1356 = vld [vmem:[%s1355] sm:$0xff]
  %v1357 = vpack.c.bf16 %v1348, %v1348
  %1359 = vrot.lane.b32.xlu0 %v1357, 32
  %v1360 = vpop.permute.xlu0 %1359
  %v1362 = vsel %vm64, %v1360, 0
  %1364 = vmatprep.subr.bf16.mxu0 0
  %1365 = vmatpush1.bf16.msra.mxu0 0
  %1366 = vmatprep.subr.bf16.mxu0 0
  %1367 = vmatpush1.bf16.msra.mxu0 0
  %1368 = vmatprep.subr.bf16.mxu0 0
  %1369 = vmatpush1.bf16.msra.mxu0 0
  %1370 = vmatprep.subr.bf16.mxu0 0
  %1371 = vmatpush1.bf16.msra.mxu0 0
  %1372 = vmatprep.subr.bf16.mxu0 0
  %1373 = vmatpush1.bf16.msra.mxu0 0
  %1374 = vmatprep.subr.bf16.mxu0 0
  %1375 = vmatpush1.bf16.msra.mxu0 0
  %1376 = vmatprep.subr.bf16.mxu0 0
  %1377 = vmatpush1.bf16.msra.mxu0 %v239
  %1378 = vmatprep.subr.bf16.mxu0 0
  %1379 = vmatpush1.bf16.msra.mxu0 %v238
  %1380 = vmatprep.subr.bf16.mxu0 0
  %1381 = vmatpush2.bf16.msra.mxu0 0
  %1382 = vmatprep.subr.bf16.mxu0 0
  %1383 = vmatpush2.bf16.msra.mxu0 0
  %1384 = vmatprep.subr.bf16.mxu0 0
  %1385 = vmatpush2.bf16.msra.mxu0 0
  %1386 = vmatprep.subr.bf16.mxu0 0
  %1387 = vmatpush2.bf16.msra.mxu0 0
  %1388 = vmatprep.subr.bf16.mxu0 0
  %1389 = vmatpush2.bf16.msra.mxu0 0
  %1390 = vmatprep.subr.bf16.mxu0 0
  %1391 = vmatpush2.bf16.msra.mxu0 0
  %1392 = vmatprep.subr.bf16.mxu0 0
  %1393 = vmatpush2.bf16.msra.mxu0 0
  %1394 = vmatprep.subr.bf16.mxu0 0
  %1395 = vmatpush2.bf16.msra.mxu0 0
  %1396 = vmatprep.mubr.bf16.mxu0 0
  %1397 = vmatmul.mubr.bf16.gmra.mxu0 %v1362
  %v1398 = vpop.f32.mrf.mxu0
  %v1399 = vadd.f32 0.0, %v1398
  %v1400 = vpop.f32.mrf.mxu0
  %v1401 = vpop.f32.mrf.mxu0
  %v1402 = vpop.f32.mrf.mxu0
  %1403 = vdwg.mxu0
  %v1404 = vadd.f32 %v1356, %v1399
  %v1405 = vxor.u32 %v1404, 2147483648
  %v1406 = vmul.f32 %v1405, 1.442695
  %v1407 = vpow.pop %v1406
  %v1408 = vadd.f32 %v1407, 1.0
  %v1409 = vrcp.pop %v1408
  %v1410 = vmul.f32 1.0, %v1409
  %v1411 = vtanh.pop %v1404
  %v1412 = vmul.f32 %v1410, %v1342
  %1414 = vrot.lane.b32.xlu0 %v1411, 64
  %v1415 = vpop.permute.xlu0 %1414
  %v1417 = vmul.f32 %v1410, %v1415
  %1419 = vrot.lane.b32.xlu0 %v1417, 32
  %v1420 = vpop.permute.xlu0 %1419
  %v1422 = vadd.f32 %v1412, %v1420
  %v1423 = vtanh.pop %v1422
  %1425 = vrot.lane.b32.xlu0 %v1423, 64
  %v1426 = vpop.permute.xlu0 %1425
  %v1428 = vmul.f32 %v1410, %v1426
  %1430 = vrot.lane.b32.xlu0 %v1428, 32
  %v1431 = vpop.permute.xlu0 %1430
  %s1433 = scalar_lea.vmem [#allocation3], 112
  %1434 = vst.msk [vmem:[%s1433] sm:$0xff] %vm64, %v1431
  %s1435 = scalar_lea.vmem [#allocation2], 120
  %v1436 = vld [vmem:[%s1435] sm:$0xff]
  %v1437 = vpack.c.bf16 %v1428, %v1428
  %1439 = vrot.lane.b32.xlu0 %v1437, 32
  %v1440 = vpop.permute.xlu0 %1439
  %v1442 = vsel %vm64, %v1440, 0
  %1444 = vmatprep.subr.bf16.mxu0 0
  %1445 = vmatpush1.bf16.msra.mxu0 0
  %1446 = vmatprep.subr.bf16.mxu0 0
  %1447 = vmatpush1.bf16.msra.mxu0 0
  %1448 = vmatprep.subr.bf16.mxu0 0
  %1449 = vmatpush1.bf16.msra.mxu0 0
  %1450 = vmatprep.subr.bf16.mxu0 0
  %1451 = vmatpush1.bf16.msra.mxu0 0
  %1452 = vmatprep.subr.bf16.mxu0 0
  %1453 = vmatpush1.bf16.msra.mxu0 0
  %1454 = vmatprep.subr.bf16.mxu0 0
  %1455 = vmatpush1.bf16.msra.mxu0 0
  %1456 = vmatprep.subr.bf16.mxu0 0
  %1457 = vmatpush1.bf16.msra.mxu0 %v239
  %1458 = vmatprep.subr.bf16.mxu0 0
  %1459 = vmatpush1.bf16.msra.mxu0 %v238
  %1460 = vmatprep.subr.bf16.mxu0 0
  %1461 = vmatpush2.bf16.msra.mxu0 0
  %1462 = vmatprep.subr.bf16.mxu0 0
  %1463 = vmatpush2.bf16.msra.mxu0 0
  %1464 = vmatprep.subr.bf16.mxu0 0
  %1465 = vmatpush2.bf16.msra.mxu0 0
  %1466 = vmatprep.subr.bf16.mxu0 0
  %1467 = vmatpush2.bf16.msra.mxu0 0
  %1468 = vmatprep.subr.bf16.mxu0 0
  %1469 = vmatpush2.bf16.msra.mxu0 0
  %1470 = vmatprep.subr.bf16.mxu0 0
  %1471 = vmatpush2.bf16.msra.mxu0 0
  %1472 = vmatprep.subr.bf16.mxu0 0
  %1473 = vmatpush2.bf16.msra.mxu0 0
  %1474 = vmatprep.subr.bf16.mxu0 0
  %1475 = vmatpush2.bf16.msra.mxu0 0
  %1476 = vmatprep.mubr.bf16.mxu0 0
  %1477 = vmatmul.mubr.bf16.gmra.mxu0 %v1442
  %v1478 = vpop.f32.mrf.mxu0
  %v1479 = vadd.f32 0.0, %v1478
  %v1480 = vpop.f32.mrf.mxu0
  %v1481 = vpop.f32.mrf.mxu0
  %v1482 = vpop.f32.mrf.mxu0
  %1483 = vdwg.mxu0
  %v1484 = vadd.f32 %v1436, %v1479
  %v1485 = vxor.u32 %v1484, 2147483648
  %v1486 = vmul.f32 %v1485, 1.442695
  %v1487 = vpow.pop %v1486
  %v1488 = vadd.f32 %v1487, 1.0
  %v1489 = vrcp.pop %v1488
  %v1490 = vmul.f32 1.0, %v1489
  %v1491 = vtanh.pop %v1484
  %v1492 = vmul.f32 %v1490, %v1422
  %1494 = vrot.lane.b32.xlu0 %v1491, 64
  %v1495 = vpop.permute.xlu0 %1494
  %v1497 = vmul.f32 %v1490, %v1495
  %1499 = vrot.lane.b32.xlu0 %v1497, 32
  %v1500 = vpop.permute.xlu0 %1499
  %v1502 = vadd.f32 %v1492, %v1500
  %v1503 = vtanh.pop %v1502
  %1505 = vrot.lane.b32.xlu0 %v1503, 64
  %v1506 = vpop.permute.xlu0 %1505
  %v1508 = vmul.f32 %v1490, %v1506
  %1510 = vrot.lane.b32.xlu0 %v1508, 32
  %v1511 = vpop.permute.xlu0 %1510
  %s1513 = scalar_lea.vmem [#allocation3], 120
  %1514 = vst.msk [vmem:[%s1513] sm:$0xff] %vm64, %v1511
  %v1515 = vld [vmem:[#allocation3] sm:$0xff]
  %v1516 = vld [vmem:[#allocation3 + $0x8] sm:$0xff]
  %v1517 = vld [vmem:[#allocation3 + $0x10] sm:$0xff]
  %v1518 = vld [vmem:[#allocation3 + $0x18] sm:$0xff]
  %v1519 = vld [vmem:[#allocation3 + $0x20] sm:$0xff]
  %v1520 = vld [vmem:[#allocation3 + $0x28] sm:$0xff]
  %v1521 = vld [vmem:[#allocation3 + $0x30] sm:$0xff]
  %v1522 = vld [vmem:[#allocation3 + $0x38] sm:$0xff]
  %v1523 = vld [vmem:[#allocation3 + $0x40] sm:$0xff]
  %v1524 = vld [vmem:[#allocation3 + $0x48] sm:$0xff]
  %v1525 = vld [vmem:[#allocation3 + $0x50] sm:$0xff]
  %v1526 = vld [vmem:[#allocation3 + $0x58] sm:$0xff]
  %v1527 = vld [vmem:[#allocation3 + $0x60] sm:$0xff]
  %v1528 = vld [vmem:[#allocation3 + $0x68] sm:$0xff]
  %v1529 = vld [vmem:[#allocation3 + $0x70] sm:$0xff]
  %v1530 = vld [vmem:[#allocation3 + $0x78] sm:$0xff]
  %v1531 = vpack.c.bf16 %v1516, %v1515
  %v1532 = vpack.c.bf16 %v1518, %v1517
  %v1533 = vpack.c.bf16 %v1520, %v1519
  %v1534 = vpack.c.bf16 %v1522, %v1521
  %v1535 = vpack.c.bf16 %v1524, %v1523
  %v1536 = vpack.c.bf16 %v1526, %v1525
  %v1537 = vpack.c.bf16 %v1528, %v1527
  %v1538 = vpack.c.bf16 %v1530, %v1529
  %v1539 = vld [vmem:[%s4] sm:$0xf]
  %v1540 = vld [vmem:[%s4 + $0x4] sm:$0xf]
  %v1541 = vld [vmem:[%s4 + $0x8] sm:$0xf]
  %v1542 = vld [vmem:[%s4 + $0xc] sm:$0xf]
  %v1547 = vunpack.c.l.b16 %v1539
  %v1548 = vunpack.c.l.b16 %v1540
  %v1549 = vunpack.c.l.b16 %v1541
  %v1550 = vunpack.c.l.b16 %v1542
  %v1551 = vpack.c.b16 %v1548, %v1547
  %v1552 = vpack.c.b16 %v1550, %v1549
  %v1556 = vsel %vm64, %v1531, 0
  %v1559 = vsel %vm64, %v1532, 0
  %v1562 = vsel %vm64, %v1533, 0
  %v1565 = vsel %vm64, %v1534, 0
  %v1568 = vsel %vm64, %v1535, 0
  %v1571 = vsel %vm64, %v1536, 0
  %v1574 = vsel %vm64, %v1537, 0
  %v1577 = vsel %vm64, %v1538, 0
  %1579 = vmatprep.subr.bf16.mxu0 0
  %1580 = vmatpush1.bf16.msra.mxu0 0
  %1581 = vmatprep.subr.bf16.mxu0 0
  %1582 = vmatpush1.bf16.msra.mxu0 0
  %1583 = vmatprep.subr.bf16.mxu0 0
  %1584 = vmatpush1.bf16.msra.mxu0 0
  %1585 = vmatprep.subr.bf16.mxu0 0
  %1586 = vmatpush1.bf16.msra.mxu0 0
  %1587 = vmatprep.subr.bf16.mxu0 0
  %1588 = vmatpush1.bf16.msra.mxu0 0
  %1589 = vmatprep.subr.bf16.mxu0 0
  %1590 = vmatpush1.bf16.msra.mxu0 0
  %1591 = vmatprep.subr.bf16.mxu0 0
  %1592 = vmatpush1.bf16.msra.mxu0 %v1552
  %1593 = vmatprep.subr.bf16.mxu0 0
  %1594 = vmatpush1.bf16.msra.mxu0 %v1551
  %1595 = vmatprep.subr.bf16.mxu0 0
  %1596 = vmatpush2.bf16.msra.mxu0 0
  %1597 = vmatprep.subr.bf16.mxu0 0
  %1598 = vmatpush2.bf16.msra.mxu0 0
  %1599 = vmatprep.subr.bf16.mxu0 0
  %1600 = vmatpush2.bf16.msra.mxu0 0
  %1601 = vmatprep.subr.bf16.mxu0 0
  %1602 = vmatpush2.bf16.msra.mxu0 0
  %1603 = vmatprep.subr.bf16.mxu0 0
  %1604 = vmatpush2.bf16.msra.mxu0 0
  %1605 = vmatprep.subr.bf16.mxu0 0
  %1606 = vmatpush2.bf16.msra.mxu0 0
  %1607 = vmatprep.subr.bf16.mxu0 0
  %1608 = vmatpush2.bf16.msra.mxu0 0
  %1609 = vmatprep.subr.bf16.mxu0 0
  %1610 = vmatpush2.bf16.msra.mxu0 0
  %1611 = vmatprep.mubr.bf16.mxu0 0
  %1612 = vmatmul.mubr.bf16.gmra.mxu0 %v1556
  %v1613 = vpop.f32.mrf.mxu0
  %v1614 = vadd.f32 0.0, %v1613
  %v1615 = vpop.f32.mrf.mxu0
  %v1616 = vpop.f32.mrf.mxu0
  %v1617 = vadd.f32 0.0, %v1616
  %v1618 = vpop.f32.mrf.mxu0
  %1619 = vmatprep.mubr.bf16.mxu0 0
  %1620 = vmatmul.mubr.bf16.gmra.mxu0 %v1559
  %v1621 = vpop.f32.mrf.mxu0
  %v1622 = vadd.f32 0.0, %v1621
  %v1623 = vpop.f32.mrf.mxu0
  %v1624 = vpop.f32.mrf.mxu0
  %v1625 = vadd.f32 0.0, %v1624
  %v1626 = vpop.f32.mrf.mxu0
  %1627 = vmatprep.mubr.bf16.mxu0 0
  %1628 = vmatmul.mubr.bf16.gmra.mxu0 %v1562
  %v1629 = vpop.f32.mrf.mxu0
  %v1630 = vadd.f32 0.0, %v1629
  %v1631 = vpop.f32.mrf.mxu0
  %v1632 = vpop.f32.mrf.mxu0
  %v1633 = vadd.f32 0.0, %v1632
  %v1634 = vpop.f32.mrf.mxu0
  %1635 = vmatprep.mubr.bf16.mxu0 0
  %1636 = vmatmul.mubr.bf16.gmra.mxu0 %v1565
  %v1637 = vpop.f32.mrf.mxu0
  %v1638 = vadd.f32 0.0, %v1637
  %v1639 = vpop.f32.mrf.mxu0
  %v1640 = vpop.f32.mrf.mxu0
  %v1641 = vadd.f32 0.0, %v1640
  %v1642 = vpop.f32.mrf.mxu0
  %1643 = vmatprep.mubr.bf16.mxu0 0
  %1644 = vmatmul.mubr.bf16.gmra.mxu0 %v1568
  %v1645 = vpop.f32.mrf.mxu0
  %v1646 = vadd.f32 0.0, %v1645
  %v1647 = vpop.f32.mrf.mxu0
  %v1648 = vpop.f32.mrf.mxu0
  %v1649 = vadd.f32 0.0, %v1648
  %v1650 = vpop.f32.mrf.mxu0
  %1651 = vmatprep.mubr.bf16.mxu0 0
  %1652 = vmatmul.mubr.bf16.gmra.mxu0 %v1571
  %v1653 = vpop.f32.mrf.mxu0
  %v1654 = vadd.f32 0.0, %v1653
  %v1655 = vpop.f32.mrf.mxu0
  %v1656 = vpop.f32.mrf.mxu0
  %v1657 = vadd.f32 0.0, %v1656
  %v1658 = vpop.f32.mrf.mxu0
  %1659 = vmatprep.mubr.bf16.mxu0 0
  %1660 = vmatmul.mubr.bf16.gmra.mxu0 %v1574
  %v1661 = vpop.f32.mrf.mxu0
  %v1662 = vadd.f32 0.0, %v1661
  %v1663 = vpop.f32.mrf.mxu0
  %v1664 = vpop.f32.mrf.mxu0
  %v1665 = vadd.f32 0.0, %v1664
  %v1666 = vpop.f32.mrf.mxu0
  %1667 = vmatprep.mubr.bf16.mxu0 0
  %1668 = vmatmul.mubr.bf16.gmra.mxu0 %v1577
  %v1669 = vpop.f32.mrf.mxu0
  %v1670 = vadd.f32 0.0, %v1669
  %v1671 = vpop.f32.mrf.mxu0
  %v1672 = vpop.f32.mrf.mxu0
  %v1673 = vadd.f32 0.0, %v1672
  %v1674 = vpop.f32.mrf.mxu0
  %1675 = vdwg.mxu0
  %v1676 = vld [vmem:[%s0] sm:$0xff]
  %v1677 = vld [vmem:[%s0 + $0x8] sm:$0xff]
  %v1678 = vld [vmem:[%s0 + $0x10] sm:$0xff]
  %v1679 = vld [vmem:[%s0 + $0x18] sm:$0xff]
  %v1680 = vld [vmem:[%s0 + $0x20] sm:$0xff]
  %v1681 = vld [vmem:[%s0 + $0x28] sm:$0xff]
  %v1682 = vld [vmem:[%s0 + $0x30] sm:$0xff]
  %v1683 = vld [vmem:[%s0 + $0x38] sm:$0xff]
  %v1684 = vld [vmem:[%s0 + $0x40] sm:$0xff]
  %v1685 = vld [vmem:[%s0 + $0x48] sm:$0xff]
  %v1686 = vld [vmem:[%s0 + $0x50] sm:$0xff]
  %v1687 = vld [vmem:[%s0 + $0x58] sm:$0xff]
  %v1688 = vld [vmem:[%s0 + $0x60] sm:$0xff]
  %v1689 = vld [vmem:[%s0 + $0x68] sm:$0xff]
  %v1690 = vld [vmem:[%s0 + $0x70] sm:$0xff]
  %v1691 = vld [vmem:[%s0 + $0x78] sm:$0xff]
  %v1692 = vadd.f32 %v1676, %v1614
  %v1693 = vadd.f32 %v1677, %v1617
  %v1694 = vadd.f32 %v1678, %v1622
  %v1695 = vadd.f32 %v1679, %v1625
  %v1696 = vadd.f32 %v1680, %v1630
  %v1697 = vadd.f32 %v1681, %v1633
  %v1698 = vadd.f32 %v1682, %v1638
  %v1699 = vadd.f32 %v1683, %v1641
  %v1700 = vadd.f32 %v1684, %v1646
  %v1701 = vadd.f32 %v1685, %v1649
  %v1702 = vadd.f32 %v1686, %v1654
  %v1703 = vadd.f32 %v1687, %v1657
  %v1704 = vadd.f32 %v1688, %v1662
  %v1705 = vadd.f32 %v1689, %v1665
  %v1706 = vadd.f32 %v1690, %v1670
  %v1707 = vadd.f32 %v1691, %v1673
  %v1708 = vld [vmem:[%s5] sm:$0x1]
  %v1710 = vlaneseq
  %v1711 = vshrl.u32 %v1710, 7
  %v1712 = vsub.s32 0, %v1711
  %v1713 = vrot.slane %v1708, %v1712
  %v1715 = vadd.f32 %v1692, %v1713
  %v1716 = vadd.f32 %v1693, %v1713
  %v1717 = vadd.f32 %v1694, %v1713
  %v1718 = vadd.f32 %v1695, %v1713
  %v1719 = vadd.f32 %v1696, %v1713
  %v1720 = vadd.f32 %v1697, %v1713
  %v1721 = vadd.f32 %v1698, %v1713
  %v1722 = vadd.f32 %v1699, %v1713
  %v1723 = vadd.f32 %v1700, %v1713
  %v1724 = vadd.f32 %v1701, %v1713
  %v1725 = vadd.f32 %v1702, %v1713
  %v1726 = vadd.f32 %v1703, %v1713
  %v1727 = vadd.f32 %v1704, %v1713
  %v1728 = vadd.f32 %v1705, %v1713
  %v1729 = vadd.f32 %v1706, %v1713
  %v1730 = vadd.f32 %v1707, %v1713
  %1731 = vst.msk [vmem:[%s6] sm:$0xff] %vm64, %v1715
  %1732 = vst.msk [vmem:[%s6 + $0x8] sm:$0xff] %vm64, %v1716
  %1733 = vst.msk [vmem:[%s6 + $0x10] sm:$0xff] %vm64, %v1717
  %1734 = vst.msk [vmem:[%s6 + $0x18] sm:$0xff] %vm64, %v1718
  %1735 = vst.msk [vmem:[%s6 + $0x20] sm:$0xff] %vm64, %v1719
  %1736 = vst.msk [vmem:[%s6 + $0x28] sm:$0xff] %vm64, %v1720
  %1737 = vst.msk [vmem:[%s6 + $0x30] sm:$0xff] %vm64, %v1721
  %1738 = vst.msk [vmem:[%s6 + $0x38] sm:$0xff] %vm64, %v1722
  %1739 = vst.msk [vmem:[%s6 + $0x40] sm:$0xff] %vm64, %v1723
  %1740 = vst.msk [vmem:[%s6 + $0x48] sm:$0xff] %vm64, %v1724
  %1741 = vst.msk [vmem:[%s6 + $0x50] sm:$0xff] %vm64, %v1725
  %1742 = vst.msk [vmem:[%s6 + $0x58] sm:$0xff] %vm64, %v1726
  %1743 = vst.msk [vmem:[%s6 + $0x60] sm:$0xff] %vm64, %v1727
  %1744 = vst.msk [vmem:[%s6 + $0x68] sm:$0xff] %vm64, %v1728
  %1745 = vst.msk [vmem:[%s6 + $0x70] sm:$0xff] %vm64, %v1729
  %1746 = vst.msk [vmem:[%s6 + $0x78] sm:$0xff] %vm64, %v1730
  // Predicated region
  $region26: #{delayed_rnn_forward.6} parent=0 // pred_check
    _
  $region27: #{delayed_rnn_forward.6} parent=0 // pred_check_branch
    %1748 = sbr.rel (0) target = $region29
  $region28: #{delayed_rnn_forward.6} parent=0 // pred_region
    _
  $region29: #{delayed_rnn_forward.6} parent=0 // pred_fallthru
    _
  // Predicated region
  $region30: #{delayed_rnn_forward.6} parent=0 // pred_check
    _
  $region31: #{delayed_rnn_forward.6} parent=0 // pred_check_branch
    %1750 = sbr.rel (0) target = $region33
  $region32: #{delayed_rnn_forward.6} parent=0 // pred_region
    _
  $region33: #{delayed_rnn_forward.6} parent=0 // pred_fallthru
    _

// kernel: delayed_rnn_forward.4
$region0: #{delayed_rnn_forward.4}
  #allocation0 [shape = 'u32[]', space=smem, size = 0x4, offset = 0x4, fixed_abs, tag = 'smem constant byte address 0x4 - core index']
  #allocation1 [shape = 'u32[144,128]{1,0:T(1,128)}', space=vmem, size = 0x12000, scoped, tag = 'internal scratch']
  #allocation2 [shape = 'f32[16,16,128]{2,1,0:T(8,128)}', space=vmem, size = 0x20000, scoped, tag = 'scratch operand']
  %s0 = inlined_call_operand.vmem [shape: f32[16,16,32], index: 0, kind: input, shape index: {}]
  %s1 = inlined_call_operand.vmem [shape: bf16[32,128], index: 1, kind: input, shape index: {}]
  %s2 = inlined_call_operand.vmem [shape: bf16[32,128], index: 2, kind: input, shape index: {}]
  %s3 = inlined_call_operand.vmem [shape: f32[1,128], index: 3, kind: input, shape index: {}]
  %s4 = inlined_call_operand.vmem [shape: bf16[16,16,32], index: 4, kind: output, shape index: {}]
  %s5 = sld [smem:[#allocation0]]
  $region26: #{delayed_rnn_forward.4} parent=0
    _
  %s7 = ssub.s32 1, %s5
  %s8 = scalar_select 0, %s7, %s5
  // Predicated region
  $region2: #{delayed_rnn_forward.4} parent=0 // pred_check
    _
  $region3: #{delayed_rnn_forward.4} parent=0 // pred_check_branch
    %10 = sbr.rel (0) target = $region5
  $region4: #{delayed_rnn_forward.4} parent=0 // pred_region
    _
  $region5: #{delayed_rnn_forward.4} parent=0 // pred_fallthru
    _
  // Predicated region
  $region6: #{delayed_rnn_forward.4} parent=0 // pred_check
    _
  $region7: #{delayed_rnn_forward.4} parent=0 // pred_check_branch
    %12 = sbr.rel (0) target = $region9
  $region8: #{delayed_rnn_forward.4} parent=0 // pred_region
    _
  $region9: #{delayed_rnn_forward.4} parent=0 // pred_fallthru
    _
  // Predicated region
  $region10: #{delayed_rnn_forward.4} parent=0 // pred_check
    _
  $region11: #{delayed_rnn_forward.4} parent=0 // pred_check_branch
    %14 = sbr.rel (0) target = $region13
  $region12: #{delayed_rnn_forward.4} parent=0 // pred_region
    _
  $region13: #{delayed_rnn_forward.4} parent=0 // pred_fallthru
    _
  // Predicated region
  $region14: #{delayed_rnn_forward.4} parent=0 // pred_check
    _
  $region15: #{delayed_rnn_forward.4} parent=0 // pred_check_branch
    %16 = sbr.rel (0) target = $region17
  $region16: #{delayed_rnn_forward.4} parent=0 // pred_region
    _
  $region17: #{delayed_rnn_forward.4} parent=0 // pred_fallthru
    _
  %v18 = vld [vmem:[%s0] sm:$0xff]
  %v19 = vld [vmem:[%s0 + $0x8] sm:$0xff]
  %v20 = vld [vmem:[%s0 + $0x10] sm:$0xff]
  %v21 = vld [vmem:[%s0 + $0x18] sm:$0xff]
  %v22 = vld [vmem:[%s0 + $0x20] sm:$0xff]
  %v23 = vld [vmem:[%s0 + $0x28] sm:$0xff]
  %v24 = vld [vmem:[%s0 + $0x30] sm:$0xff]
  %v25 = vld [vmem:[%s0 + $0x38] sm:$0xff]
  %v26 = vld [vmem:[%s0 + $0x40] sm:$0xff]
  %v27 = vld [vmem:[%s0 + $0x48] sm:$0xff]
  %v28 = vld [vmem:[%s0 + $0x50] sm:$0xff]
  %v29 = vld [vmem:[%s0 + $0x58] sm:$0xff]
  %v30 = vld [vmem:[%s0 + $0x60] sm:$0xff]
  %v31 = vld [vmem:[%s0 + $0x68] sm:$0xff]
  %v32 = vld [vmem:[%s0 + $0x70] sm:$0xff]
  %v33 = vld [vmem:[%s0 + $0x78] sm:$0xff]
  %v34 = vld [vmem:[%s0 + $0x80] sm:$0xff]
  %v35 = vld [vmem:[%s0 + $0x88] sm:$0xff]
  %v36 = vld [vmem:[%s0 + $0x90] sm:$0xff]
  %v37 = vld [vmem:[%s0 + $0x98] sm:$0xff]
  %v38 = vld [vmem:[%s0 + $0xa0] sm:$0xff]
  %v39 = vld [vmem:[%s0 + $0xa8] sm:$0xff]
  %v40 = vld [vmem:[%s0 + $0xb0] sm:$0xff]
  %v41 = vld [vmem:[%s0 + $0xb8] sm:$0xff]
  %v42 = vld [vmem:[%s0 + $0xc0] sm:$0xff]
  %v43 = vld [vmem:[%s0 + $0xc8] sm:$0xff]
  %v44 = vld [vmem:[%s0 + $0xd0] sm:$0xff]
  %v45 = vld [vmem:[%s0 + $0xd8] sm:$0xff]
  %v46 = vld [vmem:[%s0 + $0xe0] sm:$0xff]
  %v47 = vld [vmem:[%s0 + $0xe8] sm:$0xff]
  %v48 = vld [vmem:[%s0 + $0xf0] sm:$0xff]
  %v49 = vld [vmem:[%s0 + $0xf8] sm:$0xff]
  %v50 = vpack.c.bf16 %v19, %v18
  %v51 = vpack.c.bf16 %v21, %v20
  %v52 = vpack.c.bf16 %v23, %v22
  %v53 = vpack.c.bf16 %v25, %v24
  %v54 = vpack.c.bf16 %v27, %v26
  %v55 = vpack.c.bf16 %v29, %v28
  %v56 = vpack.c.bf16 %v31, %v30
  %v57 = vpack.c.bf16 %v33, %v32
  %v58 = vpack.c.bf16 %v35, %v34
  %v59 = vpack.c.bf16 %v37, %v36
  %v60 = vpack.c.bf16 %v39, %v38
  %v61 = vpack.c.bf16 %v41, %v40
  %v62 = vpack.c.bf16 %v43, %v42
  %v63 = vpack.c.bf16 %v45, %v44
  %v64 = vpack.c.bf16 %v47, %v46
  %v65 = vpack.c.bf16 %v49, %v48
  %v66 = vld [vmem:[%s1] sm:$0xf]
  %v67 = vld [vmem:[%s1 + $0x4] sm:$0xf]
  %v68 = vld [vmem:[%s1 + $0x8] sm:$0xf]
  %v69 = vld [vmem:[%s1 + $0xc] sm:$0xf]
  %v74 = vunpack.c.l.b16 %v66
  %v75 = vunpack.c.l.b16 %v67
  %v76 = vunpack.c.l.b16 %v68
  %v77 = vunpack.c.l.b16 %v69
  %v78 = vpack.c.b16 %v75, %v74
  %v79 = vpack.c.b16 %v77, %v76
  %vm82 = vcmask 261120
  %v84 = vsel %vm82, %v50, 0
  %v87 = vsel %vm82, %v51, 0
  %v90 = vsel %vm82, %v52, 0
  %v93 = vsel %vm82, %v53, 0
  %v96 = vsel %vm82, %v54, 0
  %v99 = vsel %vm82, %v55, 0
  %v102 = vsel %vm82, %v56, 0
  %v105 = vsel %vm82, %v57, 0
  %v108 = vsel %vm82, %v58, 0
  %v111 = vsel %vm82, %v59, 0
  %v114 = vsel %vm82, %v60, 0
  %v117 = vsel %vm82, %v61, 0
  %v120 = vsel %vm82, %v62, 0
  %v123 = vsel %vm82, %v63, 0
  %v126 = vsel %vm82, %v64, 0
  %v129 = vsel %vm82, %v65, 0
  %131 = vmatprep.subr.bf16.mxu0 0
  %132 = vmatpush1.bf16.msra.mxu0 0
  %133 = vmatprep.subr.bf16.mxu0 0
  %134 = vmatpush1.bf16.msra.mxu0 0
  %135 = vmatprep.subr.bf16.mxu0 0
  %136 = vmatpush1.bf16.msra.mxu0 0
  %137 = vmatprep.subr.bf16.mxu0 0
  %138 = vmatpush1.bf16.msra.mxu0 0
  %139 = vmatprep.subr.bf16.mxu0 0
  %140 = vmatpush1.bf16.msra.mxu0 0
  %141 = vmatprep.subr.bf16.mxu0 0
  %142 = vmatpush1.bf16.msra.mxu0 0
  %143 = vmatprep.subr.bf16.mxu0 0
  %144 = vmatpush1.bf16.msra.mxu0 %v79
  %145 = vmatprep.subr.bf16.mxu0 0
  %146 = vmatpush1.bf16.msra.mxu0 %v78
  %147 = vmatprep.subr.bf16.mxu0 0
  %148 = vmatpush2.bf16.msra.mxu0 0
  %149 = vmatprep.subr.bf16.mxu0 0
  %150 = vmatpush2.bf16.msra.mxu0 0
  %151 = vmatprep.subr.bf16.mxu0 0
  %152 = vmatpush2.bf16.msra.mxu0 0
  %153 = vmatprep.subr.bf16.mxu0 0
  %154 = vmatpush2.bf16.msra.mxu0 0
  %155 = vmatprep.subr.bf16.mxu0 0
  %156 = vmatpush2.bf16.msra.mxu0 0
  %157 = vmatprep.subr.bf16.mxu0 0
  %158 = vmatpush2.bf16.msra.mxu0 0
  %159 = vmatprep.subr.bf16.mxu0 0
  %160 = vmatpush2.bf16.msra.mxu0 0
  %161 = vmatprep.subr.bf16.mxu0 0
  %162 = vmatpush2.bf16.msra.mxu0 0
  %163 = vmatprep.mubr.bf16.mxu0 0
  %164 = vmatmul.mubr.bf16.gmra.mxu0 %v84
  %v165 = vpop.f32.mrf.mxu0
  %v166 = vadd.f32 0.0, %v165
  %v167 = vpop.f32.mrf.mxu0
  %v168 = vpop.f32.mrf.mxu0
  %v169 = vadd.f32 0.0, %v168
  %v170 = vpop.f32.mrf.mxu0
  %171 = vmatprep.mubr.bf16.mxu0 0
  %172 = vmatmul.mubr.bf16.gmra.mxu0 %v87
  %v173 = vpop.f32.mrf.mxu0
  %v174 = vadd.f32 0.0, %v173
  %v175 = vpop.f32.mrf.mxu0
  %v176 = vpop.f32.mrf.mxu0
  %v177 = vadd.f32 0.0, %v176
  %v178 = vpop.f32.mrf.mxu0
  %179 = vmatprep.mubr.bf16.mxu0 0
  %180 = vmatmul.mubr.bf16.gmra.mxu0 %v90
  %v181 = vpop.f32.mrf.mxu0
  %v182 = vadd.f32 0.0, %v181
  %v183 = vpop.f32.mrf.mxu0
  %v184 = vpop.f32.mrf.mxu0
  %v185 = vadd.f32 0.0, %v184
  %v186 = vpop.f32.mrf.mxu0
  %187 = vmatprep.mubr.bf16.mxu0 0
  %188 = vmatmul.mubr.bf16.gmra.mxu0 %v93
  %v189 = vpop.f32.mrf.mxu0
  %v190 = vadd.f32 0.0, %v189
  %v191 = vpop.f32.mrf.mxu0
  %v192 = vpop.f32.mrf.mxu0
  %v193 = vadd.f32 0.0, %v192
  %v194 = vpop.f32.mrf.mxu0
  %195 = vmatprep.mubr.bf16.mxu0 0
  %196 = vmatmul.mubr.bf16.gmra.mxu0 %v96
  %v197 = vpop.f32.mrf.mxu0
  %v198 = vadd.f32 0.0, %v197
  %v199 = vpop.f32.mrf.mxu0
  %v200 = vpop.f32.mrf.mxu0
  %v201 = vadd.f32 0.0, %v200
  %v202 = vpop.f32.mrf.mxu0
  %203 = vmatprep.mubr.bf16.mxu0 0
  %204 = vmatmul.mubr.bf16.gmra.mxu0 %v99
  %v205 = vpop.f32.mrf.mxu0
  %v206 = vadd.f32 0.0, %v205
  %v207 = vpop.f32.mrf.mxu0
  %v208 = vpop.f32.mrf.mxu0
  %v209 = vadd.f32 0.0, %v208
  %v210 = vpop.f32.mrf.mxu0
  %211 = vmatprep.mubr.bf16.mxu0 0
  %212 = vmatmul.mubr.bf16.gmra.mxu0 %v102
  %v213 = vpop.f32.mrf.mxu0
  %v214 = vadd.f32 0.0, %v213
  %v215 = vpop.f32.mrf.mxu0
  %v216 = vpop.f32.mrf.mxu0
  %v217 = vadd.f32 0.0, %v216
  %v218 = vpop.f32.mrf.mxu0
  %219 = vmatprep.mubr.bf16.mxu0 0
  %220 = vmatmul.mubr.bf16.gmra.mxu0 %v105
  %v221 = vpop.f32.mrf.mxu0
  %v222 = vadd.f32 0.0, %v221
  %v223 = vpop.f32.mrf.mxu0
  %v224 = vpop.f32.mrf.mxu0
  %v225 = vadd.f32 0.0, %v224
  %v226 = vpop.f32.mrf.mxu0
  %227 = vmatprep.mubr.bf16.mxu0 0
  %228 = vmatmul.mubr.bf16.gmra.mxu0 %v108
  %v229 = vpop.f32.mrf.mxu0
  %v230 = vadd.f32 0.0, %v229
  %v231 = vpop.f32.mrf.mxu0
  %v232 = vpop.f32.mrf.mxu0
  %v233 = vadd.f32 0.0, %v232
  %v234 = vpop.f32.mrf.mxu0
  %235 = vmatprep.mubr.bf16.mxu0 0
  %236 = vmatmul.mubr.bf16.gmra.mxu0 %v111
  %v237 = vpop.f32.mrf.mxu0
  %v238 = vadd.f32 0.0, %v237
  %v239 = vpop.f32.mrf.mxu0
  %v240 = vpop.f32.mrf.mxu0
  %v241 = vadd.f32 0.0, %v240
  %v242 = vpop.f32.mrf.mxu0
  %243 = vmatprep.mubr.bf16.mxu0 0
  %244 = vmatmul.mubr.bf16.gmra.mxu0 %v114
  %v245 = vpop.f32.mrf.mxu0
  %v246 = vadd.f32 0.0, %v245
  %v247 = vpop.f32.mrf.mxu0
  %v248 = vpop.f32.mrf.mxu0
  %v249 = vadd.f32 0.0, %v248
  %v250 = vpop.f32.mrf.mxu0
  %251 = vmatprep.mubr.bf16.mxu0 0
  %252 = vmatmul.mubr.bf16.gmra.mxu0 %v117
  %v253 = vpop.f32.mrf.mxu0
  %v254 = vadd.f32 0.0, %v253
  %v255 = vpop.f32.mrf.mxu0
  %v256 = vpop.f32.mrf.mxu0
  %v257 = vadd.f32 0.0, %v256
  %v258 = vpop.f32.mrf.mxu0
  %259 = vmatprep.mubr.bf16.mxu0 0
  %260 = vmatmul.mubr.bf16.gmra.mxu0 %v120
  %v261 = vpop.f32.mrf.mxu0
  %v262 = vadd.f32 0.0, %v261
  %v263 = vpop.f32.mrf.mxu0
  %v264 = vpop.f32.mrf.mxu0
  %v265 = vadd.f32 0.0, %v264
  %v266 = vpop.f32.mrf.mxu0
  %267 = vmatprep.mubr.bf16.mxu0 0
  %268 = vmatmul.mubr.bf16.gmra.mxu0 %v123
  %v269 = vpop.f32.mrf.mxu0
  %v270 = vadd.f32 0.0, %v269
  %v271 = vpop.f32.mrf.mxu0
  %v272 = vpop.f32.mrf.mxu0
  %v273 = vadd.f32 0.0, %v272
  %v274 = vpop.f32.mrf.mxu0
  %275 = vmatprep.mubr.bf16.mxu0 0
  %276 = vmatmul.mubr.bf16.gmra.mxu0 %v126
  %v277 = vpop.f32.mrf.mxu0
  %v278 = vadd.f32 0.0, %v277
  %v279 = vpop.f32.mrf.mxu0
  %v280 = vpop.f32.mrf.mxu0
  %v281 = vadd.f32 0.0, %v280
  %v282 = vpop.f32.mrf.mxu0
  %283 = vmatprep.mubr.bf16.mxu0 0
  %284 = vmatmul.mubr.bf16.gmra.mxu0 %v129
  %v285 = vpop.f32.mrf.mxu0
  %v286 = vadd.f32 0.0, %v285
  %v287 = vpop.f32.mrf.mxu0
  %v288 = vpop.f32.mrf.mxu0
  %v289 = vadd.f32 0.0, %v288
  %v290 = vpop.f32.mrf.mxu0
  %291 = vdwg.mxu0
  %v292 = vld [vmem:[%s3] sm:$0x1]
  %v294 = vlaneseq
  %v295 = vshrl.u32 %v294, 7
  %v296 = vsub.s32 0, %v295
  %v297 = vrot.slane %v292, %v296
  %v299 = vadd.f32 %v166, %v297
  %v300 = vadd.f32 %v169, %v297
  %v301 = vadd.f32 %v174, %v297
  %v302 = vadd.f32 %v177, %v297
  %v303 = vadd.f32 %v182, %v297
  %v304 = vadd.f32 %v185, %v297
  %v305 = vadd.f32 %v190, %v297
  %v306 = vadd.f32 %v193, %v297
  %v307 = vadd.f32 %v198, %v297
  %v308 = vadd.f32 %v201, %v297
  %v309 = vadd.f32 %v206, %v297
  %v310 = vadd.f32 %v209, %v297
  %v311 = vadd.f32 %v214, %v297
  %v312 = vadd.f32 %v217, %v297
  %v313 = vadd.f32 %v222, %v297
  %v314 = vadd.f32 %v225, %v297
  %v315 = vadd.f32 %v230, %v297
  %v316 = vadd.f32 %v233, %v297
  %v317 = vadd.f32 %v238, %v297
  %v318 = vadd.f32 %v241, %v297
  %v319 = vadd.f32 %v246, %v297
  %v320 = vadd.f32 %v249, %v297
  %v321 = vadd.f32 %v254, %v297
  %v322 = vadd.f32 %v257, %v297
  %v323 = vadd.f32 %v262, %v297
  %v324 = vadd.f32 %v265, %v297
  %v325 = vadd.f32 %v270, %v297
  %v326 = vadd.f32 %v273, %v297
  %v327 = vadd.f32 %v278, %v297
  %v328 = vadd.f32 %v281, %v297
  %v329 = vadd.f32 %v286, %v297
  %v330 = vadd.f32 %v289, %v297
  %331 = vst [vmem:[#allocation2] sm:$0xff] %v299
  %332 = vst [vmem:[#allocation2 + $0x8] sm:$0xff] %v300
  %333 = vst [vmem:[#allocation2 + $0x10] sm:$0xff] %v301
  %334 = vst [vmem:[#allocation2 + $0x18] sm:$0xff] %v302
  %335 = vst [vmem:[#allocation2 + $0x20] sm:$0xff] %v303
  %336 = vst [vmem:[#allocation2 + $0x28] sm:$0xff] %v304
  %337 = vst [vmem:[#allocation2 + $0x30] sm:$0xff] %v305
  %338 = vst [vmem:[#allocation2 + $0x38] sm:$0xff] %v306
  %339 = vst [vmem:[#allocation2 + $0x40] sm:$0xff] %v307
  %340 = vst [vmem:[#allocation2 + $0x48] sm:$0xff] %v308
  %341 = vst [vmem:[#allocation2 + $0x50] sm:$0xff] %v309
  %342 = vst [vmem:[#allocation2 + $0x58] sm:$0xff] %v310
  %343 = vst [vmem:[#allocation2 + $0x60] sm:$0xff] %v311
  %344 = vst [vmem:[#allocation2 + $0x68] sm:$0xff] %v312
  %345 = vst [vmem:[#allocation2 + $0x70] sm:$0xff] %v313
  %346 = vst [vmem:[#allocation2 + $0x78] sm:$0xff] %v314
  %347 = vst [vmem:[#allocation2 + $0x80] sm:$0xff] %v315
  %348 = vst [vmem:[#allocation2 + $0x88] sm:$0xff] %v316
  %349 = vst [vmem:[#allocation2 + $0x90] sm:$0xff] %v317
  %350 = vst [vmem:[#allocation2 + $0x98] sm:$0xff] %v318
  %351 = vst [vmem:[#allocation2 + $0xa0] sm:$0xff] %v319
  %352 = vst [vmem:[#allocation2 + $0xa8] sm:$0xff] %v320
  %353 = vst [vmem:[#allocation2 + $0xb0] sm:$0xff] %v321
  %354 = vst [vmem:[#allocation2 + $0xb8] sm:$0xff] %v322
  %355 = vst [vmem:[#allocation2 + $0xc0] sm:$0xff] %v323
  %356 = vst [vmem:[#allocation2 + $0xc8] sm:$0xff] %v324
  %357 = vst [vmem:[#allocation2 + $0xd0] sm:$0xff] %v325
  %358 = vst [vmem:[#allocation2 + $0xd8] sm:$0xff] %v326
  %359 = vst [vmem:[#allocation2 + $0xe0] sm:$0xff] %v327
  %360 = vst [vmem:[#allocation2 + $0xe8] sm:$0xff] %v328
  %361 = vst [vmem:[#allocation2 + $0xf0] sm:$0xff] %v329
  %362 = vst [vmem:[#allocation2 + $0xf8] sm:$0xff] %v330
  %v363 = vld [vmem:[%s2] sm:$0xf]
  %v364 = vld [vmem:[%s2 + $0x4] sm:$0xf]
  %v365 = vld [vmem:[%s2 + $0x8] sm:$0xf]
  %v366 = vld [vmem:[%s2 + $0xc] sm:$0xf]
  %v367 = vld [vmem:[#allocation2] sm:$0xff]
  %v368 = vld [vmem:[#allocation2 + $0x8] sm:$0xff]
  %v373 = vunpack.c.l.b16 %v363
  %v374 = vunpack.c.l.b16 %v364
  %v375 = vunpack.c.l.b16 %v365
  %v376 = vunpack.c.l.b16 %v366
  %v377 = vpack.c.b16 %v374, %v373
  %v378 = vpack.c.b16 %v376, %v375
  %v382 = vsel %vm82, 0, 0
  %384 = vmatprep.subr.bf16.mxu0 0
  %385 = vmatpush1.bf16.msra.mxu0 0
  %386 = vmatprep.subr.bf16.mxu0 0
  %387 = vmatpush1.bf16.msra.mxu0 0
  %388 = vmatprep.subr.bf16.mxu0 0
  %389 = vmatpush1.bf16.msra.mxu0 0
  %390 = vmatprep.subr.bf16.mxu0 0
  %391 = vmatpush1.bf16.msra.mxu0 0
  %392 = vmatprep.subr.bf16.mxu0 0
  %393 = vmatpush1.bf16.msra.mxu0 0
  %394 = vmatprep.subr.bf16.mxu0 0
  %395 = vmatpush1.bf16.msra.mxu0 0
  %396 = vmatprep.subr.bf16.mxu0 0
  %397 = vmatpush1.bf16.msra.mxu0 %v378
  %398 = vmatprep.subr.bf16.mxu0 0
  %399 = vmatpush1.bf16.msra.mxu0 %v377
  %400 = vmatprep.subr.bf16.mxu0 0
  %401 = vmatpush2.bf16.msra.mxu0 0
  %402 = vmatprep.subr.bf16.mxu0 0
  %403 = vmatpush2.bf16.msra.mxu0 0
  %404 = vmatprep.subr.bf16.mxu0 0
  %405 = vmatpush2.bf16.msra.mxu0 0
  %406 = vmatprep.subr.bf16.mxu0 0
  %407 = vmatpush2.bf16.msra.mxu0 0
  %408 = vmatprep.subr.bf16.mxu0 0
  %409 = vmatpush2.bf16.msra.mxu0 0
  %410 = vmatprep.subr.bf16.mxu0 0
  %411 = vmatpush2.bf16.msra.mxu0 0
  %412 = vmatprep.subr.bf16.mxu0 0
  %413 = vmatpush2.bf16.msra.mxu0 0
  %414 = vmatprep.subr.bf16.mxu0 0
  %415 = vmatpush2.bf16.msra.mxu0 0
  %416 = vmatprep.mubr.bf16.mxu0 0
  %417 = vmatmul.mubr.bf16.gmra.mxu0 %v382
  %v418 = vpop.f32.mrf.mxu0
  %v419 = vadd.f32 0.0, %v418
  %v420 = vpop.f32.mrf.mxu0
  %v421 = vpop.f32.mrf.mxu0
  %v422 = vadd.f32 0.0, %v421
  %v423 = vpop.f32.mrf.mxu0
  %424 = vdwg.mxu0
  %v425 = vadd.f32 %v367, %v419
  %v426 = vadd.f32 %v368, %v422
  %v427 = vxor.u32 %v425, 2147483648
  %v428 = vxor.u32 %v426, 2147483648
  %v429 = vmul.f32 %v427, 1.442695
  %v430 = vpow.pop %v429
  %v431 = vmul.f32 %v428, 1.442695
  %v432 = vpow.pop %v431
  %v433 = vadd.f32 %v430, 1.0
  %v434 = vadd.f32 %v432, 1.0
  %v435 = vrcp.pop %v433
  %v436 = vmul.f32 1.0, %v435
  %v437 = vrcp.pop %v434
  %v438 = vmul.f32 1.0, %v437
  %v439 = vtanh.pop %v425
  %v440 = vtanh.pop %v426
  %v441 = vmul.f32 %v436, 0.0
  %v442 = vmul.f32 %v438, 0.0
  %445 = vrot.lane.b32.xlu0 %v439, 64
  %v446 = vpop.permute.xlu0 %445
  %447 = vrot.lane.b32.xlu0 %v440, 64
  %v448 = vpop.permute.xlu0 %447
  %v451 = vmul.f32 %v436, %v446
  %v452 = vmul.f32 %v438, %v448
  %455 = vrot.lane.b32.xlu0 %v451, 32
  %v456 = vpop.permute.xlu0 %455
  %457 = vrot.lane.b32.xlu0 %v452, 32
  %v458 = vpop.permute.xlu0 %457
  %v461 = vadd.f32 %v441, %v456
  %v462 = vadd.f32 %v442, %v458
  %v463 = vtanh.pop %v461
  %v464 = vtanh.pop %v462
  %467 = vrot.lane.b32.xlu0 %v463, 64
  %v468 = vpop.permute.xlu0 %467
  %469 = vrot.lane.b32.xlu0 %v464, 64
  %v470 = vpop.permute.xlu0 %469
  %v473 = vmul.f32 %v436, %v468
  %v474 = vmul.f32 %v438, %v470
  %v475 = vpack.c.bf16 %v474, %v473
  %v477 = vunpack.c.l.b16 %v475
  %v478 = vunpack.c.h.b16 %v475
  %v479 = vpack.c.b16 %v477, %v477
  %v480 = vpack.c.b16 %v478, %v478
  %481 = vrot.lane.b32.xlu0 %v479, 32
  %v482 = vpop.permute.xlu0 %481
  %483 = vrot.lane.b32.xlu0 %v480, 32
  %v484 = vpop.permute.xlu0 %483
  %vm487 = vcmask 257024
  %488 = vst.msk [vmem:[%s4] sm:$0xf] %vm487, %v482
  %489 = vst.msk [vmem:[%s4 + $0x4] sm:$0xf] %vm487, %v484
  %s490 = scalar_lea.vmem [#allocation2], 16
  %v491 = vld [vmem:[%s490] sm:$0xff]
  %v492 = vld [vmem:[%s490 + $0x8] sm:$0xff]
  %493 = vrot.lane.b32.xlu0 %v475, 32
  %v494 = vpop.permute.xlu0 %493
  %v496 = vsel %vm82, %v494, 0
  %498 = vmatprep.subr.bf16.mxu0 0
  %499 = vmatpush1.bf16.msra.mxu0 0
  %500 = vmatprep.subr.bf16.mxu0 0
  %501 = vmatpush1.bf16.msra.mxu0 0
  %502 = vmatprep.subr.bf16.mxu0 0
  %503 = vmatpush1.bf16.msra.mxu0 0
  %504 = vmatprep.subr.bf16.mxu0 0
  %505 = vmatpush1.bf16.msra.mxu0 0
  %506 = vmatprep.subr.bf16.mxu0 0
  %507 = vmatpush1.bf16.msra.mxu0 0
  %508 = vmatprep.subr.bf16.mxu0 0
  %509 = vmatpush1.bf16.msra.mxu0 0
  %510 = vmatprep.subr.bf16.mxu0 0
  %511 = vmatpush1.bf16.msra.mxu0 %v378
  %512 = vmatprep.subr.bf16.mxu0 0
  %513 = vmatpush1.bf16.msra.mxu0 %v377
  %514 = vmatprep.subr.bf16.mxu0 0
  %515 = vmatpush2.bf16.msra.mxu0 0
  %516 = vmatprep.subr.bf16.mxu0 0
  %517 = vmatpush2.bf16.msra.mxu0 0
  %518 = vmatprep.subr.bf16.mxu0 0
  %519 = vmatpush2.bf16.msra.mxu0 0
  %520 = vmatprep.subr.bf16.mxu0 0
  %521 = vmatpush2.bf16.msra.mxu0 0
  %522 = vmatprep.subr.bf16.mxu0 0
  %523 = vmatpush2.bf16.msra.mxu0 0
  %524 = vmatprep.subr.bf16.mxu0 0
  %525 = vmatpush2.bf16.msra.mxu0 0
  %526 = vmatprep.subr.bf16.mxu0 0
  %527 = vmatpush2.bf16.msra.mxu0 0
  %528 = vmatprep.subr.bf16.mxu0 0
  %529 = vmatpush2.bf16.msra.mxu0 0
  %530 = vmatprep.mubr.bf16.mxu0 0
  %531 = vmatmul.mubr.bf16.gmra.mxu0 %v496
  %v532 = vpop.f32.mrf.mxu0
  %v533 = vadd.f32 0.0, %v532
  %v534 = vpop.f32.mrf.mxu0
  %v535 = vpop.f32.mrf.mxu0
  %v536 = vadd.f32 0.0, %v535
  %v537 = vpop.f32.mrf.mxu0
  %538 = vdwg.mxu0
  %v539 = vadd.f32 %v491, %v533
  %v540 = vadd.f32 %v492, %v536
  %v541 = vxor.u32 %v539, 2147483648
  %v542 = vxor.u32 %v540, 2147483648
  %v543 = vmul.f32 %v541, 1.442695
  %v544 = vpow.pop %v543
  %v545 = vmul.f32 %v542, 1.442695
  %v546 = vpow.pop %v545
  %v547 = vadd.f32 %v544, 1.0
  %v548 = vadd.f32 %v546, 1.0
  %v549 = vrcp.pop %v547
  %v550 = vmul.f32 1.0, %v549
  %v551 = vrcp.pop %v548
  %v552 = vmul.f32 1.0, %v551
  %v553 = vtanh.pop %v539
  %v554 = vtanh.pop %v540
  %v555 = vmul.f32 %v550, %v461
  %v556 = vmul.f32 %v552, %v462
  %559 = vrot.lane.b32.xlu0 %v553, 64
  %v560 = vpop.permute.xlu0 %559
  %561 = vrot.lane.b32.xlu0 %v554, 64
  %v562 = vpop.permute.xlu0 %561
  %v565 = vmul.f32 %v550, %v560
  %v566 = vmul.f32 %v552, %v562
  %569 = vrot.lane.b32.xlu0 %v565, 32
  %v570 = vpop.permute.xlu0 %569
  %571 = vrot.lane.b32.xlu0 %v566, 32
  %v572 = vpop.permute.xlu0 %571
  %v575 = vadd.f32 %v555, %v570
  %v576 = vadd.f32 %v556, %v572
  %v577 = vtanh.pop %v575
  %v578 = vtanh.pop %v576
  %581 = vrot.lane.b32.xlu0 %v577, 64
  %v582 = vpop.permute.xlu0 %581
  %583 = vrot.lane.b32.xlu0 %v578, 64
  %v584 = vpop.permute.xlu0 %583
  %v587 = vmul.f32 %v550, %v582
  %v588 = vmul.f32 %v552, %v584
  %v589 = vpack.c.bf16 %v588, %v587
  %v591 = vunpack.c.l.b16 %v589
  %v592 = vunpack.c.h.b16 %v589
  %v593 = vpack.c.b16 %v591, %v591
  %v594 = vpack.c.b16 %v592, %v592
  %595 = vrot.lane.b32.xlu0 %v593, 32
  %v596 = vpop.permute.xlu0 %595
  %597 = vrot.lane.b32.xlu0 %v594, 32
  %v598 = vpop.permute.xlu0 %597
  %s601 = scalar_lea.vmem %s4, 8
  %602 = vst.msk [vmem:[%s601] sm:$0xf] %vm487, %v596
  %603 = vst.msk [vmem:[%s601 + $0x4] sm:$0xf] %vm487, %v598
  %s604 = scalar_lea.vmem [#allocation2], 32
  %v605 = vld [vmem:[%s604] sm:$0xff]
  %v606 = vld [vmem:[%s604 + $0x8] sm:$0xff]
  %607 = vrot.lane.b32.xlu0 %v589, 32
  %v608 = vpop.permute.xlu0 %607
  %v610 = vsel %vm82, %v608, 0
  %612 = vmatprep.subr.bf16.mxu0 0
  %613 = vmatpush1.bf16.msra.mxu0 0
  %614 = vmatprep.subr.bf16.mxu0 0
  %615 = vmatpush1.bf16.msra.mxu0 0
  %616 = vmatprep.subr.bf16.mxu0 0
  %617 = vmatpush1.bf16.msra.mxu0 0
  %618 = vmatprep.subr.bf16.mxu0 0
  %619 = vmatpush1.bf16.msra.mxu0 0
  %620 = vmatprep.subr.bf16.mxu0 0
  %621 = vmatpush1.bf16.msra.mxu0 0
  %622 = vmatprep.subr.bf16.mxu0 0
  %623 = vmatpush1.bf16.msra.mxu0 0
  %624 = vmatprep.subr.bf16.mxu0 0
  %625 = vmatpush1.bf16.msra.mxu0 %v378
  %626 = vmatprep.subr.bf16.mxu0 0
  %627 = vmatpush1.bf16.msra.mxu0 %v377
  %628 = vmatprep.subr.bf16.mxu0 0
  %629 = vmatpush2.bf16.msra.mxu0 0
  %630 = vmatprep.subr.bf16.mxu0 0
  %631 = vmatpush2.bf16.msra.mxu0 0
  %632 = vmatprep.subr.bf16.mxu0 0
  %633 = vmatpush2.bf16.msra.mxu0 0
  %634 = vmatprep.subr.bf16.mxu0 0
  %635 = vmatpush2.bf16.msra.mxu0 0
  %636 = vmatprep.subr.bf16.mxu0 0
  %637 = vmatpush2.bf16.msra.mxu0 0
  %638 = vmatprep.subr.bf16.mxu0 0
  %639 = vmatpush2.bf16.msra.mxu0 0
  %640 = vmatprep.subr.bf16.mxu0 0
  %641 = vmatpush2.bf16.msra.mxu0 0
  %642 = vmatprep.subr.bf16.mxu0 0
  %643 = vmatpush2.bf16.msra.mxu0 0
  %644 = vmatprep.mubr.bf16.mxu0 0
  %645 = vmatmul.mubr.bf16.gmra.mxu0 %v610
  %v646 = vpop.f32.mrf.mxu0
  %v647 = vadd.f32 0.0, %v646
  %v648 = vpop.f32.mrf.mxu0
  %v649 = vpop.f32.mrf.mxu0
  %v650 = vadd.f32 0.0, %v649
  %v651 = vpop.f32.mrf.mxu0
  %652 = vdwg.mxu0
  %v653 = vadd.f32 %v605, %v647
  %v654 = vadd.f32 %v606, %v650
  %v655 = vxor.u32 %v653, 2147483648
  %v656 = vxor.u32 %v654, 2147483648
  %v657 = vmul.f32 %v655, 1.442695
  %v658 = vpow.pop %v657
  %v659 = vmul.f32 %v656, 1.442695
  %v660 = vpow.pop %v659
  %v661 = vadd.f32 %v658, 1.0
  %v662 = vadd.f32 %v660, 1.0
  %v663 = vrcp.pop %v661
  %v664 = vmul.f32 1.0, %v663
  %v665 = vrcp.pop %v662
  %v666 = vmul.f32 1.0, %v665
  %v667 = vtanh.pop %v653
  %v668 = vtanh.pop %v654
  %v669 = vmul.f32 %v664, %v575
  %v670 = vmul.f32 %v666, %v576
  %673 = vrot.lane.b32.xlu0 %v667, 64
  %v674 = vpop.permute.xlu0 %673
  %675 = vrot.lane.b32.xlu0 %v668, 64
  %v676 = vpop.permute.xlu0 %675
  %v679 = vmul.f32 %v664, %v674
  %v680 = vmul.f32 %v666, %v676
  %683 = vrot.lane.b32.xlu0 %v679, 32
  %v684 = vpop.permute.xlu0 %683
  %685 = vrot.lane.b32.xlu0 %v680, 32
  %v686 = vpop.permute.xlu0 %685
  %v689 = vadd.f32 %v669, %v684
  %v690 = vadd.f32 %v670, %v686
  %v691 = vtanh.pop %v689
  %v692 = vtanh.pop %v690
  %695 = vrot.lane.b32.xlu0 %v691, 64
  %v696 = vpop.permute.xlu0 %695
  %697 = vrot.lane.b32.xlu0 %v692, 64
  %v698 = vpop.permute.xlu0 %697
  %v701 = vmul.f32 %v664, %v696
  %v702 = vmul.f32 %v666, %v698
  %v703 = vpack.c.bf16 %v702, %v701
  %v705 = vunpack.c.l.b16 %v703
  %v706 = vunpack.c.h.b16 %v703
  %v707 = vpack.c.b16 %v705, %v705
  %v708 = vpack.c.b16 %v706, %v706
  %709 = vrot.lane.b32.xlu0 %v707, 32
  %v710 = vpop.permute.xlu0 %709
  %711 = vrot.lane.b32.xlu0 %v708, 32
  %v712 = vpop.permute.xlu0 %711
  %s715 = scalar_lea.vmem %s4, 16
  %716 = vst.msk [vmem:[%s715] sm:$0xf] %vm487, %v710
  %717 = vst.msk [vmem:[%s715 + $0x4] sm:$0xf] %vm487, %v712
  %s718 = scalar_lea.vmem [#allocation2], 48
  %v719 = vld [vmem:[%s718] sm:$0xff]
  %v720 = vld [vmem:[%s718 + $0x8] sm:$0xff]
  %721 = vrot.lane.b32.xlu0 %v703, 32
  %v722 = vpop.permute.xlu0 %721
  %v724 = vsel %vm82, %v722, 0
  %726 = vmatprep.subr.bf16.mxu0 0
  %727 = vmatpush1.bf16.msra.mxu0 0
  %728 = vmatprep.subr.bf16.mxu0 0
  %729 = vmatpush1.bf16.msra.mxu0 0
  %730 = vmatprep.subr.bf16.mxu0 0
  %731 = vmatpush1.bf16.msra.mxu0 0
  %732 = vmatprep.subr.bf16.mxu0 0
  %733 = vmatpush1.bf16.msra.mxu0 0
  %734 = vmatprep.subr.bf16.mxu0 0
  %735 = vmatpush1.bf16.msra.mxu0 0
  %736 = vmatprep.subr.bf16.mxu0 0
  %737 = vmatpush1.bf16.msra.mxu0 0
  %738 = vmatprep.subr.bf16.mxu0 0
  %739 = vmatpush1.bf16.msra.mxu0 %v378
  %740 = vmatprep.subr.bf16.mxu0 0
  %741 = vmatpush1.bf16.msra.mxu0 %v377
  %742 = vmatprep.subr.bf16.mxu0 0
  %743 = vmatpush2.bf16.msra.mxu0 0
  %744 = vmatprep.subr.bf16.mxu0 0
  %745 = vmatpush2.bf16.msra.mxu0 0
  %746 = vmatprep.subr.bf16.mxu0 0
  %747 = vmatpush2.bf16.msra.mxu0 0
  %748 = vmatprep.subr.bf16.mxu0 0
  %749 = vmatpush2.bf16.msra.mxu0 0
  %750 = vmatprep.subr.bf16.mxu0 0
  %751 = vmatpush2.bf16.msra.mxu0 0
  %752 = vmatprep.subr.bf16.mxu0 0
  %753 = vmatpush2.bf16.msra.mxu0 0
  %754 = vmatprep.subr.bf16.mxu0 0
  %755 = vmatpush2.bf16.msra.mxu0 0
  %756 = vmatprep.subr.bf16.mxu0 0
  %757 = vmatpush2.bf16.msra.mxu0 0
  %758 = vmatprep.mubr.bf16.mxu0 0
  %759 = vmatmul.mubr.bf16.gmra.mxu0 %v724
  %v760 = vpop.f32.mrf.mxu0
  %v761 = vadd.f32 0.0, %v760
  %v762 = vpop.f32.mrf.mxu0
  %v763 = vpop.f32.mrf.mxu0
  %v764 = vadd.f32 0.0, %v763
  %v765 = vpop.f32.mrf.mxu0
  %766 = vdwg.mxu0
  %v767 = vadd.f32 %v719, %v761
  %v768 = vadd.f32 %v720, %v764
  %v769 = vxor.u32 %v767, 2147483648
  %v770 = vxor.u32 %v768, 2147483648
  %v771 = vmul.f32 %v769, 1.442695
  %v772 = vpow.pop %v771
  %v773 = vmul.f32 %v770, 1.442695
  %v774 = vpow.pop %v773
  %v775 = vadd.f32 %v772, 1.0
  %v776 = vadd.f32 %v774, 1.0
  %v777 = vrcp.pop %v775
  %v778 = vmul.f32 1.0, %v777
  %v779 = vrcp.pop %v776
  %v780 = vmul.f32 1.0, %v779
  %v781 = vtanh.pop %v767
  %v782 = vtanh.pop %v768
  %v783 = vmul.f32 %v778, %v689
  %v784 = vmul.f32 %v780, %v690
  %787 = vrot.lane.b32.xlu0 %v781, 64
  %v788 = vpop.permute.xlu0 %787
  %789 = vrot.lane.b32.xlu0 %v782, 64
  %v790 = vpop.permute.xlu0 %789
  %v793 = vmul.f32 %v778, %v788
  %v794 = vmul.f32 %v780, %v790
  %797 = vrot.lane.b32.xlu0 %v793, 32
  %v798 = vpop.permute.xlu0 %797
  %799 = vrot.lane.b32.xlu0 %v794, 32
  %v800 = vpop.permute.xlu0 %799
  %v803 = vadd.f32 %v783, %v798
  %v804 = vadd.f32 %v784, %v800
  %v805 = vtanh.pop %v803
  %v806 = vtanh.pop %v804
  %809 = vrot.lane.b32.xlu0 %v805, 64
  %v810 = vpop.permute.xlu0 %809
  %811 = vrot.lane.b32.xlu0 %v806, 64
  %v812 = vpop.permute.xlu0 %811
  %v815 = vmul.f32 %v778, %v810
  %v816 = vmul.f32 %v780, %v812
  %v817 = vpack.c.bf16 %v816, %v815
  %v819 = vunpack.c.l.b16 %v817
  %v820 = vunpack.c.h.b16 %v817
  %v821 = vpack.c.b16 %v819, %v819
  %v822 = vpack.c.b16 %v820, %v820
  %823 = vrot.lane.b32.xlu0 %v821, 32
  %v824 = vpop.permute.xlu0 %823
  %825 = vrot.lane.b32.xlu0 %v822, 32
  %v826 = vpop.permute.xlu0 %825
  %s829 = scalar_lea.vmem %s4, 24
  %830 = vst.msk [vmem:[%s829] sm:$0xf] %vm487, %v824
  %831 = vst.msk [vmem:[%s829 + $0x4] sm:$0xf] %vm487, %v826
  %s832 = scalar_lea.vmem [#allocation2], 64
  %v833 = vld [vmem:[%s832] sm:$0xff]
  %v834 = vld [vmem:[%s832 + $0x8] sm:$0xff]
  %835 = vrot.lane.b32.xlu0 %v817, 32
  %v836 = vpop.permute.xlu0 %835
  %v838 = vsel %vm82, %v836, 0
  %840 = vmatprep.subr.bf16.mxu0 0
  %841 = vmatpush1.bf16.msra.mxu0 0
  %842 = vmatprep.subr.bf16.mxu0 0
  %843 = vmatpush1.bf16.msra.mxu0 0
  %844 = vmatprep.subr.bf16.mxu0 0
  %845 = vmatpush1.bf16.msra.mxu0 0
  %846 = vmatprep.subr.bf16.mxu0 0
  %847 = vmatpush1.bf16.msra.mxu0 0
  %848 = vmatprep.subr.bf16.mxu0 0
  %849 = vmatpush1.bf16.msra.mxu0 0
  %850 = vmatprep.subr.bf16.mxu0 0
  %851 = vmatpush1.bf16.msra.mxu0 0
  %852 = vmatprep.subr.bf16.mxu0 0
  %853 = vmatpush1.bf16.msra.mxu0 %v378
  %854 = vmatprep.subr.bf16.mxu0 0
  %855 = vmatpush1.bf16.msra.mxu0 %v377
  %856 = vmatprep.subr.bf16.mxu0 0
  %857 = vmatpush2.bf16.msra.mxu0 0
  %858 = vmatprep.subr.bf16.mxu0 0
  %859 = vmatpush2.bf16.msra.mxu0 0
  %860 = vmatprep.subr.bf16.mxu0 0
  %861 = vmatpush2.bf16.msra.mxu0 0
  %862 = vmatprep.subr.bf16.mxu0 0
  %863 = vmatpush2.bf16.msra.mxu0 0
  %864 = vmatprep.subr.bf16.mxu0 0
  %865 = vmatpush2.bf16.msra.mxu0 0
  %866 = vmatprep.subr.bf16.mxu0 0
  %867 = vmatpush2.bf16.msra.mxu0 0
  %868 = vmatprep.subr.bf16.mxu0 0
  %869 = vmatpush2.bf16.msra.mxu0 0
  %870 = vmatprep.subr.bf16.mxu0 0
  %871 = vmatpush2.bf16.msra.mxu0 0
  %872 = vmatprep.mubr.bf16.mxu0 0
  %873 = vmatmul.mubr.bf16.gmra.mxu0 %v838
  %v874 = vpop.f32.mrf.mxu0
  %v875 = vadd.f32 0.0, %v874
  %v876 = vpop.f32.mrf.mxu0
  %v877 = vpop.f32.mrf.mxu0
  %v878 = vadd.f32 0.0, %v877
  %v879 = vpop.f32.mrf.mxu0
  %880 = vdwg.mxu0
  %v881 = vadd.f32 %v833, %v875
  %v882 = vadd.f32 %v834, %v878
  %v883 = vxor.u32 %v881, 2147483648
  %v884 = vxor.u32 %v882, 2147483648
  %v885 = vmul.f32 %v883, 1.442695
  %v886 = vpow.pop %v885
  %v887 = vmul.f32 %v884, 1.442695
  %v888 = vpow.pop %v887
  %v889 = vadd.f32 %v886, 1.0
  %v890 = vadd.f32 %v888, 1.0
  %v891 = vrcp.pop %v889
  %v892 = vmul.f32 1.0, %v891
  %v893 = vrcp.pop %v890
  %v894 = vmul.f32 1.0, %v893
  %v895 = vtanh.pop %v881
  %v896 = vtanh.pop %v882
  %v897 = vmul.f32 %v892, %v803
  %v898 = vmul.f32 %v894, %v804
  %901 = vrot.lane.b32.xlu0 %v895, 64
  %v902 = vpop.permute.xlu0 %901
  %903 = vrot.lane.b32.xlu0 %v896, 64
  %v904 = vpop.permute.xlu0 %903
  %v907 = vmul.f32 %v892, %v902
  %v908 = vmul.f32 %v894, %v904
  %911 = vrot.lane.b32.xlu0 %v907, 32
  %v912 = vpop.permute.xlu0 %911
  %913 = vrot.lane.b32.xlu0 %v908, 32
  %v914 = vpop.permute.xlu0 %913
  %v917 = vadd.f32 %v897, %v912
  %v918 = vadd.f32 %v898, %v914
  %v919 = vtanh.pop %v917
  %v920 = vtanh.pop %v918
  %923 = vrot.lane.b32.xlu0 %v919, 64
  %v924 = vpop.permute.xlu0 %923
  %925 = vrot.lane.b32.xlu0 %v920, 64
  %v926 = vpop.permute.xlu0 %925
  %v929 = vmul.f32 %v892, %v924
  %v930 = vmul.f32 %v894, %v926
  %v931 = vpack.c.bf16 %v930, %v929
  %v933 = vunpack.c.l.b16 %v931
  %v934 = vunpack.c.h.b16 %v931
  %v935 = vpack.c.b16 %v933, %v933
  %v936 = vpack.c.b16 %v934, %v934
  %937 = vrot.lane.b32.xlu0 %v935, 32
  %v938 = vpop.permute.xlu0 %937
  %939 = vrot.lane.b32.xlu0 %v936, 32
  %v940 = vpop.permute.xlu0 %939
  %s943 = scalar_lea.vmem %s4, 32
  %944 = vst.msk [vmem:[%s943] sm:$0xf] %vm487, %v938
  %945 = vst.msk [vmem:[%s943 + $0x4] sm:$0xf] %vm487, %v940
  %s946 = scalar_lea.vmem [#allocation2], 80
  %v947 = vld [vmem:[%s946] sm:$0xff]
  %v948 = vld [vmem:[%s946 + $0x8] sm:$0xff]
  %949 = vrot.lane.b32.xlu0 %v931, 32
  %v950 = vpop.permute.xlu0 %949
  %v952 = vsel %vm82, %v950, 0
  %954 = vmatprep.subr.bf16.mxu0 0
  %955 = vmatpush1.bf16.msra.mxu0 0
  %956 = vmatprep.subr.bf16.mxu0 0
  %957 = vmatpush1.bf16.msra.mxu0 0
  %958 = vmatprep.subr.bf16.mxu0 0
  %959 = vmatpush1.bf16.msra.mxu0 0
  %960 = vmatprep.subr.bf16.mxu0 0
  %961 = vmatpush1.bf16.msra.mxu0 0
  %962 = vmatprep.subr.bf16.mxu0 0
  %963 = vmatpush1.bf16.msra.mxu0 0
  %964 = vmatprep.subr.bf16.mxu0 0
  %965 = vmatpush1.bf16.msra.mxu0 0
  %966 = vmatprep.subr.bf16.mxu0 0
  %967 = vmatpush1.bf16.msra.mxu0 %v378
  %968 = vmatprep.subr.bf16.mxu0 0
  %969 = vmatpush1.bf16.msra.mxu0 %v377
  %970 = vmatprep.subr.bf16.mxu0 0
  %971 = vmatpush2.bf16.msra.mxu0 0
  %972 = vmatprep.subr.bf16.mxu0 0
  %973 = vmatpush2.bf16.msra.mxu0 0
  %974 = vmatprep.subr.bf16.mxu0 0
  %975 = vmatpush2.bf16.msra.mxu0 0
  %976 = vmatprep.subr.bf16.mxu0 0
  %977 = vmatpush2.bf16.msra.mxu0 0
  %978 = vmatprep.subr.bf16.mxu0 0
  %979 = vmatpush2.bf16.msra.mxu0 0
  %980 = vmatprep.subr.bf16.mxu0 0
  %981 = vmatpush2.bf16.msra.mxu0 0
  %982 = vmatprep.subr.bf16.mxu0 0
  %983 = vmatpush2.bf16.msra.mxu0 0
  %984 = vmatprep.subr.bf16.mxu0 0
  %985 = vmatpush2.bf16.msra.mxu0 0
  %986 = vmatprep.mubr.bf16.mxu0 0
  %987 = vmatmul.mubr.bf16.gmra.mxu0 %v952
  %v988 = vpop.f32.mrf.mxu0
  %v989 = vadd.f32 0.0, %v988
  %v990 = vpop.f32.mrf.mxu0
  %v991 = vpop.f32.mrf.mxu0
  %v992 = vadd.f32 0.0, %v991
  %v993 = vpop.f32.mrf.mxu0
  %994 = vdwg.mxu0
  %v995 = vadd.f32 %v947, %v989
  %v996 = vadd.f32 %v948, %v992
  %v997 = vxor.u32 %v995, 2147483648
  %v998 = vxor.u32 %v996, 2147483648
  %v999 = vmul.f32 %v997, 1.442695
  %v1000 = vpow.pop %v999
  %v1001 = vmul.f32 %v998, 1.442695
  %v1002 = vpow.pop %v1001
  %v1003 = vadd.f32 %v1000, 1.0
  %v1004 = vadd.f32 %v1002, 1.0
  %v1005 = vrcp.pop %v1003
  %v1006 = vmul.f32 1.0, %v1005
  %v1007 = vrcp.pop %v1004
  %v1008 = vmul.f32 1.0, %v1007
  %v1009 = vtanh.pop %v995
  %v1010 = vtanh.pop %v996
  %v1011 = vmul.f32 %v1006, %v917
  %v1012 = vmul.f32 %v1008, %v918
  %1015 = vrot.lane.b32.xlu0 %v1009, 64
  %v1016 = vpop.permute.xlu0 %1015
  %1017 = vrot.lane.b32.xlu0 %v1010, 64
  %v1018 = vpop.permute.xlu0 %1017
  %v1021 = vmul.f32 %v1006, %v1016
  %v1022 = vmul.f32 %v1008, %v1018
  %1025 = vrot.lane.b32.xlu0 %v1021, 32
  %v1026 = vpop.permute.xlu0 %1025
  %1027 = vrot.lane.b32.xlu0 %v1022, 32
  %v1028 = vpop.permute.xlu0 %1027
  %v1031 = vadd.f32 %v1011, %v1026
  %v1032 = vadd.f32 %v1012, %v1028
  %v1033 = vtanh.pop %v1031
  %v1034 = vtanh.pop %v1032
  %1037 = vrot.lane.b32.xlu0 %v1033, 64
  %v1038 = vpop.permute.xlu0 %1037
  %1039 = vrot.lane.b32.xlu0 %v1034, 64
  %v1040 = vpop.permute.xlu0 %1039
  %v1043 = vmul.f32 %v1006, %v1038
  %v1044 = vmul.f32 %v1008, %v1040
  %v1045 = vpack.c.bf16 %v1044, %v1043
  %v1047 = vunpack.c.l.b16 %v1045
  %v1048 = vunpack.c.h.b16 %v1045
  %v1049 = vpack.c.b16 %v1047, %v1047
  %v1050 = vpack.c.b16 %v1048, %v1048
  %1051 = vrot.lane.b32.xlu0 %v1049, 32
  %v1052 = vpop.permute.xlu0 %1051
  %1053 = vrot.lane.b32.xlu0 %v1050, 32
  %v1054 = vpop.permute.xlu0 %1053
  %s1057 = scalar_lea.vmem %s4, 40
  %1058 = vst.msk [vmem:[%s1057] sm:$0xf] %vm487, %v1052
  %1059 = vst.msk [vmem:[%s1057 + $0x4] sm:$0xf] %vm487, %v1054
  %s1060 = scalar_lea.vmem [#allocation2], 96
  %v1061 = vld [vmem:[%s1060] sm:$0xff]
  %v1062 = vld [vmem:[%s1060 + $0x8] sm:$0xff]
  %1063 = vrot.lane.b32.xlu0 %v1045, 32
  %v1064 = vpop.permute.xlu0 %1063
  %v1066 = vsel %vm82, %v1064, 0
  %1068 = vmatprep.subr.bf16.mxu0 0
  %1069 = vmatpush1.bf16.msra.mxu0 0
  %1070 = vmatprep.subr.bf16.mxu0 0
  %1071 = vmatpush1.bf16.msra.mxu0 0
  %1072 = vmatprep.subr.bf16.mxu0 0
  %1073 = vmatpush1.bf16.msra.mxu0 0
  %1074 = vmatprep.subr.bf16.mxu0 0
  %1075 = vmatpush1.bf16.msra.mxu0 0
  %1076 = vmatprep.subr.bf16.mxu0 0
  %1077 = vmatpush1.bf16.msra.mxu0 0
  %1078 = vmatprep.subr.bf16.mxu0 0
  %1079 = vmatpush1.bf16.msra.mxu0 0
  %1080 = vmatprep.subr.bf16.mxu0 0
  %1081 = vmatpush1.bf16.msra.mxu0 %v378
  %1082 = vmatprep.subr.bf16.mxu0 0
  %1083 = vmatpush1.bf16.msra.mxu0 %v377
  %1084 = vmatprep.subr.bf16.mxu0 0
  %1085 = vmatpush2.bf16.msra.mxu0 0
  %1086 = vmatprep.subr.bf16.mxu0 0
  %1087 = vmatpush2.bf16.msra.mxu0 0
  %1088 = vmatprep.subr.bf16.mxu0 0
  %1089 = vmatpush2.bf16.msra.mxu0 0
  %1090 = vmatprep.subr.bf16.mxu0 0
  %1091 = vmatpush2.bf16.msra.mxu0 0
  %1092 = vmatprep.subr.bf16.mxu0 0
  %1093 = vmatpush2.bf16.msra.mxu0 0
  %1094 = vmatprep.subr.bf16.mxu0 0
  %1095 = vmatpush2.bf16.msra.mxu0 0
  %1096 = vmatprep.subr.bf16.mxu0 0
  %1097 = vmatpush2.bf16.msra.mxu0 0
  %1098 = vmatprep.subr.bf16.mxu0 0
  %1099 = vmatpush2.bf16.msra.mxu0 0
  %1100 = vmatprep.mubr.bf16.mxu0 0
  %1101 = vmatmul.mubr.bf16.gmra.mxu0 %v1066
  %v1102 = vpop.f32.mrf.mxu0
  %v1103 = vadd.f32 0.0, %v1102
  %v1104 = vpop.f32.mrf.mxu0
  %v1105 = vpop.f32.mrf.mxu0
  %v1106 = vadd.f32 0.0, %v1105
  %v1107 = vpop.f32.mrf.mxu0
  %1108 = vdwg.mxu0
  %v1109 = vadd.f32 %v1061, %v1103
  %v1110 = vadd.f32 %v1062, %v1106
  %v1111 = vxor.u32 %v1109, 2147483648
  %v1112 = vxor.u32 %v1110, 2147483648
  %v1113 = vmul.f32 %v1111, 1.442695
  %v1114 = vpow.pop %v1113
  %v1115 = vmul.f32 %v1112, 1.442695
  %v1116 = vpow.pop %v1115
  %v1117 = vadd.f32 %v1114, 1.0
  %v1118 = vadd.f32 %v1116, 1.0
  %v1119 = vrcp.pop %v1117
  %v1120 = vmul.f32 1.0, %v1119
  %v1121 = vrcp.pop %v1118
  %v1122 = vmul.f32 1.0, %v1121
  %v1123 = vtanh.pop %v1109
  %v1124 = vtanh.pop %v1110
  %v1125 = vmul.f32 %v1120, %v1031
  %v1126 = vmul.f32 %v1122, %v1032
  %1129 = vrot.lane.b32.xlu0 %v1123, 64
  %v1130 = vpop.permute.xlu0 %1129
  %1131 = vrot.lane.b32.xlu0 %v1124, 64
  %v1132 = vpop.permute.xlu0 %1131
  %v1135 = vmul.f32 %v1120, %v1130
  %v1136 = vmul.f32 %v1122, %v1132
  %1139 = vrot.lane.b32.xlu0 %v1135, 32
  %v1140 = vpop.permute.xlu0 %1139
  %1141 = vrot.lane.b32.xlu0 %v1136, 32
  %v1142 = vpop.permute.xlu0 %1141
  %v1145 = vadd.f32 %v1125, %v1140
  %v1146 = vadd.f32 %v1126, %v1142
  %v1147 = vtanh.pop %v1145
  %v1148 = vtanh.pop %v1146
  %1151 = vrot.lane.b32.xlu0 %v1147, 64
  %v1152 = vpop.permute.xlu0 %1151
  %1153 = vrot.lane.b32.xlu0 %v1148, 64
  %v1154 = vpop.permute.xlu0 %1153
  %v1157 = vmul.f32 %v1120, %v1152
  %v1158 = vmul.f32 %v1122, %v1154
  %v1159 = vpack.c.bf16 %v1158, %v1157
  %v1161 = vunpack.c.l.b16 %v1159
  %v1162 = vunpack.c.h.b16 %v1159
  %v1163 = vpack.c.b16 %v1161, %v1161
  %v1164 = vpack.c.b16 %v1162, %v1162
  %1165 = vrot.lane.b32.xlu0 %v1163, 32
  %v1166 = vpop.permute.xlu0 %1165
  %1167 = vrot.lane.b32.xlu0 %v1164, 32
  %v1168 = vpop.permute.xlu0 %1167
  %s1171 = scalar_lea.vmem %s4, 48
  %1172 = vst.msk [vmem:[%s1171] sm:$0xf] %vm487, %v1166
  %1173 = vst.msk [vmem:[%s1171 + $0x4] sm:$0xf] %vm487, %v1168
  %s1174 = scalar_lea.vmem [#allocation2], 112
  %v1175 = vld [vmem:[%s1174] sm:$0xff]
  %v1176 = vld [vmem:[%s1174 + $0x8] sm:$0xff]
  %1177 = vrot.lane.b32.xlu0 %v1159, 32
  %v1178 = vpop.permute.xlu0 %1177
  %v1180 = vsel %vm82, %v1178, 0
  %1182 = vmatprep.subr.bf16.mxu0 0
  %1183 = vmatpush1.bf16.msra.mxu0 0
  %1184 = vmatprep.subr.bf16.mxu0 0
  %1185 = vmatpush1.bf16.msra.mxu0 0
  %1186 = vmatprep.subr.bf16.mxu0 0
  %1187 = vmatpush1.bf16.msra.mxu0 0
  %1188 = vmatprep.subr.bf16.mxu0 0
  %1189 = vmatpush1.bf16.msra.mxu0 0
  %1190 = vmatprep.subr.bf16.mxu0 0
  %1191 = vmatpush1.bf16.msra.mxu0 0
  %1192 = vmatprep.subr.bf16.mxu0 0
  %1193 = vmatpush1.bf16.msra.mxu0 0
  %1194 = vmatprep.subr.bf16.mxu0 0
  %1195 = vmatpush1.bf16.msra.mxu0 %v378
  %1196 = vmatprep.subr.bf16.mxu0 0
  %1197 = vmatpush1.bf16.msra.mxu0 %v377
  %1198 = vmatprep.subr.bf16.mxu0 0
  %1199 = vmatpush2.bf16.msra.mxu0 0
  %1200 = vmatprep.subr.bf16.mxu0 0
  %1201 = vmatpush2.bf16.msra.mxu0 0
  %1202 = vmatprep.subr.bf16.mxu0 0
  %1203 = vmatpush2.bf16.msra.mxu0 0
  %1204 = vmatprep.subr.bf16.mxu0 0
  %1205 = vmatpush2.bf16.msra.mxu0 0
  %1206 = vmatprep.subr.bf16.mxu0 0
  %1207 = vmatpush2.bf16.msra.mxu0 0
  %1208 = vmatprep.subr.bf16.mxu0 0
  %1209 = vmatpush2.bf16.msra.mxu0 0
  %1210 = vmatprep.subr.bf16.mxu0 0
  %1211 = vmatpush2.bf16.msra.mxu0 0
  %1212 = vmatprep.subr.bf16.mxu0 0
  %1213 = vmatpush2.bf16.msra.mxu0 0
  %1214 = vmatprep.mubr.bf16.mxu0 0
  %1215 = vmatmul.mubr.bf16.gmra.mxu0 %v1180
  %v1216 = vpop.f32.mrf.mxu0
  %v1217 = vadd.f32 0.0, %v1216
  %v1218 = vpop.f32.mrf.mxu0
  %v1219 = vpop.f32.mrf.mxu0
  %v1220 = vadd.f32 0.0, %v1219
  %v1221 = vpop.f32.mrf.mxu0
  %1222 = vdwg.mxu0
  %v1223 = vadd.f32 %v1175, %v1217
  %v1224 = vadd.f32 %v1176, %v1220
  %v1225 = vxor.u32 %v1223, 2147483648
  %v1226 = vxor.u32 %v1224, 2147483648
  %v1227 = vmul.f32 %v1225, 1.442695
  %v1228 = vpow.pop %v1227
  %v1229 = vmul.f32 %v1226, 1.442695
  %v1230 = vpow.pop %v1229
  %v1231 = vadd.f32 %v1228, 1.0
  %v1232 = vadd.f32 %v1230, 1.0
  %v1233 = vrcp.pop %v1231
  %v1234 = vmul.f32 1.0, %v1233
  %v1235 = vrcp.pop %v1232
  %v1236 = vmul.f32 1.0, %v1235
  %v1237 = vtanh.pop %v1223
  %v1238 = vtanh.pop %v1224
  %v1239 = vmul.f32 %v1234, %v1145
  %v1240 = vmul.f32 %v1236, %v1146
  %1243 = vrot.lane.b32.xlu0 %v1237, 64
  %v1244 = vpop.permute.xlu0 %1243
  %1245 = vrot.lane.b32.xlu0 %v1238, 64
  %v1246 = vpop.permute.xlu0 %1245
  %v1249 = vmul.f32 %v1234, %v1244
  %v1250 = vmul.f32 %v1236, %v1246
  %1253 = vrot.lane.b32.xlu0 %v1249, 32
  %v1254 = vpop.permute.xlu0 %1253
  %1255 = vrot.lane.b32.xlu0 %v1250, 32
  %v1256 = vpop.permute.xlu0 %1255
  %v1259 = vadd.f32 %v1239, %v1254
  %v1260 = vadd.f32 %v1240, %v1256
  %v1261 = vtanh.pop %v1259
  %v1262 = vtanh.pop %v1260
  %1265 = vrot.lane.b32.xlu0 %v1261, 64
  %v1266 = vpop.permute.xlu0 %1265
  %1267 = vrot.lane.b32.xlu0 %v1262, 64
  %v1268 = vpop.permute.xlu0 %1267
  %v1271 = vmul.f32 %v1234, %v1266
  %v1272 = vmul.f32 %v1236, %v1268
  %v1273 = vpack.c.bf16 %v1272, %v1271
  %v1275 = vunpack.c.l.b16 %v1273
  %v1276 = vunpack.c.h.b16 %v1273
  %v1277 = vpack.c.b16 %v1275, %v1275
  %v1278 = vpack.c.b16 %v1276, %v1276
  %1279 = vrot.lane.b32.xlu0 %v1277, 32
  %v1280 = vpop.permute.xlu0 %1279
  %1281 = vrot.lane.b32.xlu0 %v1278, 32
  %v1282 = vpop.permute.xlu0 %1281
  %s1285 = scalar_lea.vmem %s4, 56
  %1286 = vst.msk [vmem:[%s1285] sm:$0xf] %vm487, %v1280
  %1287 = vst.msk [vmem:[%s1285 + $0x4] sm:$0xf] %vm487, %v1282
  %s1288 = scalar_lea.vmem [#allocation2], 128
  %v1289 = vld [vmem:[%s1288] sm:$0xff]
  %v1290 = vld [vmem:[%s1288 + $0x8] sm:$0xff]
  %1291 = vrot.lane.b32.xlu0 %v1273, 32
  %v1292 = vpop.permute.xlu0 %1291
  %v1294 = vsel %vm82, %v1292, 0
  %1296 = vmatprep.subr.bf16.mxu0 0
  %1297 = vmatpush1.bf16.msra.mxu0 0
  %1298 = vmatprep.subr.bf16.mxu0 0
  %1299 = vmatpush1.bf16.msra.mxu0 0
  %1300 = vmatprep.subr.bf16.mxu0 0
  %1301 = vmatpush1.bf16.msra.mxu0 0
  %1302 = vmatprep.subr.bf16.mxu0 0
  %1303 = vmatpush1.bf16.msra.mxu0 0
  %1304 = vmatprep.subr.bf16.mxu0 0
  %1305 = vmatpush1.bf16.msra.mxu0 0
  %1306 = vmatprep.subr.bf16.mxu0 0
  %1307 = vmatpush1.bf16.msra.mxu0 0
  %1308 = vmatprep.subr.bf16.mxu0 0
  %1309 = vmatpush1.bf16.msra.mxu0 %v378
  %1310 = vmatprep.subr.bf16.mxu0 0
  %1311 = vmatpush1.bf16.msra.mxu0 %v377
  %1312 = vmatprep.subr.bf16.mxu0 0
  %1313 = vmatpush2.bf16.msra.mxu0 0
  %1314 = vmatprep.subr.bf16.mxu0 0
  %1315 = vmatpush2.bf16.msra.mxu0 0
  %1316 = vmatprep.subr.bf16.mxu0 0
  %1317 = vmatpush2.bf16.msra.mxu0 0
  %1318 = vmatprep.subr.bf16.mxu0 0
  %1319 = vmatpush2.bf16.msra.mxu0 0
  %1320 = vmatprep.subr.bf16.mxu0 0
  %1321 = vmatpush2.bf16.msra.mxu0 0
  %1322 = vmatprep.subr.bf16.mxu0 0
  %1323 = vmatpush2.bf16.msra.mxu0 0
  %1324 = vmatprep.subr.bf16.mxu0 0
  %1325 = vmatpush2.bf16.msra.mxu0 0
  %1326 = vmatprep.subr.bf16.mxu0 0
  %1327 = vmatpush2.bf16.msra.mxu0 0
  %1328 = vmatprep.mubr.bf16.mxu0 0
  %1329 = vmatmul.mubr.bf16.gmra.mxu0 %v1294
  %v1330 = vpop.f32.mrf.mxu0
  %v1331 = vadd.f32 0.0, %v1330
  %v1332 = vpop.f32.mrf.mxu0
  %v1333 = vpop.f32.mrf.mxu0
  %v1334 = vadd.f32 0.0, %v1333
  %v1335 = vpop.f32.mrf.mxu0
  %1336 = vdwg.mxu0
  %v1337 = vadd.f32 %v1289, %v1331
  %v1338 = vadd.f32 %v1290, %v1334
  %v1339 = vxor.u32 %v1337, 2147483648
  %v1340 = vxor.u32 %v1338, 2147483648
  %v1341 = vmul.f32 %v1339, 1.442695
  %v1342 = vpow.pop %v1341
  %v1343 = vmul.f32 %v1340, 1.442695
  %v1344 = vpow.pop %v1343
  %v1345 = vadd.f32 %v1342, 1.0
  %v1346 = vadd.f32 %v1344, 1.0
  %v1347 = vrcp.pop %v1345
  %v1348 = vmul.f32 1.0, %v1347
  %v1349 = vrcp.pop %v1346
  %v1350 = vmul.f32 1.0, %v1349
  %v1351 = vtanh.pop %v1337
  %v1352 = vtanh.pop %v1338
  %v1353 = vmul.f32 %v1348, %v1259
  %v1354 = vmul.f32 %v1350, %v1260
  %1357 = vrot.lane.b32.xlu0 %v1351, 64
  %v1358 = vpop.permute.xlu0 %1357
  %1359 = vrot.lane.b32.xlu0 %v1352, 64
  %v1360 = vpop.permute.xlu0 %1359
  %v1363 = vmul.f32 %v1348, %v1358
  %v1364 = vmul.f32 %v1350, %v1360
  %1367 = vrot.lane.b32.xlu0 %v1363, 32
  %v1368 = vpop.permute.xlu0 %1367
  %1369 = vrot.lane.b32.xlu0 %v1364, 32
  %v1370 = vpop.permute.xlu0 %1369
  %v1373 = vadd.f32 %v1353, %v1368
  %v1374 = vadd.f32 %v1354, %v1370
  %v1375 = vtanh.pop %v1373
  %v1376 = vtanh.pop %v1374
  %1379 = vrot.lane.b32.xlu0 %v1375, 64
  %v1380 = vpop.permute.xlu0 %1379
  %1381 = vrot.lane.b32.xlu0 %v1376, 64
  %v1382 = vpop.permute.xlu0 %1381
  %v1385 = vmul.f32 %v1348, %v1380
  %v1386 = vmul.f32 %v1350, %v1382
  %v1387 = vpack.c.bf16 %v1386, %v1385
  %v1389 = vunpack.c.l.b16 %v1387
  %v1390 = vunpack.c.h.b16 %v1387
  %v1391 = vpack.c.b16 %v1389, %v1389
  %v1392 = vpack.c.b16 %v1390, %v1390
  %1393 = vrot.lane.b32.xlu0 %v1391, 32
  %v1394 = vpop.permute.xlu0 %1393
  %1395 = vrot.lane.b32.xlu0 %v1392, 32
  %v1396 = vpop.permute.xlu0 %1395
  %s1399 = scalar_lea.vmem %s4, 64
  %1400 = vst.msk [vmem:[%s1399] sm:$0xf] %vm487, %v1394
  %1401 = vst.msk [vmem:[%s1399 + $0x4] sm:$0xf] %vm487, %v1396
  %s1402 = scalar_lea.vmem [#allocation2], 144
  %v1403 = vld [vmem:[%s1402] sm:$0xff]
  %v1404 = vld [vmem:[%s1402 + $0x8] sm:$0xff]
  %1405 = vrot.lane.b32.xlu0 %v1387, 32
  %v1406 = vpop.permute.xlu0 %1405
  %v1408 = vsel %vm82, %v1406, 0
  %1410 = vmatprep.subr.bf16.mxu0 0
  %1411 = vmatpush1.bf16.msra.mxu0 0
  %1412 = vmatprep.subr.bf16.mxu0 0
  %1413 = vmatpush1.bf16.msra.mxu0 0
  %1414 = vmatprep.subr.bf16.mxu0 0
  %1415 = vmatpush1.bf16.msra.mxu0 0
  %1416 = vmatprep.subr.bf16.mxu0 0
  %1417 = vmatpush1.bf16.msra.mxu0 0
  %1418 = vmatprep.subr.bf16.mxu0 0
  %1419 = vmatpush1.bf16.msra.mxu0 0
  %1420 = vmatprep.subr.bf16.mxu0 0
  %1421 = vmatpush1.bf16.msra.mxu0 0
  %1422 = vmatprep.subr.bf16.mxu0 0
  %1423 = vmatpush1.bf16.msra.mxu0 %v378
  %1424 = vmatprep.subr.bf16.mxu0 0
  %1425 = vmatpush1.bf16.msra.mxu0 %v377
  %1426 = vmatprep.subr.bf16.mxu0 0
  %1427 = vmatpush2.bf16.msra.mxu0 0
  %1428 = vmatprep.subr.bf16.mxu0 0
  %1429 = vmatpush2.bf16.msra.mxu0 0
  %1430 = vmatprep.subr.bf16.mxu0 0
  %1431 = vmatpush2.bf16.msra.mxu0 0
  %1432 = vmatprep.subr.bf16.mxu0 0
  %1433 = vmatpush2.bf16.msra.mxu0 0
  %1434 = vmatprep.subr.bf16.mxu0 0
  %1435 = vmatpush2.bf16.msra.mxu0 0
  %1436 = vmatprep.subr.bf16.mxu0 0
  %1437 = vmatpush2.bf16.msra.mxu0 0
  %1438 = vmatprep.subr.bf16.mxu0 0
  %1439 = vmatpush2.bf16.msra.mxu0 0
  %1440 = vmatprep.subr.bf16.mxu0 0
  %1441 = vmatpush2.bf16.msra.mxu0 0
  %1442 = vmatprep.mubr.bf16.mxu0 0
  %1443 = vmatmul.mubr.bf16.gmra.mxu0 %v1408
  %v1444 = vpop.f32.mrf.mxu0
  %v1445 = vadd.f32 0.0, %v1444
  %v1446 = vpop.f32.mrf.mxu0
  %v1447 = vpop.f32.mrf.mxu0
  %v1448 = vadd.f32 0.0, %v1447
  %v1449 = vpop.f32.mrf.mxu0
  %1450 = vdwg.mxu0
  %v1451 = vadd.f32 %v1403, %v1445
  %v1452 = vadd.f32 %v1404, %v1448
  %v1453 = vxor.u32 %v1451, 2147483648
  %v1454 = vxor.u32 %v1452, 2147483648
  %v1455 = vmul.f32 %v1453, 1.442695
  %v1456 = vpow.pop %v1455
  %v1457 = vmul.f32 %v1454, 1.442695
  %v1458 = vpow.pop %v1457
  %v1459 = vadd.f32 %v1456, 1.0
  %v1460 = vadd.f32 %v1458, 1.0
  %v1461 = vrcp.pop %v1459
  %v1462 = vmul.f32 1.0, %v1461
  %v1463 = vrcp.pop %v1460
  %v1464 = vmul.f32 1.0, %v1463
  %v1465 = vtanh.pop %v1451
  %v1466 = vtanh.pop %v1452
  %v1467 = vmul.f32 %v1462, %v1373
  %v1468 = vmul.f32 %v1464, %v1374
  %1471 = vrot.lane.b32.xlu0 %v1465, 64
  %v1472 = vpop.permute.xlu0 %1471
  %1473 = vrot.lane.b32.xlu0 %v1466, 64
  %v1474 = vpop.permute.xlu0 %1473
  %v1477 = vmul.f32 %v1462, %v1472
  %v1478 = vmul.f32 %v1464, %v1474
  %1481 = vrot.lane.b32.xlu0 %v1477, 32
  %v1482 = vpop.permute.xlu0 %1481
  %1483 = vrot.lane.b32.xlu0 %v1478, 32
  %v1484 = vpop.permute.xlu0 %1483
  %v1487 = vadd.f32 %v1467, %v1482
  %v1488 = vadd.f32 %v1468, %v1484
  %v1489 = vtanh.pop %v1487
  %v1490 = vtanh.pop %v1488
  %1493 = vrot.lane.b32.xlu0 %v1489, 64
  %v1494 = vpop.permute.xlu0 %1493
  %1495 = vrot.lane.b32.xlu0 %v1490, 64
  %v1496 = vpop.permute.xlu0 %1495
  %v1499 = vmul.f32 %v1462, %v1494
  %v1500 = vmul.f32 %v1464, %v1496
  %v1501 = vpack.c.bf16 %v1500, %v1499
  %v1503 = vunpack.c.l.b16 %v1501
  %v1504 = vunpack.c.h.b16 %v1501
  %v1505 = vpack.c.b16 %v1503, %v1503
  %v1506 = vpack.c.b16 %v1504, %v1504
  %1507 = vrot.lane.b32.xlu0 %v1505, 32
  %v1508 = vpop.permute.xlu0 %1507
  %1509 = vrot.lane.b32.xlu0 %v1506, 32
  %v1510 = vpop.permute.xlu0 %1509
  %s1513 = scalar_lea.vmem %s4, 72
  %1514 = vst.msk [vmem:[%s1513] sm:$0xf] %vm487, %v1508
  %1515 = vst.msk [vmem:[%s1513 + $0x4] sm:$0xf] %vm487, %v1510
  %s1516 = scalar_lea.vmem [#allocation2], 160
  %v1517 = vld [vmem:[%s1516] sm:$0xff]
  %v1518 = vld [vmem:[%s1516 + $0x8] sm:$0xff]
  %1519 = vrot.lane.b32.xlu0 %v1501, 32
  %v1520 = vpop.permute.xlu0 %1519
  %v1522 = vsel %vm82, %v1520, 0
  %1524 = vmatprep.subr.bf16.mxu0 0
  %1525 = vmatpush1.bf16.msra.mxu0 0
  %1526 = vmatprep.subr.bf16.mxu0 0
  %1527 = vmatpush1.bf16.msra.mxu0 0
  %1528 = vmatprep.subr.bf16.mxu0 0
  %1529 = vmatpush1.bf16.msra.mxu0 0
  %1530 = vmatprep.subr.bf16.mxu0 0
  %1531 = vmatpush1.bf16.msra.mxu0 0
  %1532 = vmatprep.subr.bf16.mxu0 0
  %1533 = vmatpush1.bf16.msra.mxu0 0
  %1534 = vmatprep.subr.bf16.mxu0 0
  %1535 = vmatpush1.bf16.msra.mxu0 0
  %1536 = vmatprep.subr.bf16.mxu0 0
  %1537 = vmatpush1.bf16.msra.mxu0 %v378
  %1538 = vmatprep.subr.bf16.mxu0 0
  %1539 = vmatpush1.bf16.msra.mxu0 %v377
  %1540 = vmatprep.subr.bf16.mxu0 0
  %1541 = vmatpush2.bf16.msra.mxu0 0
  %1542 = vmatprep.subr.bf16.mxu0 0
  %1543 = vmatpush2.bf16.msra.mxu0 0
  %1544 = vmatprep.subr.bf16.mxu0 0
  %1545 = vmatpush2.bf16.msra.mxu0 0
  %1546 = vmatprep.subr.bf16.mxu0 0
  %1547 = vmatpush2.bf16.msra.mxu0 0
  %1548 = vmatprep.subr.bf16.mxu0 0
  %1549 = vmatpush2.bf16.msra.mxu0 0
  %1550 = vmatprep.subr.bf16.mxu0 0
  %1551 = vmatpush2.bf16.msra.mxu0 0
  %1552 = vmatprep.subr.bf16.mxu0 0
  %1553 = vmatpush2.bf16.msra.mxu0 0
  %1554 = vmatprep.subr.bf16.mxu0 0
  %1555 = vmatpush2.bf16.msra.mxu0 0
  %1556 = vmatprep.mubr.bf16.mxu0 0
  %1557 = vmatmul.mubr.bf16.gmra.mxu0 %v1522
  %v1558 = vpop.f32.mrf.mxu0
  %v1559 = vadd.f32 0.0, %v1558
  %v1560 = vpop.f32.mrf.mxu0
  %v1561 = vpop.f32.mrf.mxu0
  %v1562 = vadd.f32 0.0, %v1561
  %v1563 = vpop.f32.mrf.mxu0
  %1564 = vdwg.mxu0
  %v1565 = vadd.f32 %v1517, %v1559
  %v1566 = vadd.f32 %v1518, %v1562
  %v1567 = vxor.u32 %v1565, 2147483648
  %v1568 = vxor.u32 %v1566, 2147483648
  %v1569 = vmul.f32 %v1567, 1.442695
  %v1570 = vpow.pop %v1569
  %v1571 = vmul.f32 %v1568, 1.442695
  %v1572 = vpow.pop %v1571
  %v1573 = vadd.f32 %v1570, 1.0
  %v1574 = vadd.f32 %v1572, 1.0
  %v1575 = vrcp.pop %v1573
  %v1576 = vmul.f32 1.0, %v1575
  %v1577 = vrcp.pop %v1574
  %v1578 = vmul.f32 1.0, %v1577
  %v1579 = vtanh.pop %v1565
  %v1580 = vtanh.pop %v1566
  %v1581 = vmul.f32 %v1576, %v1487
  %v1582 = vmul.f32 %v1578, %v1488
  %1585 = vrot.lane.b32.xlu0 %v1579, 64
  %v1586 = vpop.permute.xlu0 %1585
  %1587 = vrot.lane.b32.xlu0 %v1580, 64
  %v1588 = vpop.permute.xlu0 %1587
  %v1591 = vmul.f32 %v1576, %v1586
  %v1592 = vmul.f32 %v1578, %v1588
  %1595 = vrot.lane.b32.xlu0 %v1591, 32
  %v1596 = vpop.permute.xlu0 %1595
  %1597 = vrot.lane.b32.xlu0 %v1592, 32
  %v1598 = vpop.permute.xlu0 %1597
  %v1601 = vadd.f32 %v1581, %v1596
  %v1602 = vadd.f32 %v1582, %v1598
  %v1603 = vtanh.pop %v1601
  %v1604 = vtanh.pop %v1602
  %1607 = vrot.lane.b32.xlu0 %v1603, 64
  %v1608 = vpop.permute.xlu0 %1607
  %1609 = vrot.lane.b32.xlu0 %v1604, 64
  %v1610 = vpop.permute.xlu0 %1609
  %v1613 = vmul.f32 %v1576, %v1608
  %v1614 = vmul.f32 %v1578, %v1610
  %v1615 = vpack.c.bf16 %v1614, %v1613
  %v1617 = vunpack.c.l.b16 %v1615
  %v1618 = vunpack.c.h.b16 %v1615
  %v1619 = vpack.c.b16 %v1617, %v1617
  %v1620 = vpack.c.b16 %v1618, %v1618
  %1621 = vrot.lane.b32.xlu0 %v1619, 32
  %v1622 = vpop.permute.xlu0 %1621
  %1623 = vrot.lane.b32.xlu0 %v1620, 32
  %v1624 = vpop.permute.xlu0 %1623
  %s1627 = scalar_lea.vmem %s4, 80
  %1628 = vst.msk [vmem:[%s1627] sm:$0xf] %vm487, %v1622
  %1629 = vst.msk [vmem:[%s1627 + $0x4] sm:$0xf] %vm487, %v1624
  %s1630 = scalar_lea.vmem [#allocation2], 176
  %v1631 = vld [vmem:[%s1630] sm:$0xff]
  %v1632 = vld [vmem:[%s1630 + $0x8] sm:$0xff]
  %1633 = vrot.lane.b32.xlu0 %v1615, 32
  %v1634 = vpop.permute.xlu0 %1633
  %v1636 = vsel %vm82, %v1634, 0
  %1638 = vmatprep.subr.bf16.mxu0 0
  %1639 = vmatpush1.bf16.msra.mxu0 0
  %1640 = vmatprep.subr.bf16.mxu0 0
  %1641 = vmatpush1.bf16.msra.mxu0 0
  %1642 = vmatprep.subr.bf16.mxu0 0
  %1643 = vmatpush1.bf16.msra.mxu0 0
  %1644 = vmatprep.subr.bf16.mxu0 0
  %1645 = vmatpush1.bf16.msra.mxu0 0
  %1646 = vmatprep.subr.bf16.mxu0 0
  %1647 = vmatpush1.bf16.msra.mxu0 0
  %1648 = vmatprep.subr.bf16.mxu0 0
  %1649 = vmatpush1.bf16.msra.mxu0 0
  %1650 = vmatprep.subr.bf16.mxu0 0
  %1651 = vmatpush1.bf16.msra.mxu0 %v378
  %1652 = vmatprep.subr.bf16.mxu0 0
  %1653 = vmatpush1.bf16.msra.mxu0 %v377
  %1654 = vmatprep.subr.bf16.mxu0 0
  %1655 = vmatpush2.bf16.msra.mxu0 0
  %1656 = vmatprep.subr.bf16.mxu0 0
  %1657 = vmatpush2.bf16.msra.mxu0 0
  %1658 = vmatprep.subr.bf16.mxu0 0
  %1659 = vmatpush2.bf16.msra.mxu0 0
  %1660 = vmatprep.subr.bf16.mxu0 0
  %1661 = vmatpush2.bf16.msra.mxu0 0
  %1662 = vmatprep.subr.bf16.mxu0 0
  %1663 = vmatpush2.bf16.msra.mxu0 0
  %1664 = vmatprep.subr.bf16.mxu0 0
  %1665 = vmatpush2.bf16.msra.mxu0 0
  %1666 = vmatprep.subr.bf16.mxu0 0
  %1667 = vmatpush2.bf16.msra.mxu0 0
  %1668 = vmatprep.subr.bf16.mxu0 0
  %1669 = vmatpush2.bf16.msra.mxu0 0
  %1670 = vmatprep.mubr.bf16.mxu0 0
  %1671 = vmatmul.mubr.bf16.gmra.mxu0 %v1636
  %v1672 = vpop.f32.mrf.mxu0
  %v1673 = vadd.f32 0.0, %v1672
  %v1674 = vpop.f32.mrf.mxu0
  %v1675 = vpop.f32.mrf.mxu0
  %v1676 = vadd.f32 0.0, %v1675
  %v1677 = vpop.f32.mrf.mxu0
  %1678 = vdwg.mxu0
  %v1679 = vadd.f32 %v1631, %v1673
  %v1680 = vadd.f32 %v1632, %v1676
  %v1681 = vxor.u32 %v1679, 2147483648
  %v1682 = vxor.u32 %v1680, 2147483648
  %v1683 = vmul.f32 %v1681, 1.442695
  %v1684 = vpow.pop %v1683
  %v1685 = vmul.f32 %v1682, 1.442695
  %v1686 = vpow.pop %v1685
  %v1687 = vadd.f32 %v1684, 1.0
  %v1688 = vadd.f32 %v1686, 1.0
  %v1689 = vrcp.pop %v1687
  %v1690 = vmul.f32 1.0, %v1689
  %v1691 = vrcp.pop %v1688
  %v1692 = vmul.f32 1.0, %v1691
  %v1693 = vtanh.pop %v1679
  %v1694 = vtanh.pop %v1680
  %v1695 = vmul.f32 %v1690, %v1601
  %v1696 = vmul.f32 %v1692, %v1602
  %1699 = vrot.lane.b32.xlu0 %v1693, 64
  %v1700 = vpop.permute.xlu0 %1699
  %1701 = vrot.lane.b32.xlu0 %v1694, 64
  %v1702 = vpop.permute.xlu0 %1701
  %v1705 = vmul.f32 %v1690, %v1700
  %v1706 = vmul.f32 %v1692, %v1702
  %1709 = vrot.lane.b32.xlu0 %v1705, 32
  %v1710 = vpop.permute.xlu0 %1709
  %1711 = vrot.lane.b32.xlu0 %v1706, 32
  %v1712 = vpop.permute.xlu0 %1711
  %v1715 = vadd.f32 %v1695, %v1710
  %v1716 = vadd.f32 %v1696, %v1712
  %v1717 = vtanh.pop %v1715
  %v1718 = vtanh.pop %v1716
  %1721 = vrot.lane.b32.xlu0 %v1717, 64
  %v1722 = vpop.permute.xlu0 %1721
  %1723 = vrot.lane.b32.xlu0 %v1718, 64
  %v1724 = vpop.permute.xlu0 %1723
  %v1727 = vmul.f32 %v1690, %v1722
  %v1728 = vmul.f32 %v1692, %v1724
  %v1729 = vpack.c.bf16 %v1728, %v1727
  %v1731 = vunpack.c.l.b16 %v1729
  %v1732 = vunpack.c.h.b16 %v1729
  %v1733 = vpack.c.b16 %v1731, %v1731
  %v1734 = vpack.c.b16 %v1732, %v1732
  %1735 = vrot.lane.b32.xlu0 %v1733, 32
  %v1736 = vpop.permute.xlu0 %1735
  %1737 = vrot.lane.b32.xlu0 %v1734, 32
  %v1738 = vpop.permute.xlu0 %1737
  %s1741 = scalar_lea.vmem %s4, 88
  %1742 = vst.msk [vmem:[%s1741] sm:$0xf] %vm487, %v1736
  %1743 = vst.msk [vmem:[%s1741 + $0x4] sm:$0xf] %vm487, %v1738
  %s1744 = scalar_lea.vmem [#allocation2], 192
  %v1745 = vld [vmem:[%s1744] sm:$0xff]
  %v1746 = vld [vmem:[%s1744 + $0x8] sm:$0xff]
  %1747 = vrot.lane.b32.xlu0 %v1729, 32
  %v1748 = vpop.permute.xlu0 %1747
  %v1750 = vsel %vm82, %v1748, 0
  %1752 = vmatprep.subr.bf16.mxu0 0
  %1753 = vmatpush1.bf16.msra.mxu0 0
  %1754 = vmatprep.subr.bf16.mxu0 0
  %1755 = vmatpush1.bf16.msra.mxu0 0
  %1756 = vmatprep.subr.bf16.mxu0 0
  %1757 = vmatpush1.bf16.msra.mxu0 0
  %1758 = vmatprep.subr.bf16.mxu0 0
  %1759 = vmatpush1.bf16.msra.mxu0 0
  %1760 = vmatprep.subr.bf16.mxu0 0
  %1761 = vmatpush1.bf16.msra.mxu0 0
  %1762 = vmatprep.subr.bf16.mxu0 0
  %1763 = vmatpush1.bf16.msra.mxu0 0
  %1764 = vmatprep.subr.bf16.mxu0 0
  %1765 = vmatpush1.bf16.msra.mxu0 %v378
  %1766 = vmatprep.subr.bf16.mxu0 0
  %1767 = vmatpush1.bf16.msra.mxu0 %v377
  %1768 = vmatprep.subr.bf16.mxu0 0
  %1769 = vmatpush2.bf16.msra.mxu0 0
  %1770 = vmatprep.subr.bf16.mxu0 0
  %1771 = vmatpush2.bf16.msra.mxu0 0
  %1772 = vmatprep.subr.bf16.mxu0 0
  %1773 = vmatpush2.bf16.msra.mxu0 0
  %1774 = vmatprep.subr.bf16.mxu0 0
  %1775 = vmatpush2.bf16.msra.mxu0 0
  %1776 = vmatprep.subr.bf16.mxu0 0
  %1777 = vmatpush2.bf16.msra.mxu0 0
  %1778 = vmatprep.subr.bf16.mxu0 0
  %1779 = vmatpush2.bf16.msra.mxu0 0
  %1780 = vmatprep.subr.bf16.mxu0 0
  %1781 = vmatpush2.bf16.msra.mxu0 0
  %1782 = vmatprep.subr.bf16.mxu0 0
  %1783 = vmatpush2.bf16.msra.mxu0 0
  %1784 = vmatprep.mubr.bf16.mxu0 0
  %1785 = vmatmul.mubr.bf16.gmra.mxu0 %v1750
  %v1786 = vpop.f32.mrf.mxu0
  %v1787 = vadd.f32 0.0, %v1786
  %v1788 = vpop.f32.mrf.mxu0
  %v1789 = vpop.f32.mrf.mxu0
  %v1790 = vadd.f32 0.0, %v1789
  %v1791 = vpop.f32.mrf.mxu0
  %1792 = vdwg.mxu0
  %v1793 = vadd.f32 %v1745, %v1787
  %v1794 = vadd.f32 %v1746, %v1790
  %v1795 = vxor.u32 %v1793, 2147483648
  %v1796 = vxor.u32 %v1794, 2147483648
  %v1797 = vmul.f32 %v1795, 1.442695
  %v1798 = vpow.pop %v1797
  %v1799 = vmul.f32 %v1796, 1.442695
  %v1800 = vpow.pop %v1799
  %v1801 = vadd.f32 %v1798, 1.0
  %v1802 = vadd.f32 %v1800, 1.0
  %v1803 = vrcp.pop %v1801
  %v1804 = vmul.f32 1.0, %v1803
  %v1805 = vrcp.pop %v1802
  %v1806 = vmul.f32 1.0, %v1805
  %v1807 = vtanh.pop %v1793
  %v1808 = vtanh.pop %v1794
  %v1809 = vmul.f32 %v1804, %v1715
  %v1810 = vmul.f32 %v1806, %v1716
  %1813 = vrot.lane.b32.xlu0 %v1807, 64
  %v1814 = vpop.permute.xlu0 %1813
  %1815 = vrot.lane.b32.xlu0 %v1808, 64
  %v1816 = vpop.permute.xlu0 %1815
  %v1819 = vmul.f32 %v1804, %v1814
  %v1820 = vmul.f32 %v1806, %v1816
  %1823 = vrot.lane.b32.xlu0 %v1819, 32
  %v1824 = vpop.permute.xlu0 %1823
  %1825 = vrot.lane.b32.xlu0 %v1820, 32
  %v1826 = vpop.permute.xlu0 %1825
  %v1829 = vadd.f32 %v1809, %v1824
  %v1830 = vadd.f32 %v1810, %v1826
  %v1831 = vtanh.pop %v1829
  %v1832 = vtanh.pop %v1830
  %1835 = vrot.lane.b32.xlu0 %v1831, 64
  %v1836 = vpop.permute.xlu0 %1835
  %1837 = vrot.lane.b32.xlu0 %v1832, 64
  %v1838 = vpop.permute.xlu0 %1837
  %v1841 = vmul.f32 %v1804, %v1836
  %v1842 = vmul.f32 %v1806, %v1838
  %v1843 = vpack.c.bf16 %v1842, %v1841
  %v1845 = vunpack.c.l.b16 %v1843
  %v1846 = vunpack.c.h.b16 %v1843
  %v1847 = vpack.c.b16 %v1845, %v1845
  %v1848 = vpack.c.b16 %v1846, %v1846
  %1849 = vrot.lane.b32.xlu0 %v1847, 32
  %v1850 = vpop.permute.xlu0 %1849
  %1851 = vrot.lane.b32.xlu0 %v1848, 32
  %v1852 = vpop.permute.xlu0 %1851
  %s1855 = scalar_lea.vmem %s4, 96
  %1856 = vst.msk [vmem:[%s1855] sm:$0xf] %vm487, %v1850
  %1857 = vst.msk [vmem:[%s1855 + $0x4] sm:$0xf] %vm487, %v1852
  %s1858 = scalar_lea.vmem [#allocation2], 208
  %v1859 = vld [vmem:[%s1858] sm:$0xff]
  %v1860 = vld [vmem:[%s1858 + $0x8] sm:$0xff]
  %1861 = vrot.lane.b32.xlu0 %v1843, 32
  %v1862 = vpop.permute.xlu0 %1861
  %v1864 = vsel %vm82, %v1862, 0
  %1866 = vmatprep.subr.bf16.mxu0 0
  %1867 = vmatpush1.bf16.msra.mxu0 0
  %1868 = vmatprep.subr.bf16.mxu0 0
  %1869 = vmatpush1.bf16.msra.mxu0 0
  %1870 = vmatprep.subr.bf16.mxu0 0
  %1871 = vmatpush1.bf16.msra.mxu0 0
  %1872 = vmatprep.subr.bf16.mxu0 0
  %1873 = vmatpush1.bf16.msra.mxu0 0
  %1874 = vmatprep.subr.bf16.mxu0 0
  %1875 = vmatpush1.bf16.msra.mxu0 0
  %1876 = vmatprep.subr.bf16.mxu0 0
  %1877 = vmatpush1.bf16.msra.mxu0 0
  %1878 = vmatprep.subr.bf16.mxu0 0
  %1879 = vmatpush1.bf16.msra.mxu0 %v378
  %1880 = vmatprep.subr.bf16.mxu0 0
  %1881 = vmatpush1.bf16.msra.mxu0 %v377
  %1882 = vmatprep.subr.bf16.mxu0 0
  %1883 = vmatpush2.bf16.msra.mxu0 0
  %1884 = vmatprep.subr.bf16.mxu0 0
  %1885 = vmatpush2.bf16.msra.mxu0 0
  %1886 = vmatprep.subr.bf16.mxu0 0
  %1887 = vmatpush2.bf16.msra.mxu0 0
  %1888 = vmatprep.subr.bf16.mxu0 0
  %1889 = vmatpush2.bf16.msra.mxu0 0
  %1890 = vmatprep.subr.bf16.mxu0 0
  %1891 = vmatpush2.bf16.msra.mxu0 0
  %1892 = vmatprep.subr.bf16.mxu0 0
  %1893 = vmatpush2.bf16.msra.mxu0 0
  %1894 = vmatprep.subr.bf16.mxu0 0
  %1895 = vmatpush2.bf16.msra.mxu0 0
  %1896 = vmatprep.subr.bf16.mxu0 0
  %1897 = vmatpush2.bf16.msra.mxu0 0
  %1898 = vmatprep.mubr.bf16.mxu0 0
  %1899 = vmatmul.mubr.bf16.gmra.mxu0 %v1864
  %v1900 = vpop.f32.mrf.mxu0
  %v1901 = vadd.f32 0.0, %v1900
  %v1902 = vpop.f32.mrf.mxu0
  %v1903 = vpop.f32.mrf.mxu0
  %v1904 = vadd.f32 0.0, %v1903
  %v1905 = vpop.f32.mrf.mxu0
  %1906 = vdwg.mxu0
  %v1907 = vadd.f32 %v1859, %v1901
  %v1908 = vadd.f32 %v1860, %v1904
  %v1909 = vxor.u32 %v1907, 2147483648
  %v1910 = vxor.u32 %v1908, 2147483648
  %v1911 = vmul.f32 %v1909, 1.442695
  %v1912 = vpow.pop %v1911
  %v1913 = vmul.f32 %v1910, 1.442695
  %v1914 = vpow.pop %v1913
  %v1915 = vadd.f32 %v1912, 1.0
  %v1916 = vadd.f32 %v1914, 1.0
  %v1917 = vrcp.pop %v1915
  %v1918 = vmul.f32 1.0, %v1917
  %v1919 = vrcp.pop %v1916
  %v1920 = vmul.f32 1.0, %v1919
  %v1921 = vtanh.pop %v1907
  %v1922 = vtanh.pop %v1908
  %v1923 = vmul.f32 %v1918, %v1829
  %v1924 = vmul.f32 %v1920, %v1830
  %1927 = vrot.lane.b32.xlu0 %v1921, 64
  %v1928 = vpop.permute.xlu0 %1927
  %1929 = vrot.lane.b32.xlu0 %v1922, 64
  %v1930 = vpop.permute.xlu0 %1929
  %v1933 = vmul.f32 %v1918, %v1928
  %v1934 = vmul.f32 %v1920, %v1930
  %1937 = vrot.lane.b32.xlu0 %v1933, 32
  %v1938 = vpop.permute.xlu0 %1937
  %1939 = vrot.lane.b32.xlu0 %v1934, 32
  %v1940 = vpop.permute.xlu0 %1939
  %v1943 = vadd.f32 %v1923, %v1938
  %v1944 = vadd.f32 %v1924, %v1940
  %v1945 = vtanh.pop %v1943
  %v1946 = vtanh.pop %v1944
  %1949 = vrot.lane.b32.xlu0 %v1945, 64
  %v1950 = vpop.permute.xlu0 %1949
  %1951 = vrot.lane.b32.xlu0 %v1946, 64
  %v1952 = vpop.permute.xlu0 %1951
  %v1955 = vmul.f32 %v1918, %v1950
  %v1956 = vmul.f32 %v1920, %v1952
  %v1957 = vpack.c.bf16 %v1956, %v1955
  %v1959 = vunpack.c.l.b16 %v1957
  %v1960 = vunpack.c.h.b16 %v1957
  %v1961 = vpack.c.b16 %v1959, %v1959
  %v1962 = vpack.c.b16 %v1960, %v1960
  %1963 = vrot.lane.b32.xlu0 %v1961, 32
  %v1964 = vpop.permute.xlu0 %1963
  %1965 = vrot.lane.b32.xlu0 %v1962, 32
  %v1966 = vpop.permute.xlu0 %1965
  %s1969 = scalar_lea.vmem %s4, 104
  %1970 = vst.msk [vmem:[%s1969] sm:$0xf] %vm487, %v1964
  %1971 = vst.msk [vmem:[%s1969 + $0x4] sm:$0xf] %vm487, %v1966
  %s1972 = scalar_lea.vmem [#allocation2], 224
  %v1973 = vld [vmem:[%s1972] sm:$0xff]
  %v1974 = vld [vmem:[%s1972 + $0x8] sm:$0xff]
  %1975 = vrot.lane.b32.xlu0 %v1957, 32
  %v1976 = vpop.permute.xlu0 %1975
  %v1978 = vsel %vm82, %v1976, 0
  %1980 = vmatprep.subr.bf16.mxu0 0
  %1981 = vmatpush1.bf16.msra.mxu0 0
  %1982 = vmatprep.subr.bf16.mxu0 0
  %1983 = vmatpush1.bf16.msra.mxu0 0
  %1984 = vmatprep.subr.bf16.mxu0 0
  %1985 = vmatpush1.bf16.msra.mxu0 0
  %1986 = vmatprep.subr.bf16.mxu0 0
  %1987 = vmatpush1.bf16.msra.mxu0 0
  %1988 = vmatprep.subr.bf16.mxu0 0
  %1989 = vmatpush1.bf16.msra.mxu0 0
  %1990 = vmatprep.subr.bf16.mxu0 0
  %1991 = vmatpush1.bf16.msra.mxu0 0
  %1992 = vmatprep.subr.bf16.mxu0 0
  %1993 = vmatpush1.bf16.msra.mxu0 %v378
  %1994 = vmatprep.subr.bf16.mxu0 0
  %1995 = vmatpush1.bf16.msra.mxu0 %v377
  %1996 = vmatprep.subr.bf16.mxu0 0
  %1997 = vmatpush2.bf16.msra.mxu0 0
  %1998 = vmatprep.subr.bf16.mxu0 0
  %1999 = vmatpush2.bf16.msra.mxu0 0
  %2000 = vmatprep.subr.bf16.mxu0 0
  %2001 = vmatpush2.bf16.msra.mxu0 0
  %2002 = vmatprep.subr.bf16.mxu0 0
  %2003 = vmatpush2.bf16.msra.mxu0 0
  %2004 = vmatprep.subr.bf16.mxu0 0
  %2005 = vmatpush2.bf16.msra.mxu0 0
  %2006 = vmatprep.subr.bf16.mxu0 0
  %2007 = vmatpush2.bf16.msra.mxu0 0
  %2008 = vmatprep.subr.bf16.mxu0 0
  %2009 = vmatpush2.bf16.msra.mxu0 0
  %2010 = vmatprep.subr.bf16.mxu0 0
  %2011 = vmatpush2.bf16.msra.mxu0 0
  %2012 = vmatprep.mubr.bf16.mxu0 0
  %2013 = vmatmul.mubr.bf16.gmra.mxu0 %v1978
  %v2014 = vpop.f32.mrf.mxu0
  %v2015 = vadd.f32 0.0, %v2014
  %v2016 = vpop.f32.mrf.mxu0
  %v2017 = vpop.f32.mrf.mxu0
  %v2018 = vadd.f32 0.0, %v2017
  %v2019 = vpop.f32.mrf.mxu0
  %2020 = vdwg.mxu0
  %v2021 = vadd.f32 %v1973, %v2015
  %v2022 = vadd.f32 %v1974, %v2018
  %v2023 = vxor.u32 %v2021, 2147483648
  %v2024 = vxor.u32 %v2022, 2147483648
  %v2025 = vmul.f32 %v2023, 1.442695
  %v2026 = vpow.pop %v2025
  %v2027 = vmul.f32 %v2024, 1.442695
  %v2028 = vpow.pop %v2027
  %v2029 = vadd.f32 %v2026, 1.0
  %v2030 = vadd.f32 %v2028, 1.0
  %v2031 = vrcp.pop %v2029
  %v2032 = vmul.f32 1.0, %v2031
  %v2033 = vrcp.pop %v2030
  %v2034 = vmul.f32 1.0, %v2033
  %v2035 = vtanh.pop %v2021
  %v2036 = vtanh.pop %v2022
  %v2037 = vmul.f32 %v2032, %v1943
  %v2038 = vmul.f32 %v2034, %v1944
  %2041 = vrot.lane.b32.xlu0 %v2035, 64
  %v2042 = vpop.permute.xlu0 %2041
  %2043 = vrot.lane.b32.xlu0 %v2036, 64
  %v2044 = vpop.permute.xlu0 %2043
  %v2047 = vmul.f32 %v2032, %v2042
  %v2048 = vmul.f32 %v2034, %v2044
  %2051 = vrot.lane.b32.xlu0 %v2047, 32
  %v2052 = vpop.permute.xlu0 %2051
  %2053 = vrot.lane.b32.xlu0 %v2048, 32
  %v2054 = vpop.permute.xlu0 %2053
  %v2057 = vadd.f32 %v2037, %v2052
  %v2058 = vadd.f32 %v2038, %v2054
  %v2059 = vtanh.pop %v2057
  %v2060 = vtanh.pop %v2058
  %2063 = vrot.lane.b32.xlu0 %v2059, 64
  %v2064 = vpop.permute.xlu0 %2063
  %2065 = vrot.lane.b32.xlu0 %v2060, 64
  %v2066 = vpop.permute.xlu0 %2065
  %v2069 = vmul.f32 %v2032, %v2064
  %v2070 = vmul.f32 %v2034, %v2066
  %v2071 = vpack.c.bf16 %v2070, %v2069
  %v2073 = vunpack.c.l.b16 %v2071
  %v2074 = vunpack.c.h.b16 %v2071
  %v2075 = vpack.c.b16 %v2073, %v2073
  %v2076 = vpack.c.b16 %v2074, %v2074
  %2077 = vrot.lane.b32.xlu0 %v2075, 32
  %v2078 = vpop.permute.xlu0 %2077
  %2079 = vrot.lane.b32.xlu0 %v2076, 32
  %v2080 = vpop.permute.xlu0 %2079
  %s2083 = scalar_lea.vmem %s4, 112
  %2084 = vst.msk [vmem:[%s2083] sm:$0xf] %vm487, %v2078
  %2085 = vst.msk [vmem:[%s2083 + $0x4] sm:$0xf] %vm487, %v2080
  %s2086 = scalar_lea.vmem [#allocation2], 240
  %v2087 = vld [vmem:[%s2086] sm:$0xff]
  %v2088 = vld [vmem:[%s2086 + $0x8] sm:$0xff]
  %2089 = vrot.lane.b32.xlu0 %v2071, 32
  %v2090 = vpop.permute.xlu0 %2089
  %v2092 = vsel %vm82, %v2090, 0
  %2094 = vmatprep.subr.bf16.mxu0 0
  %2095 = vmatpush1.bf16.msra.mxu0 0
  %2096 = vmatprep.subr.bf16.mxu0 0
  %2097 = vmatpush1.bf16.msra.mxu0 0
  %2098 = vmatprep.subr.bf16.mxu0 0
  %2099 = vmatpush1.bf16.msra.mxu0 0
  %2100 = vmatprep.subr.bf16.mxu0 0
  %2101 = vmatpush1.bf16.msra.mxu0 0
  %2102 = vmatprep.subr.bf16.mxu0 0
  %2103 = vmatpush1.bf16.msra.mxu0 0
  %2104 = vmatprep.subr.bf16.mxu0 0
  %2105 = vmatpush1.bf16.msra.mxu0 0
  %2106 = vmatprep.subr.bf16.mxu0 0
  %2107 = vmatpush1.bf16.msra.mxu0 %v378
  %2108 = vmatprep.subr.bf16.mxu0 0
  %2109 = vmatpush1.bf16.msra.mxu0 %v377
  %2110 = vmatprep.subr.bf16.mxu0 0
  %2111 = vmatpush2.bf16.msra.mxu0 0
  %2112 = vmatprep.subr.bf16.mxu0 0
  %2113 = vmatpush2.bf16.msra.mxu0 0
  %2114 = vmatprep.subr.bf16.mxu0 0
  %2115 = vmatpush2.bf16.msra.mxu0 0
  %2116 = vmatprep.subr.bf16.mxu0 0
  %2117 = vmatpush2.bf16.msra.mxu0 0
  %2118 = vmatprep.subr.bf16.mxu0 0
  %2119 = vmatpush2.bf16.msra.mxu0 0
  %2120 = vmatprep.subr.bf16.mxu0 0
  %2121 = vmatpush2.bf16.msra.mxu0 0
  %2122 = vmatprep.subr.bf16.mxu0 0
  %2123 = vmatpush2.bf16.msra.mxu0 0
  %2124 = vmatprep.subr.bf16.mxu0 0
  %2125 = vmatpush2.bf16.msra.mxu0 0
  %2126 = vmatprep.mubr.bf16.mxu0 0
  %2127 = vmatmul.mubr.bf16.gmra.mxu0 %v2092
  %v2128 = vpop.f32.mrf.mxu0
  %v2129 = vadd.f32 0.0, %v2128
  %v2130 = vpop.f32.mrf.mxu0
  %v2131 = vpop.f32.mrf.mxu0
  %v2132 = vadd.f32 0.0, %v2131
  %v2133 = vpop.f32.mrf.mxu0
  %2134 = vdwg.mxu0
  %v2135 = vadd.f32 %v2087, %v2129
  %v2136 = vadd.f32 %v2088, %v2132
  %v2137 = vxor.u32 %v2135, 2147483648
  %v2138 = vxor.u32 %v2136, 2147483648
  %v2139 = vmul.f32 %v2137, 1.442695
  %v2140 = vpow.pop %v2139
  %v2141 = vmul.f32 %v2138, 1.442695
  %v2142 = vpow.pop %v2141
  %v2143 = vadd.f32 %v2140, 1.0
  %v2144 = vadd.f32 %v2142, 1.0
  %v2145 = vrcp.pop %v2143
  %v2146 = vmul.f32 1.0, %v2145
  %v2147 = vrcp.pop %v2144
  %v2148 = vmul.f32 1.0, %v2147
  %v2149 = vtanh.pop %v2135
  %v2150 = vtanh.pop %v2136
  %v2151 = vmul.f32 %v2146, %v2057
  %v2152 = vmul.f32 %v2148, %v2058
  %2155 = vrot.lane.b32.xlu0 %v2149, 64
  %v2156 = vpop.permute.xlu0 %2155
  %2157 = vrot.lane.b32.xlu0 %v2150, 64
  %v2158 = vpop.permute.xlu0 %2157
  %v2161 = vmul.f32 %v2146, %v2156
  %v2162 = vmul.f32 %v2148, %v2158
  %2165 = vrot.lane.b32.xlu0 %v2161, 32
  %v2166 = vpop.permute.xlu0 %2165
  %2167 = vrot.lane.b32.xlu0 %v2162, 32
  %v2168 = vpop.permute.xlu0 %2167
  %v2171 = vadd.f32 %v2151, %v2166
  %v2172 = vadd.f32 %v2152, %v2168
  %v2173 = vtanh.pop %v2171
  %v2174 = vtanh.pop %v2172
  %2177 = vrot.lane.b32.xlu0 %v2173, 64
  %v2178 = vpop.permute.xlu0 %2177
  %2179 = vrot.lane.b32.xlu0 %v2174, 64
  %v2180 = vpop.permute.xlu0 %2179
  %v2183 = vmul.f32 %v2146, %v2178
  %v2184 = vmul.f32 %v2148, %v2180
  %v2185 = vpack.c.bf16 %v2184, %v2183
  %v2187 = vunpack.c.l.b16 %v2185
  %v2188 = vunpack.c.h.b16 %v2185
  %v2189 = vpack.c.b16 %v2187, %v2187
  %v2190 = vpack.c.b16 %v2188, %v2188
  %2191 = vrot.lane.b32.xlu0 %v2189, 32
  %v2192 = vpop.permute.xlu0 %2191
  %2193 = vrot.lane.b32.xlu0 %v2190, 32
  %v2194 = vpop.permute.xlu0 %2193
  %s2197 = scalar_lea.vmem %s4, 120
  %2198 = vst.msk [vmem:[%s2197] sm:$0xf] %vm487, %v2192
  %2199 = vst.msk [vmem:[%s2197 + $0x4] sm:$0xf] %vm487, %v2194
  // Predicated region
  $region18: #{delayed_rnn_forward.4} parent=0 // pred_check
    _
  $region19: #{delayed_rnn_forward.4} parent=0 // pred_check_branch
    %2201 = sbr.rel (0) target = $region21
  $region20: #{delayed_rnn_forward.4} parent=0 // pred_region
    _
  $region21: #{delayed_rnn_forward.4} parent=0 // pred_fallthru
    _
  // Predicated region
  $region22: #{delayed_rnn_forward.4} parent=0 // pred_check
    _
  $region23: #{delayed_rnn_forward.4} parent=0 // pred_check_branch
    %2203 = sbr.rel (0) target = $region25
  $region24: #{delayed_rnn_forward.4} parent=0 // pred_region
    _
  $region25: #{delayed_rnn_forward.4} parent=0 // pred_fallthru
    _

</llo_original>
